<compile_context>
chip_gen: v7x
topology: tpu7x:2x2x1
jax: 0.10.0
libtpu: 0.0.40
codegen_flags: <defaults>
</compile_context>

<pallas_src>
import jax
import jax.numpy as jnp
from jax.experimental import pallas as pl
from jax.experimental.pallas import tpu as pltpu

TAU = 0.1


# ----------------------------- Pallas kernel ------------------------------ #
def mrnn_kernel(hn0_ref, xn0_ref, x_ref, wrecT_ref, winpT_ref, bias_ref,
                hn_out_ref, xn_out_ref, inp_s, xc_s):
    """One grid step = one (batch-tile, T-chunk) of the sequential recurrence.

    grid = (B // b_tile, T // t_chunk); axis 0 "parallel" (independent batch
    shards -> v7x megacore), axis 1 "arbitrary" (sequential carry over time).

    Block shapes (VMEM):
      hn0_ref, xn0_ref : (tb, D)         initial state (only used at chunk 0)
      x_ref            : (tT, tb, I)     time-major input chunk
      wrecT_ref        : (D, D)          W_rec^T  (rec = h @ W_rec^T)
      winpT_ref        : (I, D)          W_inp^T
      bias_ref         : (1, D)
      hn_out_ref       : (tT, tb, D)     hn = relu(xn) for this chunk
      xn_out_ref       : (tT, tb, D)     xn for this chunk
      inp_s            : (tT*tb, D) f32  scratch: per-chunk input drive
      xc_s             : (tb, D)    f32  scratch: xn carried across chunks
    """
    c = pl.program_id(1)                       # time-chunk index (carried axis)
    tT, tb, I = x_ref.shape

    # Chunk 0 of each batch shard: (re)initialize the carried state.
    @pl.when(c == 0)
    def _():
        xc_s[...] = xn0_ref[...]

    # Input drive for the whole chunk: ONE big MXU matmul, bias folded in.
    # Spilled to VMEM scratch (not tT live vregs) so t_chunk can be large
    # without vreg-file blowout; per-step reads are cheap vlds with slack.
    x_flat = x_ref[...].reshape(tT * tb, I)    # free relayout: tb % 8 == 0
    inp_s[...] = (jnp.dot(x_flat, winpT_ref[...],
                          preferred_element_type=jnp.float32,
                          precision=jax.lax.Precision.HIGHEST)
                  + bias_ref[...])
    # TODO(synk): this drive matmul is off the serial critical path and could
    # run in bf16 (2-4x MXU, half the x DMA bytes); kept f32 to stay within
    # the tight f32-reference tolerance used below.

    # Recurrent weights stay resident in vregs for the whole unrolled chunk.
    wrecT = wrecT_ref[...]

    # Carried state: xc = previous xn; h = relu(xc), except on the very first
    # step of the sequence where the caller-provided hn0 is used (scalar-mask
    # blend: cheap, avoids an extra carry scratch).
    xc = xc_s[...]
    is_first = (c == 0).astype(jnp.float32)
    h = is_first * hn0_ref[...] + (1.0 - is_first) * jnp.maximum(xc, 0.0)

    # Fully-unrolled static recurrence: state (h, xc) carried in vregs,
    # per-step drive loaded from VMEM scratch, one MXU matmul per step.
    for t in range(tT):
        # TODO(synk): weight-stationary MXU driving (pltpu.matmul_push_rhs /
        # matmul_acc_lhs / matmul_pop) would avoid re-staging W_rec^T every
        # step; kept as jnp.dot for portability across v5e/v6e/v7x.
        rec = jnp.dot(h, wrecT, preferred_element_type=jnp.float32,
                      precision=jax.lax.Precision.HIGHEST)
        inp_t = inp_s[pl.ds(t * tb, tb), :]
        xn_new = xc * TAU * (-xc + rec + inp_t)
        h = jnp.maximum(xn_new, 0.0)
        xn_out_ref[t] = xn_new
        hn_out_ref[t] = h          # relu emitted in-kernel (free store slot)
        xc = xn_new

    # Persist carried state for the next chunk of this batch shard.
    xc_s[...] = xc


# ------------------------------- wrappers ---------------------------------- #
def mrnn_forward_tm(hn, xn, x_tm, w_rec, w_inp, bias, *, t_chunk=64,
                    b_tile=None, vmem_limit_bytes=None):
    """Time-major kernel path (no wrapper-side HBM transposes).

    hn, xn : (B, D) initial state;  x_tm : (T, B, I) time-major input.
    Returns (hn_seq, xn_seq), each (T, B, D) float32.
    """
    T, B, I = x_tm.shape
    D = hn.shape[1]
    t_chunk = min(t_chunk, T)
    assert T % t_chunk == 0, "T must be divisible by t_chunk"
    assert B % 8 == 0, "B must be a multiple of 8 (f32 sublane)"
    if b_tile is None:
        b_tile = min(B, 128)      # fill MXU rows; megacore shard unit on v7x
    assert B % b_tile == 0 and b_tile % 8 == 0
    n_b = B // b_tile
    n_chunks = T // t_chunk

    grid_spec = pltpu.PrefetchScalarGridSpec(
        num_scalar_prefetch=0,
        grid=(n_b, n_chunks),              # (parallel batch shards, carried T)
        in_specs=[
            pl.BlockSpec((b_tile, D), lambda b, c: (b, 0)),              # hn0
            pl.BlockSpec((b_tile, D), lambda b, c: (b, 0)),              # xn0
            pl.BlockSpec((t_chunk, b_tile, I), lambda b, c: (c, b, 0)),  # x
            pl.BlockSpec((D, D), lambda b, c: (0, 0)),                   # W_rec^T
            pl.BlockSpec((I, D), lambda b, c: (0, 0)),                   # W_inp^T
            pl.BlockSpec((1, D), lambda b, c: (0, 0)),                   # bias
        ],
        out_specs=(
            pl.BlockSpec((t_chunk, b_tile, D), lambda b, c: (c, b, 0)),  # hn
            pl.BlockSpec((t_chunk, b_tile, D), lambda b, c: (c, b, 0)),  # xn
        ),
        scratch_shapes=[
            pltpu.VMEM((t_chunk * b_tile, D), jnp.float32),  # input drive
            pltpu.VMEM((b_tile, D), jnp.float32),            # xn carry
        ],
    )

    # VMEM budget (per core): 2x x-block + 2x2x out-blocks + drive scratch +
    # weights/bias/carry ~ 16 KiB per time step at b_tile=8 -> ~1-2 MiB at
    # the default t_chunk=64; far under the scoped limits (16 MiB v5e,
    # 32 MiB v6e/v7x).  Pass vmem_limit_bytes only when pushing t_chunk /
    # b_tile much further (required on v5e around t_chunk ~ 1000).
    compiler_params = pltpu.CompilerParams(
        dimension_semantics=("parallel", "arbitrary"),
        vmem_limit_bytes=vmem_limit_bytes,
    )

    hn_seq, xn_seq = pl.pallas_call(
        mrnn_kernel,
        out_shape=(jax.ShapeDtypeStruct((T, B, D), jnp.float32),
                   jax.ShapeDtypeStruct((T, B, D), jnp.float32)),
        grid_spec=grid_spec,
        compiler_params=compiler_params,
    )(hn, xn, x_tm, w_rec.T, w_inp.T, bias.reshape(1, D))
    return hn_seq, xn_seq


def mrnn_forward(hn, xn, x, w_rec, w_inp, bias, **kwargs):
    """PyTorch-convention shim: x (B, T, I) -> (hn, xn), each (B, T, D)."""
    # TODO(synk): at production scale keep activations time-major end-to-end
    # and call mrnn_forward_tm directly -- these transposes are full HBM
    # read+write passes of (T, B, D)-sized arrays (pure layout plumbing).
    x_tm = jnp.transpose(x, (1, 0, 2))
    hn_seq, xn_seq = mrnn_forward_tm(hn, xn, x_tm, w_rec, w_inp, bias, **kwargs)
    return (jnp.transpose(hn_seq, (1, 0, 2)),
            jnp.transpose(xn_seq, (1, 0, 2)))


# ------------------------- parameter construction ------------------------- #
def init_params(key, inp_dim, hid_dim):
    assert inp_dim == hid_dim, "forward requires inp_dim == hid_dim"
    ks = jax.random.split(key, 7)
    u = lambda k, s: jax.random.uniform(k, s, jnp.float32, 0.0, 0.1)
    params = {
        "bla2acc": u(ks[0], (hid_dim, hid_dim)),
        "bla2bla": u(ks[1], (hid_dim, hid_dim)),
        "acc2bla": u(ks[2], (hid_dim, hid_dim)),
        "acc2acc": u(ks[3], (hid_dim, hid_dim)),
        "inp_weight": u(ks[4], (hid_dim, inp_dim)),
        "bias": u(ks[5], (hid_dim,)),
    }
    # Deterministic stand-in for nn.init.sparse_(ones(H,H), 0.5, std=0.01):
    # N(0, 0.01) values with half of every column zeroed.
    vals = 0.01 * jax.random.normal(ks[6], (hid_dim, hid_dim), jnp.float32)
    rows = jnp.arange(hid_dim)[:, None]
    cols = jnp.arange(hid_dim)[None, :]
    mask = ((rows + cols) % 2 == 1).astype(jnp.float32)
    params["sparse"] = vals * mask
    # sign_matrix = eye(H) with columns H/2.. flipped.
    sign = jnp.concatenate(
        [jnp.ones(hid_dim // 2, jnp.float32),
         -jnp.ones(hid_dim - hid_dim // 2, jnp.float32)])
    params["sign"] = jnp.diag(sign)
    return params


def effective_weights(p):
    """Glue (tiny): relu/mask/sign transforms and block concatenation."""
    sp, sg = p["sparse"], p["sign"]
    relu = lambda w: jnp.maximum(w, 0.0)
    bla2acc = (sp * relu(p["bla2acc"])) @ sg
    bla2bla = (sp * relu(p["bla2bla"])) @ sg
    acc2bla = (sp * relu(p["acc2bla"])) @ sg
    acc2acc = (sp * relu(p["acc2acc"])) @ sg
    inp_w = relu(p["inp_weight"]) @ sg
    bias = relu(p["bias"])

    w_bla = jnp.concatenate([bla2bla, acc2bla], axis=1)   # (H, 2H)
    w_acc = jnp.concatenate([bla2acc, acc2acc], axis=1)   # (H, 2H)
    w_rec = jnp.concatenate([w_bla, w_acc], axis=0)       # (2H, 2H)
    # TODO(synk): tile input/bias to both populations to resolve the original
    # module's broadcast inconsistency ((B,2H) state + (B,H) drive).
    w_inp = jnp.concatenate([inp_w, inp_w], axis=0)       # (2H, I)
    bias_full = jnp.concatenate([bias, bias], axis=0)     # (2H,)
    return w_rec, w_inp, bias_full


# --------------------------- pure-JAX reference ---------------------------- #
def mrnn_ref_tm(hn, xn, x_tm, w_rec, w_inp, bias):
    """Module-faithful loop, time-major. Returns (hn_seq, xn_seq): (T,B,D)."""
    T = x_tm.shape[0]
    hi = jax.lax.Precision.HIGHEST
    hns, xns = [], []
    for t in range(T):
        rec = jnp.dot(hn, w_rec.T, precision=hi)
        drv = jnp.dot(x_tm[t], w_inp.T, precision=hi)
        xn = xn * TAU * (-xn + rec + drv + bias)
        hn = jnp.maximum(xn, 0.0)
        xns.append(xn)
        hns.append(hn)
    return jnp.stack(hns, axis=0), jnp.stack(xns, axis=0)


# ---------------------------------- main ----------------------------------- #
if __name__ == "__main__":
    inp_dim = 64
    hid_dim = 64          # state dim D = 2 * hid_dim = 128 (lane-dense)
    out_dim = 32          # present in __init__, unused in forward
    B, T = 8, 16
    D = 2 * hid_dim

    key = jax.random.PRNGKey(0)
    kp, kh, kx, kin = jax.random.split(key, 4)

    params = init_params(kp, inp_dim, hid_dim)
    w_rec, w_inp, bias = effective_weights(params)

    hn0 = jax.random.uniform(kh, (B, D), jnp.float32, 0.0, 0.1)
    xn0 = jax.random.uniform(kx, (B, D), jnp.float32, 0.0, 0.1)
    x_tm = jax.random.normal(kin, (T, B, inp_dim), jnp.float32)   # time-major

    # t_chunk=8 over T=16 -> 2 chunks: exercises the cross-chunk state carry.
    fwd = jax.jit(lambda *a: mrnn_forward_tm(*a, t_chunk=8))
    hn_seq, xn_seq = fwd(hn0, xn0, x_tm, w_rec, w_inp, bias)
    jax.block_until_ready((hn_seq, xn_seq))

    hn_ref, xn_ref = mrnn_ref_tm(hn0, xn0, x_tm, w_rec, w_inp, bias)
    assert hn_seq.shape == (T, B, D) and xn_seq.shape == (T, B, D)
    assert jnp.allclose(xn_seq, xn_ref, atol=1e-5, rtol=1e-3)
    assert jnp.allclose(hn_seq, hn_ref, atol=1e-5, rtol=1e-3)

    print("KERNEL_OK")
</pallas_src>

<mosaic_0001>
module attributes {stable_mosaic.version = 11 : i64} {
  func.func @mrnn_kernel(%arg0: i32, %arg1: i32, %arg2: memref<8x128xf32, #tpu.memory_space<vmem>>, %arg3: memref<8x128xf32, #tpu.memory_space<vmem>>, %arg4: memref<8x8x64xf32, #tpu.memory_space<vmem>>, %arg5: memref<128x128xf32, #tpu.memory_space<vmem>>, %arg6: memref<64x128xf32, #tpu.memory_space<vmem>>, %arg7: memref<1x128xf32, #tpu.memory_space<vmem>>, %arg8: memref<8x8x128xf32, #tpu.memory_space<vmem>>, %arg9: memref<8x8x128xf32, #tpu.memory_space<vmem>>, %arg10: memref<64x128xf32, #tpu.memory_space<vmem>>, %arg11: memref<8x128xf32, #tpu.memory_space<vmem>>) attributes {dimension_semantics = [#tpu.dimension_semantics<parallel>, #tpu.dimension_semantics<arbitrary>], iteration_bounds = array<i64: 1, 2>, scalar_prefetch = 0 : i64, scratch_operands = 2 : i64, tpu.core_type = #tpu.core_type<tc>, window_params = [{transform_indices = @transform_0, window_bounds = array<i64: 8, 128>}, {transform_indices = @transform_1, window_bounds = array<i64: 8, 128>}, {transform_indices = @transform_2, window_bounds = array<i64: 8, 8, 64>}, {pipeline_mode = #tpu.pipeline_mode<synchronous>, transform_indices = @transform_3, window_bounds = array<i64: 128, 128>}, {pipeline_mode = #tpu.pipeline_mode<synchronous>, transform_indices = @transform_4, window_bounds = array<i64: 64, 128>}, {pipeline_mode = #tpu.pipeline_mode<synchronous>, transform_indices = @transform_5, window_bounds = array<i64: 1, 128>}, {transform_indices = @transform_6, window_bounds = array<i64: 8, 8, 128>}, {transform_indices = @transform_7, window_bounds = array<i64: 8, 8, 128>}]} {
    %c0_i32 = arith.constant 0 : i32
    %0 = arith.cmpi eq, %arg1, %c0_i32 : i32
    %1 = arith.extui %0 : i1 to i32
    %c0_i32_0 = arith.constant 0 : i32
    %2 = arith.cmpi ne, %1, %c0_i32_0 : i32
    scf.if %2 {
      %c0_102 = arith.constant 0 : index
      %c0_103 = arith.constant 0 : index
      %162 = vector.load %arg3[%c0_102, %c0_103] : memref<8x128xf32, #tpu.memory_space<vmem>>, vector<8x128xf32>
      %c0_104 = arith.constant 0 : index
      %c0_105 = arith.constant 0 : index
      %163 = vector.load %arg11[%c0_104, %c0_105] : memref<8x128xf32, #tpu.memory_space<vmem>>, vector<8x128xf32>
      tpu.vector_store %arg11[%c0_104, %c0_105], %162 {strides = array<i32>} : memref<8x128xf32, #tpu.memory_space<vmem>>, vector<8x128xf32>,
    } else {
    }
    %c0 = arith.constant 0 : index
    %c0_1 = arith.constant 0 : index
    %c0_2 = arith.constant 0 : index
    %3 = vector.load %arg4[%c0, %c0_1, %c0_2] : memref<8x8x64xf32, #tpu.memory_space<vmem>>, vector<8x8x64xf32>
    %4 = vector.shape_cast %3 : vector<8x8x64xf32> to vector<64x64xf32>
    %c0_3 = arith.constant 0 : index
    %c0_4 = arith.constant 0 : index
    %5 = vector.load %arg6[%c0_3, %c0_4] : memref<64x128xf32, #tpu.memory_space<vmem>>, vector<64x128xf32>
    %cst = arith.constant dense<0.000000e+00> : vector<64x128xf32>
    %6 = tpu.matmul %4, %5, %cst {dimension_numbers = #tpu.dot_dimension_numbers<[1], [0], [0], [1], [0, 0, 1, 1], [], []>, precision = #tpu.contract_precision<fp32>} : vector<64x64xf32>, vector<64x128xf32>, vector<64x128xf32> -> vector<64x128xf32>
    %c0_5 = arith.constant 0 : index
    %c0_6 = arith.constant 0 : index
    %7 = vector.load %arg7[%c0_5, %c0_6] : memref<1x128xf32, #tpu.memory_space<vmem>>, vector<1x128xf32>
    %8 = vector.broadcast %7 : vector<1x128xf32> to vector<64x128xf32>
    %9 = arith.addf %6, %8 : vector<64x128xf32>
    %c0_7 = arith.constant 0 : index
    %c0_8 = arith.constant 0 : index
    %10 = vector.load %arg10[%c0_7, %c0_8] : memref<64x128xf32, #tpu.memory_space<vmem>>, vector<64x128xf32>
    tpu.vector_store %arg10[%c0_7, %c0_8], %9 {strides = array<i32>} : memref<64x128xf32, #tpu.memory_space<vmem>>, vector<64x128xf32>,
    %c0_9 = arith.constant 0 : index
    %c0_10 = arith.constant 0 : index
    %11 = vector.load %arg5[%c0_9, %c0_10] : memref<128x128xf32, #tpu.memory_space<vmem>>, vector<128x128xf32>
    %c0_11 = arith.constant 0 : index
    %c0_12 = arith.constant 0 : index
    %12 = vector.load %arg11[%c0_11, %c0_12] : memref<8x128xf32, #tpu.memory_space<vmem>>, vector<8x128xf32>
    %c0_i32_13 = arith.constant 0 : i32
    %13 = arith.cmpi eq, %arg1, %c0_i32_13 : i32
    %14 = arith.extui %13 : i1 to i32
    %15 = arith.sitofp %14 : i32 to f32
    %c0_14 = arith.constant 0 : index
    %c0_15 = arith.constant 0 : index
    %16 = vector.load %arg2[%c0_14, %c0_15] : memref<8x128xf32, #tpu.memory_space<vmem>>, vector<8x128xf32>
    %17 = vector.broadcast %15 : f32 to vector<8x128xf32>
    %18 = arith.mulf %17, %16 : vector<8x128xf32>
    %cst_16 = arith.constant 1.000000e+00 : f32
    %19 = arith.subf %cst_16, %15 : f32
    %cst_17 = arith.constant 0.000000e+00 : f32
    %20 = vector.broadcast %cst_17 : f32 to vector<8x128xf32>
    %21 = arith.maximumf %12, %20 : vector<8x128xf32>
    %22 = vector.broadcast %19 : f32 to vector<8x128xf32>
    %23 = arith.mulf %22, %21 : vector<8x128xf32>
    %24 = arith.addf %18, %23 : vector<8x128xf32>
    %cst_18 = arith.constant dense<0.000000e+00> : vector<8x128xf32>
    %25 = tpu.matmul %24, %11, %cst_18 {dimension_numbers = #tpu.dot_dimension_numbers<[1], [0], [0], [1], [0, 0, 1, 1], [], []>, precision = #tpu.contract_precision<fp32>} : vector<8x128xf32>, vector<128x128xf32>, vector<8x128xf32> -> vector<8x128xf32>
    %c0_19 = arith.constant 0 : index
    %c0_20 = arith.constant 0 : index
    %26 = vector.load %arg10[%c0_19, %c0_20] : memref<64x128xf32, #tpu.memory_space<vmem>>, vector<8x128xf32>
    %cst_21 = arith.constant 1.000000e-01 : f32
    %27 = vector.broadcast %cst_21 : f32 to vector<8x128xf32>
    %28 = arith.mulf %12, %27 : vector<8x128xf32>
    %cst_22 = arith.constant 0.000000e+00 : f32
    %29 = vector.broadcast %cst_22 : f32 to vector<8x128xf32>
    %30 = arith.subf %29, %12 : vector<8x128xf32>
    %31 = arith.addf %30, %25 : vector<8x128xf32>
    %32 = arith.addf %31, %26 : vector<8x128xf32>
    %33 = arith.mulf %28, %32 : vector<8x128xf32>
    %cst_23 = arith.constant 0.000000e+00 : f32
    %34 = vector.broadcast %cst_23 : f32 to vector<8x128xf32>
    %35 = arith.maximumf %33, %34 : vector<8x128xf32>
    %c0_24 = arith.constant 0 : index
    %c0_25 = arith.constant 0 : index
    %c0_26 = arith.constant 0 : index
    %36 = vector.load %arg9[%c0_24, %c0_25, %c0_26] : memref<8x8x128xf32, #tpu.memory_space<vmem>>, vector<1x8x128xf32>
    %37 = vector.shape_cast %36 : vector<1x8x128xf32> to vector<8x128xf32>
    %38 = vector.shape_cast %33 : vector<8x128xf32> to vector<1x8x128xf32>
    tpu.vector_store %arg9[%c0_24, %c0_25, %c0_26], %38 {strides = array<i32>} : memref<8x8x128xf32, #tpu.memory_space<vmem>>, vector<1x8x128xf32>,
    %c0_27 = arith.constant 0 : index
    %c0_28 = arith.constant 0 : index
    %c0_29 = arith.constant 0 : index
    %39 = vector.load %arg8[%c0_27, %c0_28, %c0_29] : memref<8x8x128xf32, #tpu.memory_space<vmem>>, vector<1x8x128xf32>
    %40 = vector.shape_cast %39 : vector<1x8x128xf32> to vector<8x128xf32>
    %41 = vector.shape_cast %35 : vector<8x128xf32> to vector<1x8x128xf32>
    tpu.vector_store %arg8[%c0_27, %c0_28, %c0_29], %41 {strides = array<i32>} : memref<8x8x128xf32, #tpu.memory_space<vmem>>, vector<1x8x128xf32>,
    %cst_30 = arith.constant dense<0.000000e+00> : vector<8x128xf32>
    %42 = tpu.matmul %35, %11, %cst_30 {dimension_numbers = #tpu.dot_dimension_numbers<[1], [0], [0], [1], [0, 0, 1, 1], [], []>, precision = #tpu.contract_precision<fp32>} : vector<8x128xf32>, vector<128x128xf32>, vector<8x128xf32> -> vector<8x128xf32>
    %c8 = arith.constant 8 : index
    %c0_31 = arith.constant 0 : index
    %43 = vector.load %arg10[%c8, %c0_31] : memref<64x128xf32, #tpu.memory_space<vmem>>, vector<8x128xf32>
    %cst_32 = arith.constant 1.000000e-01 : f32
    %44 = vector.broadcast %cst_32 : f32 to vector<8x128xf32>
    %45 = arith.mulf %33, %44 : vector<8x128xf32>
    %cst_33 = arith.constant 0.000000e+00 : f32
    %46 = vector.broadcast %cst_33 : f32 to vector<8x128xf32>
    %47 = arith.subf %46, %33 : vector<8x128xf32>
    %48 = arith.addf %47, %42 : vector<8x128xf32>
    %49 = arith.addf %48, %43 : vector<8x128xf32>
    %50 = arith.mulf %45, %49 : vector<8x128xf32>
    %cst_34 = arith.constant 0.000000e+00 : f32
    %51 = vector.broadcast %cst_34 : f32 to vector<8x128xf32>
    %52 = arith.maximumf %50, %51 : vector<8x128xf32>
    %c1 = arith.constant 1 : index
    %c0_35 = arith.constant 0 : index
    %c0_36 = arith.constant 0 : index
    %53 = vector.load %arg9[%c1, %c0_35, %c0_36] : memref<8x8x128xf32, #tpu.memory_space<vmem>>, vector<1x8x128xf32>
    %54 = vector.shape_cast %53 : vector<1x8x128xf32> to vector<8x128xf32>
    %55 = vector.shape_cast %50 : vector<8x128xf32> to vector<1x8x128xf32>
    tpu.vector_store %arg9[%c1, %c0_35, %c0_36], %55 {strides = array<i32>} : memref<8x8x128xf32, #tpu.memory_space<vmem>>, vector<1x8x128xf32>,
    %c1_37 = arith.constant 1 : index
    %c0_38 = arith.constant 0 : index
    %c0_39 = arith.constant 0 : index
    %56 = vector.load %arg8[%c1_37, %c0_38, %c0_39] : memref<8x8x128xf32, #tpu.memory_space<vmem>>, vector<1x8x128xf32>
    %57 = vector.shape_cast %56 : vector<1x8x128xf32> to vector<8x128xf32>
    %58 = vector.shape_cast %52 : vector<8x128xf32> to vector<1x8x128xf32>
    tpu.vector_store %arg8[%c1_37, %c0_38, %c0_39], %58 {strides = array<i32>} : memref<8x8x128xf32, #tpu.memory_space<vmem>>, vector<1x8x128xf32>,
    %cst_40 = arith.constant dense<0.000000e+00> : vector<8x128xf32>
    %59 = tpu.matmul %52, %11, %cst_40 {dimension_numbers = #tpu.dot_dimension_numbers<[1], [0], [0], [1], [0, 0, 1, 1], [], []>, precision = #tpu.contract_precision<fp32>} : vector<8x128xf32>, vector<128x128xf32>, vector<8x128xf32> -> vector<8x128xf32>
    %c16 = arith.constant 16 : index
    %c0_41 = arith.constant 0 : index
    %60 = vector.load %arg10[%c16, %c0_41] : memref<64x128xf32, #tpu.memory_space<vmem>>, vector<8x128xf32>
    %cst_42 = arith.constant 1.000000e-01 : f32
    %61 = vector.broadcast %cst_42 : f32 to vector<8x128xf32>
    %62 = arith.mulf %50, %61 : vector<8x128xf32>
    %cst_43 = arith.constant 0.000000e+00 : f32
    %63 = vector.broadcast %cst_43 : f32 to vector<8x128xf32>
    %64 = arith.subf %63, %50 : vector<8x128xf32>
    %65 = arith.addf %64, %59 : vector<8x128xf32>
    %66 = arith.addf %65, %60 : vector<8x128xf32>
    %67 = arith.mulf %62, %66 : vector<8x128xf32>
    %cst_44 = arith.constant 0.000000e+00 : f32
    %68 = vector.broadcast %cst_44 : f32 to vector<8x128xf32>
    %69 = arith.maximumf %67, %68 : vector<8x128xf32>
    %c2 = arith.constant 2 : index
    %c0_45 = arith.constant 0 : index
    %c0_46 = arith.constant 0 : index
    %70 = vector.load %arg9[%c2, %c0_45, %c0_46] : memref<8x8x128xf32, #tpu.memory_space<vmem>>, vector<1x8x128xf32>
    %71 = vector.shape_cast %70 : vector<1x8x128xf32> to vector<8x128xf32>
    %72 = vector.shape_cast %67 : vector<8x128xf32> to vector<1x8x128xf32>
    tpu.vector_store %arg9[%c2, %c0_45, %c0_46], %72 {strides = array<i32>} : memref<8x8x128xf32, #tpu.memory_space<vmem>>, vector<1x8x128xf32>,
    %c2_47 = arith.constant 2 : index
    %c0_48 = arith.constant 0 : index
    %c0_49 = arith.constant 0 : index
    %73 = vector.load %arg8[%c2_47, %c0_48, %c0_49] : memref<8x8x128xf32, #tpu.memory_space<vmem>>, vector<1x8x128xf32>
    %74 = vector.shape_cast %73 : vector<1x8x128xf32> to vector<8x128xf32>
    %75 = vector.shape_cast %69 : vector<8x128xf32> to vector<1x8x128xf32>
    tpu.vector_store %arg8[%c2_47, %c0_48, %c0_49], %75 {strides = array<i32>} : memref<8x8x128xf32, #tpu.memory_space<vmem>>, vector<1x8x128xf32>,
    %cst_50 = arith.constant dense<0.000000e+00> : vector<8x128xf32>
    %76 = tpu.matmul %69, %11, %cst_50 {dimension_numbers = #tpu.dot_dimension_numbers<[1], [0], [0], [1], [0, 0, 1, 1], [], []>, precision = #tpu.contract_precision<fp32>} : vector<8x128xf32>, vector<128x128xf32>, vector<8x128xf32> -> vector<8x128xf32>
    %c24 = arith.constant 24 : index
    %c0_51 = arith.constant 0 : index
    %77 = vector.load %arg10[%c24, %c0_51] : memref<64x128xf32, #tpu.memory_space<vmem>>, vector<8x128xf32>
    %cst_52 = arith.constant 1.000000e-01 : f32
    %78 = vector.broadcast %cst_52 : f32 to vector<8x128xf32>
    %79 = arith.mulf %67, %78 : vector<8x128xf32>
    %cst_53 = arith.constant 0.000000e+00 : f32
    %80 = vector.broadcast %cst_53 : f32 to vector<8x128xf32>
    %81 = arith.subf %80, %67 : vector<8x128xf32>
    %82 = arith.addf %81, %76 : vector<8x128xf32>
    %83 = arith.addf %82, %77 : vector<8x128xf32>
    %84 = arith.mulf %79, %83 : vector<8x128xf32>
    %cst_54 = arith.constant 0.000000e+00 : f32
    %85 = vector.broadcast %cst_54 : f32 to vector<8x128xf32>
    %86 = arith.maximumf %84, %85 : vector<8x128xf32>
    %c3 = arith.constant 3 : index
    %c0_55 = arith.constant 0 : index
    %c0_56 = arith.constant 0 : index
    %87 = vector.load %arg9[%c3, %c0_55, %c0_56] : memref<8x8x128xf32, #tpu.memory_space<vmem>>, vector<1x8x128xf32>
    %88 = vector.shape_cast %87 : vector<1x8x128xf32> to vector<8x128xf32>
    %89 = vector.shape_cast %84 : vector<8x128xf32> to vector<1x8x128xf32>
    tpu.vector_store %arg9[%c3, %c0_55, %c0_56], %89 {strides = array<i32>} : memref<8x8x128xf32, #tpu.memory_space<vmem>>, vector<1x8x128xf32>,
    %c3_57 = arith.constant 3 : index
    %c0_58 = arith.constant 0 : index
    %c0_59 = arith.constant 0 : index
    %90 = vector.load %arg8[%c3_57, %c0_58, %c0_59] : memref<8x8x128xf32, #tpu.memory_space<vmem>>, vector<1x8x128xf32>
    %91 = vector.shape_cast %90 : vector<1x8x128xf32> to vector<8x128xf32>
    %92 = vector.shape_cast %86 : vector<8x128xf32> to vector<1x8x128xf32>
    tpu.vector_store %arg8[%c3_57, %c0_58, %c0_59], %92 {strides = array<i32>} : memref<8x8x128xf32, #tpu.memory_space<vmem>>, vector<1x8x128xf32>,
    %cst_60 = arith.constant dense<0.000000e+00> : vector<8x128xf32>
    %93 = tpu.matmul %86, %11, %cst_60 {dimension_numbers = #tpu.dot_dimension_numbers<[1], [0], [0], [1], [0, 0, 1, 1], [], []>, precision = #tpu.contract_precision<fp32>} : vector<8x128xf32>, vector<128x128xf32>, vector<8x128xf32> -> vector<8x128xf32>
    %c32 = arith.constant 32 : index
    %c0_61 = arith.constant 0 : index
    %94 = vector.load %arg10[%c32, %c0_61] : memref<64x128xf32, #tpu.memory_space<vmem>>, vector<8x128xf32>
    %cst_62 = arith.constant 1.000000e-01 : f32
    %95 = vector.broadcast %cst_62 : f32 to vector<8x128xf32>
    %96 = arith.mulf %84, %95 : vector<8x128xf32>
    %cst_63 = arith.constant 0.000000e+00 : f32
    %97 = vector.broadcast %cst_63 : f32 to vector<8x128xf32>
    %98 = arith.subf %97, %84 : vector<8x128xf32>
    %99 = arith.addf %98, %93 : vector<8x128xf32>
    %100 = arith.addf %99, %94 : vector<8x128xf32>
    %101 = arith.mulf %96, %100 : vector<8x128xf32>
    %cst_64 = arith.constant 0.000000e+00 : f32
    %102 = vector.broadcast %cst_64 : f32 to vector<8x128xf32>
    %103 = arith.maximumf %101, %102 : vector<8x128xf32>
    %c4 = arith.constant 4 : index
    %c0_65 = arith.constant 0 : index
    %c0_66 = arith.constant 0 : index
    %104 = vector.load %arg9[%c4, %c0_65, %c0_66] : memref<8x8x128xf32, #tpu.memory_space<vmem>>, vector<1x8x128xf32>
    %105 = vector.shape_cast %104 : vector<1x8x128xf32> to vector<8x128xf32>
    %106 = vector.shape_cast %101 : vector<8x128xf32> to vector<1x8x128xf32>
    tpu.vector_store %arg9[%c4, %c0_65, %c0_66], %106 {strides = array<i32>} : memref<8x8x128xf32, #tpu.memory_space<vmem>>, vector<1x8x128xf32>,
    %c4_67 = arith.constant 4 : index
    %c0_68 = arith.constant 0 : index
    %c0_69 = arith.constant 0 : index
    %107 = vector.load %arg8[%c4_67, %c0_68, %c0_69] : memref<8x8x128xf32, #tpu.memory_space<vmem>>, vector<1x8x128xf32>
    %108 = vector.shape_cast %107 : vector<1x8x128xf32> to vector<8x128xf32>
    %109 = vector.shape_cast %103 : vector<8x128xf32> to vector<1x8x128xf32>
    tpu.vector_store %arg8[%c4_67, %c0_68, %c0_69], %109 {strides = array<i32>} : memref<8x8x128xf32, #tpu.memory_space<vmem>>, vector<1x8x128xf32>,
    %cst_70 = arith.constant dense<0.000000e+00> : vector<8x128xf32>
    %110 = tpu.matmul %103, %11, %cst_70 {dimension_numbers = #tpu.dot_dimension_numbers<[1], [0], [0], [1], [0, 0, 1, 1], [], []>, precision = #tpu.contract_precision<fp32>} : vector<8x128xf32>, vector<128x128xf32>, vector<8x128xf32> -> vector<8x128xf32>
    %c40 = arith.constant 40 : index
    %c0_71 = arith.constant 0 : index
    %111 = vector.load %arg10[%c40, %c0_71] : memref<64x128xf32, #tpu.memory_space<vmem>>, vector<8x128xf32>
    %cst_72 = arith.constant 1.000000e-01 : f32
    %112 = vector.broadcast %cst_72 : f32 to vector<8x128xf32>
    %113 = arith.mulf %101, %112 : vector<8x128xf32>
    %cst_73 = arith.constant 0.000000e+00 : f32
    %114 = vector.broadcast %cst_73 : f32 to vector<8x128xf32>
    %115 = arith.subf %114, %101 : vector<8x128xf32>
    %116 = arith.addf %115, %110 : vector<8x128xf32>
    %117 = arith.addf %116, %111 : vector<8x128xf32>
    %118 = arith.mulf %113, %117 : vector<8x128xf32>
    %cst_74 = arith.constant 0.000000e+00 : f32
    %119 = vector.broadcast %cst_74 : f32 to vector<8x128xf32>
    %120 = arith.maximumf %118, %119 : vector<8x128xf32>
    %c5 = arith.constant 5 : index
    %c0_75 = arith.constant 0 : index
    %c0_76 = arith.constant 0 : index
    %121 = vector.load %arg9[%c5, %c0_75, %c0_76] : memref<8x8x128xf32, #tpu.memory_space<vmem>>, vector<1x8x128xf32>
    %122 = vector.shape_cast %121 : vector<1x8x128xf32> to vector<8x128xf32>
    %123 = vector.shape_cast %118 : vector<8x128xf32> to vector<1x8x128xf32>
    tpu.vector_store %arg9[%c5, %c0_75, %c0_76], %123 {strides = array<i32>} : memref<8x8x128xf32, #tpu.memory_space<vmem>>, vector<1x8x128xf32>,
    %c5_77 = arith.constant 5 : index
    %c0_78 = arith.constant 0 : index
    %c0_79 = arith.constant 0 : index
    %124 = vector.load %arg8[%c5_77, %c0_78, %c0_79] : memref<8x8x128xf32, #tpu.memory_space<vmem>>, vector<1x8x128xf32>
    %125 = vector.shape_cast %124 : vector<1x8x128xf32> to vector<8x128xf32>
    %126 = vector.shape_cast %120 : vector<8x128xf32> to vector<1x8x128xf32>
    tpu.vector_store %arg8[%c5_77, %c0_78, %c0_79], %126 {strides = array<i32>} : memref<8x8x128xf32, #tpu.memory_space<vmem>>, vector<1x8x128xf32>,
    %cst_80 = arith.constant dense<0.000000e+00> : vector<8x128xf32>
    %127 = tpu.matmul %120, %11, %cst_80 {dimension_numbers = #tpu.dot_dimension_numbers<[1], [0], [0], [1], [0, 0, 1, 1], [], []>, precision = #tpu.contract_precision<fp32>} : vector<8x128xf32>, vector<128x128xf32>, vector<8x128xf32> -> vector<8x128xf32>
    %c48 = arith.constant 48 : index
    %c0_81 = arith.constant 0 : index
    %128 = vector.load %arg10[%c48, %c0_81] : memref<64x128xf32, #tpu.memory_space<vmem>>, vector<8x128xf32>
    %cst_82 = arith.constant 1.000000e-01 : f32
    %129 = vector.broadcast %cst_82 : f32 to vector<8x128xf32>
    %130 = arith.mulf %118, %129 : vector<8x128xf32>
    %cst_83 = arith.constant 0.000000e+00 : f32
    %131 = vector.broadcast %cst_83 : f32 to vector<8x128xf32>
    %132 = arith.subf %131, %118 : vector<8x128xf32>
    %133 = arith.addf %132, %127 : vector<8x128xf32>
    %134 = arith.addf %133, %128 : vector<8x128xf32>
    %135 = arith.mulf %130, %134 : vector<8x128xf32>
    %cst_84 = arith.constant 0.000000e+00 : f32
    %136 = vector.broadcast %cst_84 : f32 to vector<8x128xf32>
    %137 = arith.maximumf %135, %136 : vector<8x128xf32>
    %c6 = arith.constant 6 : index
    %c0_85 = arith.constant 0 : index
    %c0_86 = arith.constant 0 : index
    %138 = vector.load %arg9[%c6, %c0_85, %c0_86] : memref<8x8x128xf32, #tpu.memory_space<vmem>>, vector<1x8x128xf32>
    %139 = vector.shape_cast %138 : vector<1x8x128xf32> to vector<8x128xf32>
    %140 = vector.shape_cast %135 : vector<8x128xf32> to vector<1x8x128xf32>
    tpu.vector_store %arg9[%c6, %c0_85, %c0_86], %140 {strides = array<i32>} : memref<8x8x128xf32, #tpu.memory_space<vmem>>, vector<1x8x128xf32>,
    %c6_87 = arith.constant 6 : index
    %c0_88 = arith.constant 0 : index
    %c0_89 = arith.constant 0 : index
    %141 = vector.load %arg8[%c6_87, %c0_88, %c0_89] : memref<8x8x128xf32, #tpu.memory_space<vmem>>, vector<1x8x128xf32>
    %142 = vector.shape_cast %141 : vector<1x8x128xf32> to vector<8x128xf32>
    %143 = vector.shape_cast %137 : vector<8x128xf32> to vector<1x8x128xf32>
    tpu.vector_store %arg8[%c6_87, %c0_88, %c0_89], %143 {strides = array<i32>} : memref<8x8x128xf32, #tpu.memory_space<vmem>>, vector<1x8x128xf32>,
    %cst_90 = arith.constant dense<0.000000e+00> : vector<8x128xf32>
    %144 = tpu.matmul %137, %11, %cst_90 {dimension_numbers = #tpu.dot_dimension_numbers<[1], [0], [0], [1], [0, 0, 1, 1], [], []>, precision = #tpu.contract_precision<fp32>} : vector<8x128xf32>, vector<128x128xf32>, vector<8x128xf32> -> vector<8x128xf32>
    %c56 = arith.constant 56 : index
    %c0_91 = arith.constant 0 : index
    %145 = vector.load %arg10[%c56, %c0_91] : memref<64x128xf32, #tpu.memory_space<vmem>>, vector<8x128xf32>
    %cst_92 = arith.constant 1.000000e-01 : f32
    %146 = vector.broadcast %cst_92 : f32 to vector<8x128xf32>
    %147 = arith.mulf %135, %146 : vector<8x128xf32>
    %cst_93 = arith.constant 0.000000e+00 : f32
    %148 = vector.broadcast %cst_93 : f32 to vector<8x128xf32>
    %149 = arith.subf %148, %135 : vector<8x128xf32>
    %150 = arith.addf %149, %144 : vector<8x128xf32>
    %151 = arith.addf %150, %145 : vector<8x128xf32>
    %152 = arith.mulf %147, %151 : vector<8x128xf32>
    %cst_94 = arith.constant 0.000000e+00 : f32
    %153 = vector.broadcast %cst_94 : f32 to vector<8x128xf32>
    %154 = arith.maximumf %152, %153 : vector<8x128xf32>
    %c7 = arith.constant 7 : index
    %c0_95 = arith.constant 0 : index
    %c0_96 = arith.constant 0 : index
    %155 = vector.load %arg9[%c7, %c0_95, %c0_96] : memref<8x8x128xf32, #tpu.memory_space<vmem>>, vector<1x8x128xf32>
    %156 = vector.shape_cast %155 : vector<1x8x128xf32> to vector<8x128xf32>
    %157 = vector.shape_cast %152 : vector<8x128xf32> to vector<1x8x128xf32>
    tpu.vector_store %arg9[%c7, %c0_95, %c0_96], %157 {strides = array<i32>} : memref<8x8x128xf32, #tpu.memory_space<vmem>>, vector<1x8x128xf32>,
    %c7_97 = arith.constant 7 : index
    %c0_98 = arith.constant 0 : index
    %c0_99 = arith.constant 0 : index
    %158 = vector.load %arg8[%c7_97, %c0_98, %c0_99] : memref<8x8x128xf32, #tpu.memory_space<vmem>>, vector<1x8x128xf32>
    %159 = vector.shape_cast %158 : vector<1x8x128xf32> to vector<8x128xf32>
    %160 = vector.shape_cast %154 : vector<8x128xf32> to vector<1x8x128xf32>
    tpu.vector_store %arg8[%c7_97, %c0_98, %c0_99], %160 {strides = array<i32>} : memref<8x8x128xf32, #tpu.memory_space<vmem>>, vector<1x8x128xf32>,
    %c0_100 = arith.constant 0 : index
    %c0_101 = arith.constant 0 : index
    %161 = vector.load %arg11[%c0_100, %c0_101] : memref<8x128xf32, #tpu.memory_space<vmem>>, vector<8x128xf32>
    tpu.vector_store %arg11[%c0_100, %c0_101], %152 {strides = array<i32>} : memref<8x128xf32, #tpu.memory_space<vmem>>, vector<8x128xf32>,
    return
  }
  func.func @transform_0(%arg0: i32, %arg1: i32) -> (i32, i32) {
    %c0_i32 = arith.constant 0 : i32
    %c0_i32_0 = arith.constant 0 : i32
    return %arg0, %c0_i32 : i32, i32
  }
  func.func @transform_1(%arg0: i32, %arg1: i32) -> (i32, i32) {
    %c0_i32 = arith.constant 0 : i32
    %c0_i32_0 = arith.constant 0 : i32
    return %arg0, %c0_i32 : i32, i32
  }
  func.func @transform_2(%arg0: i32, %arg1: i32) -> (i32, i32, i32) {
    %c0_i32 = arith.constant 0 : i32
    %c0_i32_0 = arith.constant 0 : i32
    return %arg1, %arg0, %c0_i32 : i32, i32, i32
  }
  func.func @transform_3(%arg0: i32, %arg1: i32) -> (i32, i32) {
    %c0_i32 = arith.constant 0 : i32
    %c0_i32_0 = arith.constant 0 : i32
    %c0_i32_1 = arith.constant 0 : i32
    return %c0_i32, %c0_i32_0 : i32, i32
  }
  func.func @transform_4(%arg0: i32, %arg1: i32) -> (i32, i32) {
    %c0_i32 = arith.constant 0 : i32
    %c0_i32_0 = arith.constant 0 : i32
    %c0_i32_1 = arith.constant 0 : i32
    return %c0_i32, %c0_i32_0 : i32, i32
  }
  func.func @transform_5(%arg0: i32, %arg1: i32) -> (i32, i32) {
    %c0_i32 = arith.constant 0 : i32
    %c0_i32_0 = arith.constant 0 : i32
    %c0_i32_1 = arith.constant 0 : i32
    return %c0_i32, %c0_i32_0 : i32, i32
  }
  func.func @transform_6(%arg0: i32, %arg1: i32) -> (i32, i32, i32) {
    %c0_i32 = arith.constant 0 : i32
    %c0_i32_0 = arith.constant 0 : i32
    return %arg1, %arg0, %c0_i32 : i32, i32, i32
  }
  func.func @transform_7(%arg0: i32, %arg1: i32) -> (i32, i32, i32) {
    %c0_i32 = arith.constant 0 : i32
    %c0_i32_0 = arith.constant 0 : i32
    return %arg1, %arg0, %c0_i32 : i32, i32, i32
  }
}

</mosaic_0001>

<llo_original>
// kernel: _lambda_.1
$region0: #{_lambda_.1}
  #allocation0 [shape = 'u32[]', space=smem, size = 0x4, offset = 0x4, fixed_abs, tag = 'smem constant byte address 0x4 - core index']
  #allocation1 [shape = 'u32[144,128]{1,0:T(1,128)}', space=vmem, size = 0x12000, scoped, tag = 'internal scratch']
  #allocation2 [shape = 'f32[64,128]{1,0:T(8,128)}', space=vmem, size = 0x8000, scoped, tag = 'scratch operand']
  #allocation3 [shape = 'f32[8,128]{1,0:T(8,128)}', space=vmem, size = 0x1000, scoped, tag = 'scratch operand']
  %s0 = inlined_call_operand.vmem [shape: f32[8,128], index: 0, kind: input, shape index: {}]
  %s1 = inlined_call_operand.vmem [shape: f32[8,128], index: 1, kind: input, shape index: {}]
  %s2 = inlined_call_operand.vmem [shape: f32[16,8,64], index: 2, kind: input, shape index: {}]
  %s3 = inlined_call_operand.vmem [shape: f32[128,128], index: 3, kind: input, shape index: {}]
  %s4 = inlined_call_operand.vmem [shape: f32[64,128], index: 4, kind: input, shape index: {}]
  %s5 = inlined_call_operand.vmem [shape: f32[1,128], index: 5, kind: input, shape index: {}]
  %s6 = inlined_call_operand.hbm [shape: f32[16,8,128], index: 6, kind: output, shape index: {0}]
  %s7 = inlined_call_operand.hbm [shape: f32[16,8,128], index: 7, kind: output, shape index: {1}]
  %8 = xla_tuple %s6, %s7
  %s9 = sld [smem:[#allocation0]]
  $region69: #{_lambda_.1} parent=0
    _
  %s11 = ssub.s32 1, %s9
  %s12 = scalar_select 0, %s11, %s9
  $region1: #{_lambda_.1} parent=0
    #allocation4 [shape = 'u8[65536]{0}', space=vmem, size = 0x10000, scoped, tag = 'output window, operand 0']
    #allocation5 [shape = 's32[2]{0}', space=sflag, size = 0x8, scoped, tag = 'scoped memory for _lambda_.1']
    #allocation6 [shape = 'u8[65536]{0}', space=vmem, size = 0x10000, scoped, tag = 'output window, operand 1']
    #allocation7 [shape = 's32[2]{0}', space=sflag, size = 0x8, scoped, tag = 'scoped memory for _lambda_.1']
    %13 = vsyncpa [#allocation5], 0
    %s14 = scalar_lea.sflag [#allocation5], 1
    %15 = vsyncpa %s14, 0
    %16 = vsyncpa [#allocation7], 0
    %s17 = scalar_lea.sflag [#allocation7], 1
    %18 = vsyncpa %s17, 0
    loop: start=0, step=1, limit=4
    $region2: #{_lambda_.1} parent=1 // loop_pre_header
      _
    $region3: #{_lambda_.1} parent=1 // loop_header
      %s20 = sphi 0, %s24
      %p21 = scmp.ge.s32.totalorder %s20, 4
      %s27 = sphi 0, %s39
      %s28 = sphi 0, %s35
      %s29 = sphi 0, %s27
      %s30 = sphi 0, %s28
      %s31 = sphi 0, %s29
      %s32 = sphi 0, %s30
      %s42 = sphi 0, %s44
      %s45 = sphi 0, %s42
      %s46 = sphi 0, %s45
      %s62 = sphi 0, %s46
      %s68 = sphi 0, %s70
      %s71 = sphi 0, %s68
      %s72 = sphi 0, %s71
      %s88 = sphi 0, %s72
      %s96 = sphi 0, %s98
      %s99 = sphi 0, %s96
      %s100 = sphi 0, %s99
      %s116 = sphi 0, %s100
      %s120 = sphi 0, %s120
      %s122 = sphi 0, %s120
      %s123 = sphi 0, %s122
      %s137 = sphi 0, %s123
      %s141 = sphi 0, %s141
      %s143 = sphi 0, %s141
      %s144 = sphi 0, %s143
      %s158 = sphi 0, %s144
      %s162 = sphi 0, %s162
      %s164 = sphi 0, %s162
      %s165 = sphi 0, %s164
      %s179 = sphi 0, %s165
      %s187 = sphi 0, %s189
      %s190 = sphi 0, %s187
      %s191 = sphi 0, %s190
      %s207 = sphi 0, %s191
      %s215 = sphi 0, %s217
      %s218 = sphi 0, %s215
      %s219 = sphi 0, %s218
      %s235 = sphi 0, %s219
    $region4: #{_lambda_.1} parent=1 // loop_header_branch
      %23 = sbr.rel (%p21) target = $region8
    $region5: #{_lambda_.1} parent=1 // loop_body
      %s25 = ssub.s32 %s20, 1
      %s26 = ssub.s32 %s20, 2
      %s33 = sadd.s32 1, %s28
      %p34 = scmp.ge.s32.totalorder %s33, 2
      %s35 = scalar_select %p34, 0, %s33
      %s36 = sadd.s32 1, %s27
      %s37 = scalar_select %p34, %s36, %s27
      %p38 = scmp.ge.s32.totalorder %s37, 1
      %s39 = scalar_select %p38, 0, %s37
      %s40 = ssub.s32 %s27, %s39
      %p41 = scmp.eq.s32.totalorder %s40, 0
      %s43 = sadd.s32 %s42, 1
      %s44 = scalar_select %p41, %s42, %s43
      %p47 = pneg %p41
      %p48 = scmp.eq.s32.totalorder %s20, 1
      %p49 = por %p47, %p48
      %p50 = scmp.ne.s32.totalorder %s42, %s45
      %p51 = scmp.eq.s32.totalorder %s20, 0
      %p52 = por %p50, %p51
      %p53 = scmp.ne.s32.totalorder %s42, %s45
      %p54 = scmp.eq.s32.totalorder %s25, 1
      %p55 = por %p53, %p54
      %p56 = scmp.ne.s32.totalorder %s45, %s46
      %p57 = scmp.eq.s32.totalorder %s25, 0
      %p58 = por %p56, %p57
      %p59 = scmp.ne.s32.totalorder %s45, %s46
      %p60 = scmp.eq.s32.totalorder %s26, 1
      %p61 = por %p59, %p60
      %p63 = scmp.ne.s32.totalorder %s46, %s62
      %p64 = scmp.eq.s32.totalorder %s26, 0
      %p65 = por %p63, %p64
      %s66 = ssub.s32 %s27, %s39
      %p67 = scmp.eq.s32.totalorder %s66, 0
      %s69 = sadd.s32 %s68, 1
      %s70 = scalar_select %p67, %s68, %s69
      %p73 = pneg %p67
      %p74 = scmp.eq.s32.totalorder %s20, 1
      %p75 = por %p73, %p74
      %p76 = scmp.ne.s32.totalorder %s68, %s71
      %p77 = scmp.eq.s32.totalorder %s20, 0
      %p78 = por %p76, %p77
      %p79 = scmp.ne.s32.totalorder %s68, %s71
      %p80 = scmp.eq.s32.totalorder %s25, 1
      %p81 = por %p79, %p80
      %p82 = scmp.ne.s32.totalorder %s71, %s72
      %p83 = scmp.eq.s32.totalorder %s25, 0
      %p84 = por %p82, %p83
      %p85 = scmp.ne.s32.totalorder %s71, %s72
      %p86 = scmp.eq.s32.totalorder %s26, 1
      %p87 = por %p85, %p86
      %p89 = scmp.ne.s32.totalorder %s72, %s88
      %p90 = scmp.eq.s32.totalorder %s26, 0
      %p91 = por %p89, %p90
      %s92 = ssub.s32 %s28, %s35
      %s93 = ssub.s32 %s27, %s39
      %s94 = sor.u32 %s92, %s93
      %p95 = scmp.eq.s32.totalorder %s94, 0
      %s97 = sadd.s32 %s96, 1
      %s98 = scalar_select %p95, %s96, %s97
      %p101 = pneg %p95
      %p102 = scmp.eq.s32.totalorder %s20, 1
      %p103 = por %p101, %p102
      %p104 = scmp.ne.s32.totalorder %s96, %s99
      %p105 = scmp.eq.s32.totalorder %s20, 0
      %p106 = por %p104, %p105
      %p107 = scmp.ne.s32.totalorder %s96, %s99
      %p108 = scmp.eq.s32.totalorder %s25, 1
      %p109 = por %p107, %p108
      %p110 = scmp.ne.s32.totalorder %s99, %s100
      %p111 = scmp.eq.s32.totalorder %s25, 0
      %p112 = por %p110, %p111
      %p113 = scmp.ne.s32.totalorder %s99, %s100
      %p114 = scmp.eq.s32.totalorder %s26, 1
      %p115 = por %p113, %p114
      %p117 = scmp.ne.s32.totalorder %s100, %s116
      %p118 = scmp.eq.s32.totalorder %s26, 0
      %p119 = por %p117, %p118
      %s121 = sadd.s32 %s120, 1
      %p124 = scmp.eq.s32.totalorder %s20, 1
      %p125 = scmp.ne.s32.totalorder %s120, %s122
      %p126 = scmp.eq.s32.totalorder %s20, 0
      %p127 = por %p125, %p126
      %p128 = scmp.ne.s32.totalorder %s120, %s122
      %p129 = scmp.eq.s32.totalorder %s25, 1
      %p130 = por %p128, %p129
      %p131 = scmp.ne.s32.totalorder %s122, %s123
      %p132 = scmp.eq.s32.totalorder %s25, 0
      %p133 = por %p131, %p132
      %p134 = scmp.ne.s32.totalorder %s122, %s123
      %p135 = scmp.eq.s32.totalorder %s26, 1
      %p136 = por %p134, %p135
      %p138 = scmp.ne.s32.totalorder %s123, %s137
      %p139 = scmp.eq.s32.totalorder %s26, 0
      %p140 = por %p138, %p139
      %s142 = sadd.s32 %s141, 1
      %p145 = scmp.eq.s32.totalorder %s20, 1
      %p146 = scmp.ne.s32.totalorder %s141, %s143
      %p147 = scmp.eq.s32.totalorder %s20, 0
      %p148 = por %p146, %p147
      %p149 = scmp.ne.s32.totalorder %s141, %s143
      %p150 = scmp.eq.s32.totalorder %s25, 1
      %p151 = por %p149, %p150
      %p152 = scmp.ne.s32.totalorder %s143, %s144
      %p153 = scmp.eq.s32.totalorder %s25, 0
      %p154 = por %p152, %p153
      %p155 = scmp.ne.s32.totalorder %s143, %s144
      %p156 = scmp.eq.s32.totalorder %s26, 1
      %p157 = por %p155, %p156
      %p159 = scmp.ne.s32.totalorder %s144, %s158
      %p160 = scmp.eq.s32.totalorder %s26, 0
      %p161 = por %p159, %p160
      %s163 = sadd.s32 %s162, 1
      %p166 = scmp.eq.s32.totalorder %s20, 1
      %p167 = scmp.ne.s32.totalorder %s162, %s164
      %p168 = scmp.eq.s32.totalorder %s20, 0
      %p169 = por %p167, %p168
      %p170 = scmp.ne.s32.totalorder %s162, %s164
      %p171 = scmp.eq.s32.totalorder %s25, 1
      %p172 = por %p170, %p171
      %p173 = scmp.ne.s32.totalorder %s164, %s165
      %p174 = scmp.eq.s32.totalorder %s25, 0
      %p175 = por %p173, %p174
      %p176 = scmp.ne.s32.totalorder %s164, %s165
      %p177 = scmp.eq.s32.totalorder %s26, 1
      %p178 = por %p176, %p177
      %p180 = scmp.ne.s32.totalorder %s165, %s179
      %p181 = scmp.eq.s32.totalorder %s26, 0
      %p182 = por %p180, %p181
      %s183 = ssub.s32 %s28, %s35
      %s184 = ssub.s32 %s27, %s39
      %s185 = sor.u32 %s183, %s184
      %p186 = scmp.eq.s32.totalorder %s185, 0
      %s188 = sadd.s32 %s187, 1
      %s189 = scalar_select %p186, %s187, %s188
      %p192 = pneg %p186
      %p193 = scmp.eq.s32.totalorder %s20, 1
      %p194 = por %p192, %p193
      %p195 = scmp.ne.s32.totalorder %s187, %s190
      %p196 = scmp.eq.s32.totalorder %s20, 0
      %p197 = por %p195, %p196
      %p198 = scmp.ne.s32.totalorder %s187, %s190
      %p199 = scmp.eq.s32.totalorder %s25, 1
      %p200 = por %p198, %p199
      %p201 = scmp.ne.s32.totalorder %s190, %s191
      %p202 = scmp.eq.s32.totalorder %s25, 0
      %p203 = por %p201, %p202
      %p204 = scmp.ne.s32.totalorder %s190, %s191
      %p205 = scmp.eq.s32.totalorder %s26, 1
      %p206 = por %p204, %p205
      %p208 = scmp.ne.s32.totalorder %s191, %s207
      %p209 = scmp.eq.s32.totalorder %s26, 0
      %p210 = por %p208, %p209
      %s211 = ssub.s32 %s28, %s35
      %s212 = ssub.s32 %s27, %s39
      %s213 = sor.u32 %s211, %s212
      %p214 = scmp.eq.s32.totalorder %s213, 0
      %s216 = sadd.s32 %s215, 1
      %s217 = scalar_select %p214, %s215, %s216
      %p220 = pneg %p214
      %p221 = scmp.eq.s32.totalorder %s20, 1
      %p222 = por %p220, %p221
      %p223 = scmp.ne.s32.totalorder %s215, %s218
      %p224 = scmp.eq.s32.totalorder %s20, 0
      %p225 = por %p223, %p224
      %p226 = scmp.ne.s32.totalorder %s215, %s218
      %p227 = scmp.eq.s32.totalorder %s25, 1
      %p228 = por %p226, %p227
      %p229 = scmp.ne.s32.totalorder %s218, %s219
      %p230 = scmp.eq.s32.totalorder %s25, 0
      %p231 = por %p229, %p230
      %p232 = scmp.ne.s32.totalorder %s218, %s219
      %p233 = scmp.eq.s32.totalorder %s26, 1
      %p234 = por %p232, %p233
      %p236 = scmp.ne.s32.totalorder %s219, %s235
      %p237 = scmp.eq.s32.totalorder %s26, 0
      %p238 = por %p236, %p237
      %p239 = scmp.le.s32.totalorder 1, %s20
      %p240 = scmp.lt.s32.totalorder %s20, 3
      %p241 = pnand %p239, %p240
      %p242 = pneg %p241
      // Predicated region
      $region9: #{_lambda_.1} parent=5 // pred_check
        _
      $region10: #{_lambda_.1} parent=5 // pred_check_branch
        %244 = sbr.rel (%p241) target = $region12
      $region11: #{_lambda_.1} parent=5 // pred_region
        %s245 = ssub.s32 %s20, 1
        // Predicated region
        $region13: #{_lambda_.1} parent=11 // pred_check
          %p246 = pneg %p58
        $region14: #{_lambda_.1} parent=11 // pred_check_branch
          %248 = sbr.rel (%p246) target = $region16
        $region15: #{_lambda_.1} parent=11 // pred_region
          %p249 = scmp.lt.s32.totalorder %s29, 0
          %s250 = scalar_select %p249, %s29, 0
          %s251 = smul.addr %s250, 8
          %s252 = scalar_lea.vmem %s0, %s251
        $region16: #{_lambda_.1} parent=11 // pred_fallthru
          _
        // Predicated region
        $region17: #{_lambda_.1} parent=11 // pred_check
          %p253 = pneg %p84
        $region18: #{_lambda_.1} parent=11 // pred_check_branch
          %255 = sbr.rel (%p253) target = $region20
        $region19: #{_lambda_.1} parent=11 // pred_region
          %p256 = scmp.lt.s32.totalorder %s29, 0
          %s257 = scalar_select %p256, %s29, 0
          %s258 = smul.addr %s257, 8
          %s259 = scalar_lea.vmem %s1, %s258
        $region20: #{_lambda_.1} parent=11 // pred_fallthru
          _
        // Predicated region
        $region21: #{_lambda_.1} parent=11 // pred_check
          %p260 = pneg %p133
        $region22: #{_lambda_.1} parent=11 // pred_check_branch
          %262 = sbr.rel (%p260) target = $region24
        $region23: #{_lambda_.1} parent=11 // pred_region
          _
        $region24: #{_lambda_.1} parent=11 // pred_fallthru
          _
        // Predicated region
        $region25: #{_lambda_.1} parent=11 // pred_check
          %p263 = pneg %p154
        $region26: #{_lambda_.1} parent=11 // pred_check_branch
          %265 = sbr.rel (%p263) target = $region28
        $region27: #{_lambda_.1} parent=11 // pred_region
          _
        $region28: #{_lambda_.1} parent=11 // pred_fallthru
          _
        // Predicated region
        $region29: #{_lambda_.1} parent=11 // pred_check
          %p266 = pneg %p175
        $region30: #{_lambda_.1} parent=11 // pred_check_branch
          %268 = sbr.rel (%p266) target = $region32
        $region31: #{_lambda_.1} parent=11 // pred_region
          _
        $region32: #{_lambda_.1} parent=11 // pred_fallthru
          _
      $region12: #{_lambda_.1} parent=5 // pred_fallthru
        _
      %p269 = scmp.lt.s32.totalorder %s20, 2
      // Predicated region
      $region33: #{_lambda_.1} parent=5 // pred_check
        %p270 = pneg %p269
      $region34: #{_lambda_.1} parent=5 // pred_check_branch
        %272 = sbr.rel (%p270) target = $region36
      $region35: #{_lambda_.1} parent=5 // pred_region
        // Predicated region
        $region37: #{_lambda_.1} parent=35 // pred_check
          %p273 = pneg %p106
        $region38: #{_lambda_.1} parent=35 // pred_check_branch
          %275 = sbr.rel (%p273) target = $region40
        $region39: #{_lambda_.1} parent=35 // pred_region
          %s276 = smul.u32 8, %s28
          %p277 = scmp.lt.s32.totalorder %s276, 15
          %s278 = scalar_select %p277, %s276, 15
          %p279 = scmp.lt.s32.totalorder %s27, 0
          %s280 = scalar_select %p279, %s27, 0
          %s281 = sadd.s32 %s280, %s278
          %s282 = smul.addr %s281, 8
          %s283 = scalar_lea.vmem %s2, %s282
          %s284 = smul.u32 8, %s28
        $region40: #{_lambda_.1} parent=35 // pred_fallthru
          _
      $region36: #{_lambda_.1} parent=5 // pred_fallthru
        _
      %p285 = scmp.le.s32.totalorder 1, %s20
      %p286 = scmp.lt.s32.totalorder %s20, 3
      %p287 = pnand %p285, %p286
      %p288 = pneg %p287
      // Predicated region
      $region41: #{_lambda_.1} parent=5 // pred_check
        _
      $region42: #{_lambda_.1} parent=5 // pred_check_branch
        %290 = sbr.rel (%p287) target = $region44
      $region43: #{_lambda_.1} parent=5 // pred_region
        %s291 = ssub.s32 %s20, 1
        %p292 = scmp.lt.s32.totalorder %s29, 0
        %s293 = scalar_select %p292, %s29, 0
        %s294 = smul.addr %s293, 8
        %s295 = scalar_lea.vmem %s0, %s294
        %p296 = pneg %p58
        %p297 = pneg %p55
        %p298 = scmp.lt.s32.totalorder %s29, 0
        %s299 = scalar_select %p298, %s29, 0
        %s300 = smul.addr %s299, 8
        %s301 = scalar_lea.vmem %s1, %s300
        %p302 = pneg %p84
        %p303 = pneg %p81
        %s304 = smul.u32 8, %s30
        %p305 = scmp.lt.s32.totalorder %s304, 15
        %s306 = scalar_select %p305, %s304, 15
        %p307 = scmp.lt.s32.totalorder %s29, 0
        %s308 = scalar_select %p307, %s29, 0
        %s309 = sadd.s32 %s308, %s306
        %s310 = smul.addr %s309, 8
        %s311 = scalar_lea.vmem %s2, %s310
        %p312 = pneg %p112
        %p313 = pneg %p109
        %p314 = pneg %p133
        %p315 = pneg %p130
        %p316 = pneg %p154
        %p317 = pneg %p151
        %p318 = pneg %p175
        %p319 = pneg %p172
        %p320 = pneg %p203
        %p321 = pneg %p200
        %s322 = sand.u32 %s190, 1
        %s323 = scalar_lea.sflag [#allocation5], %s322
        %s324 = sand.u32 %s190, 1
        %s325 = smul.addr %s324, 64
        %s326 = scalar_lea.vmem [#allocation4], %s325
        %p327 = pneg %p231
        %p328 = pneg %p228
        %s329 = sand.u32 %s218, 1
        %s330 = scalar_lea.sflag [#allocation7], %s329
        %s331 = sand.u32 %s218, 1
        %s332 = smul.addr %s331, 64
        %s333 = scalar_lea.vmem [#allocation6], %s332
        %p334 = scmp.lt.s32.totalorder %s29, 0
        %s335 = scalar_select %p334, %s29, 0
        %s336 = smul.addr %s335, 8
        %s337 = scalar_lea.vmem %s0, %s336
        %p338 = scmp.lt.s32.totalorder %s29, 0
        %s339 = scalar_select %p338, %s29, 0
        %s340 = smul.addr %s339, 8
        %s341 = scalar_lea.vmem %s1, %s340
        %s342 = smul.u32 8, %s30
        %p343 = scmp.lt.s32.totalorder %s342, 15
        %s344 = scalar_select %p343, %s342, 15
        %p345 = scmp.lt.s32.totalorder %s29, 0
        %s346 = scalar_select %p345, %s29, 0
        %s347 = sadd.s32 %s346, %s344
        %s348 = smul.addr %s347, 8
        %s349 = scalar_lea.vmem %s2, %s348
        %s350 = smul.u32 8, %s30
        %s351 = smul.u32 8, %s30
        %s352 = smul.u32 8, %s30
        %p353 = scmp.eq.s32.totalorder %s30, 0
        // Predicated region
        $region45: #{_lambda_.1} parent=43 // pred_check
          %p354 = pneg %p353
        $region46: #{_lambda_.1} parent=43 // pred_check_branch
          %356 = sbr.rel (%p354) target = $region48
        $region47: #{_lambda_.1} parent=43 // pred_region
          %v357 = vld [vmem:[%s341] sm:$0xff]
          %358 = vst [vmem:[#allocation3] sm:$0xff] %v357
        $region48: #{_lambda_.1} parent=43 // pred_fallthru
          _
        %v359 = vld [vmem:[%s349] sm:$0xff]
        %v360 = vld [vmem:[%s349 + $0x8] sm:$0xff]
        %v361 = vld [vmem:[%s349 + $0x10] sm:$0xff]
        %v362 = vld [vmem:[%s349 + $0x18] sm:$0xff]
        %v363 = vld [vmem:[%s349 + $0x20] sm:$0xff]
        %v364 = vld [vmem:[%s349 + $0x28] sm:$0xff]
        %v365 = vld [vmem:[%s349 + $0x30] sm:$0xff]
        %v366 = vld [vmem:[%s349 + $0x38] sm:$0xff]
        %v367 = vld [vmem:[%s4] sm:$0xff]
        %v368 = vld [vmem:[%s4 + $0x8] sm:$0xff]
        %v369 = vld [vmem:[%s4 + $0x10] sm:$0xff]
        %v370 = vld [vmem:[%s4 + $0x18] sm:$0xff]
        %v371 = vld [vmem:[%s4 + $0x20] sm:$0xff]
        %v372 = vld [vmem:[%s4 + $0x28] sm:$0xff]
        %v373 = vld [vmem:[%s4 + $0x30] sm:$0xff]
        %v374 = vld [vmem:[%s4 + $0x38] sm:$0xff]
        %v375 = vld [vmem:[%s5] sm:$0x1]
        %v377 = vlaneseq
        %v378 = vshrl.u32 %v377, 7
        %v379 = vsub.s32 0, %v378
        %v380 = vrot.slane %v375, %v379
        %vm382 = vcmask 523264
        %v384 = vsel %vm382, %v359, 0
        %v387 = vsel %vm382, %v360, 0
        %v390 = vsel %vm382, %v361, 0
        %v393 = vsel %vm382, %v362, 0
        %v396 = vsel %vm382, %v363, 0
        %v399 = vsel %vm382, %v364, 0
        %v402 = vsel %vm382, %v365, 0
        %v405 = vsel %vm382, %v366, 0
        %407 = vmatprep.subr.mxu0 0.0
        %v408 = vand.u32 %v367, 4294901760
        %409 = vmatpush1.msra.mxu0 %v408
        %410 = vmatprep.subr.mxu0 0.0
        %v411 = vand.u32 %v368, 4294901760
        %412 = vmatpush1.msra.mxu0 %v411
        %413 = vmatprep.subr.mxu0 0.0
        %v414 = vand.u32 %v369, 4294901760
        %415 = vmatpush1.msra.mxu0 %v414
        %416 = vmatprep.subr.mxu0 0.0
        %v417 = vand.u32 %v370, 4294901760
        %418 = vmatpush1.msra.mxu0 %v417
        %419 = vmatprep.subr.mxu0 0.0
        %v420 = vand.u32 %v371, 4294901760
        %421 = vmatpush1.msra.mxu0 %v420
        %422 = vmatprep.subr.mxu0 0.0
        %v423 = vand.u32 %v372, 4294901760
        %424 = vmatpush1.msra.mxu0 %v423
        %425 = vmatprep.subr.mxu0 0.0
        %v426 = vand.u32 %v373, 4294901760
        %427 = vmatpush1.msra.mxu0 %v426
        %428 = vmatprep.subr.mxu0 0.0
        %v429 = vand.u32 %v374, 4294901760
        %430 = vmatpush1.msra.mxu0 %v429
        %431 = vmatprep.subr.mxu0 0.0
        %432 = vmatpush1.msra.mxu0 0.0
        %433 = vmatprep.subr.mxu0 0.0
        %434 = vmatpush1.msra.mxu0 0.0
        %435 = vmatprep.subr.mxu0 0.0
        %436 = vmatpush1.msra.mxu0 0.0
        %437 = vmatprep.subr.mxu0 0.0
        %438 = vmatpush1.msra.mxu0 0.0
        %439 = vmatprep.subr.mxu0 0.0
        %440 = vmatpush1.msra.mxu0 0.0
        %441 = vmatprep.subr.mxu0 0.0
        %442 = vmatpush1.msra.mxu0 0.0
        %443 = vmatprep.subr.mxu0 0.0
        %444 = vmatpush1.msra.mxu0 0.0
        %445 = vmatprep.subr.mxu0 0.0
        %446 = vmatpush1.msra.mxu0 0.0
        %447 = vmatprep.subr.mxu0 0.0
        %448 = vmatpush1.msra.mxu0 0.0
        %449 = vmatprep.subr.mxu0 0.0
        %450 = vmatpush1.msra.mxu0 0.0
        %451 = vmatprep.subr.mxu0 0.0
        %452 = vmatpush1.msra.mxu0 0.0
        %453 = vmatprep.subr.mxu0 0.0
        %454 = vmatpush1.msra.mxu0 0.0
        %455 = vmatprep.subr.mxu0 0.0
        %456 = vmatpush1.msra.mxu0 0.0
        %457 = vmatprep.subr.mxu0 0.0
        %458 = vmatpush1.msra.mxu0 0.0
        %459 = vmatprep.subr.mxu0 0.0
        %460 = vmatpush1.msra.mxu0 0.0
        %461 = vmatprep.subr.mxu0 0.0
        %462 = vmatpush1.msra.mxu0 0.0
        %463 = vmatprep.subr.mxu0 0.0
        %464 = vmatpush1.msra.mxu0 0.0
        %465 = vmatprep.subr.mxu0 0.0
        %466 = vmatpush1.msra.mxu0 0.0
        %467 = vmatprep.subr.mxu0 0.0
        %468 = vmatpush1.msra.mxu0 0.0
        %469 = vmatprep.subr.mxu0 0.0
        %470 = vmatpush1.msra.mxu0 0.0
        %471 = vmatprep.subr.mxu0 0.0
        %472 = vmatpush1.msra.mxu0 0.0
        %473 = vmatprep.subr.mxu0 0.0
        %474 = vmatpush1.msra.mxu0 0.0
        %475 = vmatprep.subr.mxu0 0.0
        %476 = vmatpush1.msra.mxu0 0.0
        %477 = vmatprep.subr.mxu0 0.0
        %478 = vmatpush1.msra.mxu0 0.0
        %479 = vmatprep.mubr.f32.mxu0 0.0
        %v480 = vand.u32 %v384, 4294901760
        %v481 = vsub.f32 %v384, %v480
        %v482 = vand.u32 %v481, 4294901760
        %v483 = vsub.f32 %v481, %v482
        %v484 = vand.u32 %v483, 4294901760
        %485 = vmatmul.mubr.f32.gmra.mrb[0].mxu0 %v484
        %v486 = vpop.f32.mrb[0].mxu0
        %v487 = vadd.f32 %v380, %v486
        %v488 = vpop.f32.mrb[0].mxu0
        %489 = vmatprep.mubr.f32.mxu0 0.0
        %v490 = vand.u32 %v387, 4294901760
        %v491 = vsub.f32 %v387, %v490
        %v492 = vand.u32 %v491, 4294901760
        %v493 = vsub.f32 %v491, %v492
        %v494 = vand.u32 %v493, 4294901760
        %495 = vmatmul.mubr.f32.gmra.mrb[0].mxu0 %v494
        %v496 = vpop.f32.mrb[0].mxu0
        %v497 = vadd.f32 %v380, %v496
        %v498 = vpop.f32.mrb[0].mxu0
        %499 = vmatprep.mubr.f32.mxu0 0.0
        %v500 = vand.u32 %v390, 4294901760
        %v501 = vsub.f32 %v390, %v500
        %v502 = vand.u32 %v501, 4294901760
        %v503 = vsub.f32 %v501, %v502
        %v504 = vand.u32 %v503, 4294901760
        %505 = vmatmul.mubr.f32.gmra.mrb[0].mxu0 %v504
        %v506 = vpop.f32.mrb[0].mxu0
        %v507 = vadd.f32 %v380, %v506
        %v508 = vpop.f32.mrb[0].mxu0
        %509 = vmatprep.mubr.f32.mxu0 0.0
        %v510 = vand.u32 %v393, 4294901760
        %v511 = vsub.f32 %v393, %v510
        %v512 = vand.u32 %v511, 4294901760
        %v513 = vsub.f32 %v511, %v512
        %v514 = vand.u32 %v513, 4294901760
        %515 = vmatmul.mubr.f32.gmra.mrb[0].mxu0 %v514
        %v516 = vpop.f32.mrb[0].mxu0
        %v517 = vadd.f32 %v380, %v516
        %v518 = vpop.f32.mrb[0].mxu0
        %519 = vmatprep.mubr.f32.mxu0 0.0
        %v520 = vand.u32 %v396, 4294901760
        %v521 = vsub.f32 %v396, %v520
        %v522 = vand.u32 %v521, 4294901760
        %v523 = vsub.f32 %v521, %v522
        %v524 = vand.u32 %v523, 4294901760
        %525 = vmatmul.mubr.f32.gmra.mrb[0].mxu0 %v524
        %v526 = vpop.f32.mrb[0].mxu0
        %v527 = vadd.f32 %v380, %v526
        %v528 = vpop.f32.mrb[0].mxu0
        %529 = vmatprep.mubr.f32.mxu0 0.0
        %v530 = vand.u32 %v399, 4294901760
        %v531 = vsub.f32 %v399, %v530
        %v532 = vand.u32 %v531, 4294901760
        %v533 = vsub.f32 %v531, %v532
        %v534 = vand.u32 %v533, 4294901760
        %535 = vmatmul.mubr.f32.gmra.mrb[0].mxu0 %v534
        %v536 = vpop.f32.mrb[0].mxu0
        %v537 = vadd.f32 %v380, %v536
        %v538 = vpop.f32.mrb[0].mxu0
        %539 = vmatprep.mubr.f32.mxu0 0.0
        %v540 = vand.u32 %v402, 4294901760
        %v541 = vsub.f32 %v402, %v540
        %v542 = vand.u32 %v541, 4294901760
        %v543 = vsub.f32 %v541, %v542
        %v544 = vand.u32 %v543, 4294901760
        %545 = vmatmul.mubr.f32.gmra.mrb[0].mxu0 %v544
        %v546 = vpop.f32.mrb[0].mxu0
        %v547 = vadd.f32 %v380, %v546
        %v548 = vpop.f32.mrb[0].mxu0
        %549 = vmatprep.mubr.f32.mxu0 0.0
        %v550 = vand.u32 %v405, 4294901760
        %v551 = vsub.f32 %v405, %v550
        %v552 = vand.u32 %v551, 4294901760
        %v553 = vsub.f32 %v551, %v552
        %v554 = vand.u32 %v553, 4294901760
        %555 = vmatmul.mubr.f32.gmra.mrb[0].mxu0 %v554
        %v556 = vpop.f32.mrb[0].mxu0
        %v557 = vadd.f32 %v380, %v556
        %v558 = vpop.f32.mrb[0].mxu0
        %559 = vdwg.mxu0
        %560 = vmatprep.subr.mxu0 0.0
        %v561 = vand.u32 %v367, 4294901760
        %v562 = vsub.f32 %v367, %v561
        %v563 = vand.u32 %v562, 4294901760
        %v564 = vsub.f32 %v562, %v563
        %v565 = vand.u32 %v564, 4294901760
        %566 = vmatpush1.msra.mxu0 %v565
        %567 = vmatprep.subr.mxu0 0.0
        %v568 = vand.u32 %v368, 4294901760
        %v569 = vsub.f32 %v368, %v568
        %v570 = vand.u32 %v569, 4294901760
        %v571 = vsub.f32 %v569, %v570
        %v572 = vand.u32 %v571, 4294901760
        %573 = vmatpush1.msra.mxu0 %v572
        %574 = vmatprep.subr.mxu0 0.0
        %v575 = vand.u32 %v369, 4294901760
        %v576 = vsub.f32 %v369, %v575
        %v577 = vand.u32 %v576, 4294901760
        %v578 = vsub.f32 %v576, %v577
        %v579 = vand.u32 %v578, 4294901760
        %580 = vmatpush1.msra.mxu0 %v579
        %581 = vmatprep.subr.mxu0 0.0
        %v582 = vand.u32 %v370, 4294901760
        %v583 = vsub.f32 %v370, %v582
        %v584 = vand.u32 %v583, 4294901760
        %v585 = vsub.f32 %v583, %v584
        %v586 = vand.u32 %v585, 4294901760
        %587 = vmatpush1.msra.mxu0 %v586
        %588 = vmatprep.subr.mxu0 0.0
        %v589 = vand.u32 %v371, 4294901760
        %v590 = vsub.f32 %v371, %v589
        %v591 = vand.u32 %v590, 4294901760
        %v592 = vsub.f32 %v590, %v591
        %v593 = vand.u32 %v592, 4294901760
        %594 = vmatpush1.msra.mxu0 %v593
        %595 = vmatprep.subr.mxu0 0.0
        %v596 = vand.u32 %v372, 4294901760
        %v597 = vsub.f32 %v372, %v596
        %v598 = vand.u32 %v597, 4294901760
        %v599 = vsub.f32 %v597, %v598
        %v600 = vand.u32 %v599, 4294901760
        %601 = vmatpush1.msra.mxu0 %v600
        %602 = vmatprep.subr.mxu0 0.0
        %v603 = vand.u32 %v373, 4294901760
        %v604 = vsub.f32 %v373, %v603
        %v605 = vand.u32 %v604, 4294901760
        %v606 = vsub.f32 %v604, %v605
        %v607 = vand.u32 %v606, 4294901760
        %608 = vmatpush1.msra.mxu0 %v607
        %609 = vmatprep.subr.mxu0 0.0
        %v610 = vand.u32 %v374, 4294901760
        %v611 = vsub.f32 %v374, %v610
        %v612 = vand.u32 %v611, 4294901760
        %v613 = vsub.f32 %v611, %v612
        %v614 = vand.u32 %v613, 4294901760
        %615 = vmatpush1.msra.mxu0 %v614
        %616 = vmatprep.subr.mxu0 0.0
        %617 = vmatpush1.msra.mxu0 0.0
        %618 = vmatprep.subr.mxu0 0.0
        %619 = vmatpush1.msra.mxu0 0.0
        %620 = vmatprep.subr.mxu0 0.0
        %621 = vmatpush1.msra.mxu0 0.0
        %622 = vmatprep.subr.mxu0 0.0
        %623 = vmatpush1.msra.mxu0 0.0
        %624 = vmatprep.subr.mxu0 0.0
        %625 = vmatpush1.msra.mxu0 0.0
        %626 = vmatprep.subr.mxu0 0.0
        %627 = vmatpush1.msra.mxu0 0.0
        %628 = vmatprep.subr.mxu0 0.0
        %629 = vmatpush1.msra.mxu0 0.0
        %630 = vmatprep.subr.mxu0 0.0
        %631 = vmatpush1.msra.mxu0 0.0
        %632 = vmatprep.subr.mxu0 0.0
        %633 = vmatpush1.msra.mxu0 0.0
        %634 = vmatprep.subr.mxu0 0.0
        %635 = vmatpush1.msra.mxu0 0.0
        %636 = vmatprep.subr.mxu0 0.0
        %637 = vmatpush1.msra.mxu0 0.0
        %638 = vmatprep.subr.mxu0 0.0
        %639 = vmatpush1.msra.mxu0 0.0
        %640 = vmatprep.subr.mxu0 0.0
        %641 = vmatpush1.msra.mxu0 0.0
        %642 = vmatprep.subr.mxu0 0.0
        %643 = vmatpush1.msra.mxu0 0.0
        %644 = vmatprep.subr.mxu0 0.0
        %645 = vmatpush1.msra.mxu0 0.0
        %646 = vmatprep.subr.mxu0 0.0
        %647 = vmatpush1.msra.mxu0 0.0
        %648 = vmatprep.subr.mxu0 0.0
        %649 = vmatpush1.msra.mxu0 0.0
        %650 = vmatprep.subr.mxu0 0.0
        %651 = vmatpush1.msra.mxu0 0.0
        %652 = vmatprep.subr.mxu0 0.0
        %653 = vmatpush1.msra.mxu0 0.0
        %654 = vmatprep.subr.mxu0 0.0
        %655 = vmatpush1.msra.mxu0 0.0
        %656 = vmatprep.subr.mxu0 0.0
        %657 = vmatpush1.msra.mxu0 0.0
        %658 = vmatprep.subr.mxu0 0.0
        %659 = vmatpush1.msra.mxu0 0.0
        %660 = vmatprep.subr.mxu0 0.0
        %661 = vmatpush1.msra.mxu0 0.0
        %662 = vmatprep.subr.mxu0 0.0
        %663 = vmatpush1.msra.mxu0 0.0
        %664 = vmatprep.mubr.f32.mxu0 0.0
        %v665 = vand.u32 %v384, 4294901760
        %666 = vmatmul.mubr.f32.gmra.mrb[0].mxu0 %v665
        %v667 = vpop.f32.mrb[0].mxu0
        %v668 = vadd.f32 %v487, %v667
        %v669 = vpop.f32.mrb[0].mxu0
        %670 = vmatprep.mubr.f32.mxu0 0.0
        %v671 = vand.u32 %v387, 4294901760
        %672 = vmatmul.mubr.f32.gmra.mrb[0].mxu0 %v671
        %v673 = vpop.f32.mrb[0].mxu0
        %v674 = vadd.f32 %v497, %v673
        %v675 = vpop.f32.mrb[0].mxu0
        %676 = vmatprep.mubr.f32.mxu0 0.0
        %v677 = vand.u32 %v390, 4294901760
        %678 = vmatmul.mubr.f32.gmra.mrb[0].mxu0 %v677
        %v679 = vpop.f32.mrb[0].mxu0
        %v680 = vadd.f32 %v507, %v679
        %v681 = vpop.f32.mrb[0].mxu0
        %682 = vmatprep.mubr.f32.mxu0 0.0
        %v683 = vand.u32 %v393, 4294901760
        %684 = vmatmul.mubr.f32.gmra.mrb[0].mxu0 %v683
        %v685 = vpop.f32.mrb[0].mxu0
        %v686 = vadd.f32 %v517, %v685
        %v687 = vpop.f32.mrb[0].mxu0
        %688 = vmatprep.mubr.f32.mxu0 0.0
        %v689 = vand.u32 %v396, 4294901760
        %690 = vmatmul.mubr.f32.gmra.mrb[0].mxu0 %v689
        %v691 = vpop.f32.mrb[0].mxu0
        %v692 = vadd.f32 %v527, %v691
        %v693 = vpop.f32.mrb[0].mxu0
        %694 = vmatprep.mubr.f32.mxu0 0.0
        %v695 = vand.u32 %v399, 4294901760
        %696 = vmatmul.mubr.f32.gmra.mrb[0].mxu0 %v695
        %v697 = vpop.f32.mrb[0].mxu0
        %v698 = vadd.f32 %v537, %v697
        %v699 = vpop.f32.mrb[0].mxu0
        %700 = vmatprep.mubr.f32.mxu0 0.0
        %v701 = vand.u32 %v402, 4294901760
        %702 = vmatmul.mubr.f32.gmra.mrb[0].mxu0 %v701
        %v703 = vpop.f32.mrb[0].mxu0
        %v704 = vadd.f32 %v547, %v703
        %v705 = vpop.f32.mrb[0].mxu0
        %706 = vmatprep.mubr.f32.mxu0 0.0
        %v707 = vand.u32 %v405, 4294901760
        %708 = vmatmul.mubr.f32.gmra.mrb[0].mxu0 %v707
        %v709 = vpop.f32.mrb[0].mxu0
        %v710 = vadd.f32 %v557, %v709
        %v711 = vpop.f32.mrb[0].mxu0
        %712 = vdwg.mxu0
        %713 = vmatprep.subr.mxu0 0.0
        %v714 = vand.u32 %v367, 4294901760
        %v715 = vsub.f32 %v367, %v714
        %716 = vmatpush1.msra.mxu0 %v715
        %717 = vmatprep.subr.mxu0 0.0
        %v718 = vand.u32 %v368, 4294901760
        %v719 = vsub.f32 %v368, %v718
        %720 = vmatpush1.msra.mxu0 %v719
        %721 = vmatprep.subr.mxu0 0.0
        %v722 = vand.u32 %v369, 4294901760
        %v723 = vsub.f32 %v369, %v722
        %724 = vmatpush1.msra.mxu0 %v723
        %725 = vmatprep.subr.mxu0 0.0
        %v726 = vand.u32 %v370, 4294901760
        %v727 = vsub.f32 %v370, %v726
        %728 = vmatpush1.msra.mxu0 %v727
        %729 = vmatprep.subr.mxu0 0.0
        %v730 = vand.u32 %v371, 4294901760
        %v731 = vsub.f32 %v371, %v730
        %732 = vmatpush1.msra.mxu0 %v731
        %733 = vmatprep.subr.mxu0 0.0
        %v734 = vand.u32 %v372, 4294901760
        %v735 = vsub.f32 %v372, %v734
        %736 = vmatpush1.msra.mxu0 %v735
        %737 = vmatprep.subr.mxu0 0.0
        %v738 = vand.u32 %v373, 4294901760
        %v739 = vsub.f32 %v373, %v738
        %740 = vmatpush1.msra.mxu0 %v739
        %741 = vmatprep.subr.mxu0 0.0
        %v742 = vand.u32 %v374, 4294901760
        %v743 = vsub.f32 %v374, %v742
        %744 = vmatpush1.msra.mxu0 %v743
        %745 = vmatprep.subr.mxu0 0.0
        %746 = vmatpush1.msra.mxu0 0.0
        %747 = vmatprep.subr.mxu0 0.0
        %748 = vmatpush1.msra.mxu0 0.0
        %749 = vmatprep.subr.mxu0 0.0
        %750 = vmatpush1.msra.mxu0 0.0
        %751 = vmatprep.subr.mxu0 0.0
        %752 = vmatpush1.msra.mxu0 0.0
        %753 = vmatprep.subr.mxu0 0.0
        %754 = vmatpush1.msra.mxu0 0.0
        %755 = vmatprep.subr.mxu0 0.0
        %756 = vmatpush1.msra.mxu0 0.0
        %757 = vmatprep.subr.mxu0 0.0
        %758 = vmatpush1.msra.mxu0 0.0
        %759 = vmatprep.subr.mxu0 0.0
        %760 = vmatpush1.msra.mxu0 0.0
        %761 = vmatprep.subr.mxu0 0.0
        %762 = vmatpush1.msra.mxu0 0.0
        %763 = vmatprep.subr.mxu0 0.0
        %764 = vmatpush1.msra.mxu0 0.0
        %765 = vmatprep.subr.mxu0 0.0
        %766 = vmatpush1.msra.mxu0 0.0
        %767 = vmatprep.subr.mxu0 0.0
        %768 = vmatpush1.msra.mxu0 0.0
        %769 = vmatprep.subr.mxu0 0.0
        %770 = vmatpush1.msra.mxu0 0.0
        %771 = vmatprep.subr.mxu0 0.0
        %772 = vmatpush1.msra.mxu0 0.0
        %773 = vmatprep.subr.mxu0 0.0
        %774 = vmatpush1.msra.mxu0 0.0
        %775 = vmatprep.subr.mxu0 0.0
        %776 = vmatpush1.msra.mxu0 0.0
        %777 = vmatprep.subr.mxu0 0.0
        %778 = vmatpush1.msra.mxu0 0.0
        %779 = vmatprep.subr.mxu0 0.0
        %780 = vmatpush1.msra.mxu0 0.0
        %781 = vmatprep.subr.mxu0 0.0
        %782 = vmatpush1.msra.mxu0 0.0
        %783 = vmatprep.subr.mxu0 0.0
        %784 = vmatpush1.msra.mxu0 0.0
        %785 = vmatprep.subr.mxu0 0.0
        %786 = vmatpush1.msra.mxu0 0.0
        %787 = vmatprep.subr.mxu0 0.0
        %788 = vmatpush1.msra.mxu0 0.0
        %789 = vmatprep.subr.mxu0 0.0
        %790 = vmatpush1.msra.mxu0 0.0
        %791 = vmatprep.subr.mxu0 0.0
        %792 = vmatpush1.msra.mxu0 0.0
        %793 = vmatprep.mubr.f32.mxu0 0.0
        %v794 = vand.u32 %v384, 4294901760
        %v795 = vsub.f32 %v384, %v794
        %796 = vmatmul.mubr.f32.gmra.mrb[0].mxu0 %v795
        %v797 = vpop.f32.mrb[0].mxu0
        %v798 = vadd.f32 %v668, %v797
        %v799 = vpop.f32.mrb[0].mxu0
        %800 = vmatprep.mubr.f32.mxu0 0.0
        %v801 = vand.u32 %v387, 4294901760
        %v802 = vsub.f32 %v387, %v801
        %803 = vmatmul.mubr.f32.gmra.mrb[0].mxu0 %v802
        %v804 = vpop.f32.mrb[0].mxu0
        %v805 = vadd.f32 %v674, %v804
        %v806 = vpop.f32.mrb[0].mxu0
        %807 = vmatprep.mubr.f32.mxu0 0.0
        %v808 = vand.u32 %v390, 4294901760
        %v809 = vsub.f32 %v390, %v808
        %810 = vmatmul.mubr.f32.gmra.mrb[0].mxu0 %v809
        %v811 = vpop.f32.mrb[0].mxu0
        %v812 = vadd.f32 %v680, %v811
        %v813 = vpop.f32.mrb[0].mxu0
        %814 = vmatprep.mubr.f32.mxu0 0.0
        %v815 = vand.u32 %v393, 4294901760
        %v816 = vsub.f32 %v393, %v815
        %817 = vmatmul.mubr.f32.gmra.mrb[0].mxu0 %v816
        %v818 = vpop.f32.mrb[0].mxu0
        %v819 = vadd.f32 %v686, %v818
        %v820 = vpop.f32.mrb[0].mxu0
        %821 = vmatprep.mubr.f32.mxu0 0.0
        %v822 = vand.u32 %v396, 4294901760
        %v823 = vsub.f32 %v396, %v822
        %824 = vmatmul.mubr.f32.gmra.mrb[0].mxu0 %v823
        %v825 = vpop.f32.mrb[0].mxu0
        %v826 = vadd.f32 %v692, %v825
        %v827 = vpop.f32.mrb[0].mxu0
        %828 = vmatprep.mubr.f32.mxu0 0.0
        %v829 = vand.u32 %v399, 4294901760
        %v830 = vsub.f32 %v399, %v829
        %831 = vmatmul.mubr.f32.gmra.mrb[0].mxu0 %v830
        %v832 = vpop.f32.mrb[0].mxu0
        %v833 = vadd.f32 %v698, %v832
        %v834 = vpop.f32.mrb[0].mxu0
        %835 = vmatprep.mubr.f32.mxu0 0.0
        %v836 = vand.u32 %v402, 4294901760
        %v837 = vsub.f32 %v402, %v836
        %838 = vmatmul.mubr.f32.gmra.mrb[0].mxu0 %v837
        %v839 = vpop.f32.mrb[0].mxu0
        %v840 = vadd.f32 %v704, %v839
        %v841 = vpop.f32.mrb[0].mxu0
        %842 = vmatprep.mubr.f32.mxu0 0.0
        %v843 = vand.u32 %v405, 4294901760
        %v844 = vsub.f32 %v405, %v843
        %845 = vmatmul.mubr.f32.gmra.mrb[0].mxu0 %v844
        %v846 = vpop.f32.mrb[0].mxu0
        %v847 = vadd.f32 %v710, %v846
        %v848 = vpop.f32.mrb[0].mxu0
        %849 = vdwg.mxu0
        %850 = vmatprep.subr.mxu0 0.0
        %v851 = vand.u32 %v367, 4294901760
        %852 = vmatpush1.msra.mxu0 %v851
        %853 = vmatprep.subr.mxu0 0.0
        %v854 = vand.u32 %v368, 4294901760
        %855 = vmatpush1.msra.mxu0 %v854
        %856 = vmatprep.subr.mxu0 0.0
        %v857 = vand.u32 %v369, 4294901760
        %858 = vmatpush1.msra.mxu0 %v857
        %859 = vmatprep.subr.mxu0 0.0
        %v860 = vand.u32 %v370, 4294901760
        %861 = vmatpush1.msra.mxu0 %v860
        %862 = vmatprep.subr.mxu0 0.0
        %v863 = vand.u32 %v371, 4294901760
        %864 = vmatpush1.msra.mxu0 %v863
        %865 = vmatprep.subr.mxu0 0.0
        %v866 = vand.u32 %v372, 4294901760
        %867 = vmatpush1.msra.mxu0 %v866
        %868 = vmatprep.subr.mxu0 0.0
        %v869 = vand.u32 %v373, 4294901760
        %870 = vmatpush1.msra.mxu0 %v869
        %871 = vmatprep.subr.mxu0 0.0
        %v872 = vand.u32 %v374, 4294901760
        %873 = vmatpush1.msra.mxu0 %v872
        %874 = vmatprep.subr.mxu0 0.0
        %875 = vmatpush1.msra.mxu0 0.0
        %876 = vmatprep.subr.mxu0 0.0
        %877 = vmatpush1.msra.mxu0 0.0
        %878 = vmatprep.subr.mxu0 0.0
        %879 = vmatpush1.msra.mxu0 0.0
        %880 = vmatprep.subr.mxu0 0.0
        %881 = vmatpush1.msra.mxu0 0.0
        %882 = vmatprep.subr.mxu0 0.0
        %883 = vmatpush1.msra.mxu0 0.0
        %884 = vmatprep.subr.mxu0 0.0
        %885 = vmatpush1.msra.mxu0 0.0
        %886 = vmatprep.subr.mxu0 0.0
        %887 = vmatpush1.msra.mxu0 0.0
        %888 = vmatprep.subr.mxu0 0.0
        %889 = vmatpush1.msra.mxu0 0.0
        %890 = vmatprep.subr.mxu0 0.0
        %891 = vmatpush1.msra.mxu0 0.0
        %892 = vmatprep.subr.mxu0 0.0
        %893 = vmatpush1.msra.mxu0 0.0
        %894 = vmatprep.subr.mxu0 0.0
        %895 = vmatpush1.msra.mxu0 0.0
        %896 = vmatprep.subr.mxu0 0.0
        %897 = vmatpush1.msra.mxu0 0.0
        %898 = vmatprep.subr.mxu0 0.0
        %899 = vmatpush1.msra.mxu0 0.0
        %900 = vmatprep.subr.mxu0 0.0
        %901 = vmatpush1.msra.mxu0 0.0
        %902 = vmatprep.subr.mxu0 0.0
        %903 = vmatpush1.msra.mxu0 0.0
        %904 = vmatprep.subr.mxu0 0.0
        %905 = vmatpush1.msra.mxu0 0.0
        %906 = vmatprep.subr.mxu0 0.0
        %907 = vmatpush1.msra.mxu0 0.0
        %908 = vmatprep.subr.mxu0 0.0
        %909 = vmatpush1.msra.mxu0 0.0
        %910 = vmatprep.subr.mxu0 0.0
        %911 = vmatpush1.msra.mxu0 0.0
        %912 = vmatprep.subr.mxu0 0.0
        %913 = vmatpush1.msra.mxu0 0.0
        %914 = vmatprep.subr.mxu0 0.0
        %915 = vmatpush1.msra.mxu0 0.0
        %916 = vmatprep.subr.mxu0 0.0
        %917 = vmatpush1.msra.mxu0 0.0
        %918 = vmatprep.subr.mxu0 0.0
        %919 = vmatpush1.msra.mxu0 0.0
        %920 = vmatprep.subr.mxu0 0.0
        %921 = vmatpush1.msra.mxu0 0.0
        %922 = vmatprep.mubr.f32.mxu0 0.0
        %v923 = vand.u32 %v384, 4294901760
        %v924 = vsub.f32 %v384, %v923
        %v925 = vand.u32 %v924, 4294901760
        %926 = vmatmul.mubr.f32.gmra.mrb[0].mxu0 %v925
        %v927 = vpop.f32.mrb[0].mxu0
        %v928 = vadd.f32 %v798, %v927
        %v929 = vpop.f32.mrb[0].mxu0
        %930 = vmatprep.mubr.f32.mxu0 0.0
        %v931 = vand.u32 %v387, 4294901760
        %v932 = vsub.f32 %v387, %v931
        %v933 = vand.u32 %v932, 4294901760
        %934 = vmatmul.mubr.f32.gmra.mrb[0].mxu0 %v933
        %v935 = vpop.f32.mrb[0].mxu0
        %v936 = vadd.f32 %v805, %v935
        %v937 = vpop.f32.mrb[0].mxu0
        %938 = vmatprep.mubr.f32.mxu0 0.0
        %v939 = vand.u32 %v390, 4294901760
        %v940 = vsub.f32 %v390, %v939
        %v941 = vand.u32 %v940, 4294901760
        %942 = vmatmul.mubr.f32.gmra.mrb[0].mxu0 %v941
        %v943 = vpop.f32.mrb[0].mxu0
        %v944 = vadd.f32 %v812, %v943
        %v945 = vpop.f32.mrb[0].mxu0
        %946 = vmatprep.mubr.f32.mxu0 0.0
        %v947 = vand.u32 %v393, 4294901760
        %v948 = vsub.f32 %v393, %v947
        %v949 = vand.u32 %v948, 4294901760
        %950 = vmatmul.mubr.f32.gmra.mrb[0].mxu0 %v949
        %v951 = vpop.f32.mrb[0].mxu0
        %v952 = vadd.f32 %v819, %v951
        %v953 = vpop.f32.mrb[0].mxu0
        %954 = vmatprep.mubr.f32.mxu0 0.0
        %v955 = vand.u32 %v396, 4294901760
        %v956 = vsub.f32 %v396, %v955
        %v957 = vand.u32 %v956, 4294901760
        %958 = vmatmul.mubr.f32.gmra.mrb[0].mxu0 %v957
        %v959 = vpop.f32.mrb[0].mxu0
        %v960 = vadd.f32 %v826, %v959
        %v961 = vpop.f32.mrb[0].mxu0
        %962 = vmatprep.mubr.f32.mxu0 0.0
        %v963 = vand.u32 %v399, 4294901760
        %v964 = vsub.f32 %v399, %v963
        %v965 = vand.u32 %v964, 4294901760
        %966 = vmatmul.mubr.f32.gmra.mrb[0].mxu0 %v965
        %v967 = vpop.f32.mrb[0].mxu0
        %v968 = vadd.f32 %v833, %v967
        %v969 = vpop.f32.mrb[0].mxu0
        %970 = vmatprep.mubr.f32.mxu0 0.0
        %v971 = vand.u32 %v402, 4294901760
        %v972 = vsub.f32 %v402, %v971
        %v973 = vand.u32 %v972, 4294901760
        %974 = vmatmul.mubr.f32.gmra.mrb[0].mxu0 %v973
        %v975 = vpop.f32.mrb[0].mxu0
        %v976 = vadd.f32 %v840, %v975
        %v977 = vpop.f32.mrb[0].mxu0
        %978 = vmatprep.mubr.f32.mxu0 0.0
        %v979 = vand.u32 %v405, 4294901760
        %v980 = vsub.f32 %v405, %v979
        %v981 = vand.u32 %v980, 4294901760
        %982 = vmatmul.mubr.f32.gmra.mrb[0].mxu0 %v981
        %v983 = vpop.f32.mrb[0].mxu0
        %v984 = vadd.f32 %v847, %v983
        %v985 = vpop.f32.mrb[0].mxu0
        %986 = vdwg.mxu0
        %987 = vmatprep.subr.mxu0 0.0
        %v988 = vand.u32 %v367, 4294901760
        %v989 = vsub.f32 %v367, %v988
        %v990 = vand.u32 %v989, 4294901760
        %991 = vmatpush1.msra.mxu0 %v990
        %992 = vmatprep.subr.mxu0 0.0
        %v993 = vand.u32 %v368, 4294901760
        %v994 = vsub.f32 %v368, %v993
        %v995 = vand.u32 %v994, 4294901760
        %996 = vmatpush1.msra.mxu0 %v995
        %997 = vmatprep.subr.mxu0 0.0
        %v998 = vand.u32 %v369, 4294901760
        %v999 = vsub.f32 %v369, %v998
        %v1000 = vand.u32 %v999, 4294901760
        %1001 = vmatpush1.msra.mxu0 %v1000
        %1002 = vmatprep.subr.mxu0 0.0
        %v1003 = vand.u32 %v370, 4294901760
        %v1004 = vsub.f32 %v370, %v1003
        %v1005 = vand.u32 %v1004, 4294901760
        %1006 = vmatpush1.msra.mxu0 %v1005
        %1007 = vmatprep.subr.mxu0 0.0
        %v1008 = vand.u32 %v371, 4294901760
        %v1009 = vsub.f32 %v371, %v1008
        %v1010 = vand.u32 %v1009, 4294901760
        %1011 = vmatpush1.msra.mxu0 %v1010
        %1012 = vmatprep.subr.mxu0 0.0
        %v1013 = vand.u32 %v372, 4294901760
        %v1014 = vsub.f32 %v372, %v1013
        %v1015 = vand.u32 %v1014, 4294901760
        %1016 = vmatpush1.msra.mxu0 %v1015
        %1017 = vmatprep.subr.mxu0 0.0
        %v1018 = vand.u32 %v373, 4294901760
        %v1019 = vsub.f32 %v373, %v1018
        %v1020 = vand.u32 %v1019, 4294901760
        %1021 = vmatpush1.msra.mxu0 %v1020
        %1022 = vmatprep.subr.mxu0 0.0
        %v1023 = vand.u32 %v374, 4294901760
        %v1024 = vsub.f32 %v374, %v1023
        %v1025 = vand.u32 %v1024, 4294901760
        %1026 = vmatpush1.msra.mxu0 %v1025
        %1027 = vmatprep.subr.mxu0 0.0
        %1028 = vmatpush1.msra.mxu0 0.0
        %1029 = vmatprep.subr.mxu0 0.0
        %1030 = vmatpush1.msra.mxu0 0.0
        %1031 = vmatprep.subr.mxu0 0.0
        %1032 = vmatpush1.msra.mxu0 0.0
        %1033 = vmatprep.subr.mxu0 0.0
        %1034 = vmatpush1.msra.mxu0 0.0
        %1035 = vmatprep.subr.mxu0 0.0
        %1036 = vmatpush1.msra.mxu0 0.0
        %1037 = vmatprep.subr.mxu0 0.0
        %1038 = vmatpush1.msra.mxu0 0.0
        %1039 = vmatprep.subr.mxu0 0.0
        %1040 = vmatpush1.msra.mxu0 0.0
        %1041 = vmatprep.subr.mxu0 0.0
        %1042 = vmatpush1.msra.mxu0 0.0
        %1043 = vmatprep.subr.mxu0 0.0
        %1044 = vmatpush1.msra.mxu0 0.0
        %1045 = vmatprep.subr.mxu0 0.0
        %1046 = vmatpush1.msra.mxu0 0.0
        %1047 = vmatprep.subr.mxu0 0.0
        %1048 = vmatpush1.msra.mxu0 0.0
        %1049 = vmatprep.subr.mxu0 0.0
        %1050 = vmatpush1.msra.mxu0 0.0
        %1051 = vmatprep.subr.mxu0 0.0
        %1052 = vmatpush1.msra.mxu0 0.0
        %1053 = vmatprep.subr.mxu0 0.0
        %1054 = vmatpush1.msra.mxu0 0.0
        %1055 = vmatprep.subr.mxu0 0.0
        %1056 = vmatpush1.msra.mxu0 0.0
        %1057 = vmatprep.subr.mxu0 0.0
        %1058 = vmatpush1.msra.mxu0 0.0
        %1059 = vmatprep.subr.mxu0 0.0
        %1060 = vmatpush1.msra.mxu0 0.0
        %1061 = vmatprep.subr.mxu0 0.0
        %1062 = vmatpush1.msra.mxu0 0.0
        %1063 = vmatprep.subr.mxu0 0.0
        %1064 = vmatpush1.msra.mxu0 0.0
        %1065 = vmatprep.subr.mxu0 0.0
        %1066 = vmatpush1.msra.mxu0 0.0
        %1067 = vmatprep.subr.mxu0 0.0
        %1068 = vmatpush1.msra.mxu0 0.0
        %1069 = vmatprep.subr.mxu0 0.0
        %1070 = vmatpush1.msra.mxu0 0.0
        %1071 = vmatprep.subr.mxu0 0.0
        %1072 = vmatpush1.msra.mxu0 0.0
        %1073 = vmatprep.subr.mxu0 0.0
        %1074 = vmatpush1.msra.mxu0 0.0
        %1075 = vmatprep.mubr.f32.mxu0 0.0
        %v1076 = vand.u32 %v384, 4294901760
        %1077 = vmatmul.mubr.f32.gmra.mrb[0].mxu0 %v1076
        %v1078 = vpop.f32.mrb[0].mxu0
        %v1079 = vadd.f32 %v928, %v1078
        %v1080 = vpop.f32.mrb[0].mxu0
        %1081 = vmatprep.mubr.f32.mxu0 0.0
        %v1082 = vand.u32 %v387, 4294901760
        %1083 = vmatmul.mubr.f32.gmra.mrb[0].mxu0 %v1082
        %v1084 = vpop.f32.mrb[0].mxu0
        %v1085 = vadd.f32 %v936, %v1084
        %v1086 = vpop.f32.mrb[0].mxu0
        %1087 = vmatprep.mubr.f32.mxu0 0.0
        %v1088 = vand.u32 %v390, 4294901760
        %1089 = vmatmul.mubr.f32.gmra.mrb[0].mxu0 %v1088
        %v1090 = vpop.f32.mrb[0].mxu0
        %v1091 = vadd.f32 %v944, %v1090
        %v1092 = vpop.f32.mrb[0].mxu0
        %1093 = vmatprep.mubr.f32.mxu0 0.0
        %v1094 = vand.u32 %v393, 4294901760
        %1095 = vmatmul.mubr.f32.gmra.mrb[0].mxu0 %v1094
        %v1096 = vpop.f32.mrb[0].mxu0
        %v1097 = vadd.f32 %v952, %v1096
        %v1098 = vpop.f32.mrb[0].mxu0
        %1099 = vmatprep.mubr.f32.mxu0 0.0
        %v1100 = vand.u32 %v396, 4294901760
        %1101 = vmatmul.mubr.f32.gmra.mrb[0].mxu0 %v1100
        %v1102 = vpop.f32.mrb[0].mxu0
        %v1103 = vadd.f32 %v960, %v1102
        %v1104 = vpop.f32.mrb[0].mxu0
        %1105 = vmatprep.mubr.f32.mxu0 0.0
        %v1106 = vand.u32 %v399, 4294901760
        %1107 = vmatmul.mubr.f32.gmra.mrb[0].mxu0 %v1106
        %v1108 = vpop.f32.mrb[0].mxu0
        %v1109 = vadd.f32 %v968, %v1108
        %v1110 = vpop.f32.mrb[0].mxu0
        %1111 = vmatprep.mubr.f32.mxu0 0.0
        %v1112 = vand.u32 %v402, 4294901760
        %1113 = vmatmul.mubr.f32.gmra.mrb[0].mxu0 %v1112
        %v1114 = vpop.f32.mrb[0].mxu0
        %v1115 = vadd.f32 %v976, %v1114
        %v1116 = vpop.f32.mrb[0].mxu0
        %1117 = vmatprep.mubr.f32.mxu0 0.0
        %v1118 = vand.u32 %v405, 4294901760
        %1119 = vmatmul.mubr.f32.gmra.mrb[0].mxu0 %v1118
        %v1120 = vpop.f32.mrb[0].mxu0
        %v1121 = vadd.f32 %v984, %v1120
        %v1122 = vpop.f32.mrb[0].mxu0
        %1123 = vdwg.mxu0
        %1124 = vmatprep.subr.mxu0 0.0
        %v1125 = vand.u32 %v367, 4294901760
        %1126 = vmatpush1.msra.mxu0 %v1125
        %1127 = vmatprep.subr.mxu0 0.0
        %v1128 = vand.u32 %v368, 4294901760
        %1129 = vmatpush1.msra.mxu0 %v1128
        %1130 = vmatprep.subr.mxu0 0.0
        %v1131 = vand.u32 %v369, 4294901760
        %1132 = vmatpush1.msra.mxu0 %v1131
        %1133 = vmatprep.subr.mxu0 0.0
        %v1134 = vand.u32 %v370, 4294901760
        %1135 = vmatpush1.msra.mxu0 %v1134
        %1136 = vmatprep.subr.mxu0 0.0
        %v1137 = vand.u32 %v371, 4294901760
        %1138 = vmatpush1.msra.mxu0 %v1137
        %1139 = vmatprep.subr.mxu0 0.0
        %v1140 = vand.u32 %v372, 4294901760
        %1141 = vmatpush1.msra.mxu0 %v1140
        %1142 = vmatprep.subr.mxu0 0.0
        %v1143 = vand.u32 %v373, 4294901760
        %1144 = vmatpush1.msra.mxu0 %v1143
        %1145 = vmatprep.subr.mxu0 0.0
        %v1146 = vand.u32 %v374, 4294901760
        %1147 = vmatpush1.msra.mxu0 %v1146
        %1148 = vmatprep.subr.mxu0 0.0
        %1149 = vmatpush1.msra.mxu0 0.0
        %1150 = vmatprep.subr.mxu0 0.0
        %1151 = vmatpush1.msra.mxu0 0.0
        %1152 = vmatprep.subr.mxu0 0.0
        %1153 = vmatpush1.msra.mxu0 0.0
        %1154 = vmatprep.subr.mxu0 0.0
        %1155 = vmatpush1.msra.mxu0 0.0
        %1156 = vmatprep.subr.mxu0 0.0
        %1157 = vmatpush1.msra.mxu0 0.0
        %1158 = vmatprep.subr.mxu0 0.0
        %1159 = vmatpush1.msra.mxu0 0.0
        %1160 = vmatprep.subr.mxu0 0.0
        %1161 = vmatpush1.msra.mxu0 0.0
        %1162 = vmatprep.subr.mxu0 0.0
        %1163 = vmatpush1.msra.mxu0 0.0
        %1164 = vmatprep.subr.mxu0 0.0
        %1165 = vmatpush1.msra.mxu0 0.0
        %1166 = vmatprep.subr.mxu0 0.0
        %1167 = vmatpush1.msra.mxu0 0.0
        %1168 = vmatprep.subr.mxu0 0.0
        %1169 = vmatpush1.msra.mxu0 0.0
        %1170 = vmatprep.subr.mxu0 0.0
        %1171 = vmatpush1.msra.mxu0 0.0
        %1172 = vmatprep.subr.mxu0 0.0
        %1173 = vmatpush1.msra.mxu0 0.0
        %1174 = vmatprep.subr.mxu0 0.0
        %1175 = vmatpush1.msra.mxu0 0.0
        %1176 = vmatprep.subr.mxu0 0.0
        %1177 = vmatpush1.msra.mxu0 0.0
        %1178 = vmatprep.subr.mxu0 0.0
        %1179 = vmatpush1.msra.mxu0 0.0
        %1180 = vmatprep.subr.mxu0 0.0
        %1181 = vmatpush1.msra.mxu0 0.0
        %1182 = vmatprep.subr.mxu0 0.0
        %1183 = vmatpush1.msra.mxu0 0.0
        %1184 = vmatprep.subr.mxu0 0.0
        %1185 = vmatpush1.msra.mxu0 0.0
        %1186 = vmatprep.subr.mxu0 0.0
        %1187 = vmatpush1.msra.mxu0 0.0
        %1188 = vmatprep.subr.mxu0 0.0
        %1189 = vmatpush1.msra.mxu0 0.0
        %1190 = vmatprep.subr.mxu0 0.0
        %1191 = vmatpush1.msra.mxu0 0.0
        %1192 = vmatprep.subr.mxu0 0.0
        %1193 = vmatpush1.msra.mxu0 0.0
        %1194 = vmatprep.subr.mxu0 0.0
        %1195 = vmatpush1.msra.mxu0 0.0
        %1196 = vmatprep.mubr.f32.mxu0 0.0
        %v1197 = vand.u32 %v384, 4294901760
        %1198 = vmatmul.mubr.f32.gmra.mrb[0].mxu0 %v1197
        %v1199 = vpop.f32.mrb[0].mxu0
        %v1200 = vadd.f32 %v1079, %v1199
        %v1201 = vpop.f32.mrb[0].mxu0
        %1202 = vmatprep.mubr.f32.mxu0 0.0
        %v1203 = vand.u32 %v387, 4294901760
        %1204 = vmatmul.mubr.f32.gmra.mrb[0].mxu0 %v1203
        %v1205 = vpop.f32.mrb[0].mxu0
        %v1206 = vadd.f32 %v1085, %v1205
        %v1207 = vpop.f32.mrb[0].mxu0
        %1208 = vmatprep.mubr.f32.mxu0 0.0
        %v1209 = vand.u32 %v390, 4294901760
        %1210 = vmatmul.mubr.f32.gmra.mrb[0].mxu0 %v1209
        %v1211 = vpop.f32.mrb[0].mxu0
        %v1212 = vadd.f32 %v1091, %v1211
        %v1213 = vpop.f32.mrb[0].mxu0
        %1214 = vmatprep.mubr.f32.mxu0 0.0
        %v1215 = vand.u32 %v393, 4294901760
        %1216 = vmatmul.mubr.f32.gmra.mrb[0].mxu0 %v1215
        %v1217 = vpop.f32.mrb[0].mxu0
        %v1218 = vadd.f32 %v1097, %v1217
        %v1219 = vpop.f32.mrb[0].mxu0
        %1220 = vmatprep.mubr.f32.mxu0 0.0
        %v1221 = vand.u32 %v396, 4294901760
        %1222 = vmatmul.mubr.f32.gmra.mrb[0].mxu0 %v1221
        %v1223 = vpop.f32.mrb[0].mxu0
        %v1224 = vadd.f32 %v1103, %v1223
        %v1225 = vpop.f32.mrb[0].mxu0
        %1226 = vmatprep.mubr.f32.mxu0 0.0
        %v1227 = vand.u32 %v399, 4294901760
        %1228 = vmatmul.mubr.f32.gmra.mrb[0].mxu0 %v1227
        %v1229 = vpop.f32.mrb[0].mxu0
        %v1230 = vadd.f32 %v1109, %v1229
        %v1231 = vpop.f32.mrb[0].mxu0
        %1232 = vmatprep.mubr.f32.mxu0 0.0
        %v1233 = vand.u32 %v402, 4294901760
        %1234 = vmatmul.mubr.f32.gmra.mrb[0].mxu0 %v1233
        %v1235 = vpop.f32.mrb[0].mxu0
        %v1236 = vadd.f32 %v1115, %v1235
        %v1237 = vpop.f32.mrb[0].mxu0
        %1238 = vmatprep.mubr.f32.mxu0 0.0
        %v1239 = vand.u32 %v405, 4294901760
        %1240 = vmatmul.mubr.f32.gmra.mrb[0].mxu0 %v1239
        %v1241 = vpop.f32.mrb[0].mxu0
        %v1242 = vadd.f32 %v1121, %v1241
        %v1243 = vpop.f32.mrb[0].mxu0
        %1244 = vdwg.mxu0
        %1245 = vst [vmem:[#allocation2] sm:$0xff] %v1200
        %1246 = vst [vmem:[#allocation2 + $0x8] sm:$0xff] %v1206
        %1247 = vst [vmem:[#allocation2 + $0x10] sm:$0xff] %v1212
        %1248 = vst [vmem:[#allocation2 + $0x18] sm:$0xff] %v1218
        %1249 = vst [vmem:[#allocation2 + $0x20] sm:$0xff] %v1224
        %1250 = vst [vmem:[#allocation2 + $0x28] sm:$0xff] %v1230
        %1251 = vst [vmem:[#allocation2 + $0x30] sm:$0xff] %v1236
        %1252 = vst [vmem:[#allocation2 + $0x38] sm:$0xff] %v1242
        %v1253 = vld [vmem:[%s3] sm:$0xff]
        %v1254 = vld [vmem:[%s3 + $0x8] sm:$0xff]
        %v1255 = vld [vmem:[%s3 + $0x10] sm:$0xff]
        %v1256 = vld [vmem:[%s3 + $0x18] sm:$0xff]
        %v1257 = vld [vmem:[%s3 + $0x20] sm:$0xff]
        %v1258 = vld [vmem:[%s3 + $0x28] sm:$0xff]
        %v1259 = vld [vmem:[%s3 + $0x30] sm:$0xff]
        %v1260 = vld [vmem:[%s3 + $0x38] sm:$0xff]
        %v1261 = vld [vmem:[%s3 + $0x40] sm:$0xff]
        %v1262 = vld [vmem:[%s3 + $0x48] sm:$0xff]
        %v1263 = vld [vmem:[%s3 + $0x50] sm:$0xff]
        %v1264 = vld [vmem:[%s3 + $0x58] sm:$0xff]
        %v1265 = vld [vmem:[%s3 + $0x60] sm:$0xff]
        %v1266 = vld [vmem:[%s3 + $0x68] sm:$0xff]
        %v1267 = vld [vmem:[%s3 + $0x70] sm:$0xff]
        %v1268 = vld [vmem:[%s3 + $0x78] sm:$0xff]
        %v1269 = vld [vmem:[#allocation3] sm:$0xff]
        %s1270 = scalar_select %p353, 1, 0
        %s1271 = scvt.s32.f32 %s1270
        %v1272 = vld [vmem:[%s337] sm:$0xff]
        %v1273 = vstv %s1271
        %v1274 = vmul.f32 %v1273, %v1272
        %s1275 = ssub.f32 1.0, %s1271
        %v1276 = vmax.f32 %v1269, 0.0
        %v1277 = vstv %s1275
        %v1278 = vmul.f32 %v1277, %v1276
        %v1279 = vadd.f32 %v1274, %v1278
        %1280 = vmatprep.subr.mxu0 0.0
        %v1281 = vand.u32 %v1253, 4294901760
        %1282 = vmatpush1.msra.mxu0 %v1281
        %1283 = vmatprep.subr.mxu0 0.0
        %v1284 = vand.u32 %v1254, 4294901760
        %1285 = vmatpush1.msra.mxu0 %v1284
        %1286 = vmatprep.subr.mxu0 0.0
        %v1287 = vand.u32 %v1255, 4294901760
        %1288 = vmatpush1.msra.mxu0 %v1287
        %1289 = vmatprep.subr.mxu0 0.0
        %v1290 = vand.u32 %v1256, 4294901760
        %1291 = vmatpush1.msra.mxu0 %v1290
        %1292 = vmatprep.subr.mxu0 0.0
        %v1293 = vand.u32 %v1257, 4294901760
        %1294 = vmatpush1.msra.mxu0 %v1293
        %1295 = vmatprep.subr.mxu0 0.0
        %v1296 = vand.u32 %v1258, 4294901760
        %1297 = vmatpush1.msra.mxu0 %v1296
        %1298 = vmatprep.subr.mxu0 0.0
        %v1299 = vand.u32 %v1259, 4294901760
        %1300 = vmatpush1.msra.mxu0 %v1299
        %1301 = vmatprep.subr.mxu0 0.0
        %v1302 = vand.u32 %v1260, 4294901760
        %1303 = vmatpush1.msra.mxu0 %v1302
        %1304 = vmatprep.subr.mxu0 0.0
        %v1305 = vand.u32 %v1261, 4294901760
        %1306 = vmatpush1.msra.mxu0 %v1305
        %1307 = vmatprep.subr.mxu0 0.0
        %v1308 = vand.u32 %v1262, 4294901760
        %1309 = vmatpush1.msra.mxu0 %v1308
        %1310 = vmatprep.subr.mxu0 0.0
        %v1311 = vand.u32 %v1263, 4294901760
        %1312 = vmatpush1.msra.mxu0 %v1311
        %1313 = vmatprep.subr.mxu0 0.0
        %v1314 = vand.u32 %v1264, 4294901760
        %1315 = vmatpush1.msra.mxu0 %v1314
        %1316 = vmatprep.subr.mxu0 0.0
        %v1317 = vand.u32 %v1265, 4294901760
        %1318 = vmatpush1.msra.mxu0 %v1317
        %1319 = vmatprep.subr.mxu0 0.0
        %v1320 = vand.u32 %v1266, 4294901760
        %1321 = vmatpush1.msra.mxu0 %v1320
        %1322 = vmatprep.subr.mxu0 0.0
        %v1323 = vand.u32 %v1267, 4294901760
        %1324 = vmatpush1.msra.mxu0 %v1323
        %1325 = vmatprep.subr.mxu0 0.0
        %v1326 = vand.u32 %v1268, 4294901760
        %1327 = vmatpush1.msra.mxu0 %v1326
        %1328 = vmatprep.subr.mxu0 0.0
        %1329 = vmatpush1.msra.mxu0 0.0
        %1330 = vmatprep.subr.mxu0 0.0
        %1331 = vmatpush1.msra.mxu0 0.0
        %1332 = vmatprep.subr.mxu0 0.0
        %1333 = vmatpush1.msra.mxu0 0.0
        %1334 = vmatprep.subr.mxu0 0.0
        %1335 = vmatpush1.msra.mxu0 0.0
        %1336 = vmatprep.subr.mxu0 0.0
        %1337 = vmatpush1.msra.mxu0 0.0
        %1338 = vmatprep.subr.mxu0 0.0
        %1339 = vmatpush1.msra.mxu0 0.0
        %1340 = vmatprep.subr.mxu0 0.0
        %1341 = vmatpush1.msra.mxu0 0.0
        %1342 = vmatprep.subr.mxu0 0.0
        %1343 = vmatpush1.msra.mxu0 0.0
        %1344 = vmatprep.subr.mxu0 0.0
        %1345 = vmatpush1.msra.mxu0 0.0
        %1346 = vmatprep.subr.mxu0 0.0
        %1347 = vmatpush1.msra.mxu0 0.0
        %1348 = vmatprep.subr.mxu0 0.0
        %1349 = vmatpush1.msra.mxu0 0.0
        %1350 = vmatprep.subr.mxu0 0.0
        %1351 = vmatpush1.msra.mxu0 0.0
        %1352 = vmatprep.subr.mxu0 0.0
        %1353 = vmatpush1.msra.mxu0 0.0
        %1354 = vmatprep.subr.mxu0 0.0
        %1355 = vmatpush1.msra.mxu0 0.0
        %1356 = vmatprep.subr.mxu0 0.0
        %1357 = vmatpush1.msra.mxu0 0.0
        %1358 = vmatprep.subr.mxu0 0.0
        %1359 = vmatpush1.msra.mxu0 0.0
        %1360 = vmatprep.mubr.f32.mxu0 0.0
        %v1361 = vand.u32 %v1279, 4294901760
        %v1362 = vsub.f32 %v1279, %v1361
        %v1363 = vand.u32 %v1362, 4294901760
        %v1364 = vsub.f32 %v1362, %v1363
        %v1365 = vand.u32 %v1364, 4294901760
        %1366 = vmatmul.mubr.f32.gmra.mrb[0].mxu0 %v1365
        %v1367 = vpop.f32.mrb[0].mxu0
        %v1368 = vadd.f32 0.0, %v1367
        %v1369 = vpop.f32.mrb[0].mxu0
        %1370 = vdwg.mxu0
        %1371 = vmatprep.subr.mxu0 0.0
        %v1372 = vand.u32 %v1253, 4294901760
        %v1373 = vsub.f32 %v1253, %v1372
        %v1374 = vand.u32 %v1373, 4294901760
        %v1375 = vsub.f32 %v1373, %v1374
        %v1376 = vand.u32 %v1375, 4294901760
        %1377 = vmatpush1.msra.mxu0 %v1376
        %1378 = vmatprep.subr.mxu0 0.0
        %v1379 = vand.u32 %v1254, 4294901760
        %v1380 = vsub.f32 %v1254, %v1379
        %v1381 = vand.u32 %v1380, 4294901760
        %v1382 = vsub.f32 %v1380, %v1381
        %v1383 = vand.u32 %v1382, 4294901760
        %1384 = vmatpush1.msra.mxu0 %v1383
        %1385 = vmatprep.subr.mxu0 0.0
        %v1386 = vand.u32 %v1255, 4294901760
        %v1387 = vsub.f32 %v1255, %v1386
        %v1388 = vand.u32 %v1387, 4294901760
        %v1389 = vsub.f32 %v1387, %v1388
        %v1390 = vand.u32 %v1389, 4294901760
        %1391 = vmatpush1.msra.mxu0 %v1390
        %1392 = vmatprep.subr.mxu0 0.0
        %v1393 = vand.u32 %v1256, 4294901760
        %v1394 = vsub.f32 %v1256, %v1393
        %v1395 = vand.u32 %v1394, 4294901760
        %v1396 = vsub.f32 %v1394, %v1395
        %v1397 = vand.u32 %v1396, 4294901760
        %1398 = vmatpush1.msra.mxu0 %v1397
        %1399 = vmatprep.subr.mxu0 0.0
        %v1400 = vand.u32 %v1257, 4294901760
        %v1401 = vsub.f32 %v1257, %v1400
        %v1402 = vand.u32 %v1401, 4294901760
        %v1403 = vsub.f32 %v1401, %v1402
        %v1404 = vand.u32 %v1403, 4294901760
        %1405 = vmatpush1.msra.mxu0 %v1404
        %1406 = vmatprep.subr.mxu0 0.0
        %v1407 = vand.u32 %v1258, 4294901760
        %v1408 = vsub.f32 %v1258, %v1407
        %v1409 = vand.u32 %v1408, 4294901760
        %v1410 = vsub.f32 %v1408, %v1409
        %v1411 = vand.u32 %v1410, 4294901760
        %1412 = vmatpush1.msra.mxu0 %v1411
        %1413 = vmatprep.subr.mxu0 0.0
        %v1414 = vand.u32 %v1259, 4294901760
        %v1415 = vsub.f32 %v1259, %v1414
        %v1416 = vand.u32 %v1415, 4294901760
        %v1417 = vsub.f32 %v1415, %v1416
        %v1418 = vand.u32 %v1417, 4294901760
        %1419 = vmatpush1.msra.mxu0 %v1418
        %1420 = vmatprep.subr.mxu0 0.0
        %v1421 = vand.u32 %v1260, 4294901760
        %v1422 = vsub.f32 %v1260, %v1421
        %v1423 = vand.u32 %v1422, 4294901760
        %v1424 = vsub.f32 %v1422, %v1423
        %v1425 = vand.u32 %v1424, 4294901760
        %1426 = vmatpush1.msra.mxu0 %v1425
        %1427 = vmatprep.subr.mxu0 0.0
        %v1428 = vand.u32 %v1261, 4294901760
        %v1429 = vsub.f32 %v1261, %v1428
        %v1430 = vand.u32 %v1429, 4294901760
        %v1431 = vsub.f32 %v1429, %v1430
        %v1432 = vand.u32 %v1431, 4294901760
        %1433 = vmatpush1.msra.mxu0 %v1432
        %1434 = vmatprep.subr.mxu0 0.0
        %v1435 = vand.u32 %v1262, 4294901760
        %v1436 = vsub.f32 %v1262, %v1435
        %v1437 = vand.u32 %v1436, 4294901760
        %v1438 = vsub.f32 %v1436, %v1437
        %v1439 = vand.u32 %v1438, 4294901760
        %1440 = vmatpush1.msra.mxu0 %v1439
        %1441 = vmatprep.subr.mxu0 0.0
        %v1442 = vand.u32 %v1263, 4294901760
        %v1443 = vsub.f32 %v1263, %v1442
        %v1444 = vand.u32 %v1443, 4294901760
        %v1445 = vsub.f32 %v1443, %v1444
        %v1446 = vand.u32 %v1445, 4294901760
        %1447 = vmatpush1.msra.mxu0 %v1446
        %1448 = vmatprep.subr.mxu0 0.0
        %v1449 = vand.u32 %v1264, 4294901760
        %v1450 = vsub.f32 %v1264, %v1449
        %v1451 = vand.u32 %v1450, 4294901760
        %v1452 = vsub.f32 %v1450, %v1451
        %v1453 = vand.u32 %v1452, 4294901760
        %1454 = vmatpush1.msra.mxu0 %v1453
        %1455 = vmatprep.subr.mxu0 0.0
        %v1456 = vand.u32 %v1265, 4294901760
        %v1457 = vsub.f32 %v1265, %v1456
        %v1458 = vand.u32 %v1457, 4294901760
        %v1459 = vsub.f32 %v1457, %v1458
        %v1460 = vand.u32 %v1459, 4294901760
        %1461 = vmatpush1.msra.mxu0 %v1460
        %1462 = vmatprep.subr.mxu0 0.0
        %v1463 = vand.u32 %v1266, 4294901760
        %v1464 = vsub.f32 %v1266, %v1463
        %v1465 = vand.u32 %v1464, 4294901760
        %v1466 = vsub.f32 %v1464, %v1465
        %v1467 = vand.u32 %v1466, 4294901760
        %1468 = vmatpush1.msra.mxu0 %v1467
        %1469 = vmatprep.subr.mxu0 0.0
        %v1470 = vand.u32 %v1267, 4294901760
        %v1471 = vsub.f32 %v1267, %v1470
        %v1472 = vand.u32 %v1471, 4294901760
        %v1473 = vsub.f32 %v1471, %v1472
        %v1474 = vand.u32 %v1473, 4294901760
        %1475 = vmatpush1.msra.mxu0 %v1474
        %1476 = vmatprep.subr.mxu0 0.0
        %v1477 = vand.u32 %v1268, 4294901760
        %v1478 = vsub.f32 %v1268, %v1477
        %v1479 = vand.u32 %v1478, 4294901760
        %v1480 = vsub.f32 %v1478, %v1479
        %v1481 = vand.u32 %v1480, 4294901760
        %1482 = vmatpush1.msra.mxu0 %v1481
        %1483 = vmatprep.subr.mxu0 0.0
        %1484 = vmatpush1.msra.mxu0 0.0
        %1485 = vmatprep.subr.mxu0 0.0
        %1486 = vmatpush1.msra.mxu0 0.0
        %1487 = vmatprep.subr.mxu0 0.0
        %1488 = vmatpush1.msra.mxu0 0.0
        %1489 = vmatprep.subr.mxu0 0.0
        %1490 = vmatpush1.msra.mxu0 0.0
        %1491 = vmatprep.subr.mxu0 0.0
        %1492 = vmatpush1.msra.mxu0 0.0
        %1493 = vmatprep.subr.mxu0 0.0
        %1494 = vmatpush1.msra.mxu0 0.0
        %1495 = vmatprep.subr.mxu0 0.0
        %1496 = vmatpush1.msra.mxu0 0.0
        %1497 = vmatprep.subr.mxu0 0.0
        %1498 = vmatpush1.msra.mxu0 0.0
        %1499 = vmatprep.subr.mxu0 0.0
        %1500 = vmatpush1.msra.mxu0 0.0
        %1501 = vmatprep.subr.mxu0 0.0
        %1502 = vmatpush1.msra.mxu0 0.0
        %1503 = vmatprep.subr.mxu0 0.0
        %1504 = vmatpush1.msra.mxu0 0.0
        %1505 = vmatprep.subr.mxu0 0.0
        %1506 = vmatpush1.msra.mxu0 0.0
        %1507 = vmatprep.subr.mxu0 0.0
        %1508 = vmatpush1.msra.mxu0 0.0
        %1509 = vmatprep.subr.mxu0 0.0
        %1510 = vmatpush1.msra.mxu0 0.0
        %1511 = vmatprep.subr.mxu0 0.0
        %1512 = vmatpush1.msra.mxu0 0.0
        %1513 = vmatprep.subr.mxu0 0.0
        %1514 = vmatpush1.msra.mxu0 0.0
        %1515 = vmatprep.mubr.f32.mxu0 0.0
        %v1516 = vand.u32 %v1279, 4294901760
        %1517 = vmatmul.mubr.f32.gmra.mrb[0].mxu0 %v1516
        %v1518 = vpop.f32.mrb[0].mxu0
        %v1519 = vadd.f32 %v1368, %v1518
        %v1520 = vpop.f32.mrb[0].mxu0
        %1521 = vdwg.mxu0
        %1522 = vmatprep.subr.mxu0 0.0
        %v1523 = vand.u32 %v1253, 4294901760
        %v1524 = vsub.f32 %v1253, %v1523
        %1525 = vmatpush1.msra.mxu0 %v1524
        %1526 = vmatprep.subr.mxu0 0.0
        %v1527 = vand.u32 %v1254, 4294901760
        %v1528 = vsub.f32 %v1254, %v1527
        %1529 = vmatpush1.msra.mxu0 %v1528
        %1530 = vmatprep.subr.mxu0 0.0
        %v1531 = vand.u32 %v1255, 4294901760
        %v1532 = vsub.f32 %v1255, %v1531
        %1533 = vmatpush1.msra.mxu0 %v1532
        %1534 = vmatprep.subr.mxu0 0.0
        %v1535 = vand.u32 %v1256, 4294901760
        %v1536 = vsub.f32 %v1256, %v1535
        %1537 = vmatpush1.msra.mxu0 %v1536
        %1538 = vmatprep.subr.mxu0 0.0
        %v1539 = vand.u32 %v1257, 4294901760
        %v1540 = vsub.f32 %v1257, %v1539
        %1541 = vmatpush1.msra.mxu0 %v1540
        %1542 = vmatprep.subr.mxu0 0.0
        %v1543 = vand.u32 %v1258, 4294901760
        %v1544 = vsub.f32 %v1258, %v1543
        %1545 = vmatpush1.msra.mxu0 %v1544
        %1546 = vmatprep.subr.mxu0 0.0
        %v1547 = vand.u32 %v1259, 4294901760
        %v1548 = vsub.f32 %v1259, %v1547
        %1549 = vmatpush1.msra.mxu0 %v1548
        %1550 = vmatprep.subr.mxu0 0.0
        %v1551 = vand.u32 %v1260, 4294901760
        %v1552 = vsub.f32 %v1260, %v1551
        %1553 = vmatpush1.msra.mxu0 %v1552
        %1554 = vmatprep.subr.mxu0 0.0
        %v1555 = vand.u32 %v1261, 4294901760
        %v1556 = vsub.f32 %v1261, %v1555
        %1557 = vmatpush1.msra.mxu0 %v1556
        %1558 = vmatprep.subr.mxu0 0.0
        %v1559 = vand.u32 %v1262, 4294901760
        %v1560 = vsub.f32 %v1262, %v1559
        %1561 = vmatpush1.msra.mxu0 %v1560
        %1562 = vmatprep.subr.mxu0 0.0
        %v1563 = vand.u32 %v1263, 4294901760
        %v1564 = vsub.f32 %v1263, %v1563
        %1565 = vmatpush1.msra.mxu0 %v1564
        %1566 = vmatprep.subr.mxu0 0.0
        %v1567 = vand.u32 %v1264, 4294901760
        %v1568 = vsub.f32 %v1264, %v1567
        %1569 = vmatpush1.msra.mxu0 %v1568
        %1570 = vmatprep.subr.mxu0 0.0
        %v1571 = vand.u32 %v1265, 4294901760
        %v1572 = vsub.f32 %v1265, %v1571
        %1573 = vmatpush1.msra.mxu0 %v1572
        %1574 = vmatprep.subr.mxu0 0.0
        %v1575 = vand.u32 %v1266, 4294901760
        %v1576 = vsub.f32 %v1266, %v1575
        %1577 = vmatpush1.msra.mxu0 %v1576
        %1578 = vmatprep.subr.mxu0 0.0
        %v1579 = vand.u32 %v1267, 4294901760
        %v1580 = vsub.f32 %v1267, %v1579
        %1581 = vmatpush1.msra.mxu0 %v1580
        %1582 = vmatprep.subr.mxu0 0.0
        %v1583 = vand.u32 %v1268, 4294901760
        %v1584 = vsub.f32 %v1268, %v1583
        %1585 = vmatpush1.msra.mxu0 %v1584
        %1586 = vmatprep.subr.mxu0 0.0
        %1587 = vmatpush1.msra.mxu0 0.0
        %1588 = vmatprep.subr.mxu0 0.0
        %1589 = vmatpush1.msra.mxu0 0.0
        %1590 = vmatprep.subr.mxu0 0.0
        %1591 = vmatpush1.msra.mxu0 0.0
        %1592 = vmatprep.subr.mxu0 0.0
        %1593 = vmatpush1.msra.mxu0 0.0
        %1594 = vmatprep.subr.mxu0 0.0
        %1595 = vmatpush1.msra.mxu0 0.0
        %1596 = vmatprep.subr.mxu0 0.0
        %1597 = vmatpush1.msra.mxu0 0.0
        %1598 = vmatprep.subr.mxu0 0.0
        %1599 = vmatpush1.msra.mxu0 0.0
        %1600 = vmatprep.subr.mxu0 0.0
        %1601 = vmatpush1.msra.mxu0 0.0
        %1602 = vmatprep.subr.mxu0 0.0
        %1603 = vmatpush1.msra.mxu0 0.0
        %1604 = vmatprep.subr.mxu0 0.0
        %1605 = vmatpush1.msra.mxu0 0.0
        %1606 = vmatprep.subr.mxu0 0.0
        %1607 = vmatpush1.msra.mxu0 0.0
        %1608 = vmatprep.subr.mxu0 0.0
        %1609 = vmatpush1.msra.mxu0 0.0
        %1610 = vmatprep.subr.mxu0 0.0
        %1611 = vmatpush1.msra.mxu0 0.0
        %1612 = vmatprep.subr.mxu0 0.0
        %1613 = vmatpush1.msra.mxu0 0.0
        %1614 = vmatprep.subr.mxu0 0.0
        %1615 = vmatpush1.msra.mxu0 0.0
        %1616 = vmatprep.subr.mxu0 0.0
        %1617 = vmatpush1.msra.mxu0 0.0
        %1618 = vmatprep.mubr.f32.mxu0 0.0
        %v1619 = vand.u32 %v1279, 4294901760
        %v1620 = vsub.f32 %v1279, %v1619
        %1621 = vmatmul.mubr.f32.gmra.mrb[0].mxu0 %v1620
        %v1622 = vpop.f32.mrb[0].mxu0
        %v1623 = vadd.f32 %v1519, %v1622
        %v1624 = vpop.f32.mrb[0].mxu0
        %1625 = vdwg.mxu0
        %1626 = vmatprep.subr.mxu0 0.0
        %v1627 = vand.u32 %v1253, 4294901760
        %1628 = vmatpush1.msra.mxu0 %v1627
        %1629 = vmatprep.subr.mxu0 0.0
        %v1630 = vand.u32 %v1254, 4294901760
        %1631 = vmatpush1.msra.mxu0 %v1630
        %1632 = vmatprep.subr.mxu0 0.0
        %v1633 = vand.u32 %v1255, 4294901760
        %1634 = vmatpush1.msra.mxu0 %v1633
        %1635 = vmatprep.subr.mxu0 0.0
        %v1636 = vand.u32 %v1256, 4294901760
        %1637 = vmatpush1.msra.mxu0 %v1636
        %1638 = vmatprep.subr.mxu0 0.0
        %v1639 = vand.u32 %v1257, 4294901760
        %1640 = vmatpush1.msra.mxu0 %v1639
        %1641 = vmatprep.subr.mxu0 0.0
        %v1642 = vand.u32 %v1258, 4294901760
        %1643 = vmatpush1.msra.mxu0 %v1642
        %1644 = vmatprep.subr.mxu0 0.0
        %v1645 = vand.u32 %v1259, 4294901760
        %1646 = vmatpush1.msra.mxu0 %v1645
        %1647 = vmatprep.subr.mxu0 0.0
        %v1648 = vand.u32 %v1260, 4294901760
        %1649 = vmatpush1.msra.mxu0 %v1648
        %1650 = vmatprep.subr.mxu0 0.0
        %v1651 = vand.u32 %v1261, 4294901760
        %1652 = vmatpush1.msra.mxu0 %v1651
        %1653 = vmatprep.subr.mxu0 0.0
        %v1654 = vand.u32 %v1262, 4294901760
        %1655 = vmatpush1.msra.mxu0 %v1654
        %1656 = vmatprep.subr.mxu0 0.0
        %v1657 = vand.u32 %v1263, 4294901760
        %1658 = vmatpush1.msra.mxu0 %v1657
        %1659 = vmatprep.subr.mxu0 0.0
        %v1660 = vand.u32 %v1264, 4294901760
        %1661 = vmatpush1.msra.mxu0 %v1660
        %1662 = vmatprep.subr.mxu0 0.0
        %v1663 = vand.u32 %v1265, 4294901760
        %1664 = vmatpush1.msra.mxu0 %v1663
        %1665 = vmatprep.subr.mxu0 0.0
        %v1666 = vand.u32 %v1266, 4294901760
        %1667 = vmatpush1.msra.mxu0 %v1666
        %1668 = vmatprep.subr.mxu0 0.0
        %v1669 = vand.u32 %v1267, 4294901760
        %1670 = vmatpush1.msra.mxu0 %v1669
        %1671 = vmatprep.subr.mxu0 0.0
        %v1672 = vand.u32 %v1268, 4294901760
        %1673 = vmatpush1.msra.mxu0 %v1672
        %1674 = vmatprep.subr.mxu0 0.0
        %1675 = vmatpush1.msra.mxu0 0.0
        %1676 = vmatprep.subr.mxu0 0.0
        %1677 = vmatpush1.msra.mxu0 0.0
        %1678 = vmatprep.subr.mxu0 0.0
        %1679 = vmatpush1.msra.mxu0 0.0
        %1680 = vmatprep.subr.mxu0 0.0
        %1681 = vmatpush1.msra.mxu0 0.0
        %1682 = vmatprep.subr.mxu0 0.0
        %1683 = vmatpush1.msra.mxu0 0.0
        %1684 = vmatprep.subr.mxu0 0.0
        %1685 = vmatpush1.msra.mxu0 0.0
        %1686 = vmatprep.subr.mxu0 0.0
        %1687 = vmatpush1.msra.mxu0 0.0
        %1688 = vmatprep.subr.mxu0 0.0
        %1689 = vmatpush1.msra.mxu0 0.0
        %1690 = vmatprep.subr.mxu0 0.0
        %1691 = vmatpush1.msra.mxu0 0.0
        %1692 = vmatprep.subr.mxu0 0.0
        %1693 = vmatpush1.msra.mxu0 0.0
        %1694 = vmatprep.subr.mxu0 0.0
        %1695 = vmatpush1.msra.mxu0 0.0
        %1696 = vmatprep.subr.mxu0 0.0
        %1697 = vmatpush1.msra.mxu0 0.0
        %1698 = vmatprep.subr.mxu0 0.0
        %1699 = vmatpush1.msra.mxu0 0.0
        %1700 = vmatprep.subr.mxu0 0.0
        %1701 = vmatpush1.msra.mxu0 0.0
        %1702 = vmatprep.subr.mxu0 0.0
        %1703 = vmatpush1.msra.mxu0 0.0
        %1704 = vmatprep.subr.mxu0 0.0
        %1705 = vmatpush1.msra.mxu0 0.0
        %1706 = vmatprep.mubr.f32.mxu0 0.0
        %v1707 = vand.u32 %v1279, 4294901760
        %v1708 = vsub.f32 %v1279, %v1707
        %v1709 = vand.u32 %v1708, 4294901760
        %1710 = vmatmul.mubr.f32.gmra.mrb[0].mxu0 %v1709
        %v1711 = vpop.f32.mrb[0].mxu0
        %v1712 = vadd.f32 %v1623, %v1711
        %v1713 = vpop.f32.mrb[0].mxu0
        %1714 = vdwg.mxu0
        %1715 = vmatprep.subr.mxu0 0.0
        %v1716 = vand.u32 %v1253, 4294901760
        %v1717 = vsub.f32 %v1253, %v1716
        %v1718 = vand.u32 %v1717, 4294901760
        %1719 = vmatpush1.msra.mxu0 %v1718
        %1720 = vmatprep.subr.mxu0 0.0
        %v1721 = vand.u32 %v1254, 4294901760
        %v1722 = vsub.f32 %v1254, %v1721
        %v1723 = vand.u32 %v1722, 4294901760
        %1724 = vmatpush1.msra.mxu0 %v1723
        %1725 = vmatprep.subr.mxu0 0.0
        %v1726 = vand.u32 %v1255, 4294901760
        %v1727 = vsub.f32 %v1255, %v1726
        %v1728 = vand.u32 %v1727, 4294901760
        %1729 = vmatpush1.msra.mxu0 %v1728
        %1730 = vmatprep.subr.mxu0 0.0
        %v1731 = vand.u32 %v1256, 4294901760
        %v1732 = vsub.f32 %v1256, %v1731
        %v1733 = vand.u32 %v1732, 4294901760
        %1734 = vmatpush1.msra.mxu0 %v1733
        %1735 = vmatprep.subr.mxu0 0.0
        %v1736 = vand.u32 %v1257, 4294901760
        %v1737 = vsub.f32 %v1257, %v1736
        %v1738 = vand.u32 %v1737, 4294901760
        %1739 = vmatpush1.msra.mxu0 %v1738
        %1740 = vmatprep.subr.mxu0 0.0
        %v1741 = vand.u32 %v1258, 4294901760
        %v1742 = vsub.f32 %v1258, %v1741
        %v1743 = vand.u32 %v1742, 4294901760
        %1744 = vmatpush1.msra.mxu0 %v1743
        %1745 = vmatprep.subr.mxu0 0.0
        %v1746 = vand.u32 %v1259, 4294901760
        %v1747 = vsub.f32 %v1259, %v1746
        %v1748 = vand.u32 %v1747, 4294901760
        %1749 = vmatpush1.msra.mxu0 %v1748
        %1750 = vmatprep.subr.mxu0 0.0
        %v1751 = vand.u32 %v1260, 4294901760
        %v1752 = vsub.f32 %v1260, %v1751
        %v1753 = vand.u32 %v1752, 4294901760
        %1754 = vmatpush1.msra.mxu0 %v1753
        %1755 = vmatprep.subr.mxu0 0.0
        %v1756 = vand.u32 %v1261, 4294901760
        %v1757 = vsub.f32 %v1261, %v1756
        %v1758 = vand.u32 %v1757, 4294901760
        %1759 = vmatpush1.msra.mxu0 %v1758
        %1760 = vmatprep.subr.mxu0 0.0
        %v1761 = vand.u32 %v1262, 4294901760
        %v1762 = vsub.f32 %v1262, %v1761
        %v1763 = vand.u32 %v1762, 4294901760
        %1764 = vmatpush1.msra.mxu0 %v1763
        %1765 = vmatprep.subr.mxu0 0.0
        %v1766 = vand.u32 %v1263, 4294901760
        %v1767 = vsub.f32 %v1263, %v1766
        %v1768 = vand.u32 %v1767, 4294901760
        %1769 = vmatpush1.msra.mxu0 %v1768
        %1770 = vmatprep.subr.mxu0 0.0
        %v1771 = vand.u32 %v1264, 4294901760
        %v1772 = vsub.f32 %v1264, %v1771
        %v1773 = vand.u32 %v1772, 4294901760
        %1774 = vmatpush1.msra.mxu0 %v1773
        %1775 = vmatprep.subr.mxu0 0.0
        %v1776 = vand.u32 %v1265, 4294901760
        %v1777 = vsub.f32 %v1265, %v1776
        %v1778 = vand.u32 %v1777, 4294901760
        %1779 = vmatpush1.msra.mxu0 %v1778
        %1780 = vmatprep.subr.mxu0 0.0
        %v1781 = vand.u32 %v1266, 4294901760
        %v1782 = vsub.f32 %v1266, %v1781
        %v1783 = vand.u32 %v1782, 4294901760
        %1784 = vmatpush1.msra.mxu0 %v1783
        %1785 = vmatprep.subr.mxu0 0.0
        %v1786 = vand.u32 %v1267, 4294901760
        %v1787 = vsub.f32 %v1267, %v1786
        %v1788 = vand.u32 %v1787, 4294901760
        %1789 = vmatpush1.msra.mxu0 %v1788
        %1790 = vmatprep.subr.mxu0 0.0
        %v1791 = vand.u32 %v1268, 4294901760
        %v1792 = vsub.f32 %v1268, %v1791
        %v1793 = vand.u32 %v1792, 4294901760
        %1794 = vmatpush1.msra.mxu0 %v1793
        %1795 = vmatprep.subr.mxu0 0.0
        %1796 = vmatpush1.msra.mxu0 0.0
        %1797 = vmatprep.subr.mxu0 0.0
        %1798 = vmatpush1.msra.mxu0 0.0
        %1799 = vmatprep.subr.mxu0 0.0
        %1800 = vmatpush1.msra.mxu0 0.0
        %1801 = vmatprep.subr.mxu0 0.0
        %1802 = vmatpush1.msra.mxu0 0.0
        %1803 = vmatprep.subr.mxu0 0.0
        %1804 = vmatpush1.msra.mxu0 0.0
        %1805 = vmatprep.subr.mxu0 0.0
        %1806 = vmatpush1.msra.mxu0 0.0
        %1807 = vmatprep.subr.mxu0 0.0
        %1808 = vmatpush1.msra.mxu0 0.0
        %1809 = vmatprep.subr.mxu0 0.0
        %1810 = vmatpush1.msra.mxu0 0.0
        %1811 = vmatprep.subr.mxu0 0.0
        %1812 = vmatpush1.msra.mxu0 0.0
        %1813 = vmatprep.subr.mxu0 0.0
        %1814 = vmatpush1.msra.mxu0 0.0
        %1815 = vmatprep.subr.mxu0 0.0
        %1816 = vmatpush1.msra.mxu0 0.0
        %1817 = vmatprep.subr.mxu0 0.0
        %1818 = vmatpush1.msra.mxu0 0.0
        %1819 = vmatprep.subr.mxu0 0.0
        %1820 = vmatpush1.msra.mxu0 0.0
        %1821 = vmatprep.subr.mxu0 0.0
        %1822 = vmatpush1.msra.mxu0 0.0
        %1823 = vmatprep.subr.mxu0 0.0
        %1824 = vmatpush1.msra.mxu0 0.0
        %1825 = vmatprep.subr.mxu0 0.0
        %1826 = vmatpush1.msra.mxu0 0.0
        %1827 = vmatprep.mubr.f32.mxu0 0.0
        %v1828 = vand.u32 %v1279, 4294901760
        %1829 = vmatmul.mubr.f32.gmra.mrb[0].mxu0 %v1828
        %v1830 = vpop.f32.mrb[0].mxu0
        %v1831 = vadd.f32 %v1712, %v1830
        %v1832 = vpop.f32.mrb[0].mxu0
        %1833 = vdwg.mxu0
        %1834 = vmatprep.subr.mxu0 0.0
        %v1835 = vand.u32 %v1253, 4294901760
        %1836 = vmatpush1.msra.mxu0 %v1835
        %1837 = vmatprep.subr.mxu0 0.0
        %v1838 = vand.u32 %v1254, 4294901760
        %1839 = vmatpush1.msra.mxu0 %v1838
        %1840 = vmatprep.subr.mxu0 0.0
        %v1841 = vand.u32 %v1255, 4294901760
        %1842 = vmatpush1.msra.mxu0 %v1841
        %1843 = vmatprep.subr.mxu0 0.0
        %v1844 = vand.u32 %v1256, 4294901760
        %1845 = vmatpush1.msra.mxu0 %v1844
        %1846 = vmatprep.subr.mxu0 0.0
        %v1847 = vand.u32 %v1257, 4294901760
        %1848 = vmatpush1.msra.mxu0 %v1847
        %1849 = vmatprep.subr.mxu0 0.0
        %v1850 = vand.u32 %v1258, 4294901760
        %1851 = vmatpush1.msra.mxu0 %v1850
        %1852 = vmatprep.subr.mxu0 0.0
        %v1853 = vand.u32 %v1259, 4294901760
        %1854 = vmatpush1.msra.mxu0 %v1853
        %1855 = vmatprep.subr.mxu0 0.0
        %v1856 = vand.u32 %v1260, 4294901760
        %1857 = vmatpush1.msra.mxu0 %v1856
        %1858 = vmatprep.subr.mxu0 0.0
        %v1859 = vand.u32 %v1261, 4294901760
        %1860 = vmatpush1.msra.mxu0 %v1859
        %1861 = vmatprep.subr.mxu0 0.0
        %v1862 = vand.u32 %v1262, 4294901760
        %1863 = vmatpush1.msra.mxu0 %v1862
        %1864 = vmatprep.subr.mxu0 0.0
        %v1865 = vand.u32 %v1263, 4294901760
        %1866 = vmatpush1.msra.mxu0 %v1865
        %1867 = vmatprep.subr.mxu0 0.0
        %v1868 = vand.u32 %v1264, 4294901760
        %1869 = vmatpush1.msra.mxu0 %v1868
        %1870 = vmatprep.subr.mxu0 0.0
        %v1871 = vand.u32 %v1265, 4294901760
        %1872 = vmatpush1.msra.mxu0 %v1871
        %1873 = vmatprep.subr.mxu0 0.0
        %v1874 = vand.u32 %v1266, 4294901760
        %1875 = vmatpush1.msra.mxu0 %v1874
        %1876 = vmatprep.subr.mxu0 0.0
        %v1877 = vand.u32 %v1267, 4294901760
        %1878 = vmatpush1.msra.mxu0 %v1877
        %1879 = vmatprep.subr.mxu0 0.0
        %v1880 = vand.u32 %v1268, 4294901760
        %1881 = vmatpush1.msra.mxu0 %v1880
        %1882 = vmatprep.subr.mxu0 0.0
        %1883 = vmatpush1.msra.mxu0 0.0
        %1884 = vmatprep.subr.mxu0 0.0
        %1885 = vmatpush1.msra.mxu0 0.0
        %1886 = vmatprep.subr.mxu0 0.0
        %1887 = vmatpush1.msra.mxu0 0.0
        %1888 = vmatprep.subr.mxu0 0.0
        %1889 = vmatpush1.msra.mxu0 0.0
        %1890 = vmatprep.subr.mxu0 0.0
        %1891 = vmatpush1.msra.mxu0 0.0
        %1892 = vmatprep.subr.mxu0 0.0
        %1893 = vmatpush1.msra.mxu0 0.0
        %1894 = vmatprep.subr.mxu0 0.0
        %1895 = vmatpush1.msra.mxu0 0.0
        %1896 = vmatprep.subr.mxu0 0.0
        %1897 = vmatpush1.msra.mxu0 0.0
        %1898 = vmatprep.subr.mxu0 0.0
        %1899 = vmatpush1.msra.mxu0 0.0
        %1900 = vmatprep.subr.mxu0 0.0
        %1901 = vmatpush1.msra.mxu0 0.0
        %1902 = vmatprep.subr.mxu0 0.0
        %1903 = vmatpush1.msra.mxu0 0.0
        %1904 = vmatprep.subr.mxu0 0.0
        %1905 = vmatpush1.msra.mxu0 0.0
        %1906 = vmatprep.subr.mxu0 0.0
        %1907 = vmatpush1.msra.mxu0 0.0
        %1908 = vmatprep.subr.mxu0 0.0
        %1909 = vmatpush1.msra.mxu0 0.0
        %1910 = vmatprep.subr.mxu0 0.0
        %1911 = vmatpush1.msra.mxu0 0.0
        %1912 = vmatprep.subr.mxu0 0.0
        %1913 = vmatpush1.msra.mxu0 0.0
        %1914 = vmatprep.mubr.f32.mxu0 0.0
        %v1915 = vand.u32 %v1279, 4294901760
        %1916 = vmatmul.mubr.f32.gmra.mrb[0].mxu0 %v1915
        %v1917 = vpop.f32.mrb[0].mxu0
        %v1918 = vadd.f32 %v1831, %v1917
        %v1919 = vpop.f32.mrb[0].mxu0
        %1920 = vdwg.mxu0
        %v1921 = vld [vmem:[#allocation2] sm:$0xff]
        %v1922 = vmul.f32 %v1269, 0.1
        %v1923 = vsub.f32 0.0, %v1269
        %v1924 = vadd.f32 %v1923, %v1918
        %v1925 = vadd.f32 %v1924, %v1921
        %v1926 = vmul.f32 %v1922, %v1925
        %v1927 = vmax.f32 %v1926, 0.0
        %1928 = vst [vmem:[%s333] sm:$0xff] %v1926
        %1929 = vst [vmem:[%s326] sm:$0xff] %v1927
        %1930 = vmatprep.subr.mxu0 0.0
        %v1931 = vand.u32 %v1253, 4294901760
        %1932 = vmatpush1.msra.mxu0 %v1931
        %1933 = vmatprep.subr.mxu0 0.0
        %v1934 = vand.u32 %v1254, 4294901760
        %1935 = vmatpush1.msra.mxu0 %v1934
        %1936 = vmatprep.subr.mxu0 0.0
        %v1937 = vand.u32 %v1255, 4294901760
        %1938 = vmatpush1.msra.mxu0 %v1937
        %1939 = vmatprep.subr.mxu0 0.0
        %v1940 = vand.u32 %v1256, 4294901760
        %1941 = vmatpush1.msra.mxu0 %v1940
        %1942 = vmatprep.subr.mxu0 0.0
        %v1943 = vand.u32 %v1257, 4294901760
        %1944 = vmatpush1.msra.mxu0 %v1943
        %1945 = vmatprep.subr.mxu0 0.0
        %v1946 = vand.u32 %v1258, 4294901760
        %1947 = vmatpush1.msra.mxu0 %v1946
        %1948 = vmatprep.subr.mxu0 0.0
        %v1949 = vand.u32 %v1259, 4294901760
        %1950 = vmatpush1.msra.mxu0 %v1949
        %1951 = vmatprep.subr.mxu0 0.0
        %v1952 = vand.u32 %v1260, 4294901760
        %1953 = vmatpush1.msra.mxu0 %v1952
        %1954 = vmatprep.subr.mxu0 0.0
        %v1955 = vand.u32 %v1261, 4294901760
        %1956 = vmatpush1.msra.mxu0 %v1955
        %1957 = vmatprep.subr.mxu0 0.0
        %v1958 = vand.u32 %v1262, 4294901760
        %1959 = vmatpush1.msra.mxu0 %v1958
        %1960 = vmatprep.subr.mxu0 0.0
        %v1961 = vand.u32 %v1263, 4294901760
        %1962 = vmatpush1.msra.mxu0 %v1961
        %1963 = vmatprep.subr.mxu0 0.0
        %v1964 = vand.u32 %v1264, 4294901760
        %1965 = vmatpush1.msra.mxu0 %v1964
        %1966 = vmatprep.subr.mxu0 0.0
        %v1967 = vand.u32 %v1265, 4294901760
        %1968 = vmatpush1.msra.mxu0 %v1967
        %1969 = vmatprep.subr.mxu0 0.0
        %v1970 = vand.u32 %v1266, 4294901760
        %1971 = vmatpush1.msra.mxu0 %v1970
        %1972 = vmatprep.subr.mxu0 0.0
        %v1973 = vand.u32 %v1267, 4294901760
        %1974 = vmatpush1.msra.mxu0 %v1973
        %1975 = vmatprep.subr.mxu0 0.0
        %v1976 = vand.u32 %v1268, 4294901760
        %1977 = vmatpush1.msra.mxu0 %v1976
        %1978 = vmatprep.subr.mxu0 0.0
        %1979 = vmatpush1.msra.mxu0 0.0
        %1980 = vmatprep.subr.mxu0 0.0
        %1981 = vmatpush1.msra.mxu0 0.0
        %1982 = vmatprep.subr.mxu0 0.0
        %1983 = vmatpush1.msra.mxu0 0.0
        %1984 = vmatprep.subr.mxu0 0.0
        %1985 = vmatpush1.msra.mxu0 0.0
        %1986 = vmatprep.subr.mxu0 0.0
        %1987 = vmatpush1.msra.mxu0 0.0
        %1988 = vmatprep.subr.mxu0 0.0
        %1989 = vmatpush1.msra.mxu0 0.0
        %1990 = vmatprep.subr.mxu0 0.0
        %1991 = vmatpush1.msra.mxu0 0.0
        %1992 = vmatprep.subr.mxu0 0.0
        %1993 = vmatpush1.msra.mxu0 0.0
        %1994 = vmatprep.subr.mxu0 0.0
        %1995 = vmatpush1.msra.mxu0 0.0
        %1996 = vmatprep.subr.mxu0 0.0
        %1997 = vmatpush1.msra.mxu0 0.0
        %1998 = vmatprep.subr.mxu0 0.0
        %1999 = vmatpush1.msra.mxu0 0.0
        %2000 = vmatprep.subr.mxu0 0.0
        %2001 = vmatpush1.msra.mxu0 0.0
        %2002 = vmatprep.subr.mxu0 0.0
        %2003 = vmatpush1.msra.mxu0 0.0
        %2004 = vmatprep.subr.mxu0 0.0
        %2005 = vmatpush1.msra.mxu0 0.0
        %2006 = vmatprep.subr.mxu0 0.0
        %2007 = vmatpush1.msra.mxu0 0.0
        %2008 = vmatprep.subr.mxu0 0.0
        %2009 = vmatpush1.msra.mxu0 0.0
        %2010 = vmatprep.mubr.f32.mxu0 0.0
        %v2011 = vand.u32 %v1927, 4294901760
        %v2012 = vsub.f32 %v1927, %v2011
        %v2013 = vand.u32 %v2012, 4294901760
        %v2014 = vsub.f32 %v2012, %v2013
        %v2015 = vand.u32 %v2014, 4294901760
        %2016 = vmatmul.mubr.f32.gmra.mrb[0].mxu0 %v2015
        %v2017 = vpop.f32.mrb[0].mxu0
        %v2018 = vadd.f32 0.0, %v2017
        %v2019 = vpop.f32.mrb[0].mxu0
        %2020 = vdwg.mxu0
        %2021 = vmatprep.subr.mxu0 0.0
        %v2022 = vand.u32 %v1253, 4294901760
        %v2023 = vsub.f32 %v1253, %v2022
        %v2024 = vand.u32 %v2023, 4294901760
        %v2025 = vsub.f32 %v2023, %v2024
        %v2026 = vand.u32 %v2025, 4294901760
        %2027 = vmatpush1.msra.mxu0 %v2026
        %2028 = vmatprep.subr.mxu0 0.0
        %v2029 = vand.u32 %v1254, 4294901760
        %v2030 = vsub.f32 %v1254, %v2029
        %v2031 = vand.u32 %v2030, 4294901760
        %v2032 = vsub.f32 %v2030, %v2031
        %v2033 = vand.u32 %v2032, 4294901760
        %2034 = vmatpush1.msra.mxu0 %v2033
        %2035 = vmatprep.subr.mxu0 0.0
        %v2036 = vand.u32 %v1255, 4294901760
        %v2037 = vsub.f32 %v1255, %v2036
        %v2038 = vand.u32 %v2037, 4294901760
        %v2039 = vsub.f32 %v2037, %v2038
        %v2040 = vand.u32 %v2039, 4294901760
        %2041 = vmatpush1.msra.mxu0 %v2040
        %2042 = vmatprep.subr.mxu0 0.0
        %v2043 = vand.u32 %v1256, 4294901760
        %v2044 = vsub.f32 %v1256, %v2043
        %v2045 = vand.u32 %v2044, 4294901760
        %v2046 = vsub.f32 %v2044, %v2045
        %v2047 = vand.u32 %v2046, 4294901760
        %2048 = vmatpush1.msra.mxu0 %v2047
        %2049 = vmatprep.subr.mxu0 0.0
        %v2050 = vand.u32 %v1257, 4294901760
        %v2051 = vsub.f32 %v1257, %v2050
        %v2052 = vand.u32 %v2051, 4294901760
        %v2053 = vsub.f32 %v2051, %v2052
        %v2054 = vand.u32 %v2053, 4294901760
        %2055 = vmatpush1.msra.mxu0 %v2054
        %2056 = vmatprep.subr.mxu0 0.0
        %v2057 = vand.u32 %v1258, 4294901760
        %v2058 = vsub.f32 %v1258, %v2057
        %v2059 = vand.u32 %v2058, 4294901760
        %v2060 = vsub.f32 %v2058, %v2059
        %v2061 = vand.u32 %v2060, 4294901760
        %2062 = vmatpush1.msra.mxu0 %v2061
        %2063 = vmatprep.subr.mxu0 0.0
        %v2064 = vand.u32 %v1259, 4294901760
        %v2065 = vsub.f32 %v1259, %v2064
        %v2066 = vand.u32 %v2065, 4294901760
        %v2067 = vsub.f32 %v2065, %v2066
        %v2068 = vand.u32 %v2067, 4294901760
        %2069 = vmatpush1.msra.mxu0 %v2068
        %2070 = vmatprep.subr.mxu0 0.0
        %v2071 = vand.u32 %v1260, 4294901760
        %v2072 = vsub.f32 %v1260, %v2071
        %v2073 = vand.u32 %v2072, 4294901760
        %v2074 = vsub.f32 %v2072, %v2073
        %v2075 = vand.u32 %v2074, 4294901760
        %2076 = vmatpush1.msra.mxu0 %v2075
        %2077 = vmatprep.subr.mxu0 0.0
        %v2078 = vand.u32 %v1261, 4294901760
        %v2079 = vsub.f32 %v1261, %v2078
        %v2080 = vand.u32 %v2079, 4294901760
        %v2081 = vsub.f32 %v2079, %v2080
        %v2082 = vand.u32 %v2081, 4294901760
        %2083 = vmatpush1.msra.mxu0 %v2082
        %2084 = vmatprep.subr.mxu0 0.0
        %v2085 = vand.u32 %v1262, 4294901760
        %v2086 = vsub.f32 %v1262, %v2085
        %v2087 = vand.u32 %v2086, 4294901760
        %v2088 = vsub.f32 %v2086, %v2087
        %v2089 = vand.u32 %v2088, 4294901760
        %2090 = vmatpush1.msra.mxu0 %v2089
        %2091 = vmatprep.subr.mxu0 0.0
        %v2092 = vand.u32 %v1263, 4294901760
        %v2093 = vsub.f32 %v1263, %v2092
        %v2094 = vand.u32 %v2093, 4294901760
        %v2095 = vsub.f32 %v2093, %v2094
        %v2096 = vand.u32 %v2095, 4294901760
        %2097 = vmatpush1.msra.mxu0 %v2096
        %2098 = vmatprep.subr.mxu0 0.0
        %v2099 = vand.u32 %v1264, 4294901760
        %v2100 = vsub.f32 %v1264, %v2099
        %v2101 = vand.u32 %v2100, 4294901760
        %v2102 = vsub.f32 %v2100, %v2101
        %v2103 = vand.u32 %v2102, 4294901760
        %2104 = vmatpush1.msra.mxu0 %v2103
        %2105 = vmatprep.subr.mxu0 0.0
        %v2106 = vand.u32 %v1265, 4294901760
        %v2107 = vsub.f32 %v1265, %v2106
        %v2108 = vand.u32 %v2107, 4294901760
        %v2109 = vsub.f32 %v2107, %v2108
        %v2110 = vand.u32 %v2109, 4294901760
        %2111 = vmatpush1.msra.mxu0 %v2110
        %2112 = vmatprep.subr.mxu0 0.0
        %v2113 = vand.u32 %v1266, 4294901760
        %v2114 = vsub.f32 %v1266, %v2113
        %v2115 = vand.u32 %v2114, 4294901760
        %v2116 = vsub.f32 %v2114, %v2115
        %v2117 = vand.u32 %v2116, 4294901760
        %2118 = vmatpush1.msra.mxu0 %v2117
        %2119 = vmatprep.subr.mxu0 0.0
        %v2120 = vand.u32 %v1267, 4294901760
        %v2121 = vsub.f32 %v1267, %v2120
        %v2122 = vand.u32 %v2121, 4294901760
        %v2123 = vsub.f32 %v2121, %v2122
        %v2124 = vand.u32 %v2123, 4294901760
        %2125 = vmatpush1.msra.mxu0 %v2124
        %2126 = vmatprep.subr.mxu0 0.0
        %v2127 = vand.u32 %v1268, 4294901760
        %v2128 = vsub.f32 %v1268, %v2127
        %v2129 = vand.u32 %v2128, 4294901760
        %v2130 = vsub.f32 %v2128, %v2129
        %v2131 = vand.u32 %v2130, 4294901760
        %2132 = vmatpush1.msra.mxu0 %v2131
        %2133 = vmatprep.subr.mxu0 0.0
        %2134 = vmatpush1.msra.mxu0 0.0
        %2135 = vmatprep.subr.mxu0 0.0
        %2136 = vmatpush1.msra.mxu0 0.0
        %2137 = vmatprep.subr.mxu0 0.0
        %2138 = vmatpush1.msra.mxu0 0.0
        %2139 = vmatprep.subr.mxu0 0.0
        %2140 = vmatpush1.msra.mxu0 0.0
        %2141 = vmatprep.subr.mxu0 0.0
        %2142 = vmatpush1.msra.mxu0 0.0
        %2143 = vmatprep.subr.mxu0 0.0
        %2144 = vmatpush1.msra.mxu0 0.0
        %2145 = vmatprep.subr.mxu0 0.0
        %2146 = vmatpush1.msra.mxu0 0.0
        %2147 = vmatprep.subr.mxu0 0.0
        %2148 = vmatpush1.msra.mxu0 0.0
        %2149 = vmatprep.subr.mxu0 0.0
        %2150 = vmatpush1.msra.mxu0 0.0
        %2151 = vmatprep.subr.mxu0 0.0
        %2152 = vmatpush1.msra.mxu0 0.0
        %2153 = vmatprep.subr.mxu0 0.0
        %2154 = vmatpush1.msra.mxu0 0.0
        %2155 = vmatprep.subr.mxu0 0.0
        %2156 = vmatpush1.msra.mxu0 0.0
        %2157 = vmatprep.subr.mxu0 0.0
        %2158 = vmatpush1.msra.mxu0 0.0
        %2159 = vmatprep.subr.mxu0 0.0
        %2160 = vmatpush1.msra.mxu0 0.0
        %2161 = vmatprep.subr.mxu0 0.0
        %2162 = vmatpush1.msra.mxu0 0.0
        %2163 = vmatprep.subr.mxu0 0.0
        %2164 = vmatpush1.msra.mxu0 0.0
        %2165 = vmatprep.mubr.f32.mxu0 0.0
        %v2166 = vand.u32 %v1927, 4294901760
        %2167 = vmatmul.mubr.f32.gmra.mrb[0].mxu0 %v2166
        %v2168 = vpop.f32.mrb[0].mxu0
        %v2169 = vadd.f32 %v2018, %v2168
        %v2170 = vpop.f32.mrb[0].mxu0
        %2171 = vdwg.mxu0
        %2172 = vmatprep.subr.mxu0 0.0
        %v2173 = vand.u32 %v1253, 4294901760
        %v2174 = vsub.f32 %v1253, %v2173
        %2175 = vmatpush1.msra.mxu0 %v2174
        %2176 = vmatprep.subr.mxu0 0.0
        %v2177 = vand.u32 %v1254, 4294901760
        %v2178 = vsub.f32 %v1254, %v2177
        %2179 = vmatpush1.msra.mxu0 %v2178
        %2180 = vmatprep.subr.mxu0 0.0
        %v2181 = vand.u32 %v1255, 4294901760
        %v2182 = vsub.f32 %v1255, %v2181
        %2183 = vmatpush1.msra.mxu0 %v2182
        %2184 = vmatprep.subr.mxu0 0.0
        %v2185 = vand.u32 %v1256, 4294901760
        %v2186 = vsub.f32 %v1256, %v2185
        %2187 = vmatpush1.msra.mxu0 %v2186
        %2188 = vmatprep.subr.mxu0 0.0
        %v2189 = vand.u32 %v1257, 4294901760
        %v2190 = vsub.f32 %v1257, %v2189
        %2191 = vmatpush1.msra.mxu0 %v2190
        %2192 = vmatprep.subr.mxu0 0.0
        %v2193 = vand.u32 %v1258, 4294901760
        %v2194 = vsub.f32 %v1258, %v2193
        %2195 = vmatpush1.msra.mxu0 %v2194
        %2196 = vmatprep.subr.mxu0 0.0
        %v2197 = vand.u32 %v1259, 4294901760
        %v2198 = vsub.f32 %v1259, %v2197
        %2199 = vmatpush1.msra.mxu0 %v2198
        %2200 = vmatprep.subr.mxu0 0.0
        %v2201 = vand.u32 %v1260, 4294901760
        %v2202 = vsub.f32 %v1260, %v2201
        %2203 = vmatpush1.msra.mxu0 %v2202
        %2204 = vmatprep.subr.mxu0 0.0
        %v2205 = vand.u32 %v1261, 4294901760
        %v2206 = vsub.f32 %v1261, %v2205
        %2207 = vmatpush1.msra.mxu0 %v2206
        %2208 = vmatprep.subr.mxu0 0.0
        %v2209 = vand.u32 %v1262, 4294901760
        %v2210 = vsub.f32 %v1262, %v2209
        %2211 = vmatpush1.msra.mxu0 %v2210
        %2212 = vmatprep.subr.mxu0 0.0
        %v2213 = vand.u32 %v1263, 4294901760
        %v2214 = vsub.f32 %v1263, %v2213
        %2215 = vmatpush1.msra.mxu0 %v2214
        %2216 = vmatprep.subr.mxu0 0.0
        %v2217 = vand.u32 %v1264, 4294901760
        %v2218 = vsub.f32 %v1264, %v2217
        %2219 = vmatpush1.msra.mxu0 %v2218
        %2220 = vmatprep.subr.mxu0 0.0
        %v2221 = vand.u32 %v1265, 4294901760
        %v2222 = vsub.f32 %v1265, %v2221
        %2223 = vmatpush1.msra.mxu0 %v2222
        %2224 = vmatprep.subr.mxu0 0.0
        %v2225 = vand.u32 %v1266, 4294901760
        %v2226 = vsub.f32 %v1266, %v2225
        %2227 = vmatpush1.msra.mxu0 %v2226
        %2228 = vmatprep.subr.mxu0 0.0
        %v2229 = vand.u32 %v1267, 4294901760
        %v2230 = vsub.f32 %v1267, %v2229
        %2231 = vmatpush1.msra.mxu0 %v2230
        %2232 = vmatprep.subr.mxu0 0.0
        %v2233 = vand.u32 %v1268, 4294901760
        %v2234 = vsub.f32 %v1268, %v2233
        %2235 = vmatpush1.msra.mxu0 %v2234
        %2236 = vmatprep.subr.mxu0 0.0
        %2237 = vmatpush1.msra.mxu0 0.0
        %2238 = vmatprep.subr.mxu0 0.0
        %2239 = vmatpush1.msra.mxu0 0.0
        %2240 = vmatprep.subr.mxu0 0.0
        %2241 = vmatpush1.msra.mxu0 0.0
        %2242 = vmatprep.subr.mxu0 0.0
        %2243 = vmatpush1.msra.mxu0 0.0
        %2244 = vmatprep.subr.mxu0 0.0
        %2245 = vmatpush1.msra.mxu0 0.0
        %2246 = vmatprep.subr.mxu0 0.0
        %2247 = vmatpush1.msra.mxu0 0.0
        %2248 = vmatprep.subr.mxu0 0.0
        %2249 = vmatpush1.msra.mxu0 0.0
        %2250 = vmatprep.subr.mxu0 0.0
        %2251 = vmatpush1.msra.mxu0 0.0
        %2252 = vmatprep.subr.mxu0 0.0
        %2253 = vmatpush1.msra.mxu0 0.0
        %2254 = vmatprep.subr.mxu0 0.0
        %2255 = vmatpush1.msra.mxu0 0.0
        %2256 = vmatprep.subr.mxu0 0.0
        %2257 = vmatpush1.msra.mxu0 0.0
        %2258 = vmatprep.subr.mxu0 0.0
        %2259 = vmatpush1.msra.mxu0 0.0
        %2260 = vmatprep.subr.mxu0 0.0
        %2261 = vmatpush1.msra.mxu0 0.0
        %2262 = vmatprep.subr.mxu0 0.0
        %2263 = vmatpush1.msra.mxu0 0.0
        %2264 = vmatprep.subr.mxu0 0.0
        %2265 = vmatpush1.msra.mxu0 0.0
        %2266 = vmatprep.subr.mxu0 0.0
        %2267 = vmatpush1.msra.mxu0 0.0
        %2268 = vmatprep.mubr.f32.mxu0 0.0
        %v2269 = vand.u32 %v1927, 4294901760
        %v2270 = vsub.f32 %v1927, %v2269
        %2271 = vmatmul.mubr.f32.gmra.mrb[0].mxu0 %v2270
        %v2272 = vpop.f32.mrb[0].mxu0
        %v2273 = vadd.f32 %v2169, %v2272
        %v2274 = vpop.f32.mrb[0].mxu0
        %2275 = vdwg.mxu0
        %2276 = vmatprep.subr.mxu0 0.0
        %v2277 = vand.u32 %v1253, 4294901760
        %2278 = vmatpush1.msra.mxu0 %v2277
        %2279 = vmatprep.subr.mxu0 0.0
        %v2280 = vand.u32 %v1254, 4294901760
        %2281 = vmatpush1.msra.mxu0 %v2280
        %2282 = vmatprep.subr.mxu0 0.0
        %v2283 = vand.u32 %v1255, 4294901760
        %2284 = vmatpush1.msra.mxu0 %v2283
        %2285 = vmatprep.subr.mxu0 0.0
        %v2286 = vand.u32 %v1256, 4294901760
        %2287 = vmatpush1.msra.mxu0 %v2286
        %2288 = vmatprep.subr.mxu0 0.0
        %v2289 = vand.u32 %v1257, 4294901760
        %2290 = vmatpush1.msra.mxu0 %v2289
        %2291 = vmatprep.subr.mxu0 0.0
        %v2292 = vand.u32 %v1258, 4294901760
        %2293 = vmatpush1.msra.mxu0 %v2292
        %2294 = vmatprep.subr.mxu0 0.0
        %v2295 = vand.u32 %v1259, 4294901760
        %2296 = vmatpush1.msra.mxu0 %v2295
        %2297 = vmatprep.subr.mxu0 0.0
        %v2298 = vand.u32 %v1260, 4294901760
        %2299 = vmatpush1.msra.mxu0 %v2298
        %2300 = vmatprep.subr.mxu0 0.0
        %v2301 = vand.u32 %v1261, 4294901760
        %2302 = vmatpush1.msra.mxu0 %v2301
        %2303 = vmatprep.subr.mxu0 0.0
        %v2304 = vand.u32 %v1262, 4294901760
        %2305 = vmatpush1.msra.mxu0 %v2304
        %2306 = vmatprep.subr.mxu0 0.0
        %v2307 = vand.u32 %v1263, 4294901760
        %2308 = vmatpush1.msra.mxu0 %v2307
        %2309 = vmatprep.subr.mxu0 0.0
        %v2310 = vand.u32 %v1264, 4294901760
        %2311 = vmatpush1.msra.mxu0 %v2310
        %2312 = vmatprep.subr.mxu0 0.0
        %v2313 = vand.u32 %v1265, 4294901760
        %2314 = vmatpush1.msra.mxu0 %v2313
        %2315 = vmatprep.subr.mxu0 0.0
        %v2316 = vand.u32 %v1266, 4294901760
        %2317 = vmatpush1.msra.mxu0 %v2316
        %2318 = vmatprep.subr.mxu0 0.0
        %v2319 = vand.u32 %v1267, 4294901760
        %2320 = vmatpush1.msra.mxu0 %v2319
        %2321 = vmatprep.subr.mxu0 0.0
        %v2322 = vand.u32 %v1268, 4294901760
        %2323 = vmatpush1.msra.mxu0 %v2322
        %2324 = vmatprep.subr.mxu0 0.0
        %2325 = vmatpush1.msra.mxu0 0.0
        %2326 = vmatprep.subr.mxu0 0.0
        %2327 = vmatpush1.msra.mxu0 0.0
        %2328 = vmatprep.subr.mxu0 0.0
        %2329 = vmatpush1.msra.mxu0 0.0
        %2330 = vmatprep.subr.mxu0 0.0
        %2331 = vmatpush1.msra.mxu0 0.0
        %2332 = vmatprep.subr.mxu0 0.0
        %2333 = vmatpush1.msra.mxu0 0.0
        %2334 = vmatprep.subr.mxu0 0.0
        %2335 = vmatpush1.msra.mxu0 0.0
        %2336 = vmatprep.subr.mxu0 0.0
        %2337 = vmatpush1.msra.mxu0 0.0
        %2338 = vmatprep.subr.mxu0 0.0
        %2339 = vmatpush1.msra.mxu0 0.0
        %2340 = vmatprep.subr.mxu0 0.0
        %2341 = vmatpush1.msra.mxu0 0.0
        %2342 = vmatprep.subr.mxu0 0.0
        %2343 = vmatpush1.msra.mxu0 0.0
        %2344 = vmatprep.subr.mxu0 0.0
        %2345 = vmatpush1.msra.mxu0 0.0
        %2346 = vmatprep.subr.mxu0 0.0
        %2347 = vmatpush1.msra.mxu0 0.0
        %2348 = vmatprep.subr.mxu0 0.0
        %2349 = vmatpush1.msra.mxu0 0.0
        %2350 = vmatprep.subr.mxu0 0.0
        %2351 = vmatpush1.msra.mxu0 0.0
        %2352 = vmatprep.subr.mxu0 0.0
        %2353 = vmatpush1.msra.mxu0 0.0
        %2354 = vmatprep.subr.mxu0 0.0
        %2355 = vmatpush1.msra.mxu0 0.0
        %2356 = vmatprep.mubr.f32.mxu0 0.0
        %v2357 = vand.u32 %v1927, 4294901760
        %v2358 = vsub.f32 %v1927, %v2357
        %v2359 = vand.u32 %v2358, 4294901760
        %2360 = vmatmul.mubr.f32.gmra.mrb[0].mxu0 %v2359
        %v2361 = vpop.f32.mrb[0].mxu0
        %v2362 = vadd.f32 %v2273, %v2361
        %v2363 = vpop.f32.mrb[0].mxu0
        %2364 = vdwg.mxu0
        %2365 = vmatprep.subr.mxu0 0.0
        %v2366 = vand.u32 %v1253, 4294901760
        %v2367 = vsub.f32 %v1253, %v2366
        %v2368 = vand.u32 %v2367, 4294901760
        %2369 = vmatpush1.msra.mxu0 %v2368
        %2370 = vmatprep.subr.mxu0 0.0
        %v2371 = vand.u32 %v1254, 4294901760
        %v2372 = vsub.f32 %v1254, %v2371
        %v2373 = vand.u32 %v2372, 4294901760
        %2374 = vmatpush1.msra.mxu0 %v2373
        %2375 = vmatprep.subr.mxu0 0.0
        %v2376 = vand.u32 %v1255, 4294901760
        %v2377 = vsub.f32 %v1255, %v2376
        %v2378 = vand.u32 %v2377, 4294901760
        %2379 = vmatpush1.msra.mxu0 %v2378
        %2380 = vmatprep.subr.mxu0 0.0
        %v2381 = vand.u32 %v1256, 4294901760
        %v2382 = vsub.f32 %v1256, %v2381
        %v2383 = vand.u32 %v2382, 4294901760
        %2384 = vmatpush1.msra.mxu0 %v2383
        %2385 = vmatprep.subr.mxu0 0.0
        %v2386 = vand.u32 %v1257, 4294901760
        %v2387 = vsub.f32 %v1257, %v2386
        %v2388 = vand.u32 %v2387, 4294901760
        %2389 = vmatpush1.msra.mxu0 %v2388
        %2390 = vmatprep.subr.mxu0 0.0
        %v2391 = vand.u32 %v1258, 4294901760
        %v2392 = vsub.f32 %v1258, %v2391
        %v2393 = vand.u32 %v2392, 4294901760
        %2394 = vmatpush1.msra.mxu0 %v2393
        %2395 = vmatprep.subr.mxu0 0.0
        %v2396 = vand.u32 %v1259, 4294901760
        %v2397 = vsub.f32 %v1259, %v2396
        %v2398 = vand.u32 %v2397, 4294901760
        %2399 = vmatpush1.msra.mxu0 %v2398
        %2400 = vmatprep.subr.mxu0 0.0
        %v2401 = vand.u32 %v1260, 4294901760
        %v2402 = vsub.f32 %v1260, %v2401
        %v2403 = vand.u32 %v2402, 4294901760
        %2404 = vmatpush1.msra.mxu0 %v2403
        %2405 = vmatprep.subr.mxu0 0.0
        %v2406 = vand.u32 %v1261, 4294901760
        %v2407 = vsub.f32 %v1261, %v2406
        %v2408 = vand.u32 %v2407, 4294901760
        %2409 = vmatpush1.msra.mxu0 %v2408
        %2410 = vmatprep.subr.mxu0 0.0
        %v2411 = vand.u32 %v1262, 4294901760
        %v2412 = vsub.f32 %v1262, %v2411
        %v2413 = vand.u32 %v2412, 4294901760
        %2414 = vmatpush1.msra.mxu0 %v2413
        %2415 = vmatprep.subr.mxu0 0.0
        %v2416 = vand.u32 %v1263, 4294901760
        %v2417 = vsub.f32 %v1263, %v2416
        %v2418 = vand.u32 %v2417, 4294901760
        %2419 = vmatpush1.msra.mxu0 %v2418
        %2420 = vmatprep.subr.mxu0 0.0
        %v2421 = vand.u32 %v1264, 4294901760
        %v2422 = vsub.f32 %v1264, %v2421
        %v2423 = vand.u32 %v2422, 4294901760
        %2424 = vmatpush1.msra.mxu0 %v2423
        %2425 = vmatprep.subr.mxu0 0.0
        %v2426 = vand.u32 %v1265, 4294901760
        %v2427 = vsub.f32 %v1265, %v2426
        %v2428 = vand.u32 %v2427, 4294901760
        %2429 = vmatpush1.msra.mxu0 %v2428
        %2430 = vmatprep.subr.mxu0 0.0
        %v2431 = vand.u32 %v1266, 4294901760
        %v2432 = vsub.f32 %v1266, %v2431
        %v2433 = vand.u32 %v2432, 4294901760
        %2434 = vmatpush1.msra.mxu0 %v2433
        %2435 = vmatprep.subr.mxu0 0.0
        %v2436 = vand.u32 %v1267, 4294901760
        %v2437 = vsub.f32 %v1267, %v2436
        %v2438 = vand.u32 %v2437, 4294901760
        %2439 = vmatpush1.msra.mxu0 %v2438
        %2440 = vmatprep.subr.mxu0 0.0
        %v2441 = vand.u32 %v1268, 4294901760
        %v2442 = vsub.f32 %v1268, %v2441
        %v2443 = vand.u32 %v2442, 4294901760
        %2444 = vmatpush1.msra.mxu0 %v2443
        %2445 = vmatprep.subr.mxu0 0.0
        %2446 = vmatpush1.msra.mxu0 0.0
        %2447 = vmatprep.subr.mxu0 0.0
        %2448 = vmatpush1.msra.mxu0 0.0
        %2449 = vmatprep.subr.mxu0 0.0
        %2450 = vmatpush1.msra.mxu0 0.0
        %2451 = vmatprep.subr.mxu0 0.0
        %2452 = vmatpush1.msra.mxu0 0.0
        %2453 = vmatprep.subr.mxu0 0.0
        %2454 = vmatpush1.msra.mxu0 0.0
        %2455 = vmatprep.subr.mxu0 0.0
        %2456 = vmatpush1.msra.mxu0 0.0
        %2457 = vmatprep.subr.mxu0 0.0
        %2458 = vmatpush1.msra.mxu0 0.0
        %2459 = vmatprep.subr.mxu0 0.0
        %2460 = vmatpush1.msra.mxu0 0.0
        %2461 = vmatprep.subr.mxu0 0.0
        %2462 = vmatpush1.msra.mxu0 0.0
        %2463 = vmatprep.subr.mxu0 0.0
        %2464 = vmatpush1.msra.mxu0 0.0
        %2465 = vmatprep.subr.mxu0 0.0
        %2466 = vmatpush1.msra.mxu0 0.0
        %2467 = vmatprep.subr.mxu0 0.0
        %2468 = vmatpush1.msra.mxu0 0.0
        %2469 = vmatprep.subr.mxu0 0.0
        %2470 = vmatpush1.msra.mxu0 0.0
        %2471 = vmatprep.subr.mxu0 0.0
        %2472 = vmatpush1.msra.mxu0 0.0
        %2473 = vmatprep.subr.mxu0 0.0
        %2474 = vmatpush1.msra.mxu0 0.0
        %2475 = vmatprep.subr.mxu0 0.0
        %2476 = vmatpush1.msra.mxu0 0.0
        %2477 = vmatprep.mubr.f32.mxu0 0.0
        %v2478 = vand.u32 %v1927, 4294901760
        %2479 = vmatmul.mubr.f32.gmra.mrb[0].mxu0 %v2478
        %v2480 = vpop.f32.mrb[0].mxu0
        %v2481 = vadd.f32 %v2362, %v2480
        %v2482 = vpop.f32.mrb[0].mxu0
        %2483 = vdwg.mxu0
        %2484 = vmatprep.subr.mxu0 0.0
        %v2485 = vand.u32 %v1253, 4294901760
        %2486 = vmatpush1.msra.mxu0 %v2485
        %2487 = vmatprep.subr.mxu0 0.0
        %v2488 = vand.u32 %v1254, 4294901760
        %2489 = vmatpush1.msra.mxu0 %v2488
        %2490 = vmatprep.subr.mxu0 0.0
        %v2491 = vand.u32 %v1255, 4294901760
        %2492 = vmatpush1.msra.mxu0 %v2491
        %2493 = vmatprep.subr.mxu0 0.0
        %v2494 = vand.u32 %v1256, 4294901760
        %2495 = vmatpush1.msra.mxu0 %v2494
        %2496 = vmatprep.subr.mxu0 0.0
        %v2497 = vand.u32 %v1257, 4294901760
        %2498 = vmatpush1.msra.mxu0 %v2497
        %2499 = vmatprep.subr.mxu0 0.0
        %v2500 = vand.u32 %v1258, 4294901760
        %2501 = vmatpush1.msra.mxu0 %v2500
        %2502 = vmatprep.subr.mxu0 0.0
        %v2503 = vand.u32 %v1259, 4294901760
        %2504 = vmatpush1.msra.mxu0 %v2503
        %2505 = vmatprep.subr.mxu0 0.0
        %v2506 = vand.u32 %v1260, 4294901760
        %2507 = vmatpush1.msra.mxu0 %v2506
        %2508 = vmatprep.subr.mxu0 0.0
        %v2509 = vand.u32 %v1261, 4294901760
        %2510 = vmatpush1.msra.mxu0 %v2509
        %2511 = vmatprep.subr.mxu0 0.0
        %v2512 = vand.u32 %v1262, 4294901760
        %2513 = vmatpush1.msra.mxu0 %v2512
        %2514 = vmatprep.subr.mxu0 0.0
        %v2515 = vand.u32 %v1263, 4294901760
        %2516 = vmatpush1.msra.mxu0 %v2515
        %2517 = vmatprep.subr.mxu0 0.0
        %v2518 = vand.u32 %v1264, 4294901760
        %2519 = vmatpush1.msra.mxu0 %v2518
        %2520 = vmatprep.subr.mxu0 0.0
        %v2521 = vand.u32 %v1265, 4294901760
        %2522 = vmatpush1.msra.mxu0 %v2521
        %2523 = vmatprep.subr.mxu0 0.0
        %v2524 = vand.u32 %v1266, 4294901760
        %2525 = vmatpush1.msra.mxu0 %v2524
        %2526 = vmatprep.subr.mxu0 0.0
        %v2527 = vand.u32 %v1267, 4294901760
        %2528 = vmatpush1.msra.mxu0 %v2527
        %2529 = vmatprep.subr.mxu0 0.0
        %v2530 = vand.u32 %v1268, 4294901760
        %2531 = vmatpush1.msra.mxu0 %v2530
        %2532 = vmatprep.subr.mxu0 0.0
        %2533 = vmatpush1.msra.mxu0 0.0
        %2534 = vmatprep.subr.mxu0 0.0
        %2535 = vmatpush1.msra.mxu0 0.0
        %2536 = vmatprep.subr.mxu0 0.0
        %2537 = vmatpush1.msra.mxu0 0.0
        %2538 = vmatprep.subr.mxu0 0.0
        %2539 = vmatpush1.msra.mxu0 0.0
        %2540 = vmatprep.subr.mxu0 0.0
        %2541 = vmatpush1.msra.mxu0 0.0
        %2542 = vmatprep.subr.mxu0 0.0
        %2543 = vmatpush1.msra.mxu0 0.0
        %2544 = vmatprep.subr.mxu0 0.0
        %2545 = vmatpush1.msra.mxu0 0.0
        %2546 = vmatprep.subr.mxu0 0.0
        %2547 = vmatpush1.msra.mxu0 0.0
        %2548 = vmatprep.subr.mxu0 0.0
        %2549 = vmatpush1.msra.mxu0 0.0
        %2550 = vmatprep.subr.mxu0 0.0
        %2551 = vmatpush1.msra.mxu0 0.0
        %2552 = vmatprep.subr.mxu0 0.0
        %2553 = vmatpush1.msra.mxu0 0.0
        %2554 = vmatprep.subr.mxu0 0.0
        %2555 = vmatpush1.msra.mxu0 0.0
        %2556 = vmatprep.subr.mxu0 0.0
        %2557 = vmatpush1.msra.mxu0 0.0
        %2558 = vmatprep.subr.mxu0 0.0
        %2559 = vmatpush1.msra.mxu0 0.0
        %2560 = vmatprep.subr.mxu0 0.0
        %2561 = vmatpush1.msra.mxu0 0.0
        %2562 = vmatprep.subr.mxu0 0.0
        %2563 = vmatpush1.msra.mxu0 0.0
        %2564 = vmatprep.mubr.f32.mxu0 0.0
        %v2565 = vand.u32 %v1927, 4294901760
        %2566 = vmatmul.mubr.f32.gmra.mrb[0].mxu0 %v2565
        %v2567 = vpop.f32.mrb[0].mxu0
        %v2568 = vadd.f32 %v2481, %v2567
        %v2569 = vpop.f32.mrb[0].mxu0
        %2570 = vdwg.mxu0
        %v2571 = vld [vmem:[#allocation2 + $0x8] sm:$0xff]
        %v2572 = vmul.f32 %v1926, 0.1
        %v2573 = vsub.f32 0.0, %v1926
        %v2574 = vadd.f32 %v2573, %v2568
        %v2575 = vadd.f32 %v2574, %v2571
        %v2576 = vmul.f32 %v2572, %v2575
        %v2577 = vmax.f32 %v2576, 0.0
        %s2578 = scalar_lea.vmem %s333, 8 [#allocation6]
        %2579 = vst [vmem:[%s2578] sm:$0xff] %v2576
        %s2580 = scalar_lea.vmem %s326, 8 [#allocation4]
        %2581 = vst [vmem:[%s2580] sm:$0xff] %v2577
        %2582 = vmatprep.subr.mxu0 0.0
        %v2583 = vand.u32 %v1253, 4294901760
        %2584 = vmatpush1.msra.mxu0 %v2583
        %2585 = vmatprep.subr.mxu0 0.0
        %v2586 = vand.u32 %v1254, 4294901760
        %2587 = vmatpush1.msra.mxu0 %v2586
        %2588 = vmatprep.subr.mxu0 0.0
        %v2589 = vand.u32 %v1255, 4294901760
        %2590 = vmatpush1.msra.mxu0 %v2589
        %2591 = vmatprep.subr.mxu0 0.0
        %v2592 = vand.u32 %v1256, 4294901760
        %2593 = vmatpush1.msra.mxu0 %v2592
        %2594 = vmatprep.subr.mxu0 0.0
        %v2595 = vand.u32 %v1257, 4294901760
        %2596 = vmatpush1.msra.mxu0 %v2595
        %2597 = vmatprep.subr.mxu0 0.0
        %v2598 = vand.u32 %v1258, 4294901760
        %2599 = vmatpush1.msra.mxu0 %v2598
        %2600 = vmatprep.subr.mxu0 0.0
        %v2601 = vand.u32 %v1259, 4294901760
        %2602 = vmatpush1.msra.mxu0 %v2601
        %2603 = vmatprep.subr.mxu0 0.0
        %v2604 = vand.u32 %v1260, 4294901760
        %2605 = vmatpush1.msra.mxu0 %v2604
        %2606 = vmatprep.subr.mxu0 0.0
        %v2607 = vand.u32 %v1261, 4294901760
        %2608 = vmatpush1.msra.mxu0 %v2607
        %2609 = vmatprep.subr.mxu0 0.0
        %v2610 = vand.u32 %v1262, 4294901760
        %2611 = vmatpush1.msra.mxu0 %v2610
        %2612 = vmatprep.subr.mxu0 0.0
        %v2613 = vand.u32 %v1263, 4294901760
        %2614 = vmatpush1.msra.mxu0 %v2613
        %2615 = vmatprep.subr.mxu0 0.0
        %v2616 = vand.u32 %v1264, 4294901760
        %2617 = vmatpush1.msra.mxu0 %v2616
        %2618 = vmatprep.subr.mxu0 0.0
        %v2619 = vand.u32 %v1265, 4294901760
        %2620 = vmatpush1.msra.mxu0 %v2619
        %2621 = vmatprep.subr.mxu0 0.0
        %v2622 = vand.u32 %v1266, 4294901760
        %2623 = vmatpush1.msra.mxu0 %v2622
        %2624 = vmatprep.subr.mxu0 0.0
        %v2625 = vand.u32 %v1267, 4294901760
        %2626 = vmatpush1.msra.mxu0 %v2625
        %2627 = vmatprep.subr.mxu0 0.0
        %v2628 = vand.u32 %v1268, 4294901760
        %2629 = vmatpush1.msra.mxu0 %v2628
        %2630 = vmatprep.subr.mxu0 0.0
        %2631 = vmatpush1.msra.mxu0 0.0
        %2632 = vmatprep.subr.mxu0 0.0
        %2633 = vmatpush1.msra.mxu0 0.0
        %2634 = vmatprep.subr.mxu0 0.0
        %2635 = vmatpush1.msra.mxu0 0.0
        %2636 = vmatprep.subr.mxu0 0.0
        %2637 = vmatpush1.msra.mxu0 0.0
        %2638 = vmatprep.subr.mxu0 0.0
        %2639 = vmatpush1.msra.mxu0 0.0
        %2640 = vmatprep.subr.mxu0 0.0
        %2641 = vmatpush1.msra.mxu0 0.0
        %2642 = vmatprep.subr.mxu0 0.0
        %2643 = vmatpush1.msra.mxu0 0.0
        %2644 = vmatprep.subr.mxu0 0.0
        %2645 = vmatpush1.msra.mxu0 0.0
        %2646 = vmatprep.subr.mxu0 0.0
        %2647 = vmatpush1.msra.mxu0 0.0
        %2648 = vmatprep.subr.mxu0 0.0
        %2649 = vmatpush1.msra.mxu0 0.0
        %2650 = vmatprep.subr.mxu0 0.0
        %2651 = vmatpush1.msra.mxu0 0.0
        %2652 = vmatprep.subr.mxu0 0.0
        %2653 = vmatpush1.msra.mxu0 0.0
        %2654 = vmatprep.subr.mxu0 0.0
        %2655 = vmatpush1.msra.mxu0 0.0
        %2656 = vmatprep.subr.mxu0 0.0
        %2657 = vmatpush1.msra.mxu0 0.0
        %2658 = vmatprep.subr.mxu0 0.0
        %2659 = vmatpush1.msra.mxu0 0.0
        %2660 = vmatprep.subr.mxu0 0.0
        %2661 = vmatpush1.msra.mxu0 0.0
        %2662 = vmatprep.mubr.f32.mxu0 0.0
        %v2663 = vand.u32 %v2577, 4294901760
        %v2664 = vsub.f32 %v2577, %v2663
        %v2665 = vand.u32 %v2664, 4294901760
        %v2666 = vsub.f32 %v2664, %v2665
        %v2667 = vand.u32 %v2666, 4294901760
        %2668 = vmatmul.mubr.f32.gmra.mrb[0].mxu0 %v2667
        %v2669 = vpop.f32.mrb[0].mxu0
        %v2670 = vadd.f32 0.0, %v2669
        %v2671 = vpop.f32.mrb[0].mxu0
        %2672 = vdwg.mxu0
        %2673 = vmatprep.subr.mxu0 0.0
        %v2674 = vand.u32 %v1253, 4294901760
        %v2675 = vsub.f32 %v1253, %v2674
        %v2676 = vand.u32 %v2675, 4294901760
        %v2677 = vsub.f32 %v2675, %v2676
        %v2678 = vand.u32 %v2677, 4294901760
        %2679 = vmatpush1.msra.mxu0 %v2678
        %2680 = vmatprep.subr.mxu0 0.0
        %v2681 = vand.u32 %v1254, 4294901760
        %v2682 = vsub.f32 %v1254, %v2681
        %v2683 = vand.u32 %v2682, 4294901760
        %v2684 = vsub.f32 %v2682, %v2683
        %v2685 = vand.u32 %v2684, 4294901760
        %2686 = vmatpush1.msra.mxu0 %v2685
        %2687 = vmatprep.subr.mxu0 0.0
        %v2688 = vand.u32 %v1255, 4294901760
        %v2689 = vsub.f32 %v1255, %v2688
        %v2690 = vand.u32 %v2689, 4294901760
        %v2691 = vsub.f32 %v2689, %v2690
        %v2692 = vand.u32 %v2691, 4294901760
        %2693 = vmatpush1.msra.mxu0 %v2692
        %2694 = vmatprep.subr.mxu0 0.0
        %v2695 = vand.u32 %v1256, 4294901760
        %v2696 = vsub.f32 %v1256, %v2695
        %v2697 = vand.u32 %v2696, 4294901760
        %v2698 = vsub.f32 %v2696, %v2697
        %v2699 = vand.u32 %v2698, 4294901760
        %2700 = vmatpush1.msra.mxu0 %v2699
        %2701 = vmatprep.subr.mxu0 0.0
        %v2702 = vand.u32 %v1257, 4294901760
        %v2703 = vsub.f32 %v1257, %v2702
        %v2704 = vand.u32 %v2703, 4294901760
        %v2705 = vsub.f32 %v2703, %v2704
        %v2706 = vand.u32 %v2705, 4294901760
        %2707 = vmatpush1.msra.mxu0 %v2706
        %2708 = vmatprep.subr.mxu0 0.0
        %v2709 = vand.u32 %v1258, 4294901760
        %v2710 = vsub.f32 %v1258, %v2709
        %v2711 = vand.u32 %v2710, 4294901760
        %v2712 = vsub.f32 %v2710, %v2711
        %v2713 = vand.u32 %v2712, 4294901760
        %2714 = vmatpush1.msra.mxu0 %v2713
        %2715 = vmatprep.subr.mxu0 0.0
        %v2716 = vand.u32 %v1259, 4294901760
        %v2717 = vsub.f32 %v1259, %v2716
        %v2718 = vand.u32 %v2717, 4294901760
        %v2719 = vsub.f32 %v2717, %v2718
        %v2720 = vand.u32 %v2719, 4294901760
        %2721 = vmatpush1.msra.mxu0 %v2720
        %2722 = vmatprep.subr.mxu0 0.0
        %v2723 = vand.u32 %v1260, 4294901760
        %v2724 = vsub.f32 %v1260, %v2723
        %v2725 = vand.u32 %v2724, 4294901760
        %v2726 = vsub.f32 %v2724, %v2725
        %v2727 = vand.u32 %v2726, 4294901760
        %2728 = vmatpush1.msra.mxu0 %v2727
        %2729 = vmatprep.subr.mxu0 0.0
        %v2730 = vand.u32 %v1261, 4294901760
        %v2731 = vsub.f32 %v1261, %v2730
        %v2732 = vand.u32 %v2731, 4294901760
        %v2733 = vsub.f32 %v2731, %v2732
        %v2734 = vand.u32 %v2733, 4294901760
        %2735 = vmatpush1.msra.mxu0 %v2734
        %2736 = vmatprep.subr.mxu0 0.0
        %v2737 = vand.u32 %v1262, 4294901760
        %v2738 = vsub.f32 %v1262, %v2737
        %v2739 = vand.u32 %v2738, 4294901760
        %v2740 = vsub.f32 %v2738, %v2739
        %v2741 = vand.u32 %v2740, 4294901760
        %2742 = vmatpush1.msra.mxu0 %v2741
        %2743 = vmatprep.subr.mxu0 0.0
        %v2744 = vand.u32 %v1263, 4294901760
        %v2745 = vsub.f32 %v1263, %v2744
        %v2746 = vand.u32 %v2745, 4294901760
        %v2747 = vsub.f32 %v2745, %v2746
        %v2748 = vand.u32 %v2747, 4294901760
        %2749 = vmatpush1.msra.mxu0 %v2748
        %2750 = vmatprep.subr.mxu0 0.0
        %v2751 = vand.u32 %v1264, 4294901760
        %v2752 = vsub.f32 %v1264, %v2751
        %v2753 = vand.u32 %v2752, 4294901760
        %v2754 = vsub.f32 %v2752, %v2753
        %v2755 = vand.u32 %v2754, 4294901760
        %2756 = vmatpush1.msra.mxu0 %v2755
        %2757 = vmatprep.subr.mxu0 0.0
        %v2758 = vand.u32 %v1265, 4294901760
        %v2759 = vsub.f32 %v1265, %v2758
        %v2760 = vand.u32 %v2759, 4294901760
        %v2761 = vsub.f32 %v2759, %v2760
        %v2762 = vand.u32 %v2761, 4294901760
        %2763 = vmatpush1.msra.mxu0 %v2762
        %2764 = vmatprep.subr.mxu0 0.0
        %v2765 = vand.u32 %v1266, 4294901760
        %v2766 = vsub.f32 %v1266, %v2765
        %v2767 = vand.u32 %v2766, 4294901760
        %v2768 = vsub.f32 %v2766, %v2767
        %v2769 = vand.u32 %v2768, 4294901760
        %2770 = vmatpush1.msra.mxu0 %v2769
        %2771 = vmatprep.subr.mxu0 0.0
        %v2772 = vand.u32 %v1267, 4294901760
        %v2773 = vsub.f32 %v1267, %v2772
        %v2774 = vand.u32 %v2773, 4294901760
        %v2775 = vsub.f32 %v2773, %v2774
        %v2776 = vand.u32 %v2775, 4294901760
        %2777 = vmatpush1.msra.mxu0 %v2776
        %2778 = vmatprep.subr.mxu0 0.0
        %v2779 = vand.u32 %v1268, 4294901760
        %v2780 = vsub.f32 %v1268, %v2779
        %v2781 = vand.u32 %v2780, 4294901760
        %v2782 = vsub.f32 %v2780, %v2781
        %v2783 = vand.u32 %v2782, 4294901760
        %2784 = vmatpush1.msra.mxu0 %v2783
        %2785 = vmatprep.subr.mxu0 0.0
        %2786 = vmatpush1.msra.mxu0 0.0
        %2787 = vmatprep.subr.mxu0 0.0
        %2788 = vmatpush1.msra.mxu0 0.0
        %2789 = vmatprep.subr.mxu0 0.0
        %2790 = vmatpush1.msra.mxu0 0.0
        %2791 = vmatprep.subr.mxu0 0.0
        %2792 = vmatpush1.msra.mxu0 0.0
        %2793 = vmatprep.subr.mxu0 0.0
        %2794 = vmatpush1.msra.mxu0 0.0
        %2795 = vmatprep.subr.mxu0 0.0
        %2796 = vmatpush1.msra.mxu0 0.0
        %2797 = vmatprep.subr.mxu0 0.0
        %2798 = vmatpush1.msra.mxu0 0.0
        %2799 = vmatprep.subr.mxu0 0.0
        %2800 = vmatpush1.msra.mxu0 0.0
        %2801 = vmatprep.subr.mxu0 0.0
        %2802 = vmatpush1.msra.mxu0 0.0
        %2803 = vmatprep.subr.mxu0 0.0
        %2804 = vmatpush1.msra.mxu0 0.0
        %2805 = vmatprep.subr.mxu0 0.0
        %2806 = vmatpush1.msra.mxu0 0.0
        %2807 = vmatprep.subr.mxu0 0.0
        %2808 = vmatpush1.msra.mxu0 0.0
        %2809 = vmatprep.subr.mxu0 0.0
        %2810 = vmatpush1.msra.mxu0 0.0
        %2811 = vmatprep.subr.mxu0 0.0
        %2812 = vmatpush1.msra.mxu0 0.0
        %2813 = vmatprep.subr.mxu0 0.0
        %2814 = vmatpush1.msra.mxu0 0.0
        %2815 = vmatprep.subr.mxu0 0.0
        %2816 = vmatpush1.msra.mxu0 0.0
        %2817 = vmatprep.mubr.f32.mxu0 0.0
        %v2818 = vand.u32 %v2577, 4294901760
        %2819 = vmatmul.mubr.f32.gmra.mrb[0].mxu0 %v2818
        %v2820 = vpop.f32.mrb[0].mxu0
        %v2821 = vadd.f32 %v2670, %v2820
        %v2822 = vpop.f32.mrb[0].mxu0
        %2823 = vdwg.mxu0
        %2824 = vmatprep.subr.mxu0 0.0
        %v2825 = vand.u32 %v1253, 4294901760
        %v2826 = vsub.f32 %v1253, %v2825
        %2827 = vmatpush1.msra.mxu0 %v2826
        %2828 = vmatprep.subr.mxu0 0.0
        %v2829 = vand.u32 %v1254, 4294901760
        %v2830 = vsub.f32 %v1254, %v2829
        %2831 = vmatpush1.msra.mxu0 %v2830
        %2832 = vmatprep.subr.mxu0 0.0
        %v2833 = vand.u32 %v1255, 4294901760
        %v2834 = vsub.f32 %v1255, %v2833
        %2835 = vmatpush1.msra.mxu0 %v2834
        %2836 = vmatprep.subr.mxu0 0.0
        %v2837 = vand.u32 %v1256, 4294901760
        %v2838 = vsub.f32 %v1256, %v2837
        %2839 = vmatpush1.msra.mxu0 %v2838
        %2840 = vmatprep.subr.mxu0 0.0
        %v2841 = vand.u32 %v1257, 4294901760
        %v2842 = vsub.f32 %v1257, %v2841
        %2843 = vmatpush1.msra.mxu0 %v2842
        %2844 = vmatprep.subr.mxu0 0.0
        %v2845 = vand.u32 %v1258, 4294901760
        %v2846 = vsub.f32 %v1258, %v2845
        %2847 = vmatpush1.msra.mxu0 %v2846
        %2848 = vmatprep.subr.mxu0 0.0
        %v2849 = vand.u32 %v1259, 4294901760
        %v2850 = vsub.f32 %v1259, %v2849
        %2851 = vmatpush1.msra.mxu0 %v2850
        %2852 = vmatprep.subr.mxu0 0.0
        %v2853 = vand.u32 %v1260, 4294901760
        %v2854 = vsub.f32 %v1260, %v2853
        %2855 = vmatpush1.msra.mxu0 %v2854
        %2856 = vmatprep.subr.mxu0 0.0
        %v2857 = vand.u32 %v1261, 4294901760
        %v2858 = vsub.f32 %v1261, %v2857
        %2859 = vmatpush1.msra.mxu0 %v2858
        %2860 = vmatprep.subr.mxu0 0.0
        %v2861 = vand.u32 %v1262, 4294901760
        %v2862 = vsub.f32 %v1262, %v2861
        %2863 = vmatpush1.msra.mxu0 %v2862
        %2864 = vmatprep.subr.mxu0 0.0
        %v2865 = vand.u32 %v1263, 4294901760
        %v2866 = vsub.f32 %v1263, %v2865
        %2867 = vmatpush1.msra.mxu0 %v2866
        %2868 = vmatprep.subr.mxu0 0.0
        %v2869 = vand.u32 %v1264, 4294901760
        %v2870 = vsub.f32 %v1264, %v2869
        %2871 = vmatpush1.msra.mxu0 %v2870
        %2872 = vmatprep.subr.mxu0 0.0
        %v2873 = vand.u32 %v1265, 4294901760
        %v2874 = vsub.f32 %v1265, %v2873
        %2875 = vmatpush1.msra.mxu0 %v2874
        %2876 = vmatprep.subr.mxu0 0.0
        %v2877 = vand.u32 %v1266, 4294901760
        %v2878 = vsub.f32 %v1266, %v2877
        %2879 = vmatpush1.msra.mxu0 %v2878
        %2880 = vmatprep.subr.mxu0 0.0
        %v2881 = vand.u32 %v1267, 4294901760
        %v2882 = vsub.f32 %v1267, %v2881
        %2883 = vmatpush1.msra.mxu0 %v2882
        %2884 = vmatprep.subr.mxu0 0.0
        %v2885 = vand.u32 %v1268, 4294901760
        %v2886 = vsub.f32 %v1268, %v2885
        %2887 = vmatpush1.msra.mxu0 %v2886
        %2888 = vmatprep.subr.mxu0 0.0
        %2889 = vmatpush1.msra.mxu0 0.0
        %2890 = vmatprep.subr.mxu0 0.0
        %2891 = vmatpush1.msra.mxu0 0.0
        %2892 = vmatprep.subr.mxu0 0.0
        %2893 = vmatpush1.msra.mxu0 0.0
        %2894 = vmatprep.subr.mxu0 0.0
        %2895 = vmatpush1.msra.mxu0 0.0
        %2896 = vmatprep.subr.mxu0 0.0
        %2897 = vmatpush1.msra.mxu0 0.0
        %2898 = vmatprep.subr.mxu0 0.0
        %2899 = vmatpush1.msra.mxu0 0.0
        %2900 = vmatprep.subr.mxu0 0.0
        %2901 = vmatpush1.msra.mxu0 0.0
        %2902 = vmatprep.subr.mxu0 0.0
        %2903 = vmatpush1.msra.mxu0 0.0
        %2904 = vmatprep.subr.mxu0 0.0
        %2905 = vmatpush1.msra.mxu0 0.0
        %2906 = vmatprep.subr.mxu0 0.0
        %2907 = vmatpush1.msra.mxu0 0.0
        %2908 = vmatprep.subr.mxu0 0.0
        %2909 = vmatpush1.msra.mxu0 0.0
        %2910 = vmatprep.subr.mxu0 0.0
        %2911 = vmatpush1.msra.mxu0 0.0
        %2912 = vmatprep.subr.mxu0 0.0
        %2913 = vmatpush1.msra.mxu0 0.0
        %2914 = vmatprep.subr.mxu0 0.0
        %2915 = vmatpush1.msra.mxu0 0.0
        %2916 = vmatprep.subr.mxu0 0.0
        %2917 = vmatpush1.msra.mxu0 0.0
        %2918 = vmatprep.subr.mxu0 0.0
        %2919 = vmatpush1.msra.mxu0 0.0
        %2920 = vmatprep.mubr.f32.mxu0 0.0
        %v2921 = vand.u32 %v2577, 4294901760
        %v2922 = vsub.f32 %v2577, %v2921
        %2923 = vmatmul.mubr.f32.gmra.mrb[0].mxu0 %v2922
        %v2924 = vpop.f32.mrb[0].mxu0
        %v2925 = vadd.f32 %v2821, %v2924
        %v2926 = vpop.f32.mrb[0].mxu0
        %2927 = vdwg.mxu0
        %2928 = vmatprep.subr.mxu0 0.0
        %v2929 = vand.u32 %v1253, 4294901760
        %2930 = vmatpush1.msra.mxu0 %v2929
        %2931 = vmatprep.subr.mxu0 0.0
        %v2932 = vand.u32 %v1254, 4294901760
        %2933 = vmatpush1.msra.mxu0 %v2932
        %2934 = vmatprep.subr.mxu0 0.0
        %v2935 = vand.u32 %v1255, 4294901760
        %2936 = vmatpush1.msra.mxu0 %v2935
        %2937 = vmatprep.subr.mxu0 0.0
        %v2938 = vand.u32 %v1256, 4294901760
        %2939 = vmatpush1.msra.mxu0 %v2938
        %2940 = vmatprep.subr.mxu0 0.0
        %v2941 = vand.u32 %v1257, 4294901760
        %2942 = vmatpush1.msra.mxu0 %v2941
        %2943 = vmatprep.subr.mxu0 0.0
        %v2944 = vand.u32 %v1258, 4294901760
        %2945 = vmatpush1.msra.mxu0 %v2944
        %2946 = vmatprep.subr.mxu0 0.0
        %v2947 = vand.u32 %v1259, 4294901760
        %2948 = vmatpush1.msra.mxu0 %v2947
        %2949 = vmatprep.subr.mxu0 0.0
        %v2950 = vand.u32 %v1260, 4294901760
        %2951 = vmatpush1.msra.mxu0 %v2950
        %2952 = vmatprep.subr.mxu0 0.0
        %v2953 = vand.u32 %v1261, 4294901760
        %2954 = vmatpush1.msra.mxu0 %v2953
        %2955 = vmatprep.subr.mxu0 0.0
        %v2956 = vand.u32 %v1262, 4294901760
        %2957 = vmatpush1.msra.mxu0 %v2956
        %2958 = vmatprep.subr.mxu0 0.0
        %v2959 = vand.u32 %v1263, 4294901760
        %2960 = vmatpush1.msra.mxu0 %v2959
        %2961 = vmatprep.subr.mxu0 0.0
        %v2962 = vand.u32 %v1264, 4294901760
        %2963 = vmatpush1.msra.mxu0 %v2962
        %2964 = vmatprep.subr.mxu0 0.0
        %v2965 = vand.u32 %v1265, 4294901760
        %2966 = vmatpush1.msra.mxu0 %v2965
        %2967 = vmatprep.subr.mxu0 0.0
        %v2968 = vand.u32 %v1266, 4294901760
        %2969 = vmatpush1.msra.mxu0 %v2968
        %2970 = vmatprep.subr.mxu0 0.0
        %v2971 = vand.u32 %v1267, 4294901760
        %2972 = vmatpush1.msra.mxu0 %v2971
        %2973 = vmatprep.subr.mxu0 0.0
        %v2974 = vand.u32 %v1268, 4294901760
        %2975 = vmatpush1.msra.mxu0 %v2974
        %2976 = vmatprep.subr.mxu0 0.0
        %2977 = vmatpush1.msra.mxu0 0.0
        %2978 = vmatprep.subr.mxu0 0.0
        %2979 = vmatpush1.msra.mxu0 0.0
        %2980 = vmatprep.subr.mxu0 0.0
        %2981 = vmatpush1.msra.mxu0 0.0
        %2982 = vmatprep.subr.mxu0 0.0
        %2983 = vmatpush1.msra.mxu0 0.0
        %2984 = vmatprep.subr.mxu0 0.0
        %2985 = vmatpush1.msra.mxu0 0.0
        %2986 = vmatprep.subr.mxu0 0.0
        %2987 = vmatpush1.msra.mxu0 0.0
        %2988 = vmatprep.subr.mxu0 0.0
        %2989 = vmatpush1.msra.mxu0 0.0
        %2990 = vmatprep.subr.mxu0 0.0
        %2991 = vmatpush1.msra.mxu0 0.0
        %2992 = vmatprep.subr.mxu0 0.0
        %2993 = vmatpush1.msra.mxu0 0.0
        %2994 = vmatprep.subr.mxu0 0.0
        %2995 = vmatpush1.msra.mxu0 0.0
        %2996 = vmatprep.subr.mxu0 0.0
        %2997 = vmatpush1.msra.mxu0 0.0
        %2998 = vmatprep.subr.mxu0 0.0
        %2999 = vmatpush1.msra.mxu0 0.0
        %3000 = vmatprep.subr.mxu0 0.0
        %3001 = vmatpush1.msra.mxu0 0.0
        %3002 = vmatprep.subr.mxu0 0.0
        %3003 = vmatpush1.msra.mxu0 0.0
        %3004 = vmatprep.subr.mxu0 0.0
        %3005 = vmatpush1.msra.mxu0 0.0
        %3006 = vmatprep.subr.mxu0 0.0
        %3007 = vmatpush1.msra.mxu0 0.0
        %3008 = vmatprep.mubr.f32.mxu0 0.0
        %v3009 = vand.u32 %v2577, 4294901760
        %v3010 = vsub.f32 %v2577, %v3009
        %v3011 = vand.u32 %v3010, 4294901760
        %3012 = vmatmul.mubr.f32.gmra.mrb[0].mxu0 %v3011
        %v3013 = vpop.f32.mrb[0].mxu0
        %v3014 = vadd.f32 %v2925, %v3013
        %v3015 = vpop.f32.mrb[0].mxu0
        %3016 = vdwg.mxu0
        %3017 = vmatprep.subr.mxu0 0.0
        %v3018 = vand.u32 %v1253, 4294901760
        %v3019 = vsub.f32 %v1253, %v3018
        %v3020 = vand.u32 %v3019, 4294901760
        %3021 = vmatpush1.msra.mxu0 %v3020
        %3022 = vmatprep.subr.mxu0 0.0
        %v3023 = vand.u32 %v1254, 4294901760
        %v3024 = vsub.f32 %v1254, %v3023
        %v3025 = vand.u32 %v3024, 4294901760
        %3026 = vmatpush1.msra.mxu0 %v3025
        %3027 = vmatprep.subr.mxu0 0.0
        %v3028 = vand.u32 %v1255, 4294901760
        %v3029 = vsub.f32 %v1255, %v3028
        %v3030 = vand.u32 %v3029, 4294901760
        %3031 = vmatpush1.msra.mxu0 %v3030
        %3032 = vmatprep.subr.mxu0 0.0
        %v3033 = vand.u32 %v1256, 4294901760
        %v3034 = vsub.f32 %v1256, %v3033
        %v3035 = vand.u32 %v3034, 4294901760
        %3036 = vmatpush1.msra.mxu0 %v3035
        %3037 = vmatprep.subr.mxu0 0.0
        %v3038 = vand.u32 %v1257, 4294901760
        %v3039 = vsub.f32 %v1257, %v3038
        %v3040 = vand.u32 %v3039, 4294901760
        %3041 = vmatpush1.msra.mxu0 %v3040
        %3042 = vmatprep.subr.mxu0 0.0
        %v3043 = vand.u32 %v1258, 4294901760
        %v3044 = vsub.f32 %v1258, %v3043
        %v3045 = vand.u32 %v3044, 4294901760
        %3046 = vmatpush1.msra.mxu0 %v3045
        %3047 = vmatprep.subr.mxu0 0.0
        %v3048 = vand.u32 %v1259, 4294901760
        %v3049 = vsub.f32 %v1259, %v3048
        %v3050 = vand.u32 %v3049, 4294901760
        %3051 = vmatpush1.msra.mxu0 %v3050
        %3052 = vmatprep.subr.mxu0 0.0
        %v3053 = vand.u32 %v1260, 4294901760
        %v3054 = vsub.f32 %v1260, %v3053
        %v3055 = vand.u32 %v3054, 4294901760
        %3056 = vmatpush1.msra.mxu0 %v3055
        %3057 = vmatprep.subr.mxu0 0.0
        %v3058 = vand.u32 %v1261, 4294901760
        %v3059 = vsub.f32 %v1261, %v3058
        %v3060 = vand.u32 %v3059, 4294901760
        %3061 = vmatpush1.msra.mxu0 %v3060
        %3062 = vmatprep.subr.mxu0 0.0
        %v3063 = vand.u32 %v1262, 4294901760
        %v3064 = vsub.f32 %v1262, %v3063
        %v3065 = vand.u32 %v3064, 4294901760
        %3066 = vmatpush1.msra.mxu0 %v3065
        %3067 = vmatprep.subr.mxu0 0.0
        %v3068 = vand.u32 %v1263, 4294901760
        %v3069 = vsub.f32 %v1263, %v3068
        %v3070 = vand.u32 %v3069, 4294901760
        %3071 = vmatpush1.msra.mxu0 %v3070
        %3072 = vmatprep.subr.mxu0 0.0
        %v3073 = vand.u32 %v1264, 4294901760
        %v3074 = vsub.f32 %v1264, %v3073
        %v3075 = vand.u32 %v3074, 4294901760
        %3076 = vmatpush1.msra.mxu0 %v3075
        %3077 = vmatprep.subr.mxu0 0.0
        %v3078 = vand.u32 %v1265, 4294901760
        %v3079 = vsub.f32 %v1265, %v3078
        %v3080 = vand.u32 %v3079, 4294901760
        %3081 = vmatpush1.msra.mxu0 %v3080
        %3082 = vmatprep.subr.mxu0 0.0
        %v3083 = vand.u32 %v1266, 4294901760
        %v3084 = vsub.f32 %v1266, %v3083
        %v3085 = vand.u32 %v3084, 4294901760
        %3086 = vmatpush1.msra.mxu0 %v3085
        %3087 = vmatprep.subr.mxu0 0.0
        %v3088 = vand.u32 %v1267, 4294901760
        %v3089 = vsub.f32 %v1267, %v3088
        %v3090 = vand.u32 %v3089, 4294901760
        %3091 = vmatpush1.msra.mxu0 %v3090
        %3092 = vmatprep.subr.mxu0 0.0
        %v3093 = vand.u32 %v1268, 4294901760
        %v3094 = vsub.f32 %v1268, %v3093
        %v3095 = vand.u32 %v3094, 4294901760
        %3096 = vmatpush1.msra.mxu0 %v3095
        %3097 = vmatprep.subr.mxu0 0.0
        %3098 = vmatpush1.msra.mxu0 0.0
        %3099 = vmatprep.subr.mxu0 0.0
        %3100 = vmatpush1.msra.mxu0 0.0
        %3101 = vmatprep.subr.mxu0 0.0
        %3102 = vmatpush1.msra.mxu0 0.0
        %3103 = vmatprep.subr.mxu0 0.0
        %3104 = vmatpush1.msra.mxu0 0.0
        %3105 = vmatprep.subr.mxu0 0.0
        %3106 = vmatpush1.msra.mxu0 0.0
        %3107 = vmatprep.subr.mxu0 0.0
        %3108 = vmatpush1.msra.mxu0 0.0
        %3109 = vmatprep.subr.mxu0 0.0
        %3110 = vmatpush1.msra.mxu0 0.0
        %3111 = vmatprep.subr.mxu0 0.0
        %3112 = vmatpush1.msra.mxu0 0.0
        %3113 = vmatprep.subr.mxu0 0.0
        %3114 = vmatpush1.msra.mxu0 0.0
        %3115 = vmatprep.subr.mxu0 0.0
        %3116 = vmatpush1.msra.mxu0 0.0
        %3117 = vmatprep.subr.mxu0 0.0
        %3118 = vmatpush1.msra.mxu0 0.0
        %3119 = vmatprep.subr.mxu0 0.0
        %3120 = vmatpush1.msra.mxu0 0.0
        %3121 = vmatprep.subr.mxu0 0.0
        %3122 = vmatpush1.msra.mxu0 0.0
        %3123 = vmatprep.subr.mxu0 0.0
        %3124 = vmatpush1.msra.mxu0 0.0
        %3125 = vmatprep.subr.mxu0 0.0
        %3126 = vmatpush1.msra.mxu0 0.0
        %3127 = vmatprep.subr.mxu0 0.0
        %3128 = vmatpush1.msra.mxu0 0.0
        %3129 = vmatprep.mubr.f32.mxu0 0.0
        %v3130 = vand.u32 %v2577, 4294901760
        %3131 = vmatmul.mubr.f32.gmra.mrb[0].mxu0 %v3130
        %v3132 = vpop.f32.mrb[0].mxu0
        %v3133 = vadd.f32 %v3014, %v3132
        %v3134 = vpop.f32.mrb[0].mxu0
        %3135 = vdwg.mxu0
        %3136 = vmatprep.subr.mxu0 0.0
        %v3137 = vand.u32 %v1253, 4294901760
        %3138 = vmatpush1.msra.mxu0 %v3137
        %3139 = vmatprep.subr.mxu0 0.0
        %v3140 = vand.u32 %v1254, 4294901760
        %3141 = vmatpush1.msra.mxu0 %v3140
        %3142 = vmatprep.subr.mxu0 0.0
        %v3143 = vand.u32 %v1255, 4294901760
        %3144 = vmatpush1.msra.mxu0 %v3143
        %3145 = vmatprep.subr.mxu0 0.0
        %v3146 = vand.u32 %v1256, 4294901760
        %3147 = vmatpush1.msra.mxu0 %v3146
        %3148 = vmatprep.subr.mxu0 0.0
        %v3149 = vand.u32 %v1257, 4294901760
        %3150 = vmatpush1.msra.mxu0 %v3149
        %3151 = vmatprep.subr.mxu0 0.0
        %v3152 = vand.u32 %v1258, 4294901760
        %3153 = vmatpush1.msra.mxu0 %v3152
        %3154 = vmatprep.subr.mxu0 0.0
        %v3155 = vand.u32 %v1259, 4294901760
        %3156 = vmatpush1.msra.mxu0 %v3155
        %3157 = vmatprep.subr.mxu0 0.0
        %v3158 = vand.u32 %v1260, 4294901760
        %3159 = vmatpush1.msra.mxu0 %v3158
        %3160 = vmatprep.subr.mxu0 0.0
        %v3161 = vand.u32 %v1261, 4294901760
        %3162 = vmatpush1.msra.mxu0 %v3161
        %3163 = vmatprep.subr.mxu0 0.0
        %v3164 = vand.u32 %v1262, 4294901760
        %3165 = vmatpush1.msra.mxu0 %v3164
        %3166 = vmatprep.subr.mxu0 0.0
        %v3167 = vand.u32 %v1263, 4294901760
        %3168 = vmatpush1.msra.mxu0 %v3167
        %3169 = vmatprep.subr.mxu0 0.0
        %v3170 = vand.u32 %v1264, 4294901760
        %3171 = vmatpush1.msra.mxu0 %v3170
        %3172 = vmatprep.subr.mxu0 0.0
        %v3173 = vand.u32 %v1265, 4294901760
        %3174 = vmatpush1.msra.mxu0 %v3173
        %3175 = vmatprep.subr.mxu0 0.0
        %v3176 = vand.u32 %v1266, 4294901760
        %3177 = vmatpush1.msra.mxu0 %v3176
        %3178 = vmatprep.subr.mxu0 0.0
        %v3179 = vand.u32 %v1267, 4294901760
        %3180 = vmatpush1.msra.mxu0 %v3179
        %3181 = vmatprep.subr.mxu0 0.0
        %v3182 = vand.u32 %v1268, 4294901760
        %3183 = vmatpush1.msra.mxu0 %v3182
        %3184 = vmatprep.subr.mxu0 0.0
        %3185 = vmatpush1.msra.mxu0 0.0
        %3186 = vmatprep.subr.mxu0 0.0
        %3187 = vmatpush1.msra.mxu0 0.0
        %3188 = vmatprep.subr.mxu0 0.0
        %3189 = vmatpush1.msra.mxu0 0.0
        %3190 = vmatprep.subr.mxu0 0.0
        %3191 = vmatpush1.msra.mxu0 0.0
        %3192 = vmatprep.subr.mxu0 0.0
        %3193 = vmatpush1.msra.mxu0 0.0
        %3194 = vmatprep.subr.mxu0 0.0
        %3195 = vmatpush1.msra.mxu0 0.0
        %3196 = vmatprep.subr.mxu0 0.0
        %3197 = vmatpush1.msra.mxu0 0.0
        %3198 = vmatprep.subr.mxu0 0.0
        %3199 = vmatpush1.msra.mxu0 0.0
        %3200 = vmatprep.subr.mxu0 0.0
        %3201 = vmatpush1.msra.mxu0 0.0
        %3202 = vmatprep.subr.mxu0 0.0
        %3203 = vmatpush1.msra.mxu0 0.0
        %3204 = vmatprep.subr.mxu0 0.0
        %3205 = vmatpush1.msra.mxu0 0.0
        %3206 = vmatprep.subr.mxu0 0.0
        %3207 = vmatpush1.msra.mxu0 0.0
        %3208 = vmatprep.subr.mxu0 0.0
        %3209 = vmatpush1.msra.mxu0 0.0
        %3210 = vmatprep.subr.mxu0 0.0
        %3211 = vmatpush1.msra.mxu0 0.0
        %3212 = vmatprep.subr.mxu0 0.0
        %3213 = vmatpush1.msra.mxu0 0.0
        %3214 = vmatprep.subr.mxu0 0.0
        %3215 = vmatpush1.msra.mxu0 0.0
        %3216 = vmatprep.mubr.f32.mxu0 0.0
        %v3217 = vand.u32 %v2577, 4294901760
        %3218 = vmatmul.mubr.f32.gmra.mrb[0].mxu0 %v3217
        %v3219 = vpop.f32.mrb[0].mxu0
        %v3220 = vadd.f32 %v3133, %v3219
        %v3221 = vpop.f32.mrb[0].mxu0
        %3222 = vdwg.mxu0
        %v3223 = vld [vmem:[#allocation2 + $0x10] sm:$0xff]
        %v3224 = vmul.f32 %v2576, 0.1
        %v3225 = vsub.f32 0.0, %v2576
        %v3226 = vadd.f32 %v3225, %v3220
        %v3227 = vadd.f32 %v3226, %v3223
        %v3228 = vmul.f32 %v3224, %v3227
        %v3229 = vmax.f32 %v3228, 0.0
        %s3230 = scalar_lea.vmem %s333, 16 [#allocation6]
        %3231 = vst [vmem:[%s3230] sm:$0xff] %v3228
        %s3232 = scalar_lea.vmem %s326, 16 [#allocation4]
        %3233 = vst [vmem:[%s3232] sm:$0xff] %v3229
        %3234 = vmatprep.subr.mxu0 0.0
        %v3235 = vand.u32 %v1253, 4294901760
        %3236 = vmatpush1.msra.mxu0 %v3235
        %3237 = vmatprep.subr.mxu0 0.0
        %v3238 = vand.u32 %v1254, 4294901760
        %3239 = vmatpush1.msra.mxu0 %v3238
        %3240 = vmatprep.subr.mxu0 0.0
        %v3241 = vand.u32 %v1255, 4294901760
        %3242 = vmatpush1.msra.mxu0 %v3241
        %3243 = vmatprep.subr.mxu0 0.0
        %v3244 = vand.u32 %v1256, 4294901760
        %3245 = vmatpush1.msra.mxu0 %v3244
        %3246 = vmatprep.subr.mxu0 0.0
        %v3247 = vand.u32 %v1257, 4294901760
        %3248 = vmatpush1.msra.mxu0 %v3247
        %3249 = vmatprep.subr.mxu0 0.0
        %v3250 = vand.u32 %v1258, 4294901760
        %3251 = vmatpush1.msra.mxu0 %v3250
        %3252 = vmatprep.subr.mxu0 0.0
        %v3253 = vand.u32 %v1259, 4294901760
        %3254 = vmatpush1.msra.mxu0 %v3253
        %3255 = vmatprep.subr.mxu0 0.0
        %v3256 = vand.u32 %v1260, 4294901760
        %3257 = vmatpush1.msra.mxu0 %v3256
        %3258 = vmatprep.subr.mxu0 0.0
        %v3259 = vand.u32 %v1261, 4294901760
        %3260 = vmatpush1.msra.mxu0 %v3259
        %3261 = vmatprep.subr.mxu0 0.0
        %v3262 = vand.u32 %v1262, 4294901760
        %3263 = vmatpush1.msra.mxu0 %v3262
        %3264 = vmatprep.subr.mxu0 0.0
        %v3265 = vand.u32 %v1263, 4294901760
        %3266 = vmatpush1.msra.mxu0 %v3265
        %3267 = vmatprep.subr.mxu0 0.0
        %v3268 = vand.u32 %v1264, 4294901760
        %3269 = vmatpush1.msra.mxu0 %v3268
        %3270 = vmatprep.subr.mxu0 0.0
        %v3271 = vand.u32 %v1265, 4294901760
        %3272 = vmatpush1.msra.mxu0 %v3271
        %3273 = vmatprep.subr.mxu0 0.0
        %v3274 = vand.u32 %v1266, 4294901760
        %3275 = vmatpush1.msra.mxu0 %v3274
        %3276 = vmatprep.subr.mxu0 0.0
        %v3277 = vand.u32 %v1267, 4294901760
        %3278 = vmatpush1.msra.mxu0 %v3277
        %3279 = vmatprep.subr.mxu0 0.0
        %v3280 = vand.u32 %v1268, 4294901760
        %3281 = vmatpush1.msra.mxu0 %v3280
        %3282 = vmatprep.subr.mxu0 0.0
        %3283 = vmatpush1.msra.mxu0 0.0
        %3284 = vmatprep.subr.mxu0 0.0
        %3285 = vmatpush1.msra.mxu0 0.0
        %3286 = vmatprep.subr.mxu0 0.0
        %3287 = vmatpush1.msra.mxu0 0.0
        %3288 = vmatprep.subr.mxu0 0.0
        %3289 = vmatpush1.msra.mxu0 0.0
        %3290 = vmatprep.subr.mxu0 0.0
        %3291 = vmatpush1.msra.mxu0 0.0
        %3292 = vmatprep.subr.mxu0 0.0
        %3293 = vmatpush1.msra.mxu0 0.0
        %3294 = vmatprep.subr.mxu0 0.0
        %3295 = vmatpush1.msra.mxu0 0.0
        %3296 = vmatprep.subr.mxu0 0.0
        %3297 = vmatpush1.msra.mxu0 0.0
        %3298 = vmatprep.subr.mxu0 0.0
        %3299 = vmatpush1.msra.mxu0 0.0
        %3300 = vmatprep.subr.mxu0 0.0
        %3301 = vmatpush1.msra.mxu0 0.0
        %3302 = vmatprep.subr.mxu0 0.0
        %3303 = vmatpush1.msra.mxu0 0.0
        %3304 = vmatprep.subr.mxu0 0.0
        %3305 = vmatpush1.msra.mxu0 0.0
        %3306 = vmatprep.subr.mxu0 0.0
        %3307 = vmatpush1.msra.mxu0 0.0
        %3308 = vmatprep.subr.mxu0 0.0
        %3309 = vmatpush1.msra.mxu0 0.0
        %3310 = vmatprep.subr.mxu0 0.0
        %3311 = vmatpush1.msra.mxu0 0.0
        %3312 = vmatprep.subr.mxu0 0.0
        %3313 = vmatpush1.msra.mxu0 0.0
        %3314 = vmatprep.mubr.f32.mxu0 0.0
        %v3315 = vand.u32 %v3229, 4294901760
        %v3316 = vsub.f32 %v3229, %v3315
        %v3317 = vand.u32 %v3316, 4294901760
        %v3318 = vsub.f32 %v3316, %v3317
        %v3319 = vand.u32 %v3318, 4294901760
        %3320 = vmatmul.mubr.f32.gmra.mrb[0].mxu0 %v3319
        %v3321 = vpop.f32.mrb[0].mxu0
        %v3322 = vadd.f32 0.0, %v3321
        %v3323 = vpop.f32.mrb[0].mxu0
        %3324 = vdwg.mxu0
        %3325 = vmatprep.subr.mxu0 0.0
        %v3326 = vand.u32 %v1253, 4294901760
        %v3327 = vsub.f32 %v1253, %v3326
        %v3328 = vand.u32 %v3327, 4294901760
        %v3329 = vsub.f32 %v3327, %v3328
        %v3330 = vand.u32 %v3329, 4294901760
        %3331 = vmatpush1.msra.mxu0 %v3330
        %3332 = vmatprep.subr.mxu0 0.0
        %v3333 = vand.u32 %v1254, 4294901760
        %v3334 = vsub.f32 %v1254, %v3333
        %v3335 = vand.u32 %v3334, 4294901760
        %v3336 = vsub.f32 %v3334, %v3335
        %v3337 = vand.u32 %v3336, 4294901760
        %3338 = vmatpush1.msra.mxu0 %v3337
        %3339 = vmatprep.subr.mxu0 0.0
        %v3340 = vand.u32 %v1255, 4294901760
        %v3341 = vsub.f32 %v1255, %v3340
        %v3342 = vand.u32 %v3341, 4294901760
        %v3343 = vsub.f32 %v3341, %v3342
        %v3344 = vand.u32 %v3343, 4294901760
        %3345 = vmatpush1.msra.mxu0 %v3344
        %3346 = vmatprep.subr.mxu0 0.0
        %v3347 = vand.u32 %v1256, 4294901760
        %v3348 = vsub.f32 %v1256, %v3347
        %v3349 = vand.u32 %v3348, 4294901760
        %v3350 = vsub.f32 %v3348, %v3349
        %v3351 = vand.u32 %v3350, 4294901760
        %3352 = vmatpush1.msra.mxu0 %v3351
        %3353 = vmatprep.subr.mxu0 0.0
        %v3354 = vand.u32 %v1257, 4294901760
        %v3355 = vsub.f32 %v1257, %v3354
        %v3356 = vand.u32 %v3355, 4294901760
        %v3357 = vsub.f32 %v3355, %v3356
        %v3358 = vand.u32 %v3357, 4294901760
        %3359 = vmatpush1.msra.mxu0 %v3358
        %3360 = vmatprep.subr.mxu0 0.0
        %v3361 = vand.u32 %v1258, 4294901760
        %v3362 = vsub.f32 %v1258, %v3361
        %v3363 = vand.u32 %v3362, 4294901760
        %v3364 = vsub.f32 %v3362, %v3363
        %v3365 = vand.u32 %v3364, 4294901760
        %3366 = vmatpush1.msra.mxu0 %v3365
        %3367 = vmatprep.subr.mxu0 0.0
        %v3368 = vand.u32 %v1259, 4294901760
        %v3369 = vsub.f32 %v1259, %v3368
        %v3370 = vand.u32 %v3369, 4294901760
        %v3371 = vsub.f32 %v3369, %v3370
        %v3372 = vand.u32 %v3371, 4294901760
        %3373 = vmatpush1.msra.mxu0 %v3372
        %3374 = vmatprep.subr.mxu0 0.0
        %v3375 = vand.u32 %v1260, 4294901760
        %v3376 = vsub.f32 %v1260, %v3375
        %v3377 = vand.u32 %v3376, 4294901760
        %v3378 = vsub.f32 %v3376, %v3377
        %v3379 = vand.u32 %v3378, 4294901760
        %3380 = vmatpush1.msra.mxu0 %v3379
        %3381 = vmatprep.subr.mxu0 0.0
        %v3382 = vand.u32 %v1261, 4294901760
        %v3383 = vsub.f32 %v1261, %v3382
        %v3384 = vand.u32 %v3383, 4294901760
        %v3385 = vsub.f32 %v3383, %v3384
        %v3386 = vand.u32 %v3385, 4294901760
        %3387 = vmatpush1.msra.mxu0 %v3386
        %3388 = vmatprep.subr.mxu0 0.0
        %v3389 = vand.u32 %v1262, 4294901760
        %v3390 = vsub.f32 %v1262, %v3389
        %v3391 = vand.u32 %v3390, 4294901760
        %v3392 = vsub.f32 %v3390, %v3391
        %v3393 = vand.u32 %v3392, 4294901760
        %3394 = vmatpush1.msra.mxu0 %v3393
        %3395 = vmatprep.subr.mxu0 0.0
        %v3396 = vand.u32 %v1263, 4294901760
        %v3397 = vsub.f32 %v1263, %v3396
        %v3398 = vand.u32 %v3397, 4294901760
        %v3399 = vsub.f32 %v3397, %v3398
        %v3400 = vand.u32 %v3399, 4294901760
        %3401 = vmatpush1.msra.mxu0 %v3400
        %3402 = vmatprep.subr.mxu0 0.0
        %v3403 = vand.u32 %v1264, 4294901760
        %v3404 = vsub.f32 %v1264, %v3403
        %v3405 = vand.u32 %v3404, 4294901760
        %v3406 = vsub.f32 %v3404, %v3405
        %v3407 = vand.u32 %v3406, 4294901760
        %3408 = vmatpush1.msra.mxu0 %v3407
        %3409 = vmatprep.subr.mxu0 0.0
        %v3410 = vand.u32 %v1265, 4294901760
        %v3411 = vsub.f32 %v1265, %v3410
        %v3412 = vand.u32 %v3411, 4294901760
        %v3413 = vsub.f32 %v3411, %v3412
        %v3414 = vand.u32 %v3413, 4294901760
        %3415 = vmatpush1.msra.mxu0 %v3414
        %3416 = vmatprep.subr.mxu0 0.0
        %v3417 = vand.u32 %v1266, 4294901760
        %v3418 = vsub.f32 %v1266, %v3417
        %v3419 = vand.u32 %v3418, 4294901760
        %v3420 = vsub.f32 %v3418, %v3419
        %v3421 = vand.u32 %v3420, 4294901760
        %3422 = vmatpush1.msra.mxu0 %v3421
        %3423 = vmatprep.subr.mxu0 0.0
        %v3424 = vand.u32 %v1267, 4294901760
        %v3425 = vsub.f32 %v1267, %v3424
        %v3426 = vand.u32 %v3425, 4294901760
        %v3427 = vsub.f32 %v3425, %v3426
        %v3428 = vand.u32 %v3427, 4294901760
        %3429 = vmatpush1.msra.mxu0 %v3428
        %3430 = vmatprep.subr.mxu0 0.0
        %v3431 = vand.u32 %v1268, 4294901760
        %v3432 = vsub.f32 %v1268, %v3431
        %v3433 = vand.u32 %v3432, 4294901760
        %v3434 = vsub.f32 %v3432, %v3433
        %v3435 = vand.u32 %v3434, 4294901760
        %3436 = vmatpush1.msra.mxu0 %v3435
        %3437 = vmatprep.subr.mxu0 0.0
        %3438 = vmatpush1.msra.mxu0 0.0
        %3439 = vmatprep.subr.mxu0 0.0
        %3440 = vmatpush1.msra.mxu0 0.0
        %3441 = vmatprep.subr.mxu0 0.0
        %3442 = vmatpush1.msra.mxu0 0.0
        %3443 = vmatprep.subr.mxu0 0.0
        %3444 = vmatpush1.msra.mxu0 0.0
        %3445 = vmatprep.subr.mxu0 0.0
        %3446 = vmatpush1.msra.mxu0 0.0
        %3447 = vmatprep.subr.mxu0 0.0
        %3448 = vmatpush1.msra.mxu0 0.0
        %3449 = vmatprep.subr.mxu0 0.0
        %3450 = vmatpush1.msra.mxu0 0.0
        %3451 = vmatprep.subr.mxu0 0.0
        %3452 = vmatpush1.msra.mxu0 0.0
        %3453 = vmatprep.subr.mxu0 0.0
        %3454 = vmatpush1.msra.mxu0 0.0
        %3455 = vmatprep.subr.mxu0 0.0
        %3456 = vmatpush1.msra.mxu0 0.0
        %3457 = vmatprep.subr.mxu0 0.0
        %3458 = vmatpush1.msra.mxu0 0.0
        %3459 = vmatprep.subr.mxu0 0.0
        %3460 = vmatpush1.msra.mxu0 0.0
        %3461 = vmatprep.subr.mxu0 0.0
        %3462 = vmatpush1.msra.mxu0 0.0
        %3463 = vmatprep.subr.mxu0 0.0
        %3464 = vmatpush1.msra.mxu0 0.0
        %3465 = vmatprep.subr.mxu0 0.0
        %3466 = vmatpush1.msra.mxu0 0.0
        %3467 = vmatprep.subr.mxu0 0.0
        %3468 = vmatpush1.msra.mxu0 0.0
        %3469 = vmatprep.mubr.f32.mxu0 0.0
        %v3470 = vand.u32 %v3229, 4294901760
        %3471 = vmatmul.mubr.f32.gmra.mrb[0].mxu0 %v3470
        %v3472 = vpop.f32.mrb[0].mxu0
        %v3473 = vadd.f32 %v3322, %v3472
        %v3474 = vpop.f32.mrb[0].mxu0
        %3475 = vdwg.mxu0
        %3476 = vmatprep.subr.mxu0 0.0
        %v3477 = vand.u32 %v1253, 4294901760
        %v3478 = vsub.f32 %v1253, %v3477
        %3479 = vmatpush1.msra.mxu0 %v3478
        %3480 = vmatprep.subr.mxu0 0.0
        %v3481 = vand.u32 %v1254, 4294901760
        %v3482 = vsub.f32 %v1254, %v3481
        %3483 = vmatpush1.msra.mxu0 %v3482
        %3484 = vmatprep.subr.mxu0 0.0
        %v3485 = vand.u32 %v1255, 4294901760
        %v3486 = vsub.f32 %v1255, %v3485
        %3487 = vmatpush1.msra.mxu0 %v3486
        %3488 = vmatprep.subr.mxu0 0.0
        %v3489 = vand.u32 %v1256, 4294901760
        %v3490 = vsub.f32 %v1256, %v3489
        %3491 = vmatpush1.msra.mxu0 %v3490
        %3492 = vmatprep.subr.mxu0 0.0
        %v3493 = vand.u32 %v1257, 4294901760
        %v3494 = vsub.f32 %v1257, %v3493
        %3495 = vmatpush1.msra.mxu0 %v3494
        %3496 = vmatprep.subr.mxu0 0.0
        %v3497 = vand.u32 %v1258, 4294901760
        %v3498 = vsub.f32 %v1258, %v3497
        %3499 = vmatpush1.msra.mxu0 %v3498
        %3500 = vmatprep.subr.mxu0 0.0
        %v3501 = vand.u32 %v1259, 4294901760
        %v3502 = vsub.f32 %v1259, %v3501
        %3503 = vmatpush1.msra.mxu0 %v3502
        %3504 = vmatprep.subr.mxu0 0.0
        %v3505 = vand.u32 %v1260, 4294901760
        %v3506 = vsub.f32 %v1260, %v3505
        %3507 = vmatpush1.msra.mxu0 %v3506
        %3508 = vmatprep.subr.mxu0 0.0
        %v3509 = vand.u32 %v1261, 4294901760
        %v3510 = vsub.f32 %v1261, %v3509
        %3511 = vmatpush1.msra.mxu0 %v3510
        %3512 = vmatprep.subr.mxu0 0.0
        %v3513 = vand.u32 %v1262, 4294901760
        %v3514 = vsub.f32 %v1262, %v3513
        %3515 = vmatpush1.msra.mxu0 %v3514
        %3516 = vmatprep.subr.mxu0 0.0
        %v3517 = vand.u32 %v1263, 4294901760
        %v3518 = vsub.f32 %v1263, %v3517
        %3519 = vmatpush1.msra.mxu0 %v3518
        %3520 = vmatprep.subr.mxu0 0.0
        %v3521 = vand.u32 %v1264, 4294901760
        %v3522 = vsub.f32 %v1264, %v3521
        %3523 = vmatpush1.msra.mxu0 %v3522
        %3524 = vmatprep.subr.mxu0 0.0
        %v3525 = vand.u32 %v1265, 4294901760
        %v3526 = vsub.f32 %v1265, %v3525
        %3527 = vmatpush1.msra.mxu0 %v3526
        %3528 = vmatprep.subr.mxu0 0.0
        %v3529 = vand.u32 %v1266, 4294901760
        %v3530 = vsub.f32 %v1266, %v3529
        %3531 = vmatpush1.msra.mxu0 %v3530
        %3532 = vmatprep.subr.mxu0 0.0
        %v3533 = vand.u32 %v1267, 4294901760
        %v3534 = vsub.f32 %v1267, %v3533
        %3535 = vmatpush1.msra.mxu0 %v3534
        %3536 = vmatprep.subr.mxu0 0.0
        %v3537 = vand.u32 %v1268, 4294901760
        %v3538 = vsub.f32 %v1268, %v3537
        %3539 = vmatpush1.msra.mxu0 %v3538
        %3540 = vmatprep.subr.mxu0 0.0
        %3541 = vmatpush1.msra.mxu0 0.0
        %3542 = vmatprep.subr.mxu0 0.0
        %3543 = vmatpush1.msra.mxu0 0.0
        %3544 = vmatprep.subr.mxu0 0.0
        %3545 = vmatpush1.msra.mxu0 0.0
        %3546 = vmatprep.subr.mxu0 0.0
        %3547 = vmatpush1.msra.mxu0 0.0
        %3548 = vmatprep.subr.mxu0 0.0
        %3549 = vmatpush1.msra.mxu0 0.0
        %3550 = vmatprep.subr.mxu0 0.0
        %3551 = vmatpush1.msra.mxu0 0.0
        %3552 = vmatprep.subr.mxu0 0.0
        %3553 = vmatpush1.msra.mxu0 0.0
        %3554 = vmatprep.subr.mxu0 0.0
        %3555 = vmatpush1.msra.mxu0 0.0
        %3556 = vmatprep.subr.mxu0 0.0
        %3557 = vmatpush1.msra.mxu0 0.0
        %3558 = vmatprep.subr.mxu0 0.0
        %3559 = vmatpush1.msra.mxu0 0.0
        %3560 = vmatprep.subr.mxu0 0.0
        %3561 = vmatpush1.msra.mxu0 0.0
        %3562 = vmatprep.subr.mxu0 0.0
        %3563 = vmatpush1.msra.mxu0 0.0
        %3564 = vmatprep.subr.mxu0 0.0
        %3565 = vmatpush1.msra.mxu0 0.0
        %3566 = vmatprep.subr.mxu0 0.0
        %3567 = vmatpush1.msra.mxu0 0.0
        %3568 = vmatprep.subr.mxu0 0.0
        %3569 = vmatpush1.msra.mxu0 0.0
        %3570 = vmatprep.subr.mxu0 0.0
        %3571 = vmatpush1.msra.mxu0 0.0
        %3572 = vmatprep.mubr.f32.mxu0 0.0
        %v3573 = vand.u32 %v3229, 4294901760
        %v3574 = vsub.f32 %v3229, %v3573
        %3575 = vmatmul.mubr.f32.gmra.mrb[0].mxu0 %v3574
        %v3576 = vpop.f32.mrb[0].mxu0
        %v3577 = vadd.f32 %v3473, %v3576
        %v3578 = vpop.f32.mrb[0].mxu0
        %3579 = vdwg.mxu0
        %3580 = vmatprep.subr.mxu0 0.0
        %v3581 = vand.u32 %v1253, 4294901760
        %3582 = vmatpush1.msra.mxu0 %v3581
        %3583 = vmatprep.subr.mxu0 0.0
        %v3584 = vand.u32 %v1254, 4294901760
        %3585 = vmatpush1.msra.mxu0 %v3584
        %3586 = vmatprep.subr.mxu0 0.0
        %v3587 = vand.u32 %v1255, 4294901760
        %3588 = vmatpush1.msra.mxu0 %v3587
        %3589 = vmatprep.subr.mxu0 0.0
        %v3590 = vand.u32 %v1256, 4294901760
        %3591 = vmatpush1.msra.mxu0 %v3590
        %3592 = vmatprep.subr.mxu0 0.0
        %v3593 = vand.u32 %v1257, 4294901760
        %3594 = vmatpush1.msra.mxu0 %v3593
        %3595 = vmatprep.subr.mxu0 0.0
        %v3596 = vand.u32 %v1258, 4294901760
        %3597 = vmatpush1.msra.mxu0 %v3596
        %3598 = vmatprep.subr.mxu0 0.0
        %v3599 = vand.u32 %v1259, 4294901760
        %3600 = vmatpush1.msra.mxu0 %v3599
        %3601 = vmatprep.subr.mxu0 0.0
        %v3602 = vand.u32 %v1260, 4294901760
        %3603 = vmatpush1.msra.mxu0 %v3602
        %3604 = vmatprep.subr.mxu0 0.0
        %v3605 = vand.u32 %v1261, 4294901760
        %3606 = vmatpush1.msra.mxu0 %v3605
        %3607 = vmatprep.subr.mxu0 0.0
        %v3608 = vand.u32 %v1262, 4294901760
        %3609 = vmatpush1.msra.mxu0 %v3608
        %3610 = vmatprep.subr.mxu0 0.0
        %v3611 = vand.u32 %v1263, 4294901760
        %3612 = vmatpush1.msra.mxu0 %v3611
        %3613 = vmatprep.subr.mxu0 0.0
        %v3614 = vand.u32 %v1264, 4294901760
        %3615 = vmatpush1.msra.mxu0 %v3614
        %3616 = vmatprep.subr.mxu0 0.0
        %v3617 = vand.u32 %v1265, 4294901760
        %3618 = vmatpush1.msra.mxu0 %v3617
        %3619 = vmatprep.subr.mxu0 0.0
        %v3620 = vand.u32 %v1266, 4294901760
        %3621 = vmatpush1.msra.mxu0 %v3620
        %3622 = vmatprep.subr.mxu0 0.0
        %v3623 = vand.u32 %v1267, 4294901760
        %3624 = vmatpush1.msra.mxu0 %v3623
        %3625 = vmatprep.subr.mxu0 0.0
        %v3626 = vand.u32 %v1268, 4294901760
        %3627 = vmatpush1.msra.mxu0 %v3626
        %3628 = vmatprep.subr.mxu0 0.0
        %3629 = vmatpush1.msra.mxu0 0.0
        %3630 = vmatprep.subr.mxu0 0.0
        %3631 = vmatpush1.msra.mxu0 0.0
        %3632 = vmatprep.subr.mxu0 0.0
        %3633 = vmatpush1.msra.mxu0 0.0
        %3634 = vmatprep.subr.mxu0 0.0
        %3635 = vmatpush1.msra.mxu0 0.0
        %3636 = vmatprep.subr.mxu0 0.0
        %3637 = vmatpush1.msra.mxu0 0.0
        %3638 = vmatprep.subr.mxu0 0.0
        %3639 = vmatpush1.msra.mxu0 0.0
        %3640 = vmatprep.subr.mxu0 0.0
        %3641 = vmatpush1.msra.mxu0 0.0
        %3642 = vmatprep.subr.mxu0 0.0
        %3643 = vmatpush1.msra.mxu0 0.0
        %3644 = vmatprep.subr.mxu0 0.0
        %3645 = vmatpush1.msra.mxu0 0.0
        %3646 = vmatprep.subr.mxu0 0.0
        %3647 = vmatpush1.msra.mxu0 0.0
        %3648 = vmatprep.subr.mxu0 0.0
        %3649 = vmatpush1.msra.mxu0 0.0
        %3650 = vmatprep.subr.mxu0 0.0
        %3651 = vmatpush1.msra.mxu0 0.0
        %3652 = vmatprep.subr.mxu0 0.0
        %3653 = vmatpush1.msra.mxu0 0.0
        %3654 = vmatprep.subr.mxu0 0.0
        %3655 = vmatpush1.msra.mxu0 0.0
        %3656 = vmatprep.subr.mxu0 0.0
        %3657 = vmatpush1.msra.mxu0 0.0
        %3658 = vmatprep.subr.mxu0 0.0
        %3659 = vmatpush1.msra.mxu0 0.0
        %3660 = vmatprep.mubr.f32.mxu0 0.0
        %v3661 = vand.u32 %v3229, 4294901760
        %v3662 = vsub.f32 %v3229, %v3661
        %v3663 = vand.u32 %v3662, 4294901760
        %3664 = vmatmul.mubr.f32.gmra.mrb[0].mxu0 %v3663
        %v3665 = vpop.f32.mrb[0].mxu0
        %v3666 = vadd.f32 %v3577, %v3665
        %v3667 = vpop.f32.mrb[0].mxu0
        %3668 = vdwg.mxu0
        %3669 = vmatprep.subr.mxu0 0.0
        %v3670 = vand.u32 %v1253, 4294901760
        %v3671 = vsub.f32 %v1253, %v3670
        %v3672 = vand.u32 %v3671, 4294901760
        %3673 = vmatpush1.msra.mxu0 %v3672
        %3674 = vmatprep.subr.mxu0 0.0
        %v3675 = vand.u32 %v1254, 4294901760
        %v3676 = vsub.f32 %v1254, %v3675
        %v3677 = vand.u32 %v3676, 4294901760
        %3678 = vmatpush1.msra.mxu0 %v3677
        %3679 = vmatprep.subr.mxu0 0.0
        %v3680 = vand.u32 %v1255, 4294901760
        %v3681 = vsub.f32 %v1255, %v3680
        %v3682 = vand.u32 %v3681, 4294901760
        %3683 = vmatpush1.msra.mxu0 %v3682
        %3684 = vmatprep.subr.mxu0 0.0
        %v3685 = vand.u32 %v1256, 4294901760
        %v3686 = vsub.f32 %v1256, %v3685
        %v3687 = vand.u32 %v3686, 4294901760
        %3688 = vmatpush1.msra.mxu0 %v3687
        %3689 = vmatprep.subr.mxu0 0.0
        %v3690 = vand.u32 %v1257, 4294901760
        %v3691 = vsub.f32 %v1257, %v3690
        %v3692 = vand.u32 %v3691, 4294901760
        %3693 = vmatpush1.msra.mxu0 %v3692
        %3694 = vmatprep.subr.mxu0 0.0
        %v3695 = vand.u32 %v1258, 4294901760
        %v3696 = vsub.f32 %v1258, %v3695
        %v3697 = vand.u32 %v3696, 4294901760
        %3698 = vmatpush1.msra.mxu0 %v3697
        %3699 = vmatprep.subr.mxu0 0.0
        %v3700 = vand.u32 %v1259, 4294901760
        %v3701 = vsub.f32 %v1259, %v3700
        %v3702 = vand.u32 %v3701, 4294901760
        %3703 = vmatpush1.msra.mxu0 %v3702
        %3704 = vmatprep.subr.mxu0 0.0
        %v3705 = vand.u32 %v1260, 4294901760
        %v3706 = vsub.f32 %v1260, %v3705
        %v3707 = vand.u32 %v3706, 4294901760
        %3708 = vmatpush1.msra.mxu0 %v3707
        %3709 = vmatprep.subr.mxu0 0.0
        %v3710 = vand.u32 %v1261, 4294901760
        %v3711 = vsub.f32 %v1261, %v3710
        %v3712 = vand.u32 %v3711, 4294901760
        %3713 = vmatpush1.msra.mxu0 %v3712
        %3714 = vmatprep.subr.mxu0 0.0
        %v3715 = vand.u32 %v1262, 4294901760
        %v3716 = vsub.f32 %v1262, %v3715
        %v3717 = vand.u32 %v3716, 4294901760
        %3718 = vmatpush1.msra.mxu0 %v3717
        %3719 = vmatprep.subr.mxu0 0.0
        %v3720 = vand.u32 %v1263, 4294901760
        %v3721 = vsub.f32 %v1263, %v3720
        %v3722 = vand.u32 %v3721, 4294901760
        %3723 = vmatpush1.msra.mxu0 %v3722
        %3724 = vmatprep.subr.mxu0 0.0
        %v3725 = vand.u32 %v1264, 4294901760
        %v3726 = vsub.f32 %v1264, %v3725
        %v3727 = vand.u32 %v3726, 4294901760
        %3728 = vmatpush1.msra.mxu0 %v3727
        %3729 = vmatprep.subr.mxu0 0.0
        %v3730 = vand.u32 %v1265, 4294901760
        %v3731 = vsub.f32 %v1265, %v3730
        %v3732 = vand.u32 %v3731, 4294901760
        %3733 = vmatpush1.msra.mxu0 %v3732
        %3734 = vmatprep.subr.mxu0 0.0
        %v3735 = vand.u32 %v1266, 4294901760
        %v3736 = vsub.f32 %v1266, %v3735
        %v3737 = vand.u32 %v3736, 4294901760
        %3738 = vmatpush1.msra.mxu0 %v3737
        %3739 = vmatprep.subr.mxu0 0.0
        %v3740 = vand.u32 %v1267, 4294901760
        %v3741 = vsub.f32 %v1267, %v3740
        %v3742 = vand.u32 %v3741, 4294901760
        %3743 = vmatpush1.msra.mxu0 %v3742
        %3744 = vmatprep.subr.mxu0 0.0
        %v3745 = vand.u32 %v1268, 4294901760
        %v3746 = vsub.f32 %v1268, %v3745
        %v3747 = vand.u32 %v3746, 4294901760
        %3748 = vmatpush1.msra.mxu0 %v3747
        %3749 = vmatprep.subr.mxu0 0.0
        %3750 = vmatpush1.msra.mxu0 0.0
        %3751 = vmatprep.subr.mxu0 0.0
        %3752 = vmatpush1.msra.mxu0 0.0
        %3753 = vmatprep.subr.mxu0 0.0
        %3754 = vmatpush1.msra.mxu0 0.0
        %3755 = vmatprep.subr.mxu0 0.0
        %3756 = vmatpush1.msra.mxu0 0.0
        %3757 = vmatprep.subr.mxu0 0.0
        %3758 = vmatpush1.msra.mxu0 0.0
        %3759 = vmatprep.subr.mxu0 0.0
        %3760 = vmatpush1.msra.mxu0 0.0
        %3761 = vmatprep.subr.mxu0 0.0
        %3762 = vmatpush1.msra.mxu0 0.0
        %3763 = vmatprep.subr.mxu0 0.0
        %3764 = vmatpush1.msra.mxu0 0.0
        %3765 = vmatprep.subr.mxu0 0.0
        %3766 = vmatpush1.msra.mxu0 0.0
        %3767 = vmatprep.subr.mxu0 0.0
        %3768 = vmatpush1.msra.mxu0 0.0
        %3769 = vmatprep.subr.mxu0 0.0
        %3770 = vmatpush1.msra.mxu0 0.0
        %3771 = vmatprep.subr.mxu0 0.0
        %3772 = vmatpush1.msra.mxu0 0.0
        %3773 = vmatprep.subr.mxu0 0.0
        %3774 = vmatpush1.msra.mxu0 0.0
        %3775 = vmatprep.subr.mxu0 0.0
        %3776 = vmatpush1.msra.mxu0 0.0
        %3777 = vmatprep.subr.mxu0 0.0
        %3778 = vmatpush1.msra.mxu0 0.0
        %3779 = vmatprep.subr.mxu0 0.0
        %3780 = vmatpush1.msra.mxu0 0.0
        %3781 = vmatprep.mubr.f32.mxu0 0.0
        %v3782 = vand.u32 %v3229, 4294901760
        %3783 = vmatmul.mubr.f32.gmra.mrb[0].mxu0 %v3782
        %v3784 = vpop.f32.mrb[0].mxu0
        %v3785 = vadd.f32 %v3666, %v3784
        %v3786 = vpop.f32.mrb[0].mxu0
        %3787 = vdwg.mxu0
        %3788 = vmatprep.subr.mxu0 0.0
        %v3789 = vand.u32 %v1253, 4294901760
        %3790 = vmatpush1.msra.mxu0 %v3789
        %3791 = vmatprep.subr.mxu0 0.0
        %v3792 = vand.u32 %v1254, 4294901760
        %3793 = vmatpush1.msra.mxu0 %v3792
        %3794 = vmatprep.subr.mxu0 0.0
        %v3795 = vand.u32 %v1255, 4294901760
        %3796 = vmatpush1.msra.mxu0 %v3795
        %3797 = vmatprep.subr.mxu0 0.0
        %v3798 = vand.u32 %v1256, 4294901760
        %3799 = vmatpush1.msra.mxu0 %v3798
        %3800 = vmatprep.subr.mxu0 0.0
        %v3801 = vand.u32 %v1257, 4294901760
        %3802 = vmatpush1.msra.mxu0 %v3801
        %3803 = vmatprep.subr.mxu0 0.0
        %v3804 = vand.u32 %v1258, 4294901760
        %3805 = vmatpush1.msra.mxu0 %v3804
        %3806 = vmatprep.subr.mxu0 0.0
        %v3807 = vand.u32 %v1259, 4294901760
        %3808 = vmatpush1.msra.mxu0 %v3807
        %3809 = vmatprep.subr.mxu0 0.0
        %v3810 = vand.u32 %v1260, 4294901760
        %3811 = vmatpush1.msra.mxu0 %v3810
        %3812 = vmatprep.subr.mxu0 0.0
        %v3813 = vand.u32 %v1261, 4294901760
        %3814 = vmatpush1.msra.mxu0 %v3813
        %3815 = vmatprep.subr.mxu0 0.0
        %v3816 = vand.u32 %v1262, 4294901760
        %3817 = vmatpush1.msra.mxu0 %v3816
        %3818 = vmatprep.subr.mxu0 0.0
        %v3819 = vand.u32 %v1263, 4294901760
        %3820 = vmatpush1.msra.mxu0 %v3819
        %3821 = vmatprep.subr.mxu0 0.0
        %v3822 = vand.u32 %v1264, 4294901760
        %3823 = vmatpush1.msra.mxu0 %v3822
        %3824 = vmatprep.subr.mxu0 0.0
        %v3825 = vand.u32 %v1265, 4294901760
        %3826 = vmatpush1.msra.mxu0 %v3825
        %3827 = vmatprep.subr.mxu0 0.0
        %v3828 = vand.u32 %v1266, 4294901760
        %3829 = vmatpush1.msra.mxu0 %v3828
        %3830 = vmatprep.subr.mxu0 0.0
        %v3831 = vand.u32 %v1267, 4294901760
        %3832 = vmatpush1.msra.mxu0 %v3831
        %3833 = vmatprep.subr.mxu0 0.0
        %v3834 = vand.u32 %v1268, 4294901760
        %3835 = vmatpush1.msra.mxu0 %v3834
        %3836 = vmatprep.subr.mxu0 0.0
        %3837 = vmatpush1.msra.mxu0 0.0
        %3838 = vmatprep.subr.mxu0 0.0
        %3839 = vmatpush1.msra.mxu0 0.0
        %3840 = vmatprep.subr.mxu0 0.0
        %3841 = vmatpush1.msra.mxu0 0.0
        %3842 = vmatprep.subr.mxu0 0.0
        %3843 = vmatpush1.msra.mxu0 0.0
        %3844 = vmatprep.subr.mxu0 0.0
        %3845 = vmatpush1.msra.mxu0 0.0
        %3846 = vmatprep.subr.mxu0 0.0
        %3847 = vmatpush1.msra.mxu0 0.0
        %3848 = vmatprep.subr.mxu0 0.0
        %3849 = vmatpush1.msra.mxu0 0.0
        %3850 = vmatprep.subr.mxu0 0.0
        %3851 = vmatpush1.msra.mxu0 0.0
        %3852 = vmatprep.subr.mxu0 0.0
        %3853 = vmatpush1.msra.mxu0 0.0
        %3854 = vmatprep.subr.mxu0 0.0
        %3855 = vmatpush1.msra.mxu0 0.0
        %3856 = vmatprep.subr.mxu0 0.0
        %3857 = vmatpush1.msra.mxu0 0.0
        %3858 = vmatprep.subr.mxu0 0.0
        %3859 = vmatpush1.msra.mxu0 0.0
        %3860 = vmatprep.subr.mxu0 0.0
        %3861 = vmatpush1.msra.mxu0 0.0
        %3862 = vmatprep.subr.mxu0 0.0
        %3863 = vmatpush1.msra.mxu0 0.0
        %3864 = vmatprep.subr.mxu0 0.0
        %3865 = vmatpush1.msra.mxu0 0.0
        %3866 = vmatprep.subr.mxu0 0.0
        %3867 = vmatpush1.msra.mxu0 0.0
        %3868 = vmatprep.mubr.f32.mxu0 0.0
        %v3869 = vand.u32 %v3229, 4294901760
        %3870 = vmatmul.mubr.f32.gmra.mrb[0].mxu0 %v3869
        %v3871 = vpop.f32.mrb[0].mxu0
        %v3872 = vadd.f32 %v3785, %v3871
        %v3873 = vpop.f32.mrb[0].mxu0
        %3874 = vdwg.mxu0
        %v3875 = vld [vmem:[#allocation2 + $0x18] sm:$0xff]
        %v3876 = vmul.f32 %v3228, 0.1
        %v3877 = vsub.f32 0.0, %v3228
        %v3878 = vadd.f32 %v3877, %v3872
        %v3879 = vadd.f32 %v3878, %v3875
        %v3880 = vmul.f32 %v3876, %v3879
        %v3881 = vmax.f32 %v3880, 0.0
        %s3882 = scalar_lea.vmem %s333, 24 [#allocation6]
        %3883 = vst [vmem:[%s3882] sm:$0xff] %v3880
        %s3884 = scalar_lea.vmem %s326, 24 [#allocation4]
        %3885 = vst [vmem:[%s3884] sm:$0xff] %v3881
        %3886 = vmatprep.subr.mxu0 0.0
        %v3887 = vand.u32 %v1253, 4294901760
        %3888 = vmatpush1.msra.mxu0 %v3887
        %3889 = vmatprep.subr.mxu0 0.0
        %v3890 = vand.u32 %v1254, 4294901760
        %3891 = vmatpush1.msra.mxu0 %v3890
        %3892 = vmatprep.subr.mxu0 0.0
        %v3893 = vand.u32 %v1255, 4294901760
        %3894 = vmatpush1.msra.mxu0 %v3893
        %3895 = vmatprep.subr.mxu0 0.0
        %v3896 = vand.u32 %v1256, 4294901760
        %3897 = vmatpush1.msra.mxu0 %v3896
        %3898 = vmatprep.subr.mxu0 0.0
        %v3899 = vand.u32 %v1257, 4294901760
        %3900 = vmatpush1.msra.mxu0 %v3899
        %3901 = vmatprep.subr.mxu0 0.0
        %v3902 = vand.u32 %v1258, 4294901760
        %3903 = vmatpush1.msra.mxu0 %v3902
        %3904 = vmatprep.subr.mxu0 0.0
        %v3905 = vand.u32 %v1259, 4294901760
        %3906 = vmatpush1.msra.mxu0 %v3905
        %3907 = vmatprep.subr.mxu0 0.0
        %v3908 = vand.u32 %v1260, 4294901760
        %3909 = vmatpush1.msra.mxu0 %v3908
        %3910 = vmatprep.subr.mxu0 0.0
        %v3911 = vand.u32 %v1261, 4294901760
        %3912 = vmatpush1.msra.mxu0 %v3911
        %3913 = vmatprep.subr.mxu0 0.0
        %v3914 = vand.u32 %v1262, 4294901760
        %3915 = vmatpush1.msra.mxu0 %v3914
        %3916 = vmatprep.subr.mxu0 0.0
        %v3917 = vand.u32 %v1263, 4294901760
        %3918 = vmatpush1.msra.mxu0 %v3917
        %3919 = vmatprep.subr.mxu0 0.0
        %v3920 = vand.u32 %v1264, 4294901760
        %3921 = vmatpush1.msra.mxu0 %v3920
        %3922 = vmatprep.subr.mxu0 0.0
        %v3923 = vand.u32 %v1265, 4294901760
        %3924 = vmatpush1.msra.mxu0 %v3923
        %3925 = vmatprep.subr.mxu0 0.0
        %v3926 = vand.u32 %v1266, 4294901760
        %3927 = vmatpush1.msra.mxu0 %v3926
        %3928 = vmatprep.subr.mxu0 0.0
        %v3929 = vand.u32 %v1267, 4294901760
        %3930 = vmatpush1.msra.mxu0 %v3929
        %3931 = vmatprep.subr.mxu0 0.0
        %v3932 = vand.u32 %v1268, 4294901760
        %3933 = vmatpush1.msra.mxu0 %v3932
        %3934 = vmatprep.subr.mxu0 0.0
        %3935 = vmatpush1.msra.mxu0 0.0
        %3936 = vmatprep.subr.mxu0 0.0
        %3937 = vmatpush1.msra.mxu0 0.0
        %3938 = vmatprep.subr.mxu0 0.0
        %3939 = vmatpush1.msra.mxu0 0.0
        %3940 = vmatprep.subr.mxu0 0.0
        %3941 = vmatpush1.msra.mxu0 0.0
        %3942 = vmatprep.subr.mxu0 0.0
        %3943 = vmatpush1.msra.mxu0 0.0
        %3944 = vmatprep.subr.mxu0 0.0
        %3945 = vmatpush1.msra.mxu0 0.0
        %3946 = vmatprep.subr.mxu0 0.0
        %3947 = vmatpush1.msra.mxu0 0.0
        %3948 = vmatprep.subr.mxu0 0.0
        %3949 = vmatpush1.msra.mxu0 0.0
        %3950 = vmatprep.subr.mxu0 0.0
        %3951 = vmatpush1.msra.mxu0 0.0
        %3952 = vmatprep.subr.mxu0 0.0
        %3953 = vmatpush1.msra.mxu0 0.0
        %3954 = vmatprep.subr.mxu0 0.0
        %3955 = vmatpush1.msra.mxu0 0.0
        %3956 = vmatprep.subr.mxu0 0.0
        %3957 = vmatpush1.msra.mxu0 0.0
        %3958 = vmatprep.subr.mxu0 0.0
        %3959 = vmatpush1.msra.mxu0 0.0
        %3960 = vmatprep.subr.mxu0 0.0
        %3961 = vmatpush1.msra.mxu0 0.0
        %3962 = vmatprep.subr.mxu0 0.0
        %3963 = vmatpush1.msra.mxu0 0.0
        %3964 = vmatprep.subr.mxu0 0.0
        %3965 = vmatpush1.msra.mxu0 0.0
        %3966 = vmatprep.mubr.f32.mxu0 0.0
        %v3967 = vand.u32 %v3881, 4294901760
        %v3968 = vsub.f32 %v3881, %v3967
        %v3969 = vand.u32 %v3968, 4294901760
        %v3970 = vsub.f32 %v3968, %v3969
        %v3971 = vand.u32 %v3970, 4294901760
        %3972 = vmatmul.mubr.f32.gmra.mrb[0].mxu0 %v3971
        %v3973 = vpop.f32.mrb[0].mxu0
        %v3974 = vadd.f32 0.0, %v3973
        %v3975 = vpop.f32.mrb[0].mxu0
        %3976 = vdwg.mxu0
        %3977 = vmatprep.subr.mxu0 0.0
        %v3978 = vand.u32 %v1253, 4294901760
        %v3979 = vsub.f32 %v1253, %v3978
        %v3980 = vand.u32 %v3979, 4294901760
        %v3981 = vsub.f32 %v3979, %v3980
        %v3982 = vand.u32 %v3981, 4294901760
        %3983 = vmatpush1.msra.mxu0 %v3982
        %3984 = vmatprep.subr.mxu0 0.0
        %v3985 = vand.u32 %v1254, 4294901760
        %v3986 = vsub.f32 %v1254, %v3985
        %v3987 = vand.u32 %v3986, 4294901760
        %v3988 = vsub.f32 %v3986, %v3987
        %v3989 = vand.u32 %v3988, 4294901760
        %3990 = vmatpush1.msra.mxu0 %v3989
        %3991 = vmatprep.subr.mxu0 0.0
        %v3992 = vand.u32 %v1255, 4294901760
        %v3993 = vsub.f32 %v1255, %v3992
        %v3994 = vand.u32 %v3993, 4294901760
        %v3995 = vsub.f32 %v3993, %v3994
        %v3996 = vand.u32 %v3995, 4294901760
        %3997 = vmatpush1.msra.mxu0 %v3996
        %3998 = vmatprep.subr.mxu0 0.0
        %v3999 = vand.u32 %v1256, 4294901760
        %v4000 = vsub.f32 %v1256, %v3999
        %v4001 = vand.u32 %v4000, 4294901760
        %v4002 = vsub.f32 %v4000, %v4001
        %v4003 = vand.u32 %v4002, 4294901760
        %4004 = vmatpush1.msra.mxu0 %v4003
        %4005 = vmatprep.subr.mxu0 0.0
        %v4006 = vand.u32 %v1257, 4294901760
        %v4007 = vsub.f32 %v1257, %v4006
        %v4008 = vand.u32 %v4007, 4294901760
        %v4009 = vsub.f32 %v4007, %v4008
        %v4010 = vand.u32 %v4009, 4294901760
        %4011 = vmatpush1.msra.mxu0 %v4010
        %4012 = vmatprep.subr.mxu0 0.0
        %v4013 = vand.u32 %v1258, 4294901760
        %v4014 = vsub.f32 %v1258, %v4013
        %v4015 = vand.u32 %v4014, 4294901760
        %v4016 = vsub.f32 %v4014, %v4015
        %v4017 = vand.u32 %v4016, 4294901760
        %4018 = vmatpush1.msra.mxu0 %v4017
        %4019 = vmatprep.subr.mxu0 0.0
        %v4020 = vand.u32 %v1259, 4294901760
        %v4021 = vsub.f32 %v1259, %v4020
        %v4022 = vand.u32 %v4021, 4294901760
        %v4023 = vsub.f32 %v4021, %v4022
        %v4024 = vand.u32 %v4023, 4294901760
        %4025 = vmatpush1.msra.mxu0 %v4024
        %4026 = vmatprep.subr.mxu0 0.0
        %v4027 = vand.u32 %v1260, 4294901760
        %v4028 = vsub.f32 %v1260, %v4027
        %v4029 = vand.u32 %v4028, 4294901760
        %v4030 = vsub.f32 %v4028, %v4029
        %v4031 = vand.u32 %v4030, 4294901760
        %4032 = vmatpush1.msra.mxu0 %v4031
        %4033 = vmatprep.subr.mxu0 0.0
        %v4034 = vand.u32 %v1261, 4294901760
        %v4035 = vsub.f32 %v1261, %v4034
        %v4036 = vand.u32 %v4035, 4294901760
        %v4037 = vsub.f32 %v4035, %v4036
        %v4038 = vand.u32 %v4037, 4294901760
        %4039 = vmatpush1.msra.mxu0 %v4038
        %4040 = vmatprep.subr.mxu0 0.0
        %v4041 = vand.u32 %v1262, 4294901760
        %v4042 = vsub.f32 %v1262, %v4041
        %v4043 = vand.u32 %v4042, 4294901760
        %v4044 = vsub.f32 %v4042, %v4043
        %v4045 = vand.u32 %v4044, 4294901760
        %4046 = vmatpush1.msra.mxu0 %v4045
        %4047 = vmatprep.subr.mxu0 0.0
        %v4048 = vand.u32 %v1263, 4294901760
        %v4049 = vsub.f32 %v1263, %v4048
        %v4050 = vand.u32 %v4049, 4294901760
        %v4051 = vsub.f32 %v4049, %v4050
        %v4052 = vand.u32 %v4051, 4294901760
        %4053 = vmatpush1.msra.mxu0 %v4052
        %4054 = vmatprep.subr.mxu0 0.0
        %v4055 = vand.u32 %v1264, 4294901760
        %v4056 = vsub.f32 %v1264, %v4055
        %v4057 = vand.u32 %v4056, 4294901760
        %v4058 = vsub.f32 %v4056, %v4057
        %v4059 = vand.u32 %v4058, 4294901760
        %4060 = vmatpush1.msra.mxu0 %v4059
        %4061 = vmatprep.subr.mxu0 0.0
        %v4062 = vand.u32 %v1265, 4294901760
        %v4063 = vsub.f32 %v1265, %v4062
        %v4064 = vand.u32 %v4063, 4294901760
        %v4065 = vsub.f32 %v4063, %v4064
        %v4066 = vand.u32 %v4065, 4294901760
        %4067 = vmatpush1.msra.mxu0 %v4066
        %4068 = vmatprep.subr.mxu0 0.0
        %v4069 = vand.u32 %v1266, 4294901760
        %v4070 = vsub.f32 %v1266, %v4069
        %v4071 = vand.u32 %v4070, 4294901760
        %v4072 = vsub.f32 %v4070, %v4071
        %v4073 = vand.u32 %v4072, 4294901760
        %4074 = vmatpush1.msra.mxu0 %v4073
        %4075 = vmatprep.subr.mxu0 0.0
        %v4076 = vand.u32 %v1267, 4294901760
        %v4077 = vsub.f32 %v1267, %v4076
        %v4078 = vand.u32 %v4077, 4294901760
        %v4079 = vsub.f32 %v4077, %v4078
        %v4080 = vand.u32 %v4079, 4294901760
        %4081 = vmatpush1.msra.mxu0 %v4080
        %4082 = vmatprep.subr.mxu0 0.0
        %v4083 = vand.u32 %v1268, 4294901760
        %v4084 = vsub.f32 %v1268, %v4083
        %v4085 = vand.u32 %v4084, 4294901760
        %v4086 = vsub.f32 %v4084, %v4085
        %v4087 = vand.u32 %v4086, 4294901760
        %4088 = vmatpush1.msra.mxu0 %v4087
        %4089 = vmatprep.subr.mxu0 0.0
        %4090 = vmatpush1.msra.mxu0 0.0
        %4091 = vmatprep.subr.mxu0 0.0
        %4092 = vmatpush1.msra.mxu0 0.0
        %4093 = vmatprep.subr.mxu0 0.0
        %4094 = vmatpush1.msra.mxu0 0.0
        %4095 = vmatprep.subr.mxu0 0.0
        %4096 = vmatpush1.msra.mxu0 0.0
        %4097 = vmatprep.subr.mxu0 0.0
        %4098 = vmatpush1.msra.mxu0 0.0
        %4099 = vmatprep.subr.mxu0 0.0
        %4100 = vmatpush1.msra.mxu0 0.0
        %4101 = vmatprep.subr.mxu0 0.0
        %4102 = vmatpush1.msra.mxu0 0.0
        %4103 = vmatprep.subr.mxu0 0.0
        %4104 = vmatpush1.msra.mxu0 0.0
        %4105 = vmatprep.subr.mxu0 0.0
        %4106 = vmatpush1.msra.mxu0 0.0
        %4107 = vmatprep.subr.mxu0 0.0
        %4108 = vmatpush1.msra.mxu0 0.0
        %4109 = vmatprep.subr.mxu0 0.0
        %4110 = vmatpush1.msra.mxu0 0.0
        %4111 = vmatprep.subr.mxu0 0.0
        %4112 = vmatpush1.msra.mxu0 0.0
        %4113 = vmatprep.subr.mxu0 0.0
        %4114 = vmatpush1.msra.mxu0 0.0
        %4115 = vmatprep.subr.mxu0 0.0
        %4116 = vmatpush1.msra.mxu0 0.0
        %4117 = vmatprep.subr.mxu0 0.0
        %4118 = vmatpush1.msra.mxu0 0.0
        %4119 = vmatprep.subr.mxu0 0.0
        %4120 = vmatpush1.msra.mxu0 0.0
        %4121 = vmatprep.mubr.f32.mxu0 0.0
        %v4122 = vand.u32 %v3881, 4294901760
        %4123 = vmatmul.mubr.f32.gmra.mrb[0].mxu0 %v4122
        %v4124 = vpop.f32.mrb[0].mxu0
        %v4125 = vadd.f32 %v3974, %v4124
        %v4126 = vpop.f32.mrb[0].mxu0
        %4127 = vdwg.mxu0
        %4128 = vmatprep.subr.mxu0 0.0
        %v4129 = vand.u32 %v1253, 4294901760
        %v4130 = vsub.f32 %v1253, %v4129
        %4131 = vmatpush1.msra.mxu0 %v4130
        %4132 = vmatprep.subr.mxu0 0.0
        %v4133 = vand.u32 %v1254, 4294901760
        %v4134 = vsub.f32 %v1254, %v4133
        %4135 = vmatpush1.msra.mxu0 %v4134
        %4136 = vmatprep.subr.mxu0 0.0
        %v4137 = vand.u32 %v1255, 4294901760
        %v4138 = vsub.f32 %v1255, %v4137
        %4139 = vmatpush1.msra.mxu0 %v4138
        %4140 = vmatprep.subr.mxu0 0.0
        %v4141 = vand.u32 %v1256, 4294901760
        %v4142 = vsub.f32 %v1256, %v4141
        %4143 = vmatpush1.msra.mxu0 %v4142
        %4144 = vmatprep.subr.mxu0 0.0
        %v4145 = vand.u32 %v1257, 4294901760
        %v4146 = vsub.f32 %v1257, %v4145
        %4147 = vmatpush1.msra.mxu0 %v4146
        %4148 = vmatprep.subr.mxu0 0.0
        %v4149 = vand.u32 %v1258, 4294901760
        %v4150 = vsub.f32 %v1258, %v4149
        %4151 = vmatpush1.msra.mxu0 %v4150
        %4152 = vmatprep.subr.mxu0 0.0
        %v4153 = vand.u32 %v1259, 4294901760
        %v4154 = vsub.f32 %v1259, %v4153
        %4155 = vmatpush1.msra.mxu0 %v4154
        %4156 = vmatprep.subr.mxu0 0.0
        %v4157 = vand.u32 %v1260, 4294901760
        %v4158 = vsub.f32 %v1260, %v4157
        %4159 = vmatpush1.msra.mxu0 %v4158
        %4160 = vmatprep.subr.mxu0 0.0
        %v4161 = vand.u32 %v1261, 4294901760
        %v4162 = vsub.f32 %v1261, %v4161
        %4163 = vmatpush1.msra.mxu0 %v4162
        %4164 = vmatprep.subr.mxu0 0.0
        %v4165 = vand.u32 %v1262, 4294901760
        %v4166 = vsub.f32 %v1262, %v4165
        %4167 = vmatpush1.msra.mxu0 %v4166
        %4168 = vmatprep.subr.mxu0 0.0
        %v4169 = vand.u32 %v1263, 4294901760
        %v4170 = vsub.f32 %v1263, %v4169
        %4171 = vmatpush1.msra.mxu0 %v4170
        %4172 = vmatprep.subr.mxu0 0.0
        %v4173 = vand.u32 %v1264, 4294901760
        %v4174 = vsub.f32 %v1264, %v4173
        %4175 = vmatpush1.msra.mxu0 %v4174
        %4176 = vmatprep.subr.mxu0 0.0
        %v4177 = vand.u32 %v1265, 4294901760
        %v4178 = vsub.f32 %v1265, %v4177
        %4179 = vmatpush1.msra.mxu0 %v4178
        %4180 = vmatprep.subr.mxu0 0.0
        %v4181 = vand.u32 %v1266, 4294901760
        %v4182 = vsub.f32 %v1266, %v4181
        %4183 = vmatpush1.msra.mxu0 %v4182
        %4184 = vmatprep.subr.mxu0 0.0
        %v4185 = vand.u32 %v1267, 4294901760
        %v4186 = vsub.f32 %v1267, %v4185
        %4187 = vmatpush1.msra.mxu0 %v4186
        %4188 = vmatprep.subr.mxu0 0.0
        %v4189 = vand.u32 %v1268, 4294901760
        %v4190 = vsub.f32 %v1268, %v4189
        %4191 = vmatpush1.msra.mxu0 %v4190
        %4192 = vmatprep.subr.mxu0 0.0
        %4193 = vmatpush1.msra.mxu0 0.0
        %4194 = vmatprep.subr.mxu0 0.0
        %4195 = vmatpush1.msra.mxu0 0.0
        %4196 = vmatprep.subr.mxu0 0.0
        %4197 = vmatpush1.msra.mxu0 0.0
        %4198 = vmatprep.subr.mxu0 0.0
        %4199 = vmatpush1.msra.mxu0 0.0
        %4200 = vmatprep.subr.mxu0 0.0
        %4201 = vmatpush1.msra.mxu0 0.0
        %4202 = vmatprep.subr.mxu0 0.0
        %4203 = vmatpush1.msra.mxu0 0.0
        %4204 = vmatprep.subr.mxu0 0.0
        %4205 = vmatpush1.msra.mxu0 0.0
        %4206 = vmatprep.subr.mxu0 0.0
        %4207 = vmatpush1.msra.mxu0 0.0
        %4208 = vmatprep.subr.mxu0 0.0
        %4209 = vmatpush1.msra.mxu0 0.0
        %4210 = vmatprep.subr.mxu0 0.0
        %4211 = vmatpush1.msra.mxu0 0.0
        %4212 = vmatprep.subr.mxu0 0.0
        %4213 = vmatpush1.msra.mxu0 0.0
        %4214 = vmatprep.subr.mxu0 0.0
        %4215 = vmatpush1.msra.mxu0 0.0
        %4216 = vmatprep.subr.mxu0 0.0
        %4217 = vmatpush1.msra.mxu0 0.0
        %4218 = vmatprep.subr.mxu0 0.0
        %4219 = vmatpush1.msra.mxu0 0.0
        %4220 = vmatprep.subr.mxu0 0.0
        %4221 = vmatpush1.msra.mxu0 0.0
        %4222 = vmatprep.subr.mxu0 0.0
        %4223 = vmatpush1.msra.mxu0 0.0
        %4224 = vmatprep.mubr.f32.mxu0 0.0
        %v4225 = vand.u32 %v3881, 4294901760
        %v4226 = vsub.f32 %v3881, %v4225
        %4227 = vmatmul.mubr.f32.gmra.mrb[0].mxu0 %v4226
        %v4228 = vpop.f32.mrb[0].mxu0
        %v4229 = vadd.f32 %v4125, %v4228
        %v4230 = vpop.f32.mrb[0].mxu0
        %4231 = vdwg.mxu0
        %4232 = vmatprep.subr.mxu0 0.0
        %v4233 = vand.u32 %v1253, 4294901760
        %4234 = vmatpush1.msra.mxu0 %v4233
        %4235 = vmatprep.subr.mxu0 0.0
        %v4236 = vand.u32 %v1254, 4294901760
        %4237 = vmatpush1.msra.mxu0 %v4236
        %4238 = vmatprep.subr.mxu0 0.0
        %v4239 = vand.u32 %v1255, 4294901760
        %4240 = vmatpush1.msra.mxu0 %v4239
        %4241 = vmatprep.subr.mxu0 0.0
        %v4242 = vand.u32 %v1256, 4294901760
        %4243 = vmatpush1.msra.mxu0 %v4242
        %4244 = vmatprep.subr.mxu0 0.0
        %v4245 = vand.u32 %v1257, 4294901760
        %4246 = vmatpush1.msra.mxu0 %v4245
        %4247 = vmatprep.subr.mxu0 0.0
        %v4248 = vand.u32 %v1258, 4294901760
        %4249 = vmatpush1.msra.mxu0 %v4248
        %4250 = vmatprep.subr.mxu0 0.0
        %v4251 = vand.u32 %v1259, 4294901760
        %4252 = vmatpush1.msra.mxu0 %v4251
        %4253 = vmatprep.subr.mxu0 0.0
        %v4254 = vand.u32 %v1260, 4294901760
        %4255 = vmatpush1.msra.mxu0 %v4254
        %4256 = vmatprep.subr.mxu0 0.0
        %v4257 = vand.u32 %v1261, 4294901760
        %4258 = vmatpush1.msra.mxu0 %v4257
        %4259 = vmatprep.subr.mxu0 0.0
        %v4260 = vand.u32 %v1262, 4294901760
        %4261 = vmatpush1.msra.mxu0 %v4260
        %4262 = vmatprep.subr.mxu0 0.0
        %v4263 = vand.u32 %v1263, 4294901760
        %4264 = vmatpush1.msra.mxu0 %v4263
        %4265 = vmatprep.subr.mxu0 0.0
        %v4266 = vand.u32 %v1264, 4294901760
        %4267 = vmatpush1.msra.mxu0 %v4266
        %4268 = vmatprep.subr.mxu0 0.0
        %v4269 = vand.u32 %v1265, 4294901760
        %4270 = vmatpush1.msra.mxu0 %v4269
        %4271 = vmatprep.subr.mxu0 0.0
        %v4272 = vand.u32 %v1266, 4294901760
        %4273 = vmatpush1.msra.mxu0 %v4272
        %4274 = vmatprep.subr.mxu0 0.0
        %v4275 = vand.u32 %v1267, 4294901760
        %4276 = vmatpush1.msra.mxu0 %v4275
        %4277 = vmatprep.subr.mxu0 0.0
        %v4278 = vand.u32 %v1268, 4294901760
        %4279 = vmatpush1.msra.mxu0 %v4278
        %4280 = vmatprep.subr.mxu0 0.0
        %4281 = vmatpush1.msra.mxu0 0.0
        %4282 = vmatprep.subr.mxu0 0.0
        %4283 = vmatpush1.msra.mxu0 0.0
        %4284 = vmatprep.subr.mxu0 0.0
        %4285 = vmatpush1.msra.mxu0 0.0
        %4286 = vmatprep.subr.mxu0 0.0
        %4287 = vmatpush1.msra.mxu0 0.0
        %4288 = vmatprep.subr.mxu0 0.0
        %4289 = vmatpush1.msra.mxu0 0.0
        %4290 = vmatprep.subr.mxu0 0.0
        %4291 = vmatpush1.msra.mxu0 0.0
        %4292 = vmatprep.subr.mxu0 0.0
        %4293 = vmatpush1.msra.mxu0 0.0
        %4294 = vmatprep.subr.mxu0 0.0
        %4295 = vmatpush1.msra.mxu0 0.0
        %4296 = vmatprep.subr.mxu0 0.0
        %4297 = vmatpush1.msra.mxu0 0.0
        %4298 = vmatprep.subr.mxu0 0.0
        %4299 = vmatpush1.msra.mxu0 0.0
        %4300 = vmatprep.subr.mxu0 0.0
        %4301 = vmatpush1.msra.mxu0 0.0
        %4302 = vmatprep.subr.mxu0 0.0
        %4303 = vmatpush1.msra.mxu0 0.0
        %4304 = vmatprep.subr.mxu0 0.0
        %4305 = vmatpush1.msra.mxu0 0.0
        %4306 = vmatprep.subr.mxu0 0.0
        %4307 = vmatpush1.msra.mxu0 0.0
        %4308 = vmatprep.subr.mxu0 0.0
        %4309 = vmatpush1.msra.mxu0 0.0
        %4310 = vmatprep.subr.mxu0 0.0
        %4311 = vmatpush1.msra.mxu0 0.0
        %4312 = vmatprep.mubr.f32.mxu0 0.0
        %v4313 = vand.u32 %v3881, 4294901760
        %v4314 = vsub.f32 %v3881, %v4313
        %v4315 = vand.u32 %v4314, 4294901760
        %4316 = vmatmul.mubr.f32.gmra.mrb[0].mxu0 %v4315
        %v4317 = vpop.f32.mrb[0].mxu0
        %v4318 = vadd.f32 %v4229, %v4317
        %v4319 = vpop.f32.mrb[0].mxu0
        %4320 = vdwg.mxu0
        %4321 = vmatprep.subr.mxu0 0.0
        %v4322 = vand.u32 %v1253, 4294901760
        %v4323 = vsub.f32 %v1253, %v4322
        %v4324 = vand.u32 %v4323, 4294901760
        %4325 = vmatpush1.msra.mxu0 %v4324
        %4326 = vmatprep.subr.mxu0 0.0
        %v4327 = vand.u32 %v1254, 4294901760
        %v4328 = vsub.f32 %v1254, %v4327
        %v4329 = vand.u32 %v4328, 4294901760
        %4330 = vmatpush1.msra.mxu0 %v4329
        %4331 = vmatprep.subr.mxu0 0.0
        %v4332 = vand.u32 %v1255, 4294901760
        %v4333 = vsub.f32 %v1255, %v4332
        %v4334 = vand.u32 %v4333, 4294901760
        %4335 = vmatpush1.msra.mxu0 %v4334
        %4336 = vmatprep.subr.mxu0 0.0
        %v4337 = vand.u32 %v1256, 4294901760
        %v4338 = vsub.f32 %v1256, %v4337
        %v4339 = vand.u32 %v4338, 4294901760
        %4340 = vmatpush1.msra.mxu0 %v4339
        %4341 = vmatprep.subr.mxu0 0.0
        %v4342 = vand.u32 %v1257, 4294901760
        %v4343 = vsub.f32 %v1257, %v4342
        %v4344 = vand.u32 %v4343, 4294901760
        %4345 = vmatpush1.msra.mxu0 %v4344
        %4346 = vmatprep.subr.mxu0 0.0
        %v4347 = vand.u32 %v1258, 4294901760
        %v4348 = vsub.f32 %v1258, %v4347
        %v4349 = vand.u32 %v4348, 4294901760
        %4350 = vmatpush1.msra.mxu0 %v4349
        %4351 = vmatprep.subr.mxu0 0.0
        %v4352 = vand.u32 %v1259, 4294901760
        %v4353 = vsub.f32 %v1259, %v4352
        %v4354 = vand.u32 %v4353, 4294901760
        %4355 = vmatpush1.msra.mxu0 %v4354
        %4356 = vmatprep.subr.mxu0 0.0
        %v4357 = vand.u32 %v1260, 4294901760
        %v4358 = vsub.f32 %v1260, %v4357
        %v4359 = vand.u32 %v4358, 4294901760
        %4360 = vmatpush1.msra.mxu0 %v4359
        %4361 = vmatprep.subr.mxu0 0.0
        %v4362 = vand.u32 %v1261, 4294901760
        %v4363 = vsub.f32 %v1261, %v4362
        %v4364 = vand.u32 %v4363, 4294901760
        %4365 = vmatpush1.msra.mxu0 %v4364
        %4366 = vmatprep.subr.mxu0 0.0
        %v4367 = vand.u32 %v1262, 4294901760
        %v4368 = vsub.f32 %v1262, %v4367
        %v4369 = vand.u32 %v4368, 4294901760
        %4370 = vmatpush1.msra.mxu0 %v4369
        %4371 = vmatprep.subr.mxu0 0.0
        %v4372 = vand.u32 %v1263, 4294901760
        %v4373 = vsub.f32 %v1263, %v4372
        %v4374 = vand.u32 %v4373, 4294901760
        %4375 = vmatpush1.msra.mxu0 %v4374
        %4376 = vmatprep.subr.mxu0 0.0
        %v4377 = vand.u32 %v1264, 4294901760
        %v4378 = vsub.f32 %v1264, %v4377
        %v4379 = vand.u32 %v4378, 4294901760
        %4380 = vmatpush1.msra.mxu0 %v4379
        %4381 = vmatprep.subr.mxu0 0.0
        %v4382 = vand.u32 %v1265, 4294901760
        %v4383 = vsub.f32 %v1265, %v4382
        %v4384 = vand.u32 %v4383, 4294901760
        %4385 = vmatpush1.msra.mxu0 %v4384
        %4386 = vmatprep.subr.mxu0 0.0
        %v4387 = vand.u32 %v1266, 4294901760
        %v4388 = vsub.f32 %v1266, %v4387
        %v4389 = vand.u32 %v4388, 4294901760
        %4390 = vmatpush1.msra.mxu0 %v4389
        %4391 = vmatprep.subr.mxu0 0.0
        %v4392 = vand.u32 %v1267, 4294901760
        %v4393 = vsub.f32 %v1267, %v4392
        %v4394 = vand.u32 %v4393, 4294901760
        %4395 = vmatpush1.msra.mxu0 %v4394
        %4396 = vmatprep.subr.mxu0 0.0
        %v4397 = vand.u32 %v1268, 4294901760
        %v4398 = vsub.f32 %v1268, %v4397
        %v4399 = vand.u32 %v4398, 4294901760
        %4400 = vmatpush1.msra.mxu0 %v4399
        %4401 = vmatprep.subr.mxu0 0.0
        %4402 = vmatpush1.msra.mxu0 0.0
        %4403 = vmatprep.subr.mxu0 0.0
        %4404 = vmatpush1.msra.mxu0 0.0
        %4405 = vmatprep.subr.mxu0 0.0
        %4406 = vmatpush1.msra.mxu0 0.0
        %4407 = vmatprep.subr.mxu0 0.0
        %4408 = vmatpush1.msra.mxu0 0.0
        %4409 = vmatprep.subr.mxu0 0.0
        %4410 = vmatpush1.msra.mxu0 0.0
        %4411 = vmatprep.subr.mxu0 0.0
        %4412 = vmatpush1.msra.mxu0 0.0
        %4413 = vmatprep.subr.mxu0 0.0
        %4414 = vmatpush1.msra.mxu0 0.0
        %4415 = vmatprep.subr.mxu0 0.0
        %4416 = vmatpush1.msra.mxu0 0.0
        %4417 = vmatprep.subr.mxu0 0.0
        %4418 = vmatpush1.msra.mxu0 0.0
        %4419 = vmatprep.subr.mxu0 0.0
        %4420 = vmatpush1.msra.mxu0 0.0
        %4421 = vmatprep.subr.mxu0 0.0
        %4422 = vmatpush1.msra.mxu0 0.0
        %4423 = vmatprep.subr.mxu0 0.0
        %4424 = vmatpush1.msra.mxu0 0.0
        %4425 = vmatprep.subr.mxu0 0.0
        %4426 = vmatpush1.msra.mxu0 0.0
        %4427 = vmatprep.subr.mxu0 0.0
        %4428 = vmatpush1.msra.mxu0 0.0
        %4429 = vmatprep.subr.mxu0 0.0
        %4430 = vmatpush1.msra.mxu0 0.0
        %4431 = vmatprep.subr.mxu0 0.0
        %4432 = vmatpush1.msra.mxu0 0.0
        %4433 = vmatprep.mubr.f32.mxu0 0.0
        %v4434 = vand.u32 %v3881, 4294901760
        %4435 = vmatmul.mubr.f32.gmra.mrb[0].mxu0 %v4434
        %v4436 = vpop.f32.mrb[0].mxu0
        %v4437 = vadd.f32 %v4318, %v4436
        %v4438 = vpop.f32.mrb[0].mxu0
        %4439 = vdwg.mxu0
        %4440 = vmatprep.subr.mxu0 0.0
        %v4441 = vand.u32 %v1253, 4294901760
        %4442 = vmatpush1.msra.mxu0 %v4441
        %4443 = vmatprep.subr.mxu0 0.0
        %v4444 = vand.u32 %v1254, 4294901760
        %4445 = vmatpush1.msra.mxu0 %v4444
        %4446 = vmatprep.subr.mxu0 0.0
        %v4447 = vand.u32 %v1255, 4294901760
        %4448 = vmatpush1.msra.mxu0 %v4447
        %4449 = vmatprep.subr.mxu0 0.0
        %v4450 = vand.u32 %v1256, 4294901760
        %4451 = vmatpush1.msra.mxu0 %v4450
        %4452 = vmatprep.subr.mxu0 0.0
        %v4453 = vand.u32 %v1257, 4294901760
        %4454 = vmatpush1.msra.mxu0 %v4453
        %4455 = vmatprep.subr.mxu0 0.0
        %v4456 = vand.u32 %v1258, 4294901760
        %4457 = vmatpush1.msra.mxu0 %v4456
        %4458 = vmatprep.subr.mxu0 0.0
        %v4459 = vand.u32 %v1259, 4294901760
        %4460 = vmatpush1.msra.mxu0 %v4459
        %4461 = vmatprep.subr.mxu0 0.0
        %v4462 = vand.u32 %v1260, 4294901760
        %4463 = vmatpush1.msra.mxu0 %v4462
        %4464 = vmatprep.subr.mxu0 0.0
        %v4465 = vand.u32 %v1261, 4294901760
        %4466 = vmatpush1.msra.mxu0 %v4465
        %4467 = vmatprep.subr.mxu0 0.0
        %v4468 = vand.u32 %v1262, 4294901760
        %4469 = vmatpush1.msra.mxu0 %v4468
        %4470 = vmatprep.subr.mxu0 0.0
        %v4471 = vand.u32 %v1263, 4294901760
        %4472 = vmatpush1.msra.mxu0 %v4471
        %4473 = vmatprep.subr.mxu0 0.0
        %v4474 = vand.u32 %v1264, 4294901760
        %4475 = vmatpush1.msra.mxu0 %v4474
        %4476 = vmatprep.subr.mxu0 0.0
        %v4477 = vand.u32 %v1265, 4294901760
        %4478 = vmatpush1.msra.mxu0 %v4477
        %4479 = vmatprep.subr.mxu0 0.0
        %v4480 = vand.u32 %v1266, 4294901760
        %4481 = vmatpush1.msra.mxu0 %v4480
        %4482 = vmatprep.subr.mxu0 0.0
        %v4483 = vand.u32 %v1267, 4294901760
        %4484 = vmatpush1.msra.mxu0 %v4483
        %4485 = vmatprep.subr.mxu0 0.0
        %v4486 = vand.u32 %v1268, 4294901760
        %4487 = vmatpush1.msra.mxu0 %v4486
        %4488 = vmatprep.subr.mxu0 0.0
        %4489 = vmatpush1.msra.mxu0 0.0
        %4490 = vmatprep.subr.mxu0 0.0
        %4491 = vmatpush1.msra.mxu0 0.0
        %4492 = vmatprep.subr.mxu0 0.0
        %4493 = vmatpush1.msra.mxu0 0.0
        %4494 = vmatprep.subr.mxu0 0.0
        %4495 = vmatpush1.msra.mxu0 0.0
        %4496 = vmatprep.subr.mxu0 0.0
        %4497 = vmatpush1.msra.mxu0 0.0
        %4498 = vmatprep.subr.mxu0 0.0
        %4499 = vmatpush1.msra.mxu0 0.0
        %4500 = vmatprep.subr.mxu0 0.0
        %4501 = vmatpush1.msra.mxu0 0.0
        %4502 = vmatprep.subr.mxu0 0.0
        %4503 = vmatpush1.msra.mxu0 0.0
        %4504 = vmatprep.subr.mxu0 0.0
        %4505 = vmatpush1.msra.mxu0 0.0
        %4506 = vmatprep.subr.mxu0 0.0
        %4507 = vmatpush1.msra.mxu0 0.0
        %4508 = vmatprep.subr.mxu0 0.0
        %4509 = vmatpush1.msra.mxu0 0.0
        %4510 = vmatprep.subr.mxu0 0.0
        %4511 = vmatpush1.msra.mxu0 0.0
        %4512 = vmatprep.subr.mxu0 0.0
        %4513 = vmatpush1.msra.mxu0 0.0
        %4514 = vmatprep.subr.mxu0 0.0
        %4515 = vmatpush1.msra.mxu0 0.0
        %4516 = vmatprep.subr.mxu0 0.0
        %4517 = vmatpush1.msra.mxu0 0.0
        %4518 = vmatprep.subr.mxu0 0.0
        %4519 = vmatpush1.msra.mxu0 0.0
        %4520 = vmatprep.mubr.f32.mxu0 0.0
        %v4521 = vand.u32 %v3881, 4294901760
        %4522 = vmatmul.mubr.f32.gmra.mrb[0].mxu0 %v4521
        %v4523 = vpop.f32.mrb[0].mxu0
        %v4524 = vadd.f32 %v4437, %v4523
        %v4525 = vpop.f32.mrb[0].mxu0
        %4526 = vdwg.mxu0
        %v4527 = vld [vmem:[#allocation2 + $0x20] sm:$0xff]
        %v4528 = vmul.f32 %v3880, 0.1
        %v4529 = vsub.f32 0.0, %v3880
        %v4530 = vadd.f32 %v4529, %v4524
        %v4531 = vadd.f32 %v4530, %v4527
        %v4532 = vmul.f32 %v4528, %v4531
        %v4533 = vmax.f32 %v4532, 0.0
        %s4534 = scalar_lea.vmem %s333, 32 [#allocation6]
        %4535 = vst [vmem:[%s4534] sm:$0xff] %v4532
        %s4536 = scalar_lea.vmem %s326, 32 [#allocation4]
        %4537 = vst [vmem:[%s4536] sm:$0xff] %v4533
        %4538 = vmatprep.subr.mxu0 0.0
        %v4539 = vand.u32 %v1253, 4294901760
        %4540 = vmatpush1.msra.mxu0 %v4539
        %4541 = vmatprep.subr.mxu0 0.0
        %v4542 = vand.u32 %v1254, 4294901760
        %4543 = vmatpush1.msra.mxu0 %v4542
        %4544 = vmatprep.subr.mxu0 0.0
        %v4545 = vand.u32 %v1255, 4294901760
        %4546 = vmatpush1.msra.mxu0 %v4545
        %4547 = vmatprep.subr.mxu0 0.0
        %v4548 = vand.u32 %v1256, 4294901760
        %4549 = vmatpush1.msra.mxu0 %v4548
        %4550 = vmatprep.subr.mxu0 0.0
        %v4551 = vand.u32 %v1257, 4294901760
        %4552 = vmatpush1.msra.mxu0 %v4551
        %4553 = vmatprep.subr.mxu0 0.0
        %v4554 = vand.u32 %v1258, 4294901760
        %4555 = vmatpush1.msra.mxu0 %v4554
        %4556 = vmatprep.subr.mxu0 0.0
        %v4557 = vand.u32 %v1259, 4294901760
        %4558 = vmatpush1.msra.mxu0 %v4557
        %4559 = vmatprep.subr.mxu0 0.0
        %v4560 = vand.u32 %v1260, 4294901760
        %4561 = vmatpush1.msra.mxu0 %v4560
        %4562 = vmatprep.subr.mxu0 0.0
        %v4563 = vand.u32 %v1261, 4294901760
        %4564 = vmatpush1.msra.mxu0 %v4563
        %4565 = vmatprep.subr.mxu0 0.0
        %v4566 = vand.u32 %v1262, 4294901760
        %4567 = vmatpush1.msra.mxu0 %v4566
        %4568 = vmatprep.subr.mxu0 0.0
        %v4569 = vand.u32 %v1263, 4294901760
        %4570 = vmatpush1.msra.mxu0 %v4569
        %4571 = vmatprep.subr.mxu0 0.0
        %v4572 = vand.u32 %v1264, 4294901760
        %4573 = vmatpush1.msra.mxu0 %v4572
        %4574 = vmatprep.subr.mxu0 0.0
        %v4575 = vand.u32 %v1265, 4294901760
        %4576 = vmatpush1.msra.mxu0 %v4575
        %4577 = vmatprep.subr.mxu0 0.0
        %v4578 = vand.u32 %v1266, 4294901760
        %4579 = vmatpush1.msra.mxu0 %v4578
        %4580 = vmatprep.subr.mxu0 0.0
        %v4581 = vand.u32 %v1267, 4294901760
        %4582 = vmatpush1.msra.mxu0 %v4581
        %4583 = vmatprep.subr.mxu0 0.0
        %v4584 = vand.u32 %v1268, 4294901760
        %4585 = vmatpush1.msra.mxu0 %v4584
        %4586 = vmatprep.subr.mxu0 0.0
        %4587 = vmatpush1.msra.mxu0 0.0
        %4588 = vmatprep.subr.mxu0 0.0
        %4589 = vmatpush1.msra.mxu0 0.0
        %4590 = vmatprep.subr.mxu0 0.0
        %4591 = vmatpush1.msra.mxu0 0.0
        %4592 = vmatprep.subr.mxu0 0.0
        %4593 = vmatpush1.msra.mxu0 0.0
        %4594 = vmatprep.subr.mxu0 0.0
        %4595 = vmatpush1.msra.mxu0 0.0
        %4596 = vmatprep.subr.mxu0 0.0
        %4597 = vmatpush1.msra.mxu0 0.0
        %4598 = vmatprep.subr.mxu0 0.0
        %4599 = vmatpush1.msra.mxu0 0.0
        %4600 = vmatprep.subr.mxu0 0.0
        %4601 = vmatpush1.msra.mxu0 0.0
        %4602 = vmatprep.subr.mxu0 0.0
        %4603 = vmatpush1.msra.mxu0 0.0
        %4604 = vmatprep.subr.mxu0 0.0
        %4605 = vmatpush1.msra.mxu0 0.0
        %4606 = vmatprep.subr.mxu0 0.0
        %4607 = vmatpush1.msra.mxu0 0.0
        %4608 = vmatprep.subr.mxu0 0.0
        %4609 = vmatpush1.msra.mxu0 0.0
        %4610 = vmatprep.subr.mxu0 0.0
        %4611 = vmatpush1.msra.mxu0 0.0
        %4612 = vmatprep.subr.mxu0 0.0
        %4613 = vmatpush1.msra.mxu0 0.0
        %4614 = vmatprep.subr.mxu0 0.0
        %4615 = vmatpush1.msra.mxu0 0.0
        %4616 = vmatprep.subr.mxu0 0.0
        %4617 = vmatpush1.msra.mxu0 0.0
        %4618 = vmatprep.mubr.f32.mxu0 0.0
        %v4619 = vand.u32 %v4533, 4294901760
        %v4620 = vsub.f32 %v4533, %v4619
        %v4621 = vand.u32 %v4620, 4294901760
        %v4622 = vsub.f32 %v4620, %v4621
        %v4623 = vand.u32 %v4622, 4294901760
        %4624 = vmatmul.mubr.f32.gmra.mrb[0].mxu0 %v4623
        %v4625 = vpop.f32.mrb[0].mxu0
        %v4626 = vadd.f32 0.0, %v4625
        %v4627 = vpop.f32.mrb[0].mxu0
        %4628 = vdwg.mxu0
        %4629 = vmatprep.subr.mxu0 0.0
        %v4630 = vand.u32 %v1253, 4294901760
        %v4631 = vsub.f32 %v1253, %v4630
        %v4632 = vand.u32 %v4631, 4294901760
        %v4633 = vsub.f32 %v4631, %v4632
        %v4634 = vand.u32 %v4633, 4294901760
        %4635 = vmatpush1.msra.mxu0 %v4634
        %4636 = vmatprep.subr.mxu0 0.0
        %v4637 = vand.u32 %v1254, 4294901760
        %v4638 = vsub.f32 %v1254, %v4637
        %v4639 = vand.u32 %v4638, 4294901760
        %v4640 = vsub.f32 %v4638, %v4639
        %v4641 = vand.u32 %v4640, 4294901760
        %4642 = vmatpush1.msra.mxu0 %v4641
        %4643 = vmatprep.subr.mxu0 0.0
        %v4644 = vand.u32 %v1255, 4294901760
        %v4645 = vsub.f32 %v1255, %v4644
        %v4646 = vand.u32 %v4645, 4294901760
        %v4647 = vsub.f32 %v4645, %v4646
        %v4648 = vand.u32 %v4647, 4294901760
        %4649 = vmatpush1.msra.mxu0 %v4648
        %4650 = vmatprep.subr.mxu0 0.0
        %v4651 = vand.u32 %v1256, 4294901760
        %v4652 = vsub.f32 %v1256, %v4651
        %v4653 = vand.u32 %v4652, 4294901760
        %v4654 = vsub.f32 %v4652, %v4653
        %v4655 = vand.u32 %v4654, 4294901760
        %4656 = vmatpush1.msra.mxu0 %v4655
        %4657 = vmatprep.subr.mxu0 0.0
        %v4658 = vand.u32 %v1257, 4294901760
        %v4659 = vsub.f32 %v1257, %v4658
        %v4660 = vand.u32 %v4659, 4294901760
        %v4661 = vsub.f32 %v4659, %v4660
        %v4662 = vand.u32 %v4661, 4294901760
        %4663 = vmatpush1.msra.mxu0 %v4662
        %4664 = vmatprep.subr.mxu0 0.0
        %v4665 = vand.u32 %v1258, 4294901760
        %v4666 = vsub.f32 %v1258, %v4665
        %v4667 = vand.u32 %v4666, 4294901760
        %v4668 = vsub.f32 %v4666, %v4667
        %v4669 = vand.u32 %v4668, 4294901760
        %4670 = vmatpush1.msra.mxu0 %v4669
        %4671 = vmatprep.subr.mxu0 0.0
        %v4672 = vand.u32 %v1259, 4294901760
        %v4673 = vsub.f32 %v1259, %v4672
        %v4674 = vand.u32 %v4673, 4294901760
        %v4675 = vsub.f32 %v4673, %v4674
        %v4676 = vand.u32 %v4675, 4294901760
        %4677 = vmatpush1.msra.mxu0 %v4676
        %4678 = vmatprep.subr.mxu0 0.0
        %v4679 = vand.u32 %v1260, 4294901760
        %v4680 = vsub.f32 %v1260, %v4679
        %v4681 = vand.u32 %v4680, 4294901760
        %v4682 = vsub.f32 %v4680, %v4681
        %v4683 = vand.u32 %v4682, 4294901760
        %4684 = vmatpush1.msra.mxu0 %v4683
        %4685 = vmatprep.subr.mxu0 0.0
        %v4686 = vand.u32 %v1261, 4294901760
        %v4687 = vsub.f32 %v1261, %v4686
        %v4688 = vand.u32 %v4687, 4294901760
        %v4689 = vsub.f32 %v4687, %v4688
        %v4690 = vand.u32 %v4689, 4294901760
        %4691 = vmatpush1.msra.mxu0 %v4690
        %4692 = vmatprep.subr.mxu0 0.0
        %v4693 = vand.u32 %v1262, 4294901760
        %v4694 = vsub.f32 %v1262, %v4693
        %v4695 = vand.u32 %v4694, 4294901760
        %v4696 = vsub.f32 %v4694, %v4695
        %v4697 = vand.u32 %v4696, 4294901760
        %4698 = vmatpush1.msra.mxu0 %v4697
        %4699 = vmatprep.subr.mxu0 0.0
        %v4700 = vand.u32 %v1263, 4294901760
        %v4701 = vsub.f32 %v1263, %v4700
        %v4702 = vand.u32 %v4701, 4294901760
        %v4703 = vsub.f32 %v4701, %v4702
        %v4704 = vand.u32 %v4703, 4294901760
        %4705 = vmatpush1.msra.mxu0 %v4704
        %4706 = vmatprep.subr.mxu0 0.0
        %v4707 = vand.u32 %v1264, 4294901760
        %v4708 = vsub.f32 %v1264, %v4707
        %v4709 = vand.u32 %v4708, 4294901760
        %v4710 = vsub.f32 %v4708, %v4709
        %v4711 = vand.u32 %v4710, 4294901760
        %4712 = vmatpush1.msra.mxu0 %v4711
        %4713 = vmatprep.subr.mxu0 0.0
        %v4714 = vand.u32 %v1265, 4294901760
        %v4715 = vsub.f32 %v1265, %v4714
        %v4716 = vand.u32 %v4715, 4294901760
        %v4717 = vsub.f32 %v4715, %v4716
        %v4718 = vand.u32 %v4717, 4294901760
        %4719 = vmatpush1.msra.mxu0 %v4718
        %4720 = vmatprep.subr.mxu0 0.0
        %v4721 = vand.u32 %v1266, 4294901760
        %v4722 = vsub.f32 %v1266, %v4721
        %v4723 = vand.u32 %v4722, 4294901760
        %v4724 = vsub.f32 %v4722, %v4723
        %v4725 = vand.u32 %v4724, 4294901760
        %4726 = vmatpush1.msra.mxu0 %v4725
        %4727 = vmatprep.subr.mxu0 0.0
        %v4728 = vand.u32 %v1267, 4294901760
        %v4729 = vsub.f32 %v1267, %v4728
        %v4730 = vand.u32 %v4729, 4294901760
        %v4731 = vsub.f32 %v4729, %v4730
        %v4732 = vand.u32 %v4731, 4294901760
        %4733 = vmatpush1.msra.mxu0 %v4732
        %4734 = vmatprep.subr.mxu0 0.0
        %v4735 = vand.u32 %v1268, 4294901760
        %v4736 = vsub.f32 %v1268, %v4735
        %v4737 = vand.u32 %v4736, 4294901760
        %v4738 = vsub.f32 %v4736, %v4737
        %v4739 = vand.u32 %v4738, 4294901760
        %4740 = vmatpush1.msra.mxu0 %v4739
        %4741 = vmatprep.subr.mxu0 0.0
        %4742 = vmatpush1.msra.mxu0 0.0
        %4743 = vmatprep.subr.mxu0 0.0
        %4744 = vmatpush1.msra.mxu0 0.0
        %4745 = vmatprep.subr.mxu0 0.0
        %4746 = vmatpush1.msra.mxu0 0.0
        %4747 = vmatprep.subr.mxu0 0.0
        %4748 = vmatpush1.msra.mxu0 0.0
        %4749 = vmatprep.subr.mxu0 0.0
        %4750 = vmatpush1.msra.mxu0 0.0
        %4751 = vmatprep.subr.mxu0 0.0
        %4752 = vmatpush1.msra.mxu0 0.0
        %4753 = vmatprep.subr.mxu0 0.0
        %4754 = vmatpush1.msra.mxu0 0.0
        %4755 = vmatprep.subr.mxu0 0.0
        %4756 = vmatpush1.msra.mxu0 0.0
        %4757 = vmatprep.subr.mxu0 0.0
        %4758 = vmatpush1.msra.mxu0 0.0
        %4759 = vmatprep.subr.mxu0 0.0
        %4760 = vmatpush1.msra.mxu0 0.0
        %4761 = vmatprep.subr.mxu0 0.0
        %4762 = vmatpush1.msra.mxu0 0.0
        %4763 = vmatprep.subr.mxu0 0.0
        %4764 = vmatpush1.msra.mxu0 0.0
        %4765 = vmatprep.subr.mxu0 0.0
        %4766 = vmatpush1.msra.mxu0 0.0
        %4767 = vmatprep.subr.mxu0 0.0
        %4768 = vmatpush1.msra.mxu0 0.0
        %4769 = vmatprep.subr.mxu0 0.0
        %4770 = vmatpush1.msra.mxu0 0.0
        %4771 = vmatprep.subr.mxu0 0.0
        %4772 = vmatpush1.msra.mxu0 0.0
        %4773 = vmatprep.mubr.f32.mxu0 0.0
        %v4774 = vand.u32 %v4533, 4294901760
        %4775 = vmatmul.mubr.f32.gmra.mrb[0].mxu0 %v4774
        %v4776 = vpop.f32.mrb[0].mxu0
        %v4777 = vadd.f32 %v4626, %v4776
        %v4778 = vpop.f32.mrb[0].mxu0
        %4779 = vdwg.mxu0
        %4780 = vmatprep.subr.mxu0 0.0
        %v4781 = vand.u32 %v1253, 4294901760
        %v4782 = vsub.f32 %v1253, %v4781
        %4783 = vmatpush1.msra.mxu0 %v4782
        %4784 = vmatprep.subr.mxu0 0.0
        %v4785 = vand.u32 %v1254, 4294901760
        %v4786 = vsub.f32 %v1254, %v4785
        %4787 = vmatpush1.msra.mxu0 %v4786
        %4788 = vmatprep.subr.mxu0 0.0
        %v4789 = vand.u32 %v1255, 4294901760
        %v4790 = vsub.f32 %v1255, %v4789
        %4791 = vmatpush1.msra.mxu0 %v4790
        %4792 = vmatprep.subr.mxu0 0.0
        %v4793 = vand.u32 %v1256, 4294901760
        %v4794 = vsub.f32 %v1256, %v4793
        %4795 = vmatpush1.msra.mxu0 %v4794
        %4796 = vmatprep.subr.mxu0 0.0
        %v4797 = vand.u32 %v1257, 4294901760
        %v4798 = vsub.f32 %v1257, %v4797
        %4799 = vmatpush1.msra.mxu0 %v4798
        %4800 = vmatprep.subr.mxu0 0.0
        %v4801 = vand.u32 %v1258, 4294901760
        %v4802 = vsub.f32 %v1258, %v4801
        %4803 = vmatpush1.msra.mxu0 %v4802
        %4804 = vmatprep.subr.mxu0 0.0
        %v4805 = vand.u32 %v1259, 4294901760
        %v4806 = vsub.f32 %v1259, %v4805
        %4807 = vmatpush1.msra.mxu0 %v4806
        %4808 = vmatprep.subr.mxu0 0.0
        %v4809 = vand.u32 %v1260, 4294901760
        %v4810 = vsub.f32 %v1260, %v4809
        %4811 = vmatpush1.msra.mxu0 %v4810
        %4812 = vmatprep.subr.mxu0 0.0
        %v4813 = vand.u32 %v1261, 4294901760
        %v4814 = vsub.f32 %v1261, %v4813
        %4815 = vmatpush1.msra.mxu0 %v4814
        %4816 = vmatprep.subr.mxu0 0.0
        %v4817 = vand.u32 %v1262, 4294901760
        %v4818 = vsub.f32 %v1262, %v4817
        %4819 = vmatpush1.msra.mxu0 %v4818
        %4820 = vmatprep.subr.mxu0 0.0
        %v4821 = vand.u32 %v1263, 4294901760
        %v4822 = vsub.f32 %v1263, %v4821
        %4823 = vmatpush1.msra.mxu0 %v4822
        %4824 = vmatprep.subr.mxu0 0.0
        %v4825 = vand.u32 %v1264, 4294901760
        %v4826 = vsub.f32 %v1264, %v4825
        %4827 = vmatpush1.msra.mxu0 %v4826
        %4828 = vmatprep.subr.mxu0 0.0
        %v4829 = vand.u32 %v1265, 4294901760
        %v4830 = vsub.f32 %v1265, %v4829
        %4831 = vmatpush1.msra.mxu0 %v4830
        %4832 = vmatprep.subr.mxu0 0.0
        %v4833 = vand.u32 %v1266, 4294901760
        %v4834 = vsub.f32 %v1266, %v4833
        %4835 = vmatpush1.msra.mxu0 %v4834
        %4836 = vmatprep.subr.mxu0 0.0
        %v4837 = vand.u32 %v1267, 4294901760
        %v4838 = vsub.f32 %v1267, %v4837
        %4839 = vmatpush1.msra.mxu0 %v4838
        %4840 = vmatprep.subr.mxu0 0.0
        %v4841 = vand.u32 %v1268, 4294901760
        %v4842 = vsub.f32 %v1268, %v4841
        %4843 = vmatpush1.msra.mxu0 %v4842
        %4844 = vmatprep.subr.mxu0 0.0
        %4845 = vmatpush1.msra.mxu0 0.0
        %4846 = vmatprep.subr.mxu0 0.0
        %4847 = vmatpush1.msra.mxu0 0.0
        %4848 = vmatprep.subr.mxu0 0.0
        %4849 = vmatpush1.msra.mxu0 0.0
        %4850 = vmatprep.subr.mxu0 0.0
        %4851 = vmatpush1.msra.mxu0 0.0
        %4852 = vmatprep.subr.mxu0 0.0
        %4853 = vmatpush1.msra.mxu0 0.0
        %4854 = vmatprep.subr.mxu0 0.0
        %4855 = vmatpush1.msra.mxu0 0.0
        %4856 = vmatprep.subr.mxu0 0.0
        %4857 = vmatpush1.msra.mxu0 0.0
        %4858 = vmatprep.subr.mxu0 0.0
        %4859 = vmatpush1.msra.mxu0 0.0
        %4860 = vmatprep.subr.mxu0 0.0
        %4861 = vmatpush1.msra.mxu0 0.0
        %4862 = vmatprep.subr.mxu0 0.0
        %4863 = vmatpush1.msra.mxu0 0.0
        %4864 = vmatprep.subr.mxu0 0.0
        %4865 = vmatpush1.msra.mxu0 0.0
        %4866 = vmatprep.subr.mxu0 0.0
        %4867 = vmatpush1.msra.mxu0 0.0
        %4868 = vmatprep.subr.mxu0 0.0
        %4869 = vmatpush1.msra.mxu0 0.0
        %4870 = vmatprep.subr.mxu0 0.0
        %4871 = vmatpush1.msra.mxu0 0.0
        %4872 = vmatprep.subr.mxu0 0.0
        %4873 = vmatpush1.msra.mxu0 0.0
        %4874 = vmatprep.subr.mxu0 0.0
        %4875 = vmatpush1.msra.mxu0 0.0
        %4876 = vmatprep.mubr.f32.mxu0 0.0
        %v4877 = vand.u32 %v4533, 4294901760
        %v4878 = vsub.f32 %v4533, %v4877
        %4879 = vmatmul.mubr.f32.gmra.mrb[0].mxu0 %v4878
        %v4880 = vpop.f32.mrb[0].mxu0
        %v4881 = vadd.f32 %v4777, %v4880
        %v4882 = vpop.f32.mrb[0].mxu0
        %4883 = vdwg.mxu0
        %4884 = vmatprep.subr.mxu0 0.0
        %v4885 = vand.u32 %v1253, 4294901760
        %4886 = vmatpush1.msra.mxu0 %v4885
        %4887 = vmatprep.subr.mxu0 0.0
        %v4888 = vand.u32 %v1254, 4294901760
        %4889 = vmatpush1.msra.mxu0 %v4888
        %4890 = vmatprep.subr.mxu0 0.0
        %v4891 = vand.u32 %v1255, 4294901760
        %4892 = vmatpush1.msra.mxu0 %v4891
        %4893 = vmatprep.subr.mxu0 0.0
        %v4894 = vand.u32 %v1256, 4294901760
        %4895 = vmatpush1.msra.mxu0 %v4894
        %4896 = vmatprep.subr.mxu0 0.0
        %v4897 = vand.u32 %v1257, 4294901760
        %4898 = vmatpush1.msra.mxu0 %v4897
        %4899 = vmatprep.subr.mxu0 0.0
        %v4900 = vand.u32 %v1258, 4294901760
        %4901 = vmatpush1.msra.mxu0 %v4900
        %4902 = vmatprep.subr.mxu0 0.0
        %v4903 = vand.u32 %v1259, 4294901760
        %4904 = vmatpush1.msra.mxu0 %v4903
        %4905 = vmatprep.subr.mxu0 0.0
        %v4906 = vand.u32 %v1260, 4294901760
        %4907 = vmatpush1.msra.mxu0 %v4906
        %4908 = vmatprep.subr.mxu0 0.0
        %v4909 = vand.u32 %v1261, 4294901760
        %4910 = vmatpush1.msra.mxu0 %v4909
        %4911 = vmatprep.subr.mxu0 0.0
        %v4912 = vand.u32 %v1262, 4294901760
        %4913 = vmatpush1.msra.mxu0 %v4912
        %4914 = vmatprep.subr.mxu0 0.0
        %v4915 = vand.u32 %v1263, 4294901760
        %4916 = vmatpush1.msra.mxu0 %v4915
        %4917 = vmatprep.subr.mxu0 0.0
        %v4918 = vand.u32 %v1264, 4294901760
        %4919 = vmatpush1.msra.mxu0 %v4918
        %4920 = vmatprep.subr.mxu0 0.0
        %v4921 = vand.u32 %v1265, 4294901760
        %4922 = vmatpush1.msra.mxu0 %v4921
        %4923 = vmatprep.subr.mxu0 0.0
        %v4924 = vand.u32 %v1266, 4294901760
        %4925 = vmatpush1.msra.mxu0 %v4924
        %4926 = vmatprep.subr.mxu0 0.0
        %v4927 = vand.u32 %v1267, 4294901760
        %4928 = vmatpush1.msra.mxu0 %v4927
        %4929 = vmatprep.subr.mxu0 0.0
        %v4930 = vand.u32 %v1268, 4294901760
        %4931 = vmatpush1.msra.mxu0 %v4930
        %4932 = vmatprep.subr.mxu0 0.0
        %4933 = vmatpush1.msra.mxu0 0.0
        %4934 = vmatprep.subr.mxu0 0.0
        %4935 = vmatpush1.msra.mxu0 0.0
        %4936 = vmatprep.subr.mxu0 0.0
        %4937 = vmatpush1.msra.mxu0 0.0
        %4938 = vmatprep.subr.mxu0 0.0
        %4939 = vmatpush1.msra.mxu0 0.0
        %4940 = vmatprep.subr.mxu0 0.0
        %4941 = vmatpush1.msra.mxu0 0.0
        %4942 = vmatprep.subr.mxu0 0.0
        %4943 = vmatpush1.msra.mxu0 0.0
        %4944 = vmatprep.subr.mxu0 0.0
        %4945 = vmatpush1.msra.mxu0 0.0
        %4946 = vmatprep.subr.mxu0 0.0
        %4947 = vmatpush1.msra.mxu0 0.0
        %4948 = vmatprep.subr.mxu0 0.0
        %4949 = vmatpush1.msra.mxu0 0.0
        %4950 = vmatprep.subr.mxu0 0.0
        %4951 = vmatpush1.msra.mxu0 0.0
        %4952 = vmatprep.subr.mxu0 0.0
        %4953 = vmatpush1.msra.mxu0 0.0
        %4954 = vmatprep.subr.mxu0 0.0
        %4955 = vmatpush1.msra.mxu0 0.0
        %4956 = vmatprep.subr.mxu0 0.0
        %4957 = vmatpush1.msra.mxu0 0.0
        %4958 = vmatprep.subr.mxu0 0.0
        %4959 = vmatpush1.msra.mxu0 0.0
        %4960 = vmatprep.subr.mxu0 0.0
        %4961 = vmatpush1.msra.mxu0 0.0
        %4962 = vmatprep.subr.mxu0 0.0
        %4963 = vmatpush1.msra.mxu0 0.0
        %4964 = vmatprep.mubr.f32.mxu0 0.0
        %v4965 = vand.u32 %v4533, 4294901760
        %v4966 = vsub.f32 %v4533, %v4965
        %v4967 = vand.u32 %v4966, 4294901760
        %4968 = vmatmul.mubr.f32.gmra.mrb[0].mxu0 %v4967
        %v4969 = vpop.f32.mrb[0].mxu0
        %v4970 = vadd.f32 %v4881, %v4969
        %v4971 = vpop.f32.mrb[0].mxu0
        %4972 = vdwg.mxu0
        %4973 = vmatprep.subr.mxu0 0.0
        %v4974 = vand.u32 %v1253, 4294901760
        %v4975 = vsub.f32 %v1253, %v4974
        %v4976 = vand.u32 %v4975, 4294901760
        %4977 = vmatpush1.msra.mxu0 %v4976
        %4978 = vmatprep.subr.mxu0 0.0
        %v4979 = vand.u32 %v1254, 4294901760
        %v4980 = vsub.f32 %v1254, %v4979
        %v4981 = vand.u32 %v4980, 4294901760
        %4982 = vmatpush1.msra.mxu0 %v4981
        %4983 = vmatprep.subr.mxu0 0.0
        %v4984 = vand.u32 %v1255, 4294901760
        %v4985 = vsub.f32 %v1255, %v4984
        %v4986 = vand.u32 %v4985, 4294901760
        %4987 = vmatpush1.msra.mxu0 %v4986
        %4988 = vmatprep.subr.mxu0 0.0
        %v4989 = vand.u32 %v1256, 4294901760
        %v4990 = vsub.f32 %v1256, %v4989
        %v4991 = vand.u32 %v4990, 4294901760
        %4992 = vmatpush1.msra.mxu0 %v4991
        %4993 = vmatprep.subr.mxu0 0.0
        %v4994 = vand.u32 %v1257, 4294901760
        %v4995 = vsub.f32 %v1257, %v4994
        %v4996 = vand.u32 %v4995, 4294901760
        %4997 = vmatpush1.msra.mxu0 %v4996
        %4998 = vmatprep.subr.mxu0 0.0
        %v4999 = vand.u32 %v1258, 4294901760
        %v5000 = vsub.f32 %v1258, %v4999
        %v5001 = vand.u32 %v5000, 4294901760
        %5002 = vmatpush1.msra.mxu0 %v5001
        %5003 = vmatprep.subr.mxu0 0.0
        %v5004 = vand.u32 %v1259, 4294901760
        %v5005 = vsub.f32 %v1259, %v5004
        %v5006 = vand.u32 %v5005, 4294901760
        %5007 = vmatpush1.msra.mxu0 %v5006
        %5008 = vmatprep.subr.mxu0 0.0
        %v5009 = vand.u32 %v1260, 4294901760
        %v5010 = vsub.f32 %v1260, %v5009
        %v5011 = vand.u32 %v5010, 4294901760
        %5012 = vmatpush1.msra.mxu0 %v5011
        %5013 = vmatprep.subr.mxu0 0.0
        %v5014 = vand.u32 %v1261, 4294901760
        %v5015 = vsub.f32 %v1261, %v5014
        %v5016 = vand.u32 %v5015, 4294901760
        %5017 = vmatpush1.msra.mxu0 %v5016
        %5018 = vmatprep.subr.mxu0 0.0
        %v5019 = vand.u32 %v1262, 4294901760
        %v5020 = vsub.f32 %v1262, %v5019
        %v5021 = vand.u32 %v5020, 4294901760
        %5022 = vmatpush1.msra.mxu0 %v5021
        %5023 = vmatprep.subr.mxu0 0.0
        %v5024 = vand.u32 %v1263, 4294901760
        %v5025 = vsub.f32 %v1263, %v5024
        %v5026 = vand.u32 %v5025, 4294901760
        %5027 = vmatpush1.msra.mxu0 %v5026
        %5028 = vmatprep.subr.mxu0 0.0
        %v5029 = vand.u32 %v1264, 4294901760
        %v5030 = vsub.f32 %v1264, %v5029
        %v5031 = vand.u32 %v5030, 4294901760
        %5032 = vmatpush1.msra.mxu0 %v5031
        %5033 = vmatprep.subr.mxu0 0.0
        %v5034 = vand.u32 %v1265, 4294901760
        %v5035 = vsub.f32 %v1265, %v5034
        %v5036 = vand.u32 %v5035, 4294901760
        %5037 = vmatpush1.msra.mxu0 %v5036
        %5038 = vmatprep.subr.mxu0 0.0
        %v5039 = vand.u32 %v1266, 4294901760
        %v5040 = vsub.f32 %v1266, %v5039
        %v5041 = vand.u32 %v5040, 4294901760
        %5042 = vmatpush1.msra.mxu0 %v5041
        %5043 = vmatprep.subr.mxu0 0.0
        %v5044 = vand.u32 %v1267, 4294901760
        %v5045 = vsub.f32 %v1267, %v5044
        %v5046 = vand.u32 %v5045, 4294901760
        %5047 = vmatpush1.msra.mxu0 %v5046
        %5048 = vmatprep.subr.mxu0 0.0
        %v5049 = vand.u32 %v1268, 4294901760
        %v5050 = vsub.f32 %v1268, %v5049
        %v5051 = vand.u32 %v5050, 4294901760
        %5052 = vmatpush1.msra.mxu0 %v5051
        %5053 = vmatprep.subr.mxu0 0.0
        %5054 = vmatpush1.msra.mxu0 0.0
        %5055 = vmatprep.subr.mxu0 0.0
        %5056 = vmatpush1.msra.mxu0 0.0
        %5057 = vmatprep.subr.mxu0 0.0
        %5058 = vmatpush1.msra.mxu0 0.0
        %5059 = vmatprep.subr.mxu0 0.0
        %5060 = vmatpush1.msra.mxu0 0.0
        %5061 = vmatprep.subr.mxu0 0.0
        %5062 = vmatpush1.msra.mxu0 0.0
        %5063 = vmatprep.subr.mxu0 0.0
        %5064 = vmatpush1.msra.mxu0 0.0
        %5065 = vmatprep.subr.mxu0 0.0
        %5066 = vmatpush1.msra.mxu0 0.0
        %5067 = vmatprep.subr.mxu0 0.0
        %5068 = vmatpush1.msra.mxu0 0.0
        %5069 = vmatprep.subr.mxu0 0.0
        %5070 = vmatpush1.msra.mxu0 0.0
        %5071 = vmatprep.subr.mxu0 0.0
        %5072 = vmatpush1.msra.mxu0 0.0
        %5073 = vmatprep.subr.mxu0 0.0
        %5074 = vmatpush1.msra.mxu0 0.0
        %5075 = vmatprep.subr.mxu0 0.0
        %5076 = vmatpush1.msra.mxu0 0.0
        %5077 = vmatprep.subr.mxu0 0.0
        %5078 = vmatpush1.msra.mxu0 0.0
        %5079 = vmatprep.subr.mxu0 0.0
        %5080 = vmatpush1.msra.mxu0 0.0
        %5081 = vmatprep.subr.mxu0 0.0
        %5082 = vmatpush1.msra.mxu0 0.0
        %5083 = vmatprep.subr.mxu0 0.0
        %5084 = vmatpush1.msra.mxu0 0.0
        %5085 = vmatprep.mubr.f32.mxu0 0.0
        %v5086 = vand.u32 %v4533, 4294901760
        %5087 = vmatmul.mubr.f32.gmra.mrb[0].mxu0 %v5086
        %v5088 = vpop.f32.mrb[0].mxu0
        %v5089 = vadd.f32 %v4970, %v5088
        %v5090 = vpop.f32.mrb[0].mxu0
        %5091 = vdwg.mxu0
        %5092 = vmatprep.subr.mxu0 0.0
        %v5093 = vand.u32 %v1253, 4294901760
        %5094 = vmatpush1.msra.mxu0 %v5093
        %5095 = vmatprep.subr.mxu0 0.0
        %v5096 = vand.u32 %v1254, 4294901760
        %5097 = vmatpush1.msra.mxu0 %v5096
        %5098 = vmatprep.subr.mxu0 0.0
        %v5099 = vand.u32 %v1255, 4294901760
        %5100 = vmatpush1.msra.mxu0 %v5099
        %5101 = vmatprep.subr.mxu0 0.0
        %v5102 = vand.u32 %v1256, 4294901760
        %5103 = vmatpush1.msra.mxu0 %v5102
        %5104 = vmatprep.subr.mxu0 0.0
        %v5105 = vand.u32 %v1257, 4294901760
        %5106 = vmatpush1.msra.mxu0 %v5105
        %5107 = vmatprep.subr.mxu0 0.0
        %v5108 = vand.u32 %v1258, 4294901760
        %5109 = vmatpush1.msra.mxu0 %v5108
        %5110 = vmatprep.subr.mxu0 0.0
        %v5111 = vand.u32 %v1259, 4294901760
        %5112 = vmatpush1.msra.mxu0 %v5111
        %5113 = vmatprep.subr.mxu0 0.0
        %v5114 = vand.u32 %v1260, 4294901760
        %5115 = vmatpush1.msra.mxu0 %v5114
        %5116 = vmatprep.subr.mxu0 0.0
        %v5117 = vand.u32 %v1261, 4294901760
        %5118 = vmatpush1.msra.mxu0 %v5117
        %5119 = vmatprep.subr.mxu0 0.0
        %v5120 = vand.u32 %v1262, 4294901760
        %5121 = vmatpush1.msra.mxu0 %v5120
        %5122 = vmatprep.subr.mxu0 0.0
        %v5123 = vand.u32 %v1263, 4294901760
        %5124 = vmatpush1.msra.mxu0 %v5123
        %5125 = vmatprep.subr.mxu0 0.0
        %v5126 = vand.u32 %v1264, 4294901760
        %5127 = vmatpush1.msra.mxu0 %v5126
        %5128 = vmatprep.subr.mxu0 0.0
        %v5129 = vand.u32 %v1265, 4294901760
        %5130 = vmatpush1.msra.mxu0 %v5129
        %5131 = vmatprep.subr.mxu0 0.0
        %v5132 = vand.u32 %v1266, 4294901760
        %5133 = vmatpush1.msra.mxu0 %v5132
        %5134 = vmatprep.subr.mxu0 0.0
        %v5135 = vand.u32 %v1267, 4294901760
        %5136 = vmatpush1.msra.mxu0 %v5135
        %5137 = vmatprep.subr.mxu0 0.0
        %v5138 = vand.u32 %v1268, 4294901760
        %5139 = vmatpush1.msra.mxu0 %v5138
        %5140 = vmatprep.subr.mxu0 0.0
        %5141 = vmatpush1.msra.mxu0 0.0
        %5142 = vmatprep.subr.mxu0 0.0
        %5143 = vmatpush1.msra.mxu0 0.0
        %5144 = vmatprep.subr.mxu0 0.0
        %5145 = vmatpush1.msra.mxu0 0.0
        %5146 = vmatprep.subr.mxu0 0.0
        %5147 = vmatpush1.msra.mxu0 0.0
        %5148 = vmatprep.subr.mxu0 0.0
        %5149 = vmatpush1.msra.mxu0 0.0
        %5150 = vmatprep.subr.mxu0 0.0
        %5151 = vmatpush1.msra.mxu0 0.0
        %5152 = vmatprep.subr.mxu0 0.0
        %5153 = vmatpush1.msra.mxu0 0.0
        %5154 = vmatprep.subr.mxu0 0.0
        %5155 = vmatpush1.msra.mxu0 0.0
        %5156 = vmatprep.subr.mxu0 0.0
        %5157 = vmatpush1.msra.mxu0 0.0
        %5158 = vmatprep.subr.mxu0 0.0
        %5159 = vmatpush1.msra.mxu0 0.0
        %5160 = vmatprep.subr.mxu0 0.0
        %5161 = vmatpush1.msra.mxu0 0.0
        %5162 = vmatprep.subr.mxu0 0.0
        %5163 = vmatpush1.msra.mxu0 0.0
        %5164 = vmatprep.subr.mxu0 0.0
        %5165 = vmatpush1.msra.mxu0 0.0
        %5166 = vmatprep.subr.mxu0 0.0
        %5167 = vmatpush1.msra.mxu0 0.0
        %5168 = vmatprep.subr.mxu0 0.0
        %5169 = vmatpush1.msra.mxu0 0.0
        %5170 = vmatprep.subr.mxu0 0.0
        %5171 = vmatpush1.msra.mxu0 0.0
        %5172 = vmatprep.mubr.f32.mxu0 0.0
        %v5173 = vand.u32 %v4533, 4294901760
        %5174 = vmatmul.mubr.f32.gmra.mrb[0].mxu0 %v5173
        %v5175 = vpop.f32.mrb[0].mxu0
        %v5176 = vadd.f32 %v5089, %v5175
        %v5177 = vpop.f32.mrb[0].mxu0
        %5178 = vdwg.mxu0
        %v5179 = vld [vmem:[#allocation2 + $0x28] sm:$0xff]
        %v5180 = vmul.f32 %v4532, 0.1
        %v5181 = vsub.f32 0.0, %v4532
        %v5182 = vadd.f32 %v5181, %v5176
        %v5183 = vadd.f32 %v5182, %v5179
        %v5184 = vmul.f32 %v5180, %v5183
        %v5185 = vmax.f32 %v5184, 0.0
        %s5186 = scalar_lea.vmem %s333, 40 [#allocation6]
        %5187 = vst [vmem:[%s5186] sm:$0xff] %v5184
        %s5188 = scalar_lea.vmem %s326, 40 [#allocation4]
        %5189 = vst [vmem:[%s5188] sm:$0xff] %v5185
        %5190 = vmatprep.subr.mxu0 0.0
        %v5191 = vand.u32 %v1253, 4294901760
        %5192 = vmatpush1.msra.mxu0 %v5191
        %5193 = vmatprep.subr.mxu0 0.0
        %v5194 = vand.u32 %v1254, 4294901760
        %5195 = vmatpush1.msra.mxu0 %v5194
        %5196 = vmatprep.subr.mxu0 0.0
        %v5197 = vand.u32 %v1255, 4294901760
        %5198 = vmatpush1.msra.mxu0 %v5197
        %5199 = vmatprep.subr.mxu0 0.0
        %v5200 = vand.u32 %v1256, 4294901760
        %5201 = vmatpush1.msra.mxu0 %v5200
        %5202 = vmatprep.subr.mxu0 0.0
        %v5203 = vand.u32 %v1257, 4294901760
        %5204 = vmatpush1.msra.mxu0 %v5203
        %5205 = vmatprep.subr.mxu0 0.0
        %v5206 = vand.u32 %v1258, 4294901760
        %5207 = vmatpush1.msra.mxu0 %v5206
        %5208 = vmatprep.subr.mxu0 0.0
        %v5209 = vand.u32 %v1259, 4294901760
        %5210 = vmatpush1.msra.mxu0 %v5209
        %5211 = vmatprep.subr.mxu0 0.0
        %v5212 = vand.u32 %v1260, 4294901760
        %5213 = vmatpush1.msra.mxu0 %v5212
        %5214 = vmatprep.subr.mxu0 0.0
        %v5215 = vand.u32 %v1261, 4294901760
        %5216 = vmatpush1.msra.mxu0 %v5215
        %5217 = vmatprep.subr.mxu0 0.0
        %v5218 = vand.u32 %v1262, 4294901760
        %5219 = vmatpush1.msra.mxu0 %v5218
        %5220 = vmatprep.subr.mxu0 0.0
        %v5221 = vand.u32 %v1263, 4294901760
        %5222 = vmatpush1.msra.mxu0 %v5221
        %5223 = vmatprep.subr.mxu0 0.0
        %v5224 = vand.u32 %v1264, 4294901760
        %5225 = vmatpush1.msra.mxu0 %v5224
        %5226 = vmatprep.subr.mxu0 0.0
        %v5227 = vand.u32 %v1265, 4294901760
        %5228 = vmatpush1.msra.mxu0 %v5227
        %5229 = vmatprep.subr.mxu0 0.0
        %v5230 = vand.u32 %v1266, 4294901760
        %5231 = vmatpush1.msra.mxu0 %v5230
        %5232 = vmatprep.subr.mxu0 0.0
        %v5233 = vand.u32 %v1267, 4294901760
        %5234 = vmatpush1.msra.mxu0 %v5233
        %5235 = vmatprep.subr.mxu0 0.0
        %v5236 = vand.u32 %v1268, 4294901760
        %5237 = vmatpush1.msra.mxu0 %v5236
        %5238 = vmatprep.subr.mxu0 0.0
        %5239 = vmatpush1.msra.mxu0 0.0
        %5240 = vmatprep.subr.mxu0 0.0
        %5241 = vmatpush1.msra.mxu0 0.0
        %5242 = vmatprep.subr.mxu0 0.0
        %5243 = vmatpush1.msra.mxu0 0.0
        %5244 = vmatprep.subr.mxu0 0.0
        %5245 = vmatpush1.msra.mxu0 0.0
        %5246 = vmatprep.subr.mxu0 0.0
        %5247 = vmatpush1.msra.mxu0 0.0
        %5248 = vmatprep.subr.mxu0 0.0
        %5249 = vmatpush1.msra.mxu0 0.0
        %5250 = vmatprep.subr.mxu0 0.0
        %5251 = vmatpush1.msra.mxu0 0.0
        %5252 = vmatprep.subr.mxu0 0.0
        %5253 = vmatpush1.msra.mxu0 0.0
        %5254 = vmatprep.subr.mxu0 0.0
        %5255 = vmatpush1.msra.mxu0 0.0
        %5256 = vmatprep.subr.mxu0 0.0
        %5257 = vmatpush1.msra.mxu0 0.0
        %5258 = vmatprep.subr.mxu0 0.0
        %5259 = vmatpush1.msra.mxu0 0.0
        %5260 = vmatprep.subr.mxu0 0.0
        %5261 = vmatpush1.msra.mxu0 0.0
        %5262 = vmatprep.subr.mxu0 0.0
        %5263 = vmatpush1.msra.mxu0 0.0
        %5264 = vmatprep.subr.mxu0 0.0
        %5265 = vmatpush1.msra.mxu0 0.0
        %5266 = vmatprep.subr.mxu0 0.0
        %5267 = vmatpush1.msra.mxu0 0.0
        %5268 = vmatprep.subr.mxu0 0.0
        %5269 = vmatpush1.msra.mxu0 0.0
        %5270 = vmatprep.mubr.f32.mxu0 0.0
        %v5271 = vand.u32 %v5185, 4294901760
        %v5272 = vsub.f32 %v5185, %v5271
        %v5273 = vand.u32 %v5272, 4294901760
        %v5274 = vsub.f32 %v5272, %v5273
        %v5275 = vand.u32 %v5274, 4294901760
        %5276 = vmatmul.mubr.f32.gmra.mrb[0].mxu0 %v5275
        %v5277 = vpop.f32.mrb[0].mxu0
        %v5278 = vadd.f32 0.0, %v5277
        %v5279 = vpop.f32.mrb[0].mxu0
        %5280 = vdwg.mxu0
        %5281 = vmatprep.subr.mxu0 0.0
        %v5282 = vand.u32 %v1253, 4294901760
        %v5283 = vsub.f32 %v1253, %v5282
        %v5284 = vand.u32 %v5283, 4294901760
        %v5285 = vsub.f32 %v5283, %v5284
        %v5286 = vand.u32 %v5285, 4294901760
        %5287 = vmatpush1.msra.mxu0 %v5286
        %5288 = vmatprep.subr.mxu0 0.0
        %v5289 = vand.u32 %v1254, 4294901760
        %v5290 = vsub.f32 %v1254, %v5289
        %v5291 = vand.u32 %v5290, 4294901760
        %v5292 = vsub.f32 %v5290, %v5291
        %v5293 = vand.u32 %v5292, 4294901760
        %5294 = vmatpush1.msra.mxu0 %v5293
        %5295 = vmatprep.subr.mxu0 0.0
        %v5296 = vand.u32 %v1255, 4294901760
        %v5297 = vsub.f32 %v1255, %v5296
        %v5298 = vand.u32 %v5297, 4294901760
        %v5299 = vsub.f32 %v5297, %v5298
        %v5300 = vand.u32 %v5299, 4294901760
        %5301 = vmatpush1.msra.mxu0 %v5300
        %5302 = vmatprep.subr.mxu0 0.0
        %v5303 = vand.u32 %v1256, 4294901760
        %v5304 = vsub.f32 %v1256, %v5303
        %v5305 = vand.u32 %v5304, 4294901760
        %v5306 = vsub.f32 %v5304, %v5305
        %v5307 = vand.u32 %v5306, 4294901760
        %5308 = vmatpush1.msra.mxu0 %v5307
        %5309 = vmatprep.subr.mxu0 0.0
        %v5310 = vand.u32 %v1257, 4294901760
        %v5311 = vsub.f32 %v1257, %v5310
        %v5312 = vand.u32 %v5311, 4294901760
        %v5313 = vsub.f32 %v5311, %v5312
        %v5314 = vand.u32 %v5313, 4294901760
        %5315 = vmatpush1.msra.mxu0 %v5314
        %5316 = vmatprep.subr.mxu0 0.0
        %v5317 = vand.u32 %v1258, 4294901760
        %v5318 = vsub.f32 %v1258, %v5317
        %v5319 = vand.u32 %v5318, 4294901760
        %v5320 = vsub.f32 %v5318, %v5319
        %v5321 = vand.u32 %v5320, 4294901760
        %5322 = vmatpush1.msra.mxu0 %v5321
        %5323 = vmatprep.subr.mxu0 0.0
        %v5324 = vand.u32 %v1259, 4294901760
        %v5325 = vsub.f32 %v1259, %v5324
        %v5326 = vand.u32 %v5325, 4294901760
        %v5327 = vsub.f32 %v5325, %v5326
        %v5328 = vand.u32 %v5327, 4294901760
        %5329 = vmatpush1.msra.mxu0 %v5328
        %5330 = vmatprep.subr.mxu0 0.0
        %v5331 = vand.u32 %v1260, 4294901760
        %v5332 = vsub.f32 %v1260, %v5331
        %v5333 = vand.u32 %v5332, 4294901760
        %v5334 = vsub.f32 %v5332, %v5333
        %v5335 = vand.u32 %v5334, 4294901760
        %5336 = vmatpush1.msra.mxu0 %v5335
        %5337 = vmatprep.subr.mxu0 0.0
        %v5338 = vand.u32 %v1261, 4294901760
        %v5339 = vsub.f32 %v1261, %v5338
        %v5340 = vand.u32 %v5339, 4294901760
        %v5341 = vsub.f32 %v5339, %v5340
        %v5342 = vand.u32 %v5341, 4294901760
        %5343 = vmatpush1.msra.mxu0 %v5342
        %5344 = vmatprep.subr.mxu0 0.0
        %v5345 = vand.u32 %v1262, 4294901760
        %v5346 = vsub.f32 %v1262, %v5345
        %v5347 = vand.u32 %v5346, 4294901760
        %v5348 = vsub.f32 %v5346, %v5347
        %v5349 = vand.u32 %v5348, 4294901760
        %5350 = vmatpush1.msra.mxu0 %v5349
        %5351 = vmatprep.subr.mxu0 0.0
        %v5352 = vand.u32 %v1263, 4294901760
        %v5353 = vsub.f32 %v1263, %v5352
        %v5354 = vand.u32 %v5353, 4294901760
        %v5355 = vsub.f32 %v5353, %v5354
        %v5356 = vand.u32 %v5355, 4294901760
        %5357 = vmatpush1.msra.mxu0 %v5356
        %5358 = vmatprep.subr.mxu0 0.0
        %v5359 = vand.u32 %v1264, 4294901760
        %v5360 = vsub.f32 %v1264, %v5359
        %v5361 = vand.u32 %v5360, 4294901760
        %v5362 = vsub.f32 %v5360, %v5361
        %v5363 = vand.u32 %v5362, 4294901760
        %5364 = vmatpush1.msra.mxu0 %v5363
        %5365 = vmatprep.subr.mxu0 0.0
        %v5366 = vand.u32 %v1265, 4294901760
        %v5367 = vsub.f32 %v1265, %v5366
        %v5368 = vand.u32 %v5367, 4294901760
        %v5369 = vsub.f32 %v5367, %v5368
        %v5370 = vand.u32 %v5369, 4294901760
        %5371 = vmatpush1.msra.mxu0 %v5370
        %5372 = vmatprep.subr.mxu0 0.0
        %v5373 = vand.u32 %v1266, 4294901760
        %v5374 = vsub.f32 %v1266, %v5373
        %v5375 = vand.u32 %v5374, 4294901760
        %v5376 = vsub.f32 %v5374, %v5375
        %v5377 = vand.u32 %v5376, 4294901760
        %5378 = vmatpush1.msra.mxu0 %v5377
        %5379 = vmatprep.subr.mxu0 0.0
        %v5380 = vand.u32 %v1267, 4294901760
        %v5381 = vsub.f32 %v1267, %v5380
        %v5382 = vand.u32 %v5381, 4294901760
        %v5383 = vsub.f32 %v5381, %v5382
        %v5384 = vand.u32 %v5383, 4294901760
        %5385 = vmatpush1.msra.mxu0 %v5384
        %5386 = vmatprep.subr.mxu0 0.0
        %v5387 = vand.u32 %v1268, 4294901760
        %v5388 = vsub.f32 %v1268, %v5387
        %v5389 = vand.u32 %v5388, 4294901760
        %v5390 = vsub.f32 %v5388, %v5389
        %v5391 = vand.u32 %v5390, 4294901760
        %5392 = vmatpush1.msra.mxu0 %v5391
        %5393 = vmatprep.subr.mxu0 0.0
        %5394 = vmatpush1.msra.mxu0 0.0
        %5395 = vmatprep.subr.mxu0 0.0
        %5396 = vmatpush1.msra.mxu0 0.0
        %5397 = vmatprep.subr.mxu0 0.0
        %5398 = vmatpush1.msra.mxu0 0.0
        %5399 = vmatprep.subr.mxu0 0.0
        %5400 = vmatpush1.msra.mxu0 0.0
        %5401 = vmatprep.subr.mxu0 0.0
        %5402 = vmatpush1.msra.mxu0 0.0
        %5403 = vmatprep.subr.mxu0 0.0
        %5404 = vmatpush1.msra.mxu0 0.0
        %5405 = vmatprep.subr.mxu0 0.0
        %5406 = vmatpush1.msra.mxu0 0.0
        %5407 = vmatprep.subr.mxu0 0.0
        %5408 = vmatpush1.msra.mxu0 0.0
        %5409 = vmatprep.subr.mxu0 0.0
        %5410 = vmatpush1.msra.mxu0 0.0
        %5411 = vmatprep.subr.mxu0 0.0
        %5412 = vmatpush1.msra.mxu0 0.0
        %5413 = vmatprep.subr.mxu0 0.0
        %5414 = vmatpush1.msra.mxu0 0.0
        %5415 = vmatprep.subr.mxu0 0.0
        %5416 = vmatpush1.msra.mxu0 0.0
        %5417 = vmatprep.subr.mxu0 0.0
        %5418 = vmatpush1.msra.mxu0 0.0
        %5419 = vmatprep.subr.mxu0 0.0
        %5420 = vmatpush1.msra.mxu0 0.0
        %5421 = vmatprep.subr.mxu0 0.0
        %5422 = vmatpush1.msra.mxu0 0.0
        %5423 = vmatprep.subr.mxu0 0.0
        %5424 = vmatpush1.msra.mxu0 0.0
        %5425 = vmatprep.mubr.f32.mxu0 0.0
        %v5426 = vand.u32 %v5185, 4294901760
        %5427 = vmatmul.mubr.f32.gmra.mrb[0].mxu0 %v5426
        %v5428 = vpop.f32.mrb[0].mxu0
        %v5429 = vadd.f32 %v5278, %v5428
        %v5430 = vpop.f32.mrb[0].mxu0
        %5431 = vdwg.mxu0
        %5432 = vmatprep.subr.mxu0 0.0
        %v5433 = vand.u32 %v1253, 4294901760
        %v5434 = vsub.f32 %v1253, %v5433
        %5435 = vmatpush1.msra.mxu0 %v5434
        %5436 = vmatprep.subr.mxu0 0.0
        %v5437 = vand.u32 %v1254, 4294901760
        %v5438 = vsub.f32 %v1254, %v5437
        %5439 = vmatpush1.msra.mxu0 %v5438
        %5440 = vmatprep.subr.mxu0 0.0
        %v5441 = vand.u32 %v1255, 4294901760
        %v5442 = vsub.f32 %v1255, %v5441
        %5443 = vmatpush1.msra.mxu0 %v5442
        %5444 = vmatprep.subr.mxu0 0.0
        %v5445 = vand.u32 %v1256, 4294901760
        %v5446 = vsub.f32 %v1256, %v5445
        %5447 = vmatpush1.msra.mxu0 %v5446
        %5448 = vmatprep.subr.mxu0 0.0
        %v5449 = vand.u32 %v1257, 4294901760
        %v5450 = vsub.f32 %v1257, %v5449
        %5451 = vmatpush1.msra.mxu0 %v5450
        %5452 = vmatprep.subr.mxu0 0.0
        %v5453 = vand.u32 %v1258, 4294901760
        %v5454 = vsub.f32 %v1258, %v5453
        %5455 = vmatpush1.msra.mxu0 %v5454
        %5456 = vmatprep.subr.mxu0 0.0
        %v5457 = vand.u32 %v1259, 4294901760
        %v5458 = vsub.f32 %v1259, %v5457
        %5459 = vmatpush1.msra.mxu0 %v5458
        %5460 = vmatprep.subr.mxu0 0.0
        %v5461 = vand.u32 %v1260, 4294901760
        %v5462 = vsub.f32 %v1260, %v5461
        %5463 = vmatpush1.msra.mxu0 %v5462
        %5464 = vmatprep.subr.mxu0 0.0
        %v5465 = vand.u32 %v1261, 4294901760
        %v5466 = vsub.f32 %v1261, %v5465
        %5467 = vmatpush1.msra.mxu0 %v5466
        %5468 = vmatprep.subr.mxu0 0.0
        %v5469 = vand.u32 %v1262, 4294901760
        %v5470 = vsub.f32 %v1262, %v5469
        %5471 = vmatpush1.msra.mxu0 %v5470
        %5472 = vmatprep.subr.mxu0 0.0
        %v5473 = vand.u32 %v1263, 4294901760
        %v5474 = vsub.f32 %v1263, %v5473
        %5475 = vmatpush1.msra.mxu0 %v5474
        %5476 = vmatprep.subr.mxu0 0.0
        %v5477 = vand.u32 %v1264, 4294901760
        %v5478 = vsub.f32 %v1264, %v5477
        %5479 = vmatpush1.msra.mxu0 %v5478
        %5480 = vmatprep.subr.mxu0 0.0
        %v5481 = vand.u32 %v1265, 4294901760
        %v5482 = vsub.f32 %v1265, %v5481
        %5483 = vmatpush1.msra.mxu0 %v5482
        %5484 = vmatprep.subr.mxu0 0.0
        %v5485 = vand.u32 %v1266, 4294901760
        %v5486 = vsub.f32 %v1266, %v5485
        %5487 = vmatpush1.msra.mxu0 %v5486
        %5488 = vmatprep.subr.mxu0 0.0
        %v5489 = vand.u32 %v1267, 4294901760
        %v5490 = vsub.f32 %v1267, %v5489
        %5491 = vmatpush1.msra.mxu0 %v5490
        %5492 = vmatprep.subr.mxu0 0.0
        %v5493 = vand.u32 %v1268, 4294901760
        %v5494 = vsub.f32 %v1268, %v5493
        %5495 = vmatpush1.msra.mxu0 %v5494
        %5496 = vmatprep.subr.mxu0 0.0
        %5497 = vmatpush1.msra.mxu0 0.0
        %5498 = vmatprep.subr.mxu0 0.0
        %5499 = vmatpush1.msra.mxu0 0.0
        %5500 = vmatprep.subr.mxu0 0.0
        %5501 = vmatpush1.msra.mxu0 0.0
        %5502 = vmatprep.subr.mxu0 0.0
        %5503 = vmatpush1.msra.mxu0 0.0
        %5504 = vmatprep.subr.mxu0 0.0
        %5505 = vmatpush1.msra.mxu0 0.0
        %5506 = vmatprep.subr.mxu0 0.0
        %5507 = vmatpush1.msra.mxu0 0.0
        %5508 = vmatprep.subr.mxu0 0.0
        %5509 = vmatpush1.msra.mxu0 0.0
        %5510 = vmatprep.subr.mxu0 0.0
        %5511 = vmatpush1.msra.mxu0 0.0
        %5512 = vmatprep.subr.mxu0 0.0
        %5513 = vmatpush1.msra.mxu0 0.0
        %5514 = vmatprep.subr.mxu0 0.0
        %5515 = vmatpush1.msra.mxu0 0.0
        %5516 = vmatprep.subr.mxu0 0.0
        %5517 = vmatpush1.msra.mxu0 0.0
        %5518 = vmatprep.subr.mxu0 0.0
        %5519 = vmatpush1.msra.mxu0 0.0
        %5520 = vmatprep.subr.mxu0 0.0
        %5521 = vmatpush1.msra.mxu0 0.0
        %5522 = vmatprep.subr.mxu0 0.0
        %5523 = vmatpush1.msra.mxu0 0.0
        %5524 = vmatprep.subr.mxu0 0.0
        %5525 = vmatpush1.msra.mxu0 0.0
        %5526 = vmatprep.subr.mxu0 0.0
        %5527 = vmatpush1.msra.mxu0 0.0
        %5528 = vmatprep.mubr.f32.mxu0 0.0
        %v5529 = vand.u32 %v5185, 4294901760
        %v5530 = vsub.f32 %v5185, %v5529
        %5531 = vmatmul.mubr.f32.gmra.mrb[0].mxu0 %v5530
        %v5532 = vpop.f32.mrb[0].mxu0
        %v5533 = vadd.f32 %v5429, %v5532
        %v5534 = vpop.f32.mrb[0].mxu0
        %5535 = vdwg.mxu0
        %5536 = vmatprep.subr.mxu0 0.0
        %v5537 = vand.u32 %v1253, 4294901760
        %5538 = vmatpush1.msra.mxu0 %v5537
        %5539 = vmatprep.subr.mxu0 0.0
        %v5540 = vand.u32 %v1254, 4294901760
        %5541 = vmatpush1.msra.mxu0 %v5540
        %5542 = vmatprep.subr.mxu0 0.0
        %v5543 = vand.u32 %v1255, 4294901760
        %5544 = vmatpush1.msra.mxu0 %v5543
        %5545 = vmatprep.subr.mxu0 0.0
        %v5546 = vand.u32 %v1256, 4294901760
        %5547 = vmatpush1.msra.mxu0 %v5546
        %5548 = vmatprep.subr.mxu0 0.0
        %v5549 = vand.u32 %v1257, 4294901760
        %5550 = vmatpush1.msra.mxu0 %v5549
        %5551 = vmatprep.subr.mxu0 0.0
        %v5552 = vand.u32 %v1258, 4294901760
        %5553 = vmatpush1.msra.mxu0 %v5552
        %5554 = vmatprep.subr.mxu0 0.0
        %v5555 = vand.u32 %v1259, 4294901760
        %5556 = vmatpush1.msra.mxu0 %v5555
        %5557 = vmatprep.subr.mxu0 0.0
        %v5558 = vand.u32 %v1260, 4294901760
        %5559 = vmatpush1.msra.mxu0 %v5558
        %5560 = vmatprep.subr.mxu0 0.0
        %v5561 = vand.u32 %v1261, 4294901760
        %5562 = vmatpush1.msra.mxu0 %v5561
        %5563 = vmatprep.subr.mxu0 0.0
        %v5564 = vand.u32 %v1262, 4294901760
        %5565 = vmatpush1.msra.mxu0 %v5564
        %5566 = vmatprep.subr.mxu0 0.0
        %v5567 = vand.u32 %v1263, 4294901760
        %5568 = vmatpush1.msra.mxu0 %v5567
        %5569 = vmatprep.subr.mxu0 0.0
        %v5570 = vand.u32 %v1264, 4294901760
        %5571 = vmatpush1.msra.mxu0 %v5570
        %5572 = vmatprep.subr.mxu0 0.0
        %v5573 = vand.u32 %v1265, 4294901760
        %5574 = vmatpush1.msra.mxu0 %v5573
        %5575 = vmatprep.subr.mxu0 0.0
        %v5576 = vand.u32 %v1266, 4294901760
        %5577 = vmatpush1.msra.mxu0 %v5576
        %5578 = vmatprep.subr.mxu0 0.0
        %v5579 = vand.u32 %v1267, 4294901760
        %5580 = vmatpush1.msra.mxu0 %v5579
        %5581 = vmatprep.subr.mxu0 0.0
        %v5582 = vand.u32 %v1268, 4294901760
        %5583 = vmatpush1.msra.mxu0 %v5582
        %5584 = vmatprep.subr.mxu0 0.0
        %5585 = vmatpush1.msra.mxu0 0.0
        %5586 = vmatprep.subr.mxu0 0.0
        %5587 = vmatpush1.msra.mxu0 0.0
        %5588 = vmatprep.subr.mxu0 0.0
        %5589 = vmatpush1.msra.mxu0 0.0
        %5590 = vmatprep.subr.mxu0 0.0
        %5591 = vmatpush1.msra.mxu0 0.0
        %5592 = vmatprep.subr.mxu0 0.0
        %5593 = vmatpush1.msra.mxu0 0.0
        %5594 = vmatprep.subr.mxu0 0.0
        %5595 = vmatpush1.msra.mxu0 0.0
        %5596 = vmatprep.subr.mxu0 0.0
        %5597 = vmatpush1.msra.mxu0 0.0
        %5598 = vmatprep.subr.mxu0 0.0
        %5599 = vmatpush1.msra.mxu0 0.0
        %5600 = vmatprep.subr.mxu0 0.0
        %5601 = vmatpush1.msra.mxu0 0.0
        %5602 = vmatprep.subr.mxu0 0.0
        %5603 = vmatpush1.msra.mxu0 0.0
        %5604 = vmatprep.subr.mxu0 0.0
        %5605 = vmatpush1.msra.mxu0 0.0
        %5606 = vmatprep.subr.mxu0 0.0
        %5607 = vmatpush1.msra.mxu0 0.0
        %5608 = vmatprep.subr.mxu0 0.0
        %5609 = vmatpush1.msra.mxu0 0.0
        %5610 = vmatprep.subr.mxu0 0.0
        %5611 = vmatpush1.msra.mxu0 0.0
        %5612 = vmatprep.subr.mxu0 0.0
        %5613 = vmatpush1.msra.mxu0 0.0
        %5614 = vmatprep.subr.mxu0 0.0
        %5615 = vmatpush1.msra.mxu0 0.0
        %5616 = vmatprep.mubr.f32.mxu0 0.0
        %v5617 = vand.u32 %v5185, 4294901760
        %v5618 = vsub.f32 %v5185, %v5617
        %v5619 = vand.u32 %v5618, 4294901760
        %5620 = vmatmul.mubr.f32.gmra.mrb[0].mxu0 %v5619
        %v5621 = vpop.f32.mrb[0].mxu0
        %v5622 = vadd.f32 %v5533, %v5621
        %v5623 = vpop.f32.mrb[0].mxu0
        %5624 = vdwg.mxu0
        %5625 = vmatprep.subr.mxu0 0.0
        %v5626 = vand.u32 %v1253, 4294901760
        %v5627 = vsub.f32 %v1253, %v5626
        %v5628 = vand.u32 %v5627, 4294901760
        %5629 = vmatpush1.msra.mxu0 %v5628
        %5630 = vmatprep.subr.mxu0 0.0
        %v5631 = vand.u32 %v1254, 4294901760
        %v5632 = vsub.f32 %v1254, %v5631
        %v5633 = vand.u32 %v5632, 4294901760
        %5634 = vmatpush1.msra.mxu0 %v5633
        %5635 = vmatprep.subr.mxu0 0.0
        %v5636 = vand.u32 %v1255, 4294901760
        %v5637 = vsub.f32 %v1255, %v5636
        %v5638 = vand.u32 %v5637, 4294901760
        %5639 = vmatpush1.msra.mxu0 %v5638
        %5640 = vmatprep.subr.mxu0 0.0
        %v5641 = vand.u32 %v1256, 4294901760
        %v5642 = vsub.f32 %v1256, %v5641
        %v5643 = vand.u32 %v5642, 4294901760
        %5644 = vmatpush1.msra.mxu0 %v5643
        %5645 = vmatprep.subr.mxu0 0.0
        %v5646 = vand.u32 %v1257, 4294901760
        %v5647 = vsub.f32 %v1257, %v5646
        %v5648 = vand.u32 %v5647, 4294901760
        %5649 = vmatpush1.msra.mxu0 %v5648
        %5650 = vmatprep.subr.mxu0 0.0
        %v5651 = vand.u32 %v1258, 4294901760
        %v5652 = vsub.f32 %v1258, %v5651
        %v5653 = vand.u32 %v5652, 4294901760
        %5654 = vmatpush1.msra.mxu0 %v5653
        %5655 = vmatprep.subr.mxu0 0.0
        %v5656 = vand.u32 %v1259, 4294901760
        %v5657 = vsub.f32 %v1259, %v5656
        %v5658 = vand.u32 %v5657, 4294901760
        %5659 = vmatpush1.msra.mxu0 %v5658
        %5660 = vmatprep.subr.mxu0 0.0
        %v5661 = vand.u32 %v1260, 4294901760
        %v5662 = vsub.f32 %v1260, %v5661
        %v5663 = vand.u32 %v5662, 4294901760
        %5664 = vmatpush1.msra.mxu0 %v5663
        %5665 = vmatprep.subr.mxu0 0.0
        %v5666 = vand.u32 %v1261, 4294901760
        %v5667 = vsub.f32 %v1261, %v5666
        %v5668 = vand.u32 %v5667, 4294901760
        %5669 = vmatpush1.msra.mxu0 %v5668
        %5670 = vmatprep.subr.mxu0 0.0
        %v5671 = vand.u32 %v1262, 4294901760
        %v5672 = vsub.f32 %v1262, %v5671
        %v5673 = vand.u32 %v5672, 4294901760
        %5674 = vmatpush1.msra.mxu0 %v5673
        %5675 = vmatprep.subr.mxu0 0.0
        %v5676 = vand.u32 %v1263, 4294901760
        %v5677 = vsub.f32 %v1263, %v5676
        %v5678 = vand.u32 %v5677, 4294901760
        %5679 = vmatpush1.msra.mxu0 %v5678
        %5680 = vmatprep.subr.mxu0 0.0
        %v5681 = vand.u32 %v1264, 4294901760
        %v5682 = vsub.f32 %v1264, %v5681
        %v5683 = vand.u32 %v5682, 4294901760
        %5684 = vmatpush1.msra.mxu0 %v5683
        %5685 = vmatprep.subr.mxu0 0.0
        %v5686 = vand.u32 %v1265, 4294901760
        %v5687 = vsub.f32 %v1265, %v5686
        %v5688 = vand.u32 %v5687, 4294901760
        %5689 = vmatpush1.msra.mxu0 %v5688
        %5690 = vmatprep.subr.mxu0 0.0
        %v5691 = vand.u32 %v1266, 4294901760
        %v5692 = vsub.f32 %v1266, %v5691
        %v5693 = vand.u32 %v5692, 4294901760
        %5694 = vmatpush1.msra.mxu0 %v5693
        %5695 = vmatprep.subr.mxu0 0.0
        %v5696 = vand.u32 %v1267, 4294901760
        %v5697 = vsub.f32 %v1267, %v5696
        %v5698 = vand.u32 %v5697, 4294901760
        %5699 = vmatpush1.msra.mxu0 %v5698
        %5700 = vmatprep.subr.mxu0 0.0
        %v5701 = vand.u32 %v1268, 4294901760
        %v5702 = vsub.f32 %v1268, %v5701
        %v5703 = vand.u32 %v5702, 4294901760
        %5704 = vmatpush1.msra.mxu0 %v5703
        %5705 = vmatprep.subr.mxu0 0.0
        %5706 = vmatpush1.msra.mxu0 0.0
        %5707 = vmatprep.subr.mxu0 0.0
        %5708 = vmatpush1.msra.mxu0 0.0
        %5709 = vmatprep.subr.mxu0 0.0
        %5710 = vmatpush1.msra.mxu0 0.0
        %5711 = vmatprep.subr.mxu0 0.0
        %5712 = vmatpush1.msra.mxu0 0.0
        %5713 = vmatprep.subr.mxu0 0.0
        %5714 = vmatpush1.msra.mxu0 0.0
        %5715 = vmatprep.subr.mxu0 0.0
        %5716 = vmatpush1.msra.mxu0 0.0
        %5717 = vmatprep.subr.mxu0 0.0
        %5718 = vmatpush1.msra.mxu0 0.0
        %5719 = vmatprep.subr.mxu0 0.0
        %5720 = vmatpush1.msra.mxu0 0.0
        %5721 = vmatprep.subr.mxu0 0.0
        %5722 = vmatpush1.msra.mxu0 0.0
        %5723 = vmatprep.subr.mxu0 0.0
        %5724 = vmatpush1.msra.mxu0 0.0
        %5725 = vmatprep.subr.mxu0 0.0
        %5726 = vmatpush1.msra.mxu0 0.0
        %5727 = vmatprep.subr.mxu0 0.0
        %5728 = vmatpush1.msra.mxu0 0.0
        %5729 = vmatprep.subr.mxu0 0.0
        %5730 = vmatpush1.msra.mxu0 0.0
        %5731 = vmatprep.subr.mxu0 0.0
        %5732 = vmatpush1.msra.mxu0 0.0
        %5733 = vmatprep.subr.mxu0 0.0
        %5734 = vmatpush1.msra.mxu0 0.0
        %5735 = vmatprep.subr.mxu0 0.0
        %5736 = vmatpush1.msra.mxu0 0.0
        %5737 = vmatprep.mubr.f32.mxu0 0.0
        %v5738 = vand.u32 %v5185, 4294901760
        %5739 = vmatmul.mubr.f32.gmra.mrb[0].mxu0 %v5738
        %v5740 = vpop.f32.mrb[0].mxu0
        %v5741 = vadd.f32 %v5622, %v5740
        %v5742 = vpop.f32.mrb[0].mxu0
        %5743 = vdwg.mxu0
        %5744 = vmatprep.subr.mxu0 0.0
        %v5745 = vand.u32 %v1253, 4294901760
        %5746 = vmatpush1.msra.mxu0 %v5745
        %5747 = vmatprep.subr.mxu0 0.0
        %v5748 = vand.u32 %v1254, 4294901760
        %5749 = vmatpush1.msra.mxu0 %v5748
        %5750 = vmatprep.subr.mxu0 0.0
        %v5751 = vand.u32 %v1255, 4294901760
        %5752 = vmatpush1.msra.mxu0 %v5751
        %5753 = vmatprep.subr.mxu0 0.0
        %v5754 = vand.u32 %v1256, 4294901760
        %5755 = vmatpush1.msra.mxu0 %v5754
        %5756 = vmatprep.subr.mxu0 0.0
        %v5757 = vand.u32 %v1257, 4294901760
        %5758 = vmatpush1.msra.mxu0 %v5757
        %5759 = vmatprep.subr.mxu0 0.0
        %v5760 = vand.u32 %v1258, 4294901760
        %5761 = vmatpush1.msra.mxu0 %v5760
        %5762 = vmatprep.subr.mxu0 0.0
        %v5763 = vand.u32 %v1259, 4294901760
        %5764 = vmatpush1.msra.mxu0 %v5763
        %5765 = vmatprep.subr.mxu0 0.0
        %v5766 = vand.u32 %v1260, 4294901760
        %5767 = vmatpush1.msra.mxu0 %v5766
        %5768 = vmatprep.subr.mxu0 0.0
        %v5769 = vand.u32 %v1261, 4294901760
        %5770 = vmatpush1.msra.mxu0 %v5769
        %5771 = vmatprep.subr.mxu0 0.0
        %v5772 = vand.u32 %v1262, 4294901760
        %5773 = vmatpush1.msra.mxu0 %v5772
        %5774 = vmatprep.subr.mxu0 0.0
        %v5775 = vand.u32 %v1263, 4294901760
        %5776 = vmatpush1.msra.mxu0 %v5775
        %5777 = vmatprep.subr.mxu0 0.0
        %v5778 = vand.u32 %v1264, 4294901760
        %5779 = vmatpush1.msra.mxu0 %v5778
        %5780 = vmatprep.subr.mxu0 0.0
        %v5781 = vand.u32 %v1265, 4294901760
        %5782 = vmatpush1.msra.mxu0 %v5781
        %5783 = vmatprep.subr.mxu0 0.0
        %v5784 = vand.u32 %v1266, 4294901760
        %5785 = vmatpush1.msra.mxu0 %v5784
        %5786 = vmatprep.subr.mxu0 0.0
        %v5787 = vand.u32 %v1267, 4294901760
        %5788 = vmatpush1.msra.mxu0 %v5787
        %5789 = vmatprep.subr.mxu0 0.0
        %v5790 = vand.u32 %v1268, 4294901760
        %5791 = vmatpush1.msra.mxu0 %v5790
        %5792 = vmatprep.subr.mxu0 0.0
        %5793 = vmatpush1.msra.mxu0 0.0
        %5794 = vmatprep.subr.mxu0 0.0
        %5795 = vmatpush1.msra.mxu0 0.0
        %5796 = vmatprep.subr.mxu0 0.0
        %5797 = vmatpush1.msra.mxu0 0.0
        %5798 = vmatprep.subr.mxu0 0.0
        %5799 = vmatpush1.msra.mxu0 0.0
        %5800 = vmatprep.subr.mxu0 0.0
        %5801 = vmatpush1.msra.mxu0 0.0
        %5802 = vmatprep.subr.mxu0 0.0
        %5803 = vmatpush1.msra.mxu0 0.0
        %5804 = vmatprep.subr.mxu0 0.0
        %5805 = vmatpush1.msra.mxu0 0.0
        %5806 = vmatprep.subr.mxu0 0.0
        %5807 = vmatpush1.msra.mxu0 0.0
        %5808 = vmatprep.subr.mxu0 0.0
        %5809 = vmatpush1.msra.mxu0 0.0
        %5810 = vmatprep.subr.mxu0 0.0
        %5811 = vmatpush1.msra.mxu0 0.0
        %5812 = vmatprep.subr.mxu0 0.0
        %5813 = vmatpush1.msra.mxu0 0.0
        %5814 = vmatprep.subr.mxu0 0.0
        %5815 = vmatpush1.msra.mxu0 0.0
        %5816 = vmatprep.subr.mxu0 0.0
        %5817 = vmatpush1.msra.mxu0 0.0
        %5818 = vmatprep.subr.mxu0 0.0
        %5819 = vmatpush1.msra.mxu0 0.0
        %5820 = vmatprep.subr.mxu0 0.0
        %5821 = vmatpush1.msra.mxu0 0.0
        %5822 = vmatprep.subr.mxu0 0.0
        %5823 = vmatpush1.msra.mxu0 0.0
        %5824 = vmatprep.mubr.f32.mxu0 0.0
        %v5825 = vand.u32 %v5185, 4294901760
        %5826 = vmatmul.mubr.f32.gmra.mrb[0].mxu0 %v5825
        %v5827 = vpop.f32.mrb[0].mxu0
        %v5828 = vadd.f32 %v5741, %v5827
        %v5829 = vpop.f32.mrb[0].mxu0
        %5830 = vdwg.mxu0
        %v5831 = vld [vmem:[#allocation2 + $0x30] sm:$0xff]
        %v5832 = vmul.f32 %v5184, 0.1
        %v5833 = vsub.f32 0.0, %v5184
        %v5834 = vadd.f32 %v5833, %v5828
        %v5835 = vadd.f32 %v5834, %v5831
        %v5836 = vmul.f32 %v5832, %v5835
        %v5837 = vmax.f32 %v5836, 0.0
        %s5838 = scalar_lea.vmem %s333, 48 [#allocation6]
        %5839 = vst [vmem:[%s5838] sm:$0xff] %v5836
        %s5840 = scalar_lea.vmem %s326, 48 [#allocation4]
        %5841 = vst [vmem:[%s5840] sm:$0xff] %v5837
        %5842 = vmatprep.subr.mxu0 0.0
        %v5843 = vand.u32 %v1253, 4294901760
        %5844 = vmatpush1.msra.mxu0 %v5843
        %5845 = vmatprep.subr.mxu0 0.0
        %v5846 = vand.u32 %v1254, 4294901760
        %5847 = vmatpush1.msra.mxu0 %v5846
        %5848 = vmatprep.subr.mxu0 0.0
        %v5849 = vand.u32 %v1255, 4294901760
        %5850 = vmatpush1.msra.mxu0 %v5849
        %5851 = vmatprep.subr.mxu0 0.0
        %v5852 = vand.u32 %v1256, 4294901760
        %5853 = vmatpush1.msra.mxu0 %v5852
        %5854 = vmatprep.subr.mxu0 0.0
        %v5855 = vand.u32 %v1257, 4294901760
        %5856 = vmatpush1.msra.mxu0 %v5855
        %5857 = vmatprep.subr.mxu0 0.0
        %v5858 = vand.u32 %v1258, 4294901760
        %5859 = vmatpush1.msra.mxu0 %v5858
        %5860 = vmatprep.subr.mxu0 0.0
        %v5861 = vand.u32 %v1259, 4294901760
        %5862 = vmatpush1.msra.mxu0 %v5861
        %5863 = vmatprep.subr.mxu0 0.0
        %v5864 = vand.u32 %v1260, 4294901760
        %5865 = vmatpush1.msra.mxu0 %v5864
        %5866 = vmatprep.subr.mxu0 0.0
        %v5867 = vand.u32 %v1261, 4294901760
        %5868 = vmatpush1.msra.mxu0 %v5867
        %5869 = vmatprep.subr.mxu0 0.0
        %v5870 = vand.u32 %v1262, 4294901760
        %5871 = vmatpush1.msra.mxu0 %v5870
        %5872 = vmatprep.subr.mxu0 0.0
        %v5873 = vand.u32 %v1263, 4294901760
        %5874 = vmatpush1.msra.mxu0 %v5873
        %5875 = vmatprep.subr.mxu0 0.0
        %v5876 = vand.u32 %v1264, 4294901760
        %5877 = vmatpush1.msra.mxu0 %v5876
        %5878 = vmatprep.subr.mxu0 0.0
        %v5879 = vand.u32 %v1265, 4294901760
        %5880 = vmatpush1.msra.mxu0 %v5879
        %5881 = vmatprep.subr.mxu0 0.0
        %v5882 = vand.u32 %v1266, 4294901760
        %5883 = vmatpush1.msra.mxu0 %v5882
        %5884 = vmatprep.subr.mxu0 0.0
        %v5885 = vand.u32 %v1267, 4294901760
        %5886 = vmatpush1.msra.mxu0 %v5885
        %5887 = vmatprep.subr.mxu0 0.0
        %v5888 = vand.u32 %v1268, 4294901760
        %5889 = vmatpush1.msra.mxu0 %v5888
        %5890 = vmatprep.subr.mxu0 0.0
        %5891 = vmatpush1.msra.mxu0 0.0
        %5892 = vmatprep.subr.mxu0 0.0
        %5893 = vmatpush1.msra.mxu0 0.0
        %5894 = vmatprep.subr.mxu0 0.0
        %5895 = vmatpush1.msra.mxu0 0.0
        %5896 = vmatprep.subr.mxu0 0.0
        %5897 = vmatpush1.msra.mxu0 0.0
        %5898 = vmatprep.subr.mxu0 0.0
        %5899 = vmatpush1.msra.mxu0 0.0
        %5900 = vmatprep.subr.mxu0 0.0
        %5901 = vmatpush1.msra.mxu0 0.0
        %5902 = vmatprep.subr.mxu0 0.0
        %5903 = vmatpush1.msra.mxu0 0.0
        %5904 = vmatprep.subr.mxu0 0.0
        %5905 = vmatpush1.msra.mxu0 0.0
        %5906 = vmatprep.subr.mxu0 0.0
        %5907 = vmatpush1.msra.mxu0 0.0
        %5908 = vmatprep.subr.mxu0 0.0
        %5909 = vmatpush1.msra.mxu0 0.0
        %5910 = vmatprep.subr.mxu0 0.0
        %5911 = vmatpush1.msra.mxu0 0.0
        %5912 = vmatprep.subr.mxu0 0.0
        %5913 = vmatpush1.msra.mxu0 0.0
        %5914 = vmatprep.subr.mxu0 0.0
        %5915 = vmatpush1.msra.mxu0 0.0
        %5916 = vmatprep.subr.mxu0 0.0
        %5917 = vmatpush1.msra.mxu0 0.0
        %5918 = vmatprep.subr.mxu0 0.0
        %5919 = vmatpush1.msra.mxu0 0.0
        %5920 = vmatprep.subr.mxu0 0.0
        %5921 = vmatpush1.msra.mxu0 0.0
        %5922 = vmatprep.mubr.f32.mxu0 0.0
        %v5923 = vand.u32 %v5837, 4294901760
        %v5924 = vsub.f32 %v5837, %v5923
        %v5925 = vand.u32 %v5924, 4294901760
        %v5926 = vsub.f32 %v5924, %v5925
        %v5927 = vand.u32 %v5926, 4294901760
        %5928 = vmatmul.mubr.f32.gmra.mrb[0].mxu0 %v5927
        %v5929 = vpop.f32.mrb[0].mxu0
        %v5930 = vadd.f32 0.0, %v5929
        %v5931 = vpop.f32.mrb[0].mxu0
        %5932 = vdwg.mxu0
        %5933 = vmatprep.subr.mxu0 0.0
        %v5934 = vand.u32 %v1253, 4294901760
        %v5935 = vsub.f32 %v1253, %v5934
        %v5936 = vand.u32 %v5935, 4294901760
        %v5937 = vsub.f32 %v5935, %v5936
        %v5938 = vand.u32 %v5937, 4294901760
        %5939 = vmatpush1.msra.mxu0 %v5938
        %5940 = vmatprep.subr.mxu0 0.0
        %v5941 = vand.u32 %v1254, 4294901760
        %v5942 = vsub.f32 %v1254, %v5941
        %v5943 = vand.u32 %v5942, 4294901760
        %v5944 = vsub.f32 %v5942, %v5943
        %v5945 = vand.u32 %v5944, 4294901760
        %5946 = vmatpush1.msra.mxu0 %v5945
        %5947 = vmatprep.subr.mxu0 0.0
        %v5948 = vand.u32 %v1255, 4294901760
        %v5949 = vsub.f32 %v1255, %v5948
        %v5950 = vand.u32 %v5949, 4294901760
        %v5951 = vsub.f32 %v5949, %v5950
        %v5952 = vand.u32 %v5951, 4294901760
        %5953 = vmatpush1.msra.mxu0 %v5952
        %5954 = vmatprep.subr.mxu0 0.0
        %v5955 = vand.u32 %v1256, 4294901760
        %v5956 = vsub.f32 %v1256, %v5955
        %v5957 = vand.u32 %v5956, 4294901760
        %v5958 = vsub.f32 %v5956, %v5957
        %v5959 = vand.u32 %v5958, 4294901760
        %5960 = vmatpush1.msra.mxu0 %v5959
        %5961 = vmatprep.subr.mxu0 0.0
        %v5962 = vand.u32 %v1257, 4294901760
        %v5963 = vsub.f32 %v1257, %v5962
        %v5964 = vand.u32 %v5963, 4294901760
        %v5965 = vsub.f32 %v5963, %v5964
        %v5966 = vand.u32 %v5965, 4294901760
        %5967 = vmatpush1.msra.mxu0 %v5966
        %5968 = vmatprep.subr.mxu0 0.0
        %v5969 = vand.u32 %v1258, 4294901760
        %v5970 = vsub.f32 %v1258, %v5969
        %v5971 = vand.u32 %v5970, 4294901760
        %v5972 = vsub.f32 %v5970, %v5971
        %v5973 = vand.u32 %v5972, 4294901760
        %5974 = vmatpush1.msra.mxu0 %v5973
        %5975 = vmatprep.subr.mxu0 0.0
        %v5976 = vand.u32 %v1259, 4294901760
        %v5977 = vsub.f32 %v1259, %v5976
        %v5978 = vand.u32 %v5977, 4294901760
        %v5979 = vsub.f32 %v5977, %v5978
        %v5980 = vand.u32 %v5979, 4294901760
        %5981 = vmatpush1.msra.mxu0 %v5980
        %5982 = vmatprep.subr.mxu0 0.0
        %v5983 = vand.u32 %v1260, 4294901760
        %v5984 = vsub.f32 %v1260, %v5983
        %v5985 = vand.u32 %v5984, 4294901760
        %v5986 = vsub.f32 %v5984, %v5985
        %v5987 = vand.u32 %v5986, 4294901760
        %5988 = vmatpush1.msra.mxu0 %v5987
        %5989 = vmatprep.subr.mxu0 0.0
        %v5990 = vand.u32 %v1261, 4294901760
        %v5991 = vsub.f32 %v1261, %v5990
        %v5992 = vand.u32 %v5991, 4294901760
        %v5993 = vsub.f32 %v5991, %v5992
        %v5994 = vand.u32 %v5993, 4294901760
        %5995 = vmatpush1.msra.mxu0 %v5994
        %5996 = vmatprep.subr.mxu0 0.0
        %v5997 = vand.u32 %v1262, 4294901760
        %v5998 = vsub.f32 %v1262, %v5997
        %v5999 = vand.u32 %v5998, 4294901760
        %v6000 = vsub.f32 %v5998, %v5999
        %v6001 = vand.u32 %v6000, 4294901760
        %6002 = vmatpush1.msra.mxu0 %v6001
        %6003 = vmatprep.subr.mxu0 0.0
        %v6004 = vand.u32 %v1263, 4294901760
        %v6005 = vsub.f32 %v1263, %v6004
        %v6006 = vand.u32 %v6005, 4294901760
        %v6007 = vsub.f32 %v6005, %v6006
        %v6008 = vand.u32 %v6007, 4294901760
        %6009 = vmatpush1.msra.mxu0 %v6008
        %6010 = vmatprep.subr.mxu0 0.0
        %v6011 = vand.u32 %v1264, 4294901760
        %v6012 = vsub.f32 %v1264, %v6011
        %v6013 = vand.u32 %v6012, 4294901760
        %v6014 = vsub.f32 %v6012, %v6013
        %v6015 = vand.u32 %v6014, 4294901760
        %6016 = vmatpush1.msra.mxu0 %v6015
        %6017 = vmatprep.subr.mxu0 0.0
        %v6018 = vand.u32 %v1265, 4294901760
        %v6019 = vsub.f32 %v1265, %v6018
        %v6020 = vand.u32 %v6019, 4294901760
        %v6021 = vsub.f32 %v6019, %v6020
        %v6022 = vand.u32 %v6021, 4294901760
        %6023 = vmatpush1.msra.mxu0 %v6022
        %6024 = vmatprep.subr.mxu0 0.0
        %v6025 = vand.u32 %v1266, 4294901760
        %v6026 = vsub.f32 %v1266, %v6025
        %v6027 = vand.u32 %v6026, 4294901760
        %v6028 = vsub.f32 %v6026, %v6027
        %v6029 = vand.u32 %v6028, 4294901760
        %6030 = vmatpush1.msra.mxu0 %v6029
        %6031 = vmatprep.subr.mxu0 0.0
        %v6032 = vand.u32 %v1267, 4294901760
        %v6033 = vsub.f32 %v1267, %v6032
        %v6034 = vand.u32 %v6033, 4294901760
        %v6035 = vsub.f32 %v6033, %v6034
        %v6036 = vand.u32 %v6035, 4294901760
        %6037 = vmatpush1.msra.mxu0 %v6036
        %6038 = vmatprep.subr.mxu0 0.0
        %v6039 = vand.u32 %v1268, 4294901760
        %v6040 = vsub.f32 %v1268, %v6039
        %v6041 = vand.u32 %v6040, 4294901760
        %v6042 = vsub.f32 %v6040, %v6041
        %v6043 = vand.u32 %v6042, 4294901760
        %6044 = vmatpush1.msra.mxu0 %v6043
        %6045 = vmatprep.subr.mxu0 0.0
        %6046 = vmatpush1.msra.mxu0 0.0
        %6047 = vmatprep.subr.mxu0 0.0
        %6048 = vmatpush1.msra.mxu0 0.0
        %6049 = vmatprep.subr.mxu0 0.0
        %6050 = vmatpush1.msra.mxu0 0.0
        %6051 = vmatprep.subr.mxu0 0.0
        %6052 = vmatpush1.msra.mxu0 0.0
        %6053 = vmatprep.subr.mxu0 0.0
        %6054 = vmatpush1.msra.mxu0 0.0
        %6055 = vmatprep.subr.mxu0 0.0
        %6056 = vmatpush1.msra.mxu0 0.0
        %6057 = vmatprep.subr.mxu0 0.0
        %6058 = vmatpush1.msra.mxu0 0.0
        %6059 = vmatprep.subr.mxu0 0.0
        %6060 = vmatpush1.msra.mxu0 0.0
        %6061 = vmatprep.subr.mxu0 0.0
        %6062 = vmatpush1.msra.mxu0 0.0
        %6063 = vmatprep.subr.mxu0 0.0
        %6064 = vmatpush1.msra.mxu0 0.0
        %6065 = vmatprep.subr.mxu0 0.0
        %6066 = vmatpush1.msra.mxu0 0.0
        %6067 = vmatprep.subr.mxu0 0.0
        %6068 = vmatpush1.msra.mxu0 0.0
        %6069 = vmatprep.subr.mxu0 0.0
        %6070 = vmatpush1.msra.mxu0 0.0
        %6071 = vmatprep.subr.mxu0 0.0
        %6072 = vmatpush1.msra.mxu0 0.0
        %6073 = vmatprep.subr.mxu0 0.0
        %6074 = vmatpush1.msra.mxu0 0.0
        %6075 = vmatprep.subr.mxu0 0.0
        %6076 = vmatpush1.msra.mxu0 0.0
        %6077 = vmatprep.mubr.f32.mxu0 0.0
        %v6078 = vand.u32 %v5837, 4294901760
        %6079 = vmatmul.mubr.f32.gmra.mrb[0].mxu0 %v6078
        %v6080 = vpop.f32.mrb[0].mxu0
        %v6081 = vadd.f32 %v5930, %v6080
        %v6082 = vpop.f32.mrb[0].mxu0
        %6083 = vdwg.mxu0
        %6084 = vmatprep.subr.mxu0 0.0
        %v6085 = vand.u32 %v1253, 4294901760
        %v6086 = vsub.f32 %v1253, %v6085
        %6087 = vmatpush1.msra.mxu0 %v6086
        %6088 = vmatprep.subr.mxu0 0.0
        %v6089 = vand.u32 %v1254, 4294901760
        %v6090 = vsub.f32 %v1254, %v6089
        %6091 = vmatpush1.msra.mxu0 %v6090
        %6092 = vmatprep.subr.mxu0 0.0
        %v6093 = vand.u32 %v1255, 4294901760
        %v6094 = vsub.f32 %v1255, %v6093
        %6095 = vmatpush1.msra.mxu0 %v6094
        %6096 = vmatprep.subr.mxu0 0.0
        %v6097 = vand.u32 %v1256, 4294901760
        %v6098 = vsub.f32 %v1256, %v6097
        %6099 = vmatpush1.msra.mxu0 %v6098
        %6100 = vmatprep.subr.mxu0 0.0
        %v6101 = vand.u32 %v1257, 4294901760
        %v6102 = vsub.f32 %v1257, %v6101
        %6103 = vmatpush1.msra.mxu0 %v6102
        %6104 = vmatprep.subr.mxu0 0.0
        %v6105 = vand.u32 %v1258, 4294901760
        %v6106 = vsub.f32 %v1258, %v6105
        %6107 = vmatpush1.msra.mxu0 %v6106
        %6108 = vmatprep.subr.mxu0 0.0
        %v6109 = vand.u32 %v1259, 4294901760
        %v6110 = vsub.f32 %v1259, %v6109
        %6111 = vmatpush1.msra.mxu0 %v6110
        %6112 = vmatprep.subr.mxu0 0.0
        %v6113 = vand.u32 %v1260, 4294901760
        %v6114 = vsub.f32 %v1260, %v6113
        %6115 = vmatpush1.msra.mxu0 %v6114
        %6116 = vmatprep.subr.mxu0 0.0
        %v6117 = vand.u32 %v1261, 4294901760
        %v6118 = vsub.f32 %v1261, %v6117
        %6119 = vmatpush1.msra.mxu0 %v6118
        %6120 = vmatprep.subr.mxu0 0.0
        %v6121 = vand.u32 %v1262, 4294901760
        %v6122 = vsub.f32 %v1262, %v6121
        %6123 = vmatpush1.msra.mxu0 %v6122
        %6124 = vmatprep.subr.mxu0 0.0
        %v6125 = vand.u32 %v1263, 4294901760
        %v6126 = vsub.f32 %v1263, %v6125
        %6127 = vmatpush1.msra.mxu0 %v6126
        %6128 = vmatprep.subr.mxu0 0.0
        %v6129 = vand.u32 %v1264, 4294901760
        %v6130 = vsub.f32 %v1264, %v6129
        %6131 = vmatpush1.msra.mxu0 %v6130
        %6132 = vmatprep.subr.mxu0 0.0
        %v6133 = vand.u32 %v1265, 4294901760
        %v6134 = vsub.f32 %v1265, %v6133
        %6135 = vmatpush1.msra.mxu0 %v6134
        %6136 = vmatprep.subr.mxu0 0.0
        %v6137 = vand.u32 %v1266, 4294901760
        %v6138 = vsub.f32 %v1266, %v6137
        %6139 = vmatpush1.msra.mxu0 %v6138
        %6140 = vmatprep.subr.mxu0 0.0
        %v6141 = vand.u32 %v1267, 4294901760
        %v6142 = vsub.f32 %v1267, %v6141
        %6143 = vmatpush1.msra.mxu0 %v6142
        %6144 = vmatprep.subr.mxu0 0.0
        %v6145 = vand.u32 %v1268, 4294901760
        %v6146 = vsub.f32 %v1268, %v6145
        %6147 = vmatpush1.msra.mxu0 %v6146
        %6148 = vmatprep.subr.mxu0 0.0
        %6149 = vmatpush1.msra.mxu0 0.0
        %6150 = vmatprep.subr.mxu0 0.0
        %6151 = vmatpush1.msra.mxu0 0.0
        %6152 = vmatprep.subr.mxu0 0.0
        %6153 = vmatpush1.msra.mxu0 0.0
        %6154 = vmatprep.subr.mxu0 0.0
        %6155 = vmatpush1.msra.mxu0 0.0
        %6156 = vmatprep.subr.mxu0 0.0
        %6157 = vmatpush1.msra.mxu0 0.0
        %6158 = vmatprep.subr.mxu0 0.0
        %6159 = vmatpush1.msra.mxu0 0.0
        %6160 = vmatprep.subr.mxu0 0.0
        %6161 = vmatpush1.msra.mxu0 0.0
        %6162 = vmatprep.subr.mxu0 0.0
        %6163 = vmatpush1.msra.mxu0 0.0
        %6164 = vmatprep.subr.mxu0 0.0
        %6165 = vmatpush1.msra.mxu0 0.0
        %6166 = vmatprep.subr.mxu0 0.0
        %6167 = vmatpush1.msra.mxu0 0.0
        %6168 = vmatprep.subr.mxu0 0.0
        %6169 = vmatpush1.msra.mxu0 0.0
        %6170 = vmatprep.subr.mxu0 0.0
        %6171 = vmatpush1.msra.mxu0 0.0
        %6172 = vmatprep.subr.mxu0 0.0
        %6173 = vmatpush1.msra.mxu0 0.0
        %6174 = vmatprep.subr.mxu0 0.0
        %6175 = vmatpush1.msra.mxu0 0.0
        %6176 = vmatprep.subr.mxu0 0.0
        %6177 = vmatpush1.msra.mxu0 0.0
        %6178 = vmatprep.subr.mxu0 0.0
        %6179 = vmatpush1.msra.mxu0 0.0
        %6180 = vmatprep.mubr.f32.mxu0 0.0
        %v6181 = vand.u32 %v5837, 4294901760
        %v6182 = vsub.f32 %v5837, %v6181
        %6183 = vmatmul.mubr.f32.gmra.mrb[0].mxu0 %v6182
        %v6184 = vpop.f32.mrb[0].mxu0
        %v6185 = vadd.f32 %v6081, %v6184
        %v6186 = vpop.f32.mrb[0].mxu0
        %6187 = vdwg.mxu0
        %6188 = vmatprep.subr.mxu0 0.0
        %v6189 = vand.u32 %v1253, 4294901760
        %6190 = vmatpush1.msra.mxu0 %v6189
        %6191 = vmatprep.subr.mxu0 0.0
        %v6192 = vand.u32 %v1254, 4294901760
        %6193 = vmatpush1.msra.mxu0 %v6192
        %6194 = vmatprep.subr.mxu0 0.0
        %v6195 = vand.u32 %v1255, 4294901760
        %6196 = vmatpush1.msra.mxu0 %v6195
        %6197 = vmatprep.subr.mxu0 0.0
        %v6198 = vand.u32 %v1256, 4294901760
        %6199 = vmatpush1.msra.mxu0 %v6198
        %6200 = vmatprep.subr.mxu0 0.0
        %v6201 = vand.u32 %v1257, 4294901760
        %6202 = vmatpush1.msra.mxu0 %v6201
        %6203 = vmatprep.subr.mxu0 0.0
        %v6204 = vand.u32 %v1258, 4294901760
        %6205 = vmatpush1.msra.mxu0 %v6204
        %6206 = vmatprep.subr.mxu0 0.0
        %v6207 = vand.u32 %v1259, 4294901760
        %6208 = vmatpush1.msra.mxu0 %v6207
        %6209 = vmatprep.subr.mxu0 0.0
        %v6210 = vand.u32 %v1260, 4294901760
        %6211 = vmatpush1.msra.mxu0 %v6210
        %6212 = vmatprep.subr.mxu0 0.0
        %v6213 = vand.u32 %v1261, 4294901760
        %6214 = vmatpush1.msra.mxu0 %v6213
        %6215 = vmatprep.subr.mxu0 0.0
        %v6216 = vand.u32 %v1262, 4294901760
        %6217 = vmatpush1.msra.mxu0 %v6216
        %6218 = vmatprep.subr.mxu0 0.0
        %v6219 = vand.u32 %v1263, 4294901760
        %6220 = vmatpush1.msra.mxu0 %v6219
        %6221 = vmatprep.subr.mxu0 0.0
        %v6222 = vand.u32 %v1264, 4294901760
        %6223 = vmatpush1.msra.mxu0 %v6222
        %6224 = vmatprep.subr.mxu0 0.0
        %v6225 = vand.u32 %v1265, 4294901760
        %6226 = vmatpush1.msra.mxu0 %v6225
        %6227 = vmatprep.subr.mxu0 0.0
        %v6228 = vand.u32 %v1266, 4294901760
        %6229 = vmatpush1.msra.mxu0 %v6228
        %6230 = vmatprep.subr.mxu0 0.0
        %v6231 = vand.u32 %v1267, 4294901760
        %6232 = vmatpush1.msra.mxu0 %v6231
        %6233 = vmatprep.subr.mxu0 0.0
        %v6234 = vand.u32 %v1268, 4294901760
        %6235 = vmatpush1.msra.mxu0 %v6234
        %6236 = vmatprep.subr.mxu0 0.0
        %6237 = vmatpush1.msra.mxu0 0.0
        %6238 = vmatprep.subr.mxu0 0.0
        %6239 = vmatpush1.msra.mxu0 0.0
        %6240 = vmatprep.subr.mxu0 0.0
        %6241 = vmatpush1.msra.mxu0 0.0
        %6242 = vmatprep.subr.mxu0 0.0
        %6243 = vmatpush1.msra.mxu0 0.0
        %6244 = vmatprep.subr.mxu0 0.0
        %6245 = vmatpush1.msra.mxu0 0.0
        %6246 = vmatprep.subr.mxu0 0.0
        %6247 = vmatpush1.msra.mxu0 0.0
        %6248 = vmatprep.subr.mxu0 0.0
        %6249 = vmatpush1.msra.mxu0 0.0
        %6250 = vmatprep.subr.mxu0 0.0
        %6251 = vmatpush1.msra.mxu0 0.0
        %6252 = vmatprep.subr.mxu0 0.0
        %6253 = vmatpush1.msra.mxu0 0.0
        %6254 = vmatprep.subr.mxu0 0.0
        %6255 = vmatpush1.msra.mxu0 0.0
        %6256 = vmatprep.subr.mxu0 0.0
        %6257 = vmatpush1.msra.mxu0 0.0
        %6258 = vmatprep.subr.mxu0 0.0
        %6259 = vmatpush1.msra.mxu0 0.0
        %6260 = vmatprep.subr.mxu0 0.0
        %6261 = vmatpush1.msra.mxu0 0.0
        %6262 = vmatprep.subr.mxu0 0.0
        %6263 = vmatpush1.msra.mxu0 0.0
        %6264 = vmatprep.subr.mxu0 0.0
        %6265 = vmatpush1.msra.mxu0 0.0
        %6266 = vmatprep.subr.mxu0 0.0
        %6267 = vmatpush1.msra.mxu0 0.0
        %6268 = vmatprep.mubr.f32.mxu0 0.0
        %v6269 = vand.u32 %v5837, 4294901760
        %v6270 = vsub.f32 %v5837, %v6269
        %v6271 = vand.u32 %v6270, 4294901760
        %6272 = vmatmul.mubr.f32.gmra.mrb[0].mxu0 %v6271
        %v6273 = vpop.f32.mrb[0].mxu0
        %v6274 = vadd.f32 %v6185, %v6273
        %v6275 = vpop.f32.mrb[0].mxu0
        %6276 = vdwg.mxu0
        %6277 = vmatprep.subr.mxu0 0.0
        %v6278 = vand.u32 %v1253, 4294901760
        %v6279 = vsub.f32 %v1253, %v6278
        %v6280 = vand.u32 %v6279, 4294901760
        %6281 = vmatpush1.msra.mxu0 %v6280
        %6282 = vmatprep.subr.mxu0 0.0
        %v6283 = vand.u32 %v1254, 4294901760
        %v6284 = vsub.f32 %v1254, %v6283
        %v6285 = vand.u32 %v6284, 4294901760
        %6286 = vmatpush1.msra.mxu0 %v6285
        %6287 = vmatprep.subr.mxu0 0.0
        %v6288 = vand.u32 %v1255, 4294901760
        %v6289 = vsub.f32 %v1255, %v6288
        %v6290 = vand.u32 %v6289, 4294901760
        %6291 = vmatpush1.msra.mxu0 %v6290
        %6292 = vmatprep.subr.mxu0 0.0
        %v6293 = vand.u32 %v1256, 4294901760
        %v6294 = vsub.f32 %v1256, %v6293
        %v6295 = vand.u32 %v6294, 4294901760
        %6296 = vmatpush1.msra.mxu0 %v6295
        %6297 = vmatprep.subr.mxu0 0.0
        %v6298 = vand.u32 %v1257, 4294901760
        %v6299 = vsub.f32 %v1257, %v6298
        %v6300 = vand.u32 %v6299, 4294901760
        %6301 = vmatpush1.msra.mxu0 %v6300
        %6302 = vmatprep.subr.mxu0 0.0
        %v6303 = vand.u32 %v1258, 4294901760
        %v6304 = vsub.f32 %v1258, %v6303
        %v6305 = vand.u32 %v6304, 4294901760
        %6306 = vmatpush1.msra.mxu0 %v6305
        %6307 = vmatprep.subr.mxu0 0.0
        %v6308 = vand.u32 %v1259, 4294901760
        %v6309 = vsub.f32 %v1259, %v6308
        %v6310 = vand.u32 %v6309, 4294901760
        %6311 = vmatpush1.msra.mxu0 %v6310
        %6312 = vmatprep.subr.mxu0 0.0
        %v6313 = vand.u32 %v1260, 4294901760
        %v6314 = vsub.f32 %v1260, %v6313
        %v6315 = vand.u32 %v6314, 4294901760
        %6316 = vmatpush1.msra.mxu0 %v6315
        %6317 = vmatprep.subr.mxu0 0.0
        %v6318 = vand.u32 %v1261, 4294901760
        %v6319 = vsub.f32 %v1261, %v6318
        %v6320 = vand.u32 %v6319, 4294901760
        %6321 = vmatpush1.msra.mxu0 %v6320
        %6322 = vmatprep.subr.mxu0 0.0
        %v6323 = vand.u32 %v1262, 4294901760
        %v6324 = vsub.f32 %v1262, %v6323
        %v6325 = vand.u32 %v6324, 4294901760
        %6326 = vmatpush1.msra.mxu0 %v6325
        %6327 = vmatprep.subr.mxu0 0.0
        %v6328 = vand.u32 %v1263, 4294901760
        %v6329 = vsub.f32 %v1263, %v6328
        %v6330 = vand.u32 %v6329, 4294901760
        %6331 = vmatpush1.msra.mxu0 %v6330
        %6332 = vmatprep.subr.mxu0 0.0
        %v6333 = vand.u32 %v1264, 4294901760
        %v6334 = vsub.f32 %v1264, %v6333
        %v6335 = vand.u32 %v6334, 4294901760
        %6336 = vmatpush1.msra.mxu0 %v6335
        %6337 = vmatprep.subr.mxu0 0.0
        %v6338 = vand.u32 %v1265, 4294901760
        %v6339 = vsub.f32 %v1265, %v6338
        %v6340 = vand.u32 %v6339, 4294901760
        %6341 = vmatpush1.msra.mxu0 %v6340
        %6342 = vmatprep.subr.mxu0 0.0
        %v6343 = vand.u32 %v1266, 4294901760
        %v6344 = vsub.f32 %v1266, %v6343
        %v6345 = vand.u32 %v6344, 4294901760
        %6346 = vmatpush1.msra.mxu0 %v6345
        %6347 = vmatprep.subr.mxu0 0.0
        %v6348 = vand.u32 %v1267, 4294901760
        %v6349 = vsub.f32 %v1267, %v6348
        %v6350 = vand.u32 %v6349, 4294901760
        %6351 = vmatpush1.msra.mxu0 %v6350
        %6352 = vmatprep.subr.mxu0 0.0
        %v6353 = vand.u32 %v1268, 4294901760
        %v6354 = vsub.f32 %v1268, %v6353
        %v6355 = vand.u32 %v6354, 4294901760
        %6356 = vmatpush1.msra.mxu0 %v6355
        %6357 = vmatprep.subr.mxu0 0.0
        %6358 = vmatpush1.msra.mxu0 0.0
        %6359 = vmatprep.subr.mxu0 0.0
        %6360 = vmatpush1.msra.mxu0 0.0
        %6361 = vmatprep.subr.mxu0 0.0
        %6362 = vmatpush1.msra.mxu0 0.0
        %6363 = vmatprep.subr.mxu0 0.0
        %6364 = vmatpush1.msra.mxu0 0.0
        %6365 = vmatprep.subr.mxu0 0.0
        %6366 = vmatpush1.msra.mxu0 0.0
        %6367 = vmatprep.subr.mxu0 0.0
        %6368 = vmatpush1.msra.mxu0 0.0
        %6369 = vmatprep.subr.mxu0 0.0
        %6370 = vmatpush1.msra.mxu0 0.0
        %6371 = vmatprep.subr.mxu0 0.0
        %6372 = vmatpush1.msra.mxu0 0.0
        %6373 = vmatprep.subr.mxu0 0.0
        %6374 = vmatpush1.msra.mxu0 0.0
        %6375 = vmatprep.subr.mxu0 0.0
        %6376 = vmatpush1.msra.mxu0 0.0
        %6377 = vmatprep.subr.mxu0 0.0
        %6378 = vmatpush1.msra.mxu0 0.0
        %6379 = vmatprep.subr.mxu0 0.0
        %6380 = vmatpush1.msra.mxu0 0.0
        %6381 = vmatprep.subr.mxu0 0.0
        %6382 = vmatpush1.msra.mxu0 0.0
        %6383 = vmatprep.subr.mxu0 0.0
        %6384 = vmatpush1.msra.mxu0 0.0
        %6385 = vmatprep.subr.mxu0 0.0
        %6386 = vmatpush1.msra.mxu0 0.0
        %6387 = vmatprep.subr.mxu0 0.0
        %6388 = vmatpush1.msra.mxu0 0.0
        %6389 = vmatprep.mubr.f32.mxu0 0.0
        %v6390 = vand.u32 %v5837, 4294901760
        %6391 = vmatmul.mubr.f32.gmra.mrb[0].mxu0 %v6390
        %v6392 = vpop.f32.mrb[0].mxu0
        %v6393 = vadd.f32 %v6274, %v6392
        %v6394 = vpop.f32.mrb[0].mxu0
        %6395 = vdwg.mxu0
        %6396 = vmatprep.subr.mxu0 0.0
        %v6397 = vand.u32 %v1253, 4294901760
        %6398 = vmatpush1.msra.mxu0 %v6397
        %6399 = vmatprep.subr.mxu0 0.0
        %v6400 = vand.u32 %v1254, 4294901760
        %6401 = vmatpush1.msra.mxu0 %v6400
        %6402 = vmatprep.subr.mxu0 0.0
        %v6403 = vand.u32 %v1255, 4294901760
        %6404 = vmatpush1.msra.mxu0 %v6403
        %6405 = vmatprep.subr.mxu0 0.0
        %v6406 = vand.u32 %v1256, 4294901760
        %6407 = vmatpush1.msra.mxu0 %v6406
        %6408 = vmatprep.subr.mxu0 0.0
        %v6409 = vand.u32 %v1257, 4294901760
        %6410 = vmatpush1.msra.mxu0 %v6409
        %6411 = vmatprep.subr.mxu0 0.0
        %v6412 = vand.u32 %v1258, 4294901760
        %6413 = vmatpush1.msra.mxu0 %v6412
        %6414 = vmatprep.subr.mxu0 0.0
        %v6415 = vand.u32 %v1259, 4294901760
        %6416 = vmatpush1.msra.mxu0 %v6415
        %6417 = vmatprep.subr.mxu0 0.0
        %v6418 = vand.u32 %v1260, 4294901760
        %6419 = vmatpush1.msra.mxu0 %v6418
        %6420 = vmatprep.subr.mxu0 0.0
        %v6421 = vand.u32 %v1261, 4294901760
        %6422 = vmatpush1.msra.mxu0 %v6421
        %6423 = vmatprep.subr.mxu0 0.0
        %v6424 = vand.u32 %v1262, 4294901760
        %6425 = vmatpush1.msra.mxu0 %v6424
        %6426 = vmatprep.subr.mxu0 0.0
        %v6427 = vand.u32 %v1263, 4294901760
        %6428 = vmatpush1.msra.mxu0 %v6427
        %6429 = vmatprep.subr.mxu0 0.0
        %v6430 = vand.u32 %v1264, 4294901760
        %6431 = vmatpush1.msra.mxu0 %v6430
        %6432 = vmatprep.subr.mxu0 0.0
        %v6433 = vand.u32 %v1265, 4294901760
        %6434 = vmatpush1.msra.mxu0 %v6433
        %6435 = vmatprep.subr.mxu0 0.0
        %v6436 = vand.u32 %v1266, 4294901760
        %6437 = vmatpush1.msra.mxu0 %v6436
        %6438 = vmatprep.subr.mxu0 0.0
        %v6439 = vand.u32 %v1267, 4294901760
        %6440 = vmatpush1.msra.mxu0 %v6439
        %6441 = vmatprep.subr.mxu0 0.0
        %v6442 = vand.u32 %v1268, 4294901760
        %6443 = vmatpush1.msra.mxu0 %v6442
        %6444 = vmatprep.subr.mxu0 0.0
        %6445 = vmatpush1.msra.mxu0 0.0
        %6446 = vmatprep.subr.mxu0 0.0
        %6447 = vmatpush1.msra.mxu0 0.0
        %6448 = vmatprep.subr.mxu0 0.0
        %6449 = vmatpush1.msra.mxu0 0.0
        %6450 = vmatprep.subr.mxu0 0.0
        %6451 = vmatpush1.msra.mxu0 0.0
        %6452 = vmatprep.subr.mxu0 0.0
        %6453 = vmatpush1.msra.mxu0 0.0
        %6454 = vmatprep.subr.mxu0 0.0
        %6455 = vmatpush1.msra.mxu0 0.0
        %6456 = vmatprep.subr.mxu0 0.0
        %6457 = vmatpush1.msra.mxu0 0.0
        %6458 = vmatprep.subr.mxu0 0.0
        %6459 = vmatpush1.msra.mxu0 0.0
        %6460 = vmatprep.subr.mxu0 0.0
        %6461 = vmatpush1.msra.mxu0 0.0
        %6462 = vmatprep.subr.mxu0 0.0
        %6463 = vmatpush1.msra.mxu0 0.0
        %6464 = vmatprep.subr.mxu0 0.0
        %6465 = vmatpush1.msra.mxu0 0.0
        %6466 = vmatprep.subr.mxu0 0.0
        %6467 = vmatpush1.msra.mxu0 0.0
        %6468 = vmatprep.subr.mxu0 0.0
        %6469 = vmatpush1.msra.mxu0 0.0
        %6470 = vmatprep.subr.mxu0 0.0
        %6471 = vmatpush1.msra.mxu0 0.0
        %6472 = vmatprep.subr.mxu0 0.0
        %6473 = vmatpush1.msra.mxu0 0.0
        %6474 = vmatprep.subr.mxu0 0.0
        %6475 = vmatpush1.msra.mxu0 0.0
        %6476 = vmatprep.mubr.f32.mxu0 0.0
        %v6477 = vand.u32 %v5837, 4294901760
        %6478 = vmatmul.mubr.f32.gmra.mrb[0].mxu0 %v6477
        %v6479 = vpop.f32.mrb[0].mxu0
        %v6480 = vadd.f32 %v6393, %v6479
        %v6481 = vpop.f32.mrb[0].mxu0
        %6482 = vdwg.mxu0
        %v6483 = vld [vmem:[#allocation2 + $0x38] sm:$0xff]
        %v6484 = vmul.f32 %v5836, 0.1
        %v6485 = vsub.f32 0.0, %v5836
        %v6486 = vadd.f32 %v6485, %v6480
        %v6487 = vadd.f32 %v6486, %v6483
        %v6488 = vmul.f32 %v6484, %v6487
        %v6489 = vmax.f32 %v6488, 0.0
        %s6490 = scalar_lea.vmem %s333, 56 [#allocation6]
        %6491 = vst [vmem:[%s6490] sm:$0xff] %v6488
        %s6492 = scalar_lea.vmem %s326, 56 [#allocation4]
        %6493 = vst [vmem:[%s6492] sm:$0xff] %v6489
        %6494 = vst [vmem:[#allocation3] sm:$0xff] %v6488
        %s6495 = sand.u32 %s190, 1
        %s6496 = scalar_lea.sflag [#allocation5], %s6495
        %s6497 = sand.u32 %s190, 1
        %s6498 = smul.addr %s6497, 64
        %s6499 = scalar_lea.vmem [#allocation4], %s6498
        %s6500 = sand.u32 %s218, 1
        %s6501 = scalar_lea.sflag [#allocation7], %s6500
        %s6502 = sand.u32 %s218, 1
        %s6503 = smul.addr %s6502, 64
        %s6504 = scalar_lea.vmem [#allocation6], %s6503
        // Predicated region
        $region49: #{_lambda_.1} parent=43 // pred_check
          %p6505 = pneg %p200
        $region50: #{_lambda_.1} parent=43 // pred_check_branch
          %6507 = sbr.rel (%p6505) target = $region52
        $region51: #{_lambda_.1} parent=43 // pred_region
          %s6508 = smul.u32 8, %s30
          %s6510 = ssub.s32 1024, 1024
          %6511 = vsyncadd %s6496, %s6510
          %s6512 = sadd.s32 %s29, %s6508
          %s6513 = smul.addr %s6512, 128
          %s6514 = scalar_lea.hbm %s6, %s6513
          %s6515 = sshll.u32 %s6499, 4
          %s6516 = int_to_ptr.vmem [resolvable:$true] %s6515
          %6521 = dma.vmem_to_hbm [thread:$0]  %s6516, 1024, %s6514, %s6496, 128, 128, 8
        $region52: #{_lambda_.1} parent=43 // pred_fallthru
          _
        // Predicated region
        $region53: #{_lambda_.1} parent=43 // pred_check
          %p6522 = pneg %p228
        $region54: #{_lambda_.1} parent=43 // pred_check_branch
          %6524 = sbr.rel (%p6522) target = $region56
        $region55: #{_lambda_.1} parent=43 // pred_region
          %s6525 = smul.u32 8, %s30
          %s6527 = ssub.s32 1024, 1024
          %6528 = vsyncadd %s6501, %s6527
          %s6529 = sadd.s32 %s29, %s6525
          %s6530 = smul.addr %s6529, 128
          %s6531 = scalar_lea.hbm %s7, %s6530
          %s6532 = sshll.u32 %s6504, 4
          %s6533 = int_to_ptr.vmem [resolvable:$true] %s6532
          %6538 = dma.vmem_to_hbm [thread:$0]  %s6533, 1024, %s6531, %s6501, 128, 128, 8
        $region56: #{_lambda_.1} parent=43 // pred_fallthru
          _
      $region44: #{_lambda_.1} parent=5 // pred_fallthru
        _
      %p6539 = scmp.le.s32.totalorder 2, %s20
      // Predicated region
      $region57: #{_lambda_.1} parent=5 // pred_check
        %p6540 = pneg %p6539
      $region58: #{_lambda_.1} parent=5 // pred_check_branch
        %6542 = sbr.rel (%p6540) target = $region60
      $region59: #{_lambda_.1} parent=5 // pred_region
        %s6543 = ssub.s32 %s20, 2
        // Predicated region
        $region61: #{_lambda_.1} parent=59 // pred_check
          %p6544 = pneg %p206
        $region62: #{_lambda_.1} parent=59 // pred_check_branch
          %6546 = sbr.rel (%p6544) target = $region64
        $region63: #{_lambda_.1} parent=59 // pred_region
          %s6547 = sand.u32 %s191, 1
          %s6548 = scalar_lea.sflag [#allocation5], %s6547
          %s6549 = sand.u32 %s191, 1
          %s6550 = smul.addr %s6549, 64
          %s6551 = scalar_lea.vmem [#allocation4], %s6550
          %6552 = dma.done %s6548, 1024
        $region64: #{_lambda_.1} parent=59 // pred_fallthru
          _
        // Predicated region
        $region65: #{_lambda_.1} parent=59 // pred_check
          %p6553 = pneg %p234
        $region66: #{_lambda_.1} parent=59 // pred_check_branch
          %6555 = sbr.rel (%p6553) target = $region68
        $region67: #{_lambda_.1} parent=59 // pred_region
          %s6556 = sand.u32 %s219, 1
          %s6557 = scalar_lea.sflag [#allocation7], %s6556
          %s6558 = sand.u32 %s219, 1
          %s6559 = smul.addr %s6558, 64
          %s6560 = scalar_lea.vmem [#allocation6], %s6559
          %6561 = dma.done %s6557, 1024
        $region68: #{_lambda_.1} parent=59 // pred_fallthru
          _
      $region60: #{_lambda_.1} parent=5 // pred_fallthru
        _
    $region6: #{_lambda_.1} parent=1 // loop_footer
      %s24 = sadd.s32 1, %s20
    $region7: #{_lambda_.1} parent=1 // loop_footer_branch
      %19 = sbr.rel target = $region3
    $region8: #{_lambda_.1} parent=1 // loop_exit
      _
    %6562 = vsyncpa [#allocation5], 1
    %s6563 = scalar_lea.sflag [#allocation5], 1
    %6564 = vsyncpa %s6563, 1
    %6565 = vsyncpa [#allocation7], 1
    %s6566 = scalar_lea.sflag [#allocation7], 1
    %6567 = vsyncpa %s6566, 1

</llo_original>
